<compile_context>
chip_gen: v6e
topology: v6e:2x2x1
jax: 0.10.0
libtpu: 0.0.40
codegen_flags: <defaults>
</compile_context>

<pallas_src>
import jax
import jax.numpy as jnp
import numpy as np
from jax.experimental import pallas as pl
from jax.experimental.pallas import tpu as pltpu

EPS = 1e-5
_VSPEC = pl.BlockSpec(memory_space=pltpu.MemorySpace.VMEM)
_NT = (((1,), (1,)), ((), ()))          # contract last dims:  q @ k^T


# ---------------------------------------------------------------------------
# Glue: constant gather matrices (conv padding / stride done on the MXU)
# ---------------------------------------------------------------------------
def _gather_mats(B, L, K, stride, pad):
    """Per-tap (B*Lout, B*Lin) 0/1 matrices such that
       (G_k @ x)[b*Lout + lo] = x[b*L + stride*lo + k - pad]
    with an all-zero row when the source index is out of range (zero padding).
    The identity tap of a stride-1 conv is returned as None (skipped in-kernel)."""
    Lo = (L + 2 * pad - K) // stride + 1
    mats = []
    for k in range(K):
        if stride == 1 and k == pad:
            mats.append(None)
            continue
        g = np.zeros((B * Lo, B * L), np.float32)
        for b in range(B):
            for lo in range(Lo):
                src = stride * lo + k - pad
                if 0 <= src < L:
                    g[b * Lo + lo, b * L + src] = 1.0
        mats.append(jnp.asarray(g))
    return mats


# ---------------------------------------------------------------------------
# Glue: re-layout torch-style parameters for the channels-last (lane) layout
# ---------------------------------------------------------------------------
def _prep_conv(p):
    w = p['w']                                        # (Cout, Cin, K) torch layout
    K = w.shape[2]
    return {'w': [jnp.transpose(w[:, :, k]) for k in range(K)],   # K x (Cin, Cout)
            'b': p['b'].reshape(1, -1)}


def _prep_bn(p):
    return {'g': p['gamma'].reshape(1, -1), 'b': p['beta'].reshape(1, -1)}


def _prep_sat(p):
    c = p['q']['w'].shape[0]
    scale = float(c) ** (-0.5)
    out = {'bn': _prep_bn(p['bn'])}
    for name in ('q', 'k', 'v', 'p'):
        w = p[name]['w'].T                            # (Cin, Cout)
        b = p[name]['b'].reshape(1, -1)
        if name == 'q':                               # fold softmax scale into q
            w = w * scale
            b = b * scale
        out[name] = {'w': w, 'b': b}
    return out


# ---------------------------------------------------------------------------
# In-kernel building blocks (operate on jnp values, all data already in VMEM)
# ---------------------------------------------------------------------------
def _silu(x):
    return x * jax.nn.sigmoid(x)


def _bn(x, gamma, beta):
    # training-mode batch statistics over all rows (= batch x length), per channel
    mu = jnp.mean(x, axis=0, keepdims=True)
    d = x - mu
    var = jnp.mean(d * d, axis=0, keepdims=True)
    return d * jax.lax.rsqrt(var + EPS) * gamma + beta


def _conv(x, wp, gmats):
    # x: (B*Lin, Cin);  wp['w'][k]: (Cin, Cout);  gmats[k]: (B*Lout, B*Lin) or None
    y = None
    for k, wk in enumerate(wp['w']):
        xk = x if gmats[k] is None else jnp.dot(
            gmats[k], x, preferred_element_type=jnp.float32)
        t = jnp.dot(xk, wk, preferred_element_type=jnp.float32)
        y = t if y is None else y + t
    return y + wp['b']


def _self_attention(x, p, B, L):
    # x: (B*L, C)
    h = _bn(x, p['bn']['g'], p['bn']['b'])
    q = jnp.dot(h, p['q']['w'], preferred_element_type=jnp.float32) + p['q']['b']
    k = jnp.dot(h, p['k']['w'], preferred_element_type=jnp.float32) + p['k']['b']
    v = jnp.dot(h, p['v']['w'], preferred_element_type=jnp.float32) + p['v']['b']
    outs = []
    for b in range(B):                                # B is small & static
        s = slice(b * L, (b + 1) * L)
        att = jax.lax.dot_general(q[s], k[s], _NT,
                                  preferred_element_type=jnp.float32)   # (L, L)
        att = jnp.exp(att - jnp.max(att, axis=-1, keepdims=True))
        att = att * pl.reciprocal(jnp.sum(att, axis=-1, keepdims=True), approx=True)
        outs.append(jnp.dot(att, v[s], preferred_element_type=jnp.float32))
    o = jnp.concatenate(outs, axis=0)
    o = jnp.dot(o, p['p']['w'], preferred_element_type=jnp.float32) + p['p']['b']
    return x + o


# ---------------------------------------------------------------------------
# Fused Encoder forward (single pallas_call)
# ---------------------------------------------------------------------------
def encoder_forward(params, x, n_layer=2):
    B, c_in, L = x.shape
    assert L % (2 ** n_layer) == 0, "length must be divisible by 2**n_layer"

    # trace-time parameter relayout
    kp = {'econv_start': _prep_conv(params['econv_start']),
          'esat_start': _prep_sat(params['esat_start']),
          'ebn_start': _prep_bn(params['ebn_start']),
          'rconv_1': _prep_conv(params['rconv_1']),
          'rconv_2': _prep_conv(params['rconv_2'])}
    for i in range(n_layer):
        kp[f'econv_d_{i}'] = _prep_conv(params[f'econv_d_{i}'])
        kp[f'econv_{i}'] = _prep_conv(params[f'econv_{i}'])
        kp[f'esat_{i}'] = _prep_sat(params[f'esat_{i}'])
        kp[f'ebn2_{i}'] = _prep_bn(params[f'ebn2_{i}'])

    # constant gather matrices (padding / stride-2 as MXU selections)
    lengths = [L // (2 ** i) for i in range(n_layer + 1)]
    aux = {}
    for li in sorted(set(lengths)):
        aux[f'k3_{li}'] = _gather_mats(B, li, 3, 1, 1)
    for i in range(n_layer):
        aux[f'k4_{lengths[i]}'] = _gather_mats(B, lengths[i], 4, 2, 1)

    leaves, treedef = jax.tree_util.tree_flatten({'p': kp, 'a': aux})

    l_out = lengths[-1]
    c_out = params['rconv_2']['w'].shape[0]

    # (B, C, L) -> flattened channels-last (B*L, C)
    x_flat = jnp.transpose(x, (0, 2, 1)).reshape(B * L, c_in).astype(jnp.float32)

    def kernel(*refs):
        x_ref, o_ref = refs[0], refs[-1]
        tree = jax.tree_util.tree_unflatten(treedef, [r[...] for r in refs[1:-1]])
        p, a = tree['p'], tree['a']

        h = x_ref[...]
        h = _conv(h, p['econv_start'], a[f'k3_{L}'])
        h = _self_attention(h, p['esat_start'], B, L)
        h = _silu(h)
        h = _bn(h, p['ebn_start']['g'], p['ebn_start']['b'])
        lc = L
        for i in range(n_layer):
            h = _conv(h, p[f'econv_d_{i}'], a[f'k4_{lc}'])     # k=4, stride 2
            lc //= 2
            h = _silu(h)
            h = _conv(h, p[f'econv_{i}'], a[f'k3_{lc}'])       # k=3, stride 1
            h = _silu(h)
            h = _self_attention(h, p[f'esat_{i}'], B, lc)
            h = _silu(h)
            h = _bn(h, p[f'ebn2_{i}']['g'], p[f'ebn2_{i}']['b'])
        h = _conv(h, p['rconv_1'], a[f'k3_{lc}'])
        h = _conv(h, p['rconv_2'], a[f'k3_{lc}'])
        o_ref[...] = h

    out = pl.pallas_call(
        kernel,
        out_shape=jax.ShapeDtypeStruct((B * l_out, c_out), jnp.float32),
        in_specs=[_VSPEC] * (1 + len(leaves)),
        out_specs=_VSPEC,
    )(x_flat, *leaves)

    # back to torch NCL layout
    return jnp.transpose(out.reshape(B, l_out, c_out), (0, 2, 1))


# ---------------------------------------------------------------------------
# Parameter init (deterministic, torch-like uniform +-1/sqrt(fan_in))
# ---------------------------------------------------------------------------
def init_encoder_params(key, input_channel=6, ch=16, latent_channel=2, n_layer=2):
    keys = iter(jax.random.split(key, 128))

    def conv(cin, cout, k):
        s = 1.0 / np.sqrt(cin * k)
        w = jax.random.uniform(next(keys), (cout, cin, k), jnp.float32, -s, s)
        b = jax.random.uniform(next(keys), (cout,), jnp.float32, -s, s)
        return {'w': w, 'b': b}

    def bn(c):
        return {'gamma': jnp.ones((c,), jnp.float32),
                'beta': jnp.zeros((c,), jnp.float32)}

    def sat(c):
        p = {'bn': bn(c)}
        for name in ('q', 'k', 'v', 'p'):
            cp = conv(c, c, 1)
            p[name] = {'w': cp['w'][:, :, 0], 'b': cp['b']}
        return p

    params = {}
    params['econv_start'] = conv(input_channel, ch, 3)
    params['esat_start'] = sat(ch)
    params['ebn_start'] = bn(ch)
    for i in range(n_layer):
        cin = ch * 4 ** i
        cout = ch * 4 ** (i + 1)
        params[f'econv_d_{i}'] = conv(cin, cin, 4)          # k=4, p=1, s=2
        params[f'econv_{i}'] = conv(cin, cout, 3)           # k=3, p=1, s=1
        params[f'esat_{i}'] = sat(cout)
        params[f'ebn2_{i}'] = bn(cout)
    params['rconv_1'] = conv(ch * 4 ** n_layer, latent_channel, 3)
    params['rconv_2'] = conv(latent_channel, latent_channel * 2, 3)
    return params


# ---------------------------------------------------------------------------
# Pure-JAX reference (same math, no Pallas) for the correctness check
# ---------------------------------------------------------------------------
def _conv_ref(x, w, b, stride, pad):
    y = jax.lax.conv_general_dilated(
        x, w, window_strides=(stride,), padding=[(pad, pad)],
        dimension_numbers=('NCH', 'OIH', 'NCH'),
        precision=jax.lax.Precision.HIGHEST)
    return y + b[None, :, None]


def _bn_ref(x, g, b):
    mean = jnp.mean(x, axis=(0, 2), keepdims=True)
    var = jnp.mean((x - mean) ** 2, axis=(0, 2), keepdims=True)
    return (x - mean) * jax.lax.rsqrt(var + EPS) * g[None, :, None] + b[None, :, None]


def _silu_ref(x):
    return x * jax.nn.sigmoid(x)


def _sat_ref(x, p):
    B, C, L = x.shape
    h = _bn_ref(x, p['bn']['gamma'], p['bn']['beta'])
    hi = jax.lax.Precision.HIGHEST
    q = jnp.einsum('oc,bcl->bol', p['q']['w'], h, precision=hi) + p['q']['b'][None, :, None]
    k = jnp.einsum('oc,bcl->bol', p['k']['w'], h, precision=hi) + p['k']['b'][None, :, None]
    v = jnp.einsum('oc,bcl->bol', p['v']['w'], h, precision=hi) + p['v']['b'][None, :, None]
    w = jnp.einsum('bci,bcj->bij', q, k, precision=hi) * (float(C) ** (-0.5))
    w = jax.nn.softmax(w, axis=2)
    hh = jnp.einsum('bcj,bij->bci', v, w, precision=hi)
    out = jnp.einsum('oc,bci->boi', p['p']['w'], hh, precision=hi) + p['p']['b'][None, :, None]
    return x + out


def encoder_ref(params, x, n_layer=2):
    h = _conv_ref(x, params['econv_start']['w'], params['econv_start']['b'], 1, 1)
    h = _sat_ref(h, params['esat_start'])
    h = _silu_ref(h)
    h = _bn_ref(h, params['ebn_start']['gamma'], params['ebn_start']['beta'])
    for i in range(n_layer):
        h = _conv_ref(h, params[f'econv_d_{i}']['w'], params[f'econv_d_{i}']['b'], 2, 1)
        h = _silu_ref(h)
        h = _conv_ref(h, params[f'econv_{i}']['w'], params[f'econv_{i}']['b'], 1, 1)
        h = _silu_ref(h)
        h = _sat_ref(h, params[f'esat_{i}'])
        h = _silu_ref(h)
        h = _bn_ref(h, params[f'ebn2_{i}']['gamma'], params[f'ebn2_{i}']['beta'])
    h = _conv_ref(h, params['rconv_1']['w'], params['rconv_1']['b'], 1, 1)
    h = _conv_ref(h, params['rconv_2']['w'], params['rconv_2']['b'], 1, 1)
    return h


# ---------------------------------------------------------------------------
if __name__ == "__main__":
    key = jax.random.PRNGKey(0)
    kparam, kx = jax.random.split(key)

    # Encoder(input_channel=6, ch=16, latent_channel=2, n_layer=2)
    params = init_encoder_params(kparam, input_channel=6, ch=16,
                                 latent_channel=2, n_layer=2)

    B, CIN, L = 2, 6, 32                       # input: (B, input_channel, L)
    x = jax.random.normal(kx, (B, CIN, L), dtype=jnp.float32)

    fwd = jax.jit(lambda p, xx: encoder_forward(p, xx, n_layer=2))
    out = jax.block_until_ready(fwd(params, x))

    ref = encoder_ref(params, x, n_layer=2)
    assert out.shape == (B, 4, L // 4), out.shape          # (B, 2*latent, L/4)
    np.testing.assert_allclose(np.asarray(out), np.asarray(ref), rtol=2e-2, atol=2e-2)

    print("KERNEL_OK")
</pallas_src>

<mosaic_0001>
module attributes {stable_mosaic.version = 11 : i64} {
  func.func @kernel(%arg0: memref<64x6xf32, #tpu.memory_space<vmem>>, %arg1: memref<32x32xf32, #tpu.memory_space<vmem>>, %arg2: memref<32x32xf32, #tpu.memory_space<vmem>>, %arg3: memref<64x64xf32, #tpu.memory_space<vmem>>, %arg4: memref<64x64xf32, #tpu.memory_space<vmem>>, %arg5: memref<16x16xf32, #tpu.memory_space<vmem>>, %arg6: memref<16x16xf32, #tpu.memory_space<vmem>>, %arg7: memref<16x32xf32, #tpu.memory_space<vmem>>, %arg8: memref<16x32xf32, #tpu.memory_space<vmem>>, %arg9: memref<16x32xf32, #tpu.memory_space<vmem>>, %arg10: memref<16x32xf32, #tpu.memory_space<vmem>>, %arg11: memref<32x64xf32, #tpu.memory_space<vmem>>, %arg12: memref<32x64xf32, #tpu.memory_space<vmem>>, %arg13: memref<32x64xf32, #tpu.memory_space<vmem>>, %arg14: memref<32x64xf32, #tpu.memory_space<vmem>>, %arg15: memref<1x64xf32, #tpu.memory_space<vmem>>, %arg16: memref<1x64xf32, #tpu.memory_space<vmem>>, %arg17: memref<1x256xf32, #tpu.memory_space<vmem>>, %arg18: memref<1x256xf32, #tpu.memory_space<vmem>>, %arg19: memref<1x16xf32, #tpu.memory_space<vmem>>, %arg20: memref<1x16xf32, #tpu.memory_space<vmem>>, %arg21: memref<1x64xf32, #tpu.memory_space<vmem>>, %arg22: memref<16x64xf32, #tpu.memory_space<vmem>>, %arg23: memref<16x64xf32, #tpu.memory_space<vmem>>, %arg24: memref<16x64xf32, #tpu.memory_space<vmem>>, %arg25: memref<1x256xf32, #tpu.memory_space<vmem>>, %arg26: memref<64x256xf32, #tpu.memory_space<vmem>>, %arg27: memref<64x256xf32, #tpu.memory_space<vmem>>, %arg28: memref<64x256xf32, #tpu.memory_space<vmem>>, %arg29: memref<1x16xf32, #tpu.memory_space<vmem>>, %arg30: memref<16x16xf32, #tpu.memory_space<vmem>>, %arg31: memref<16x16xf32, #tpu.memory_space<vmem>>, %arg32: memref<16x16xf32, #tpu.memory_space<vmem>>, %arg33: memref<16x16xf32, #tpu.memory_space<vmem>>, %arg34: memref<1x64xf32, #tpu.memory_space<vmem>>, %arg35: memref<64x64xf32, #tpu.memory_space<vmem>>, %arg36: memref<64x64xf32, #tpu.memory_space<vmem>>, %arg37: memref<64x64xf32, #tpu.memory_space<vmem>>, %arg38: memref<64x64xf32, #tpu.memory_space<vmem>>, %arg39: memref<1x16xf32, #tpu.memory_space<vmem>>, %arg40: memref<6x16xf32, #tpu.memory_space<vmem>>, %arg41: memref<6x16xf32, #tpu.memory_space<vmem>>, %arg42: memref<6x16xf32, #tpu.memory_space<vmem>>, %arg43: memref<1x64xf32, #tpu.memory_space<vmem>>, %arg44: memref<1x64xf32, #tpu.memory_space<vmem>>, %arg45: memref<1x64xf32, #tpu.memory_space<vmem>>, %arg46: memref<64x64xf32, #tpu.memory_space<vmem>>, %arg47: memref<1x64xf32, #tpu.memory_space<vmem>>, %arg48: memref<64x64xf32, #tpu.memory_space<vmem>>, %arg49: memref<1x64xf32, #tpu.memory_space<vmem>>, %arg50: memref<64x64xf32, #tpu.memory_space<vmem>>, %arg51: memref<1x64xf32, #tpu.memory_space<vmem>>, %arg52: memref<64x64xf32, #tpu.memory_space<vmem>>, %arg53: memref<1x256xf32, #tpu.memory_space<vmem>>, %arg54: memref<1x256xf32, #tpu.memory_space<vmem>>, %arg55: memref<1x256xf32, #tpu.memory_space<vmem>>, %arg56: memref<256x256xf32, #tpu.memory_space<vmem>>, %arg57: memref<1x256xf32, #tpu.memory_space<vmem>>, %arg58: memref<256x256xf32, #tpu.memory_space<vmem>>, %arg59: memref<1x256xf32, #tpu.memory_space<vmem>>, %arg60: memref<256x256xf32, #tpu.memory_space<vmem>>, %arg61: memref<1x256xf32, #tpu.memory_space<vmem>>, %arg62: memref<256x256xf32, #tpu.memory_space<vmem>>, %arg63: memref<1x16xf32, #tpu.memory_space<vmem>>, %arg64: memref<1x16xf32, #tpu.memory_space<vmem>>, %arg65: memref<1x16xf32, #tpu.memory_space<vmem>>, %arg66: memref<16x16xf32, #tpu.memory_space<vmem>>, %arg67: memref<1x16xf32, #tpu.memory_space<vmem>>, %arg68: memref<16x16xf32, #tpu.memory_space<vmem>>, %arg69: memref<1x16xf32, #tpu.memory_space<vmem>>, %arg70: memref<16x16xf32, #tpu.memory_space<vmem>>, %arg71: memref<1x16xf32, #tpu.memory_space<vmem>>, %arg72: memref<16x16xf32, #tpu.memory_space<vmem>>, %arg73: memref<1x2xf32, #tpu.memory_space<vmem>>, %arg74: memref<256x2xf32, #tpu.memory_space<vmem>>, %arg75: memref<256x2xf32, #tpu.memory_space<vmem>>, %arg76: memref<256x2xf32, #tpu.memory_space<vmem>>, %arg77: memref<1x4xf32, #tpu.memory_space<vmem>>, %arg78: memref<2x4xf32, #tpu.memory_space<vmem>>, %arg79: memref<2x4xf32, #tpu.memory_space<vmem>>, %arg80: memref<2x4xf32, #tpu.memory_space<vmem>>, %arg81: memref<16x4xf32, #tpu.memory_space<vmem>>) attributes {dimension_semantics = [], scalar_prefetch = 0 : i64, scratch_operands = 0 : i64, tpu.core_type = #tpu.core_type<tc>} {
    %c0 = arith.constant 0 : index
    %c0_0 = arith.constant 0 : index
    %0 = vector.load %arg1[%c0, %c0_0] : memref<32x32xf32, #tpu.memory_space<vmem>>, vector<32x32xf32>
    %c0_1 = arith.constant 0 : index
    %c0_2 = arith.constant 0 : index
    %1 = vector.load %arg2[%c0_1, %c0_2] : memref<32x32xf32, #tpu.memory_space<vmem>>, vector<32x32xf32>
    %c0_3 = arith.constant 0 : index
    %c0_4 = arith.constant 0 : index
    %2 = vector.load %arg3[%c0_3, %c0_4] : memref<64x64xf32, #tpu.memory_space<vmem>>, vector<64x64xf32>
    %c0_5 = arith.constant 0 : index
    %c0_6 = arith.constant 0 : index
    %3 = vector.load %arg4[%c0_5, %c0_6] : memref<64x64xf32, #tpu.memory_space<vmem>>, vector<64x64xf32>
    %c0_7 = arith.constant 0 : index
    %c0_8 = arith.constant 0 : index
    %4 = vector.load %arg5[%c0_7, %c0_8] : memref<16x16xf32, #tpu.memory_space<vmem>>, vector<16x16xf32>
    %c0_9 = arith.constant 0 : index
    %c0_10 = arith.constant 0 : index
    %5 = vector.load %arg6[%c0_9, %c0_10] : memref<16x16xf32, #tpu.memory_space<vmem>>, vector<16x16xf32>
    %c0_11 = arith.constant 0 : index
    %c0_12 = arith.constant 0 : index
    %6 = vector.load %arg7[%c0_11, %c0_12] : memref<16x32xf32, #tpu.memory_space<vmem>>, vector<16x32xf32>
    %c0_13 = arith.constant 0 : index
    %c0_14 = arith.constant 0 : index
    %7 = vector.load %arg8[%c0_13, %c0_14] : memref<16x32xf32, #tpu.memory_space<vmem>>, vector<16x32xf32>
    %c0_15 = arith.constant 0 : index
    %c0_16 = arith.constant 0 : index
    %8 = vector.load %arg9[%c0_15, %c0_16] : memref<16x32xf32, #tpu.memory_space<vmem>>, vector<16x32xf32>
    %c0_17 = arith.constant 0 : index
    %c0_18 = arith.constant 0 : index
    %9 = vector.load %arg10[%c0_17, %c0_18] : memref<16x32xf32, #tpu.memory_space<vmem>>, vector<16x32xf32>
    %c0_19 = arith.constant 0 : index
    %c0_20 = arith.constant 0 : index
    %10 = vector.load %arg11[%c0_19, %c0_20] : memref<32x64xf32, #tpu.memory_space<vmem>>, vector<32x64xf32>
    %c0_21 = arith.constant 0 : index
    %c0_22 = arith.constant 0 : index
    %11 = vector.load %arg12[%c0_21, %c0_22] : memref<32x64xf32, #tpu.memory_space<vmem>>, vector<32x64xf32>
    %c0_23 = arith.constant 0 : index
    %c0_24 = arith.constant 0 : index
    %12 = vector.load %arg13[%c0_23, %c0_24] : memref<32x64xf32, #tpu.memory_space<vmem>>, vector<32x64xf32>
    %c0_25 = arith.constant 0 : index
    %c0_26 = arith.constant 0 : index
    %13 = vector.load %arg14[%c0_25, %c0_26] : memref<32x64xf32, #tpu.memory_space<vmem>>, vector<32x64xf32>
    %c0_27 = arith.constant 0 : index
    %c0_28 = arith.constant 0 : index
    %14 = vector.load %arg15[%c0_27, %c0_28] : memref<1x64xf32, #tpu.memory_space<vmem>>, vector<1x64xf32>
    %c0_29 = arith.constant 0 : index
    %c0_30 = arith.constant 0 : index
    %15 = vector.load %arg16[%c0_29, %c0_30] : memref<1x64xf32, #tpu.memory_space<vmem>>, vector<1x64xf32>
    %c0_31 = arith.constant 0 : index
    %c0_32 = arith.constant 0 : index
    %16 = vector.load %arg17[%c0_31, %c0_32] : memref<1x256xf32, #tpu.memory_space<vmem>>, vector<1x256xf32>
    %c0_33 = arith.constant 0 : index
    %c0_34 = arith.constant 0 : index
    %17 = vector.load %arg18[%c0_33, %c0_34] : memref<1x256xf32, #tpu.memory_space<vmem>>, vector<1x256xf32>
    %c0_35 = arith.constant 0 : index
    %c0_36 = arith.constant 0 : index
    %18 = vector.load %arg19[%c0_35, %c0_36] : memref<1x16xf32, #tpu.memory_space<vmem>>, vector<1x16xf32>
    %c0_37 = arith.constant 0 : index
    %c0_38 = arith.constant 0 : index
    %19 = vector.load %arg20[%c0_37, %c0_38] : memref<1x16xf32, #tpu.memory_space<vmem>>, vector<1x16xf32>
    %c0_39 = arith.constant 0 : index
    %c0_40 = arith.constant 0 : index
    %20 = vector.load %arg21[%c0_39, %c0_40] : memref<1x64xf32, #tpu.memory_space<vmem>>, vector<1x64xf32>
    %c0_41 = arith.constant 0 : index
    %c0_42 = arith.constant 0 : index
    %21 = vector.load %arg22[%c0_41, %c0_42] : memref<16x64xf32, #tpu.memory_space<vmem>>, vector<16x64xf32>
    %c0_43 = arith.constant 0 : index
    %c0_44 = arith.constant 0 : index
    %22 = vector.load %arg23[%c0_43, %c0_44] : memref<16x64xf32, #tpu.memory_space<vmem>>, vector<16x64xf32>
    %c0_45 = arith.constant 0 : index
    %c0_46 = arith.constant 0 : index
    %23 = vector.load %arg24[%c0_45, %c0_46] : memref<16x64xf32, #tpu.memory_space<vmem>>, vector<16x64xf32>
    %c0_47 = arith.constant 0 : index
    %c0_48 = arith.constant 0 : index
    %24 = vector.load %arg25[%c0_47, %c0_48] : memref<1x256xf32, #tpu.memory_space<vmem>>, vector<1x256xf32>
    %c0_49 = arith.constant 0 : index
    %c0_50 = arith.constant 0 : index
    %25 = vector.load %arg26[%c0_49, %c0_50] : memref<64x256xf32, #tpu.memory_space<vmem>>, vector<64x256xf32>
    %c0_51 = arith.constant 0 : index
    %c0_52 = arith.constant 0 : index
    %26 = vector.load %arg27[%c0_51, %c0_52] : memref<64x256xf32, #tpu.memory_space<vmem>>, vector<64x256xf32>
    %c0_53 = arith.constant 0 : index
    %c0_54 = arith.constant 0 : index
    %27 = vector.load %arg28[%c0_53, %c0_54] : memref<64x256xf32, #tpu.memory_space<vmem>>, vector<64x256xf32>
    %c0_55 = arith.constant 0 : index
    %c0_56 = arith.constant 0 : index
    %28 = vector.load %arg29[%c0_55, %c0_56] : memref<1x16xf32, #tpu.memory_space<vmem>>, vector<1x16xf32>
    %c0_57 = arith.constant 0 : index
    %c0_58 = arith.constant 0 : index
    %29 = vector.load %arg30[%c0_57, %c0_58] : memref<16x16xf32, #tpu.memory_space<vmem>>, vector<16x16xf32>
    %c0_59 = arith.constant 0 : index
    %c0_60 = arith.constant 0 : index
    %30 = vector.load %arg31[%c0_59, %c0_60] : memref<16x16xf32, #tpu.memory_space<vmem>>, vector<16x16xf32>
    %c0_61 = arith.constant 0 : index
    %c0_62 = arith.constant 0 : index
    %31 = vector.load %arg32[%c0_61, %c0_62] : memref<16x16xf32, #tpu.memory_space<vmem>>, vector<16x16xf32>
    %c0_63 = arith.constant 0 : index
    %c0_64 = arith.constant 0 : index
    %32 = vector.load %arg33[%c0_63, %c0_64] : memref<16x16xf32, #tpu.memory_space<vmem>>, vector<16x16xf32>
    %c0_65 = arith.constant 0 : index
    %c0_66 = arith.constant 0 : index
    %33 = vector.load %arg34[%c0_65, %c0_66] : memref<1x64xf32, #tpu.memory_space<vmem>>, vector<1x64xf32>
    %c0_67 = arith.constant 0 : index
    %c0_68 = arith.constant 0 : index
    %34 = vector.load %arg35[%c0_67, %c0_68] : memref<64x64xf32, #tpu.memory_space<vmem>>, vector<64x64xf32>
    %c0_69 = arith.constant 0 : index
    %c0_70 = arith.constant 0 : index
    %35 = vector.load %arg36[%c0_69, %c0_70] : memref<64x64xf32, #tpu.memory_space<vmem>>, vector<64x64xf32>
    %c0_71 = arith.constant 0 : index
    %c0_72 = arith.constant 0 : index
    %36 = vector.load %arg37[%c0_71, %c0_72] : memref<64x64xf32, #tpu.memory_space<vmem>>, vector<64x64xf32>
    %c0_73 = arith.constant 0 : index
    %c0_74 = arith.constant 0 : index
    %37 = vector.load %arg38[%c0_73, %c0_74] : memref<64x64xf32, #tpu.memory_space<vmem>>, vector<64x64xf32>
    %c0_75 = arith.constant 0 : index
    %c0_76 = arith.constant 0 : index
    %38 = vector.load %arg39[%c0_75, %c0_76] : memref<1x16xf32, #tpu.memory_space<vmem>>, vector<1x16xf32>
    %c0_77 = arith.constant 0 : index
    %c0_78 = arith.constant 0 : index
    %39 = vector.load %arg40[%c0_77, %c0_78] : memref<6x16xf32, #tpu.memory_space<vmem>>, vector<6x16xf32>
    %c0_79 = arith.constant 0 : index
    %c0_80 = arith.constant 0 : index
    %40 = vector.load %arg41[%c0_79, %c0_80] : memref<6x16xf32, #tpu.memory_space<vmem>>, vector<6x16xf32>
    %c0_81 = arith.constant 0 : index
    %c0_82 = arith.constant 0 : index
    %41 = vector.load %arg42[%c0_81, %c0_82] : memref<6x16xf32, #tpu.memory_space<vmem>>, vector<6x16xf32>
    %c0_83 = arith.constant 0 : index
    %c0_84 = arith.constant 0 : index
    %42 = vector.load %arg43[%c0_83, %c0_84] : memref<1x64xf32, #tpu.memory_space<vmem>>, vector<1x64xf32>
    %c0_85 = arith.constant 0 : index
    %c0_86 = arith.constant 0 : index
    %43 = vector.load %arg44[%c0_85, %c0_86] : memref<1x64xf32, #tpu.memory_space<vmem>>, vector<1x64xf32>
    %c0_87 = arith.constant 0 : index
    %c0_88 = arith.constant 0 : index
    %44 = vector.load %arg45[%c0_87, %c0_88] : memref<1x64xf32, #tpu.memory_space<vmem>>, vector<1x64xf32>
    %c0_89 = arith.constant 0 : index
    %c0_90 = arith.constant 0 : index
    %45 = vector.load %arg46[%c0_89, %c0_90] : memref<64x64xf32, #tpu.memory_space<vmem>>, vector<64x64xf32>
    %c0_91 = arith.constant 0 : index
    %c0_92 = arith.constant 0 : index
    %46 = vector.load %arg47[%c0_91, %c0_92] : memref<1x64xf32, #tpu.memory_space<vmem>>, vector<1x64xf32>
    %c0_93 = arith.constant 0 : index
    %c0_94 = arith.constant 0 : index
    %47 = vector.load %arg48[%c0_93, %c0_94] : memref<64x64xf32, #tpu.memory_space<vmem>>, vector<64x64xf32>
    %c0_95 = arith.constant 0 : index
    %c0_96 = arith.constant 0 : index
    %48 = vector.load %arg49[%c0_95, %c0_96] : memref<1x64xf32, #tpu.memory_space<vmem>>, vector<1x64xf32>
    %c0_97 = arith.constant 0 : index
    %c0_98 = arith.constant 0 : index
    %49 = vector.load %arg50[%c0_97, %c0_98] : memref<64x64xf32, #tpu.memory_space<vmem>>, vector<64x64xf32>
    %c0_99 = arith.constant 0 : index
    %c0_100 = arith.constant 0 : index
    %50 = vector.load %arg51[%c0_99, %c0_100] : memref<1x64xf32, #tpu.memory_space<vmem>>, vector<1x64xf32>
    %c0_101 = arith.constant 0 : index
    %c0_102 = arith.constant 0 : index
    %51 = vector.load %arg52[%c0_101, %c0_102] : memref<64x64xf32, #tpu.memory_space<vmem>>, vector<64x64xf32>
    %c0_103 = arith.constant 0 : index
    %c0_104 = arith.constant 0 : index
    %52 = vector.load %arg53[%c0_103, %c0_104] : memref<1x256xf32, #tpu.memory_space<vmem>>, vector<1x256xf32>
    %c0_105 = arith.constant 0 : index
    %c0_106 = arith.constant 0 : index
    %53 = vector.load %arg54[%c0_105, %c0_106] : memref<1x256xf32, #tpu.memory_space<vmem>>, vector<1x256xf32>
    %c0_107 = arith.constant 0 : index
    %c0_108 = arith.constant 0 : index
    %54 = vector.load %arg55[%c0_107, %c0_108] : memref<1x256xf32, #tpu.memory_space<vmem>>, vector<1x256xf32>
    %c0_109 = arith.constant 0 : index
    %c0_110 = arith.constant 0 : index
    %55 = vector.load %arg56[%c0_109, %c0_110] : memref<256x256xf32, #tpu.memory_space<vmem>>, vector<256x256xf32>
    %c0_111 = arith.constant 0 : index
    %c0_112 = arith.constant 0 : index
    %56 = vector.load %arg57[%c0_111, %c0_112] : memref<1x256xf32, #tpu.memory_space<vmem>>, vector<1x256xf32>
    %c0_113 = arith.constant 0 : index
    %c0_114 = arith.constant 0 : index
    %57 = vector.load %arg58[%c0_113, %c0_114] : memref<256x256xf32, #tpu.memory_space<vmem>>, vector<256x256xf32>
    %c0_115 = arith.constant 0 : index
    %c0_116 = arith.constant 0 : index
    %58 = vector.load %arg59[%c0_115, %c0_116] : memref<1x256xf32, #tpu.memory_space<vmem>>, vector<1x256xf32>
    %c0_117 = arith.constant 0 : index
    %c0_118 = arith.constant 0 : index
    %59 = vector.load %arg60[%c0_117, %c0_118] : memref<256x256xf32, #tpu.memory_space<vmem>>, vector<256x256xf32>
    %c0_119 = arith.constant 0 : index
    %c0_120 = arith.constant 0 : index
    %60 = vector.load %arg61[%c0_119, %c0_120] : memref<1x256xf32, #tpu.memory_space<vmem>>, vector<1x256xf32>
    %c0_121 = arith.constant 0 : index
    %c0_122 = arith.constant 0 : index
    %61 = vector.load %arg62[%c0_121, %c0_122] : memref<256x256xf32, #tpu.memory_space<vmem>>, vector<256x256xf32>
    %c0_123 = arith.constant 0 : index
    %c0_124 = arith.constant 0 : index
    %62 = vector.load %arg63[%c0_123, %c0_124] : memref<1x16xf32, #tpu.memory_space<vmem>>, vector<1x16xf32>
    %c0_125 = arith.constant 0 : index
    %c0_126 = arith.constant 0 : index
    %63 = vector.load %arg64[%c0_125, %c0_126] : memref<1x16xf32, #tpu.memory_space<vmem>>, vector<1x16xf32>
    %c0_127 = arith.constant 0 : index
    %c0_128 = arith.constant 0 : index
    %64 = vector.load %arg65[%c0_127, %c0_128] : memref<1x16xf32, #tpu.memory_space<vmem>>, vector<1x16xf32>
    %c0_129 = arith.constant 0 : index
    %c0_130 = arith.constant 0 : index
    %65 = vector.load %arg66[%c0_129, %c0_130] : memref<16x16xf32, #tpu.memory_space<vmem>>, vector<16x16xf32>
    %c0_131 = arith.constant 0 : index
    %c0_132 = arith.constant 0 : index
    %66 = vector.load %arg67[%c0_131, %c0_132] : memref<1x16xf32, #tpu.memory_space<vmem>>, vector<1x16xf32>
    %c0_133 = arith.constant 0 : index
    %c0_134 = arith.constant 0 : index
    %67 = vector.load %arg68[%c0_133, %c0_134] : memref<16x16xf32, #tpu.memory_space<vmem>>, vector<16x16xf32>
    %c0_135 = arith.constant 0 : index
    %c0_136 = arith.constant 0 : index
    %68 = vector.load %arg69[%c0_135, %c0_136] : memref<1x16xf32, #tpu.memory_space<vmem>>, vector<1x16xf32>
    %c0_137 = arith.constant 0 : index
    %c0_138 = arith.constant 0 : index
    %69 = vector.load %arg70[%c0_137, %c0_138] : memref<16x16xf32, #tpu.memory_space<vmem>>, vector<16x16xf32>
    %c0_139 = arith.constant 0 : index
    %c0_140 = arith.constant 0 : index
    %70 = vector.load %arg71[%c0_139, %c0_140] : memref<1x16xf32, #tpu.memory_space<vmem>>, vector<1x16xf32>
    %c0_141 = arith.constant 0 : index
    %c0_142 = arith.constant 0 : index
    %71 = vector.load %arg72[%c0_141, %c0_142] : memref<16x16xf32, #tpu.memory_space<vmem>>, vector<16x16xf32>
    %c0_143 = arith.constant 0 : index
    %c0_144 = arith.constant 0 : index
    %72 = vector.load %arg73[%c0_143, %c0_144] : memref<1x2xf32, #tpu.memory_space<vmem>>, vector<1x2xf32>
    %c0_145 = arith.constant 0 : index
    %c0_146 = arith.constant 0 : index
    %73 = vector.load %arg74[%c0_145, %c0_146] : memref<256x2xf32, #tpu.memory_space<vmem>>, vector<256x2xf32>
    %c0_147 = arith.constant 0 : index
    %c0_148 = arith.constant 0 : index
    %74 = vector.load %arg75[%c0_147, %c0_148] : memref<256x2xf32, #tpu.memory_space<vmem>>, vector<256x2xf32>
    %c0_149 = arith.constant 0 : index
    %c0_150 = arith.constant 0 : index
    %75 = vector.load %arg76[%c0_149, %c0_150] : memref<256x2xf32, #tpu.memory_space<vmem>>, vector<256x2xf32>
    %c0_151 = arith.constant 0 : index
    %c0_152 = arith.constant 0 : index
    %76 = vector.load %arg77[%c0_151, %c0_152] : memref<1x4xf32, #tpu.memory_space<vmem>>, vector<1x4xf32>
    %c0_153 = arith.constant 0 : index
    %c0_154 = arith.constant 0 : index
    %77 = vector.load %arg78[%c0_153, %c0_154] : memref<2x4xf32, #tpu.memory_space<vmem>>, vector<2x4xf32>
    %c0_155 = arith.constant 0 : index
    %c0_156 = arith.constant 0 : index
    %78 = vector.load %arg79[%c0_155, %c0_156] : memref<2x4xf32, #tpu.memory_space<vmem>>, vector<2x4xf32>
    %c0_157 = arith.constant 0 : index
    %c0_158 = arith.constant 0 : index
    %79 = vector.load %arg80[%c0_157, %c0_158] : memref<2x4xf32, #tpu.memory_space<vmem>>, vector<2x4xf32>
    %c0_159 = arith.constant 0 : index
    %c0_160 = arith.constant 0 : index
    %80 = vector.load %arg0[%c0_159, %c0_160] : memref<64x6xf32, #tpu.memory_space<vmem>>, vector<64x6xf32>
    %cst = arith.constant dense<0.000000e+00> : vector<64x6xf32>
    %81 = tpu.matmul %2, %80, %cst {dimension_numbers = #tpu.dot_dimension_numbers<[1], [0], [0], [1], [0, 0, 1, 1], [], []>} : vector<64x64xf32>, vector<64x6xf32>, vector<64x6xf32> -> vector<64x6xf32>
    %cst_161 = arith.constant dense<0.000000e+00> : vector<64x16xf32>
    %82 = tpu.matmul %81, %39, %cst_161 {dimension_numbers = #tpu.dot_dimension_numbers<[1], [0], [0], [1], [0, 0, 1, 1], [], []>} : vector<64x6xf32>, vector<6x16xf32>, vector<64x16xf32> -> vector<64x16xf32>
    %cst_162 = arith.constant dense<0.000000e+00> : vector<64x16xf32>
    %83 = tpu.matmul %80, %40, %cst_162 {dimension_numbers = #tpu.dot_dimension_numbers<[1], [0], [0], [1], [0, 0, 1, 1], [], []>} : vector<64x6xf32>, vector<6x16xf32>, vector<64x16xf32> -> vector<64x16xf32>
    %84 = arith.addf %82, %83 : vector<64x16xf32>
    %cst_163 = arith.constant dense<0.000000e+00> : vector<64x6xf32>
    %85 = tpu.matmul %3, %80, %cst_163 {dimension_numbers = #tpu.dot_dimension_numbers<[1], [0], [0], [1], [0, 0, 1, 1], [], []>} : vector<64x64xf32>, vector<64x6xf32>, vector<64x6xf32> -> vector<64x6xf32>
    %cst_164 = arith.constant dense<0.000000e+00> : vector<64x16xf32>
    %86 = tpu.matmul %85, %41, %cst_164 {dimension_numbers = #tpu.dot_dimension_numbers<[1], [0], [0], [1], [0, 0, 1, 1], [], []>} : vector<64x6xf32>, vector<6x16xf32>, vector<64x16xf32> -> vector<64x16xf32>
    %87 = arith.addf %84, %86 : vector<64x16xf32>
    %88 = vector.broadcast %38 : vector<1x16xf32> to vector<64x16xf32>
    %89 = arith.addf %87, %88 : vector<64x16xf32>
    %cst_165 = arith.constant dense<0.000000e+00> : vector<16xf32>
    %90 = vector.multi_reduction <add>, %89, %cst_165 [0] : vector<64x16xf32> to vector<16xf32>
    %91 = vector.shape_cast %90 : vector<16xf32> to vector<1x16xf32>
    %cst_166 = arith.constant 6.400000e+01 : f32
    %92 = vector.broadcast %cst_166 : f32 to vector<1x16xf32>
    %93 = arith.divf %91, %92 : vector<1x16xf32>
    %94 = vector.broadcast %93 : vector<1x16xf32> to vector<64x16xf32>
    %95 = arith.subf %89, %94 : vector<64x16xf32>
    %96 = arith.mulf %95, %95 : vector<64x16xf32>
    %cst_167 = arith.constant dense<0.000000e+00> : vector<16xf32>
    %97 = vector.multi_reduction <add>, %96, %cst_167 [0] : vector<64x16xf32> to vector<16xf32>
    %98 = vector.shape_cast %97 : vector<16xf32> to vector<1x16xf32>
    %cst_168 = arith.constant 6.400000e+01 : f32
    %99 = vector.broadcast %cst_168 : f32 to vector<1x16xf32>
    %100 = arith.divf %98, %99 : vector<1x16xf32>
    %cst_169 = arith.constant 9.99999974E-6 : f32
    %101 = vector.broadcast %cst_169 : f32 to vector<1x16xf32>
    %102 = arith.addf %100, %101 : vector<1x16xf32>
    %103 = math.rsqrt %102 : vector<1x16xf32>
    %104 = vector.broadcast %103 : vector<1x16xf32> to vector<64x16xf32>
    %105 = arith.mulf %95, %104 : vector<64x16xf32>
    %106 = vector.broadcast %63 : vector<1x16xf32> to vector<64x16xf32>
    %107 = arith.mulf %105, %106 : vector<64x16xf32>
    %108 = vector.broadcast %62 : vector<1x16xf32> to vector<64x16xf32>
    %109 = arith.addf %107, %108 : vector<64x16xf32>
    %cst_170 = arith.constant dense<0.000000e+00> : vector<64x16xf32>
    %110 = tpu.matmul %109, %69, %cst_170 {dimension_numbers = #tpu.dot_dimension_numbers<[1], [0], [0], [1], [0, 0, 1, 1], [], []>} : vector<64x16xf32>, vector<16x16xf32>, vector<64x16xf32> -> vector<64x16xf32>
    %111 = vector.broadcast %68 : vector<1x16xf32> to vector<64x16xf32>
    %112 = arith.addf %110, %111 : vector<64x16xf32>
    %cst_171 = arith.constant dense<0.000000e+00> : vector<64x16xf32>
    %113 = tpu.matmul %109, %65, %cst_171 {dimension_numbers = #tpu.dot_dimension_numbers<[1], [0], [0], [1], [0, 0, 1, 1], [], []>} : vector<64x16xf32>, vector<16x16xf32>, vector<64x16xf32> -> vector<64x16xf32>
    %114 = vector.broadcast %64 : vector<1x16xf32> to vector<64x16xf32>
    %115 = arith.addf %113, %114 : vector<64x16xf32>
    %cst_172 = arith.constant dense<0.000000e+00> : vector<64x16xf32>
    %116 = tpu.matmul %109, %71, %cst_172 {dimension_numbers = #tpu.dot_dimension_numbers<[1], [0], [0], [1], [0, 0, 1, 1], [], []>} : vector<64x16xf32>, vector<16x16xf32>, vector<64x16xf32> -> vector<64x16xf32>
    %117 = vector.broadcast %70 : vector<1x16xf32> to vector<64x16xf32>
    %118 = arith.addf %116, %117 : vector<64x16xf32>
    %119 = vector.extract_strided_slice %112 {offsets = [0, 0], sizes = [32, 16], strides = [1, 1]} : vector<64x16xf32> to vector<32x16xf32>
    %120 = vector.extract_strided_slice %115 {offsets = [0, 0], sizes = [32, 16], strides = [1, 1]} : vector<64x16xf32> to vector<32x16xf32>
    %cst_173 = arith.constant dense<0.000000e+00> : vector<32x32xf32>
    %121 = tpu.matmul %119, %120, %cst_173 {dimension_numbers = #tpu.dot_dimension_numbers<[1], [1], [0], [0], [0, 0, 1, 0], [], []>} : vector<32x16xf32>, vector<32x16xf32>, vector<32x32xf32> -> vector<32x32xf32>
    %cst_174 = arith.constant dense<0xFF800000> : vector<32xf32>
    %122 = vector.multi_reduction <maximumf>, %121, %cst_174 [1] : vector<32x32xf32> to vector<32xf32>
    %123 = vector.shape_cast %122 : vector<32xf32> to vector<32x1xf32>
    %124 = vector.broadcast %123 : vector<32x1xf32> to vector<32x32xf32>
    %125 = arith.subf %121, %124 : vector<32x32xf32>
    %126 = math.exp %125 : vector<32x32xf32>
    %cst_175 = arith.constant dense<0.000000e+00> : vector<32xf32>
    %127 = vector.multi_reduction <add>, %126, %cst_175 [1] : vector<32x32xf32> to vector<32xf32>
    %128 = vector.shape_cast %127 : vector<32xf32> to vector<32x1xf32>
    %129 = tpu.reciprocal %128 {approx = true} : vector<32x1xf32> -> vector<32x1xf32>
    %130 = vector.broadcast %129 : vector<32x1xf32> to vector<32x32xf32>
    %131 = arith.mulf %126, %130 : vector<32x32xf32>
    %132 = vector.extract_strided_slice %118 {offsets = [0, 0], sizes = [32, 16], strides = [1, 1]} : vector<64x16xf32> to vector<32x16xf32>
    %cst_176 = arith.constant dense<0.000000e+00> : vector<32x16xf32>
    %133 = tpu.matmul %131, %132, %cst_176 {dimension_numbers = #tpu.dot_dimension_numbers<[1], [0], [0], [1], [0, 0, 1, 1], [], []>} : vector<32x32xf32>, vector<32x16xf32>, vector<32x16xf32> -> vector<32x16xf32>
    %134 = vector.extract_strided_slice %112 {offsets = [32, 0], sizes = [32, 16], strides = [1, 1]} : vector<64x16xf32> to vector<32x16xf32>
    %135 = vector.extract_strided_slice %115 {offsets = [32, 0], sizes = [32, 16], strides = [1, 1]} : vector<64x16xf32> to vector<32x16xf32>
    %cst_177 = arith.constant dense<0.000000e+00> : vector<32x32xf32>
    %136 = tpu.matmul %134, %135, %cst_177 {dimension_numbers = #tpu.dot_dimension_numbers<[1], [1], [0], [0], [0, 0, 1, 0], [], []>} : vector<32x16xf32>, vector<32x16xf32>, vector<32x32xf32> -> vector<32x32xf32>
    %cst_178 = arith.constant dense<0xFF800000> : vector<32xf32>
    %137 = vector.multi_reduction <maximumf>, %136, %cst_178 [1] : vector<32x32xf32> to vector<32xf32>
    %138 = vector.shape_cast %137 : vector<32xf32> to vector<32x1xf32>
    %139 = vector.broadcast %138 : vector<32x1xf32> to vector<32x32xf32>
    %140 = arith.subf %136, %139 : vector<32x32xf32>
    %141 = math.exp %140 : vector<32x32xf32>
    %cst_179 = arith.constant dense<0.000000e+00> : vector<32xf32>
    %142 = vector.multi_reduction <add>, %141, %cst_179 [1] : vector<32x32xf32> to vector<32xf32>
    %143 = vector.shape_cast %142 : vector<32xf32> to vector<32x1xf32>
    %144 = tpu.reciprocal %143 {approx = true} : vector<32x1xf32> -> vector<32x1xf32>
    %145 = vector.broadcast %144 : vector<32x1xf32> to vector<32x32xf32>
    %146 = arith.mulf %141, %145 : vector<32x32xf32>
    %147 = vector.extract_strided_slice %118 {offsets = [32, 0], sizes = [32, 16], strides = [1, 1]} : vector<64x16xf32> to vector<32x16xf32>
    %cst_180 = arith.constant dense<0.000000e+00> : vector<32x16xf32>
    %148 = tpu.matmul %146, %147, %cst_180 {dimension_numbers = #tpu.dot_dimension_numbers<[1], [0], [0], [1], [0, 0, 1, 1], [], []>} : vector<32x32xf32>, vector<32x16xf32>, vector<32x16xf32> -> vector<32x16xf32>
    %149 = tpu.concatenate %133, %148 in 0 : vector<32x16xf32>, vector<32x16xf32> -> vector<64x16xf32>
    %cst_181 = arith.constant dense<0.000000e+00> : vector<64x16xf32>
    %150 = tpu.matmul %149, %67, %cst_181 {dimension_numbers = #tpu.dot_dimension_numbers<[1], [0], [0], [1], [0, 0, 1, 1], [], []>} : vector<64x16xf32>, vector<16x16xf32>, vector<64x16xf32> -> vector<64x16xf32>
    %151 = vector.broadcast %66 : vector<1x16xf32> to vector<64x16xf32>
    %152 = arith.addf %150, %151 : vector<64x16xf32>
    %153 = arith.addf %89, %152 : vector<64x16xf32>
    %154 = arith.negf %153 : vector<64x16xf32>
    %155 = math.exp %154 : vector<64x16xf32>
    %cst_182 = arith.constant 1.000000e+00 : f32
    %156 = vector.broadcast %cst_182 : f32 to vector<64x16xf32>
    %157 = arith.addf %156, %155 : vector<64x16xf32>
    %158 = arith.divf %156, %157 : vector<64x16xf32>
    %159 = arith.mulf %153, %158 : vector<64x16xf32>
    %cst_183 = arith.constant dense<0.000000e+00> : vector<16xf32>
    %160 = vector.multi_reduction <add>, %159, %cst_183 [0] : vector<64x16xf32> to vector<16xf32>
    %161 = vector.shape_cast %160 : vector<16xf32> to vector<1x16xf32>
    %cst_184 = arith.constant 6.400000e+01 : f32
    %162 = vector.broadcast %cst_184 : f32 to vector<1x16xf32>
    %163 = arith.divf %161, %162 : vector<1x16xf32>
    %164 = vector.broadcast %163 : vector<1x16xf32> to vector<64x16xf32>
    %165 = arith.subf %159, %164 : vector<64x16xf32>
    %166 = arith.mulf %165, %165 : vector<64x16xf32>
    %cst_185 = arith.constant dense<0.000000e+00> : vector<16xf32>
    %167 = vector.multi_reduction <add>, %166, %cst_185 [0] : vector<64x16xf32> to vector<16xf32>
    %168 = vector.shape_cast %167 : vector<16xf32> to vector<1x16xf32>
    %cst_186 = arith.constant 6.400000e+01 : f32
    %169 = vector.broadcast %cst_186 : f32 to vector<1x16xf32>
    %170 = arith.divf %168, %169 : vector<1x16xf32>
    %cst_187 = arith.constant 9.99999974E-6 : f32
    %171 = vector.broadcast %cst_187 : f32 to vector<1x16xf32>
    %172 = arith.addf %170, %171 : vector<1x16xf32>
    %173 = math.rsqrt %172 : vector<1x16xf32>
    %174 = vector.broadcast %173 : vector<1x16xf32> to vector<64x16xf32>
    %175 = arith.mulf %165, %174 : vector<64x16xf32>
    %176 = vector.broadcast %19 : vector<1x16xf32> to vector<64x16xf32>
    %177 = arith.mulf %175, %176 : vector<64x16xf32>
    %178 = vector.broadcast %18 : vector<1x16xf32> to vector<64x16xf32>
    %179 = arith.addf %177, %178 : vector<64x16xf32>
    %cst_188 = arith.constant dense<0.000000e+00> : vector<32x16xf32>
    %180 = tpu.matmul %10, %179, %cst_188 {dimension_numbers = #tpu.dot_dimension_numbers<[1], [0], [0], [1], [0, 0, 1, 1], [], []>} : vector<32x64xf32>, vector<64x16xf32>, vector<32x16xf32> -> vector<32x16xf32>
    %cst_189 = arith.constant dense<0.000000e+00> : vector<32x16xf32>
    %181 = tpu.matmul %180, %29, %cst_189 {dimension_numbers = #tpu.dot_dimension_numbers<[1], [0], [0], [1], [0, 0, 1, 1], [], []>} : vector<32x16xf32>, vector<16x16xf32>, vector<32x16xf32> -> vector<32x16xf32>
    %cst_190 = arith.constant dense<0.000000e+00> : vector<32x16xf32>
    %182 = tpu.matmul %11, %179, %cst_190 {dimension_numbers = #tpu.dot_dimension_numbers<[1], [0], [0], [1], [0, 0, 1, 1], [], []>} : vector<32x64xf32>, vector<64x16xf32>, vector<32x16xf32> -> vector<32x16xf32>
    %cst_191 = arith.constant dense<0.000000e+00> : vector<32x16xf32>
    %183 = tpu.matmul %182, %30, %cst_191 {dimension_numbers = #tpu.dot_dimension_numbers<[1], [0], [0], [1], [0, 0, 1, 1], [], []>} : vector<32x16xf32>, vector<16x16xf32>, vector<32x16xf32> -> vector<32x16xf32>
    %184 = arith.addf %181, %183 : vector<32x16xf32>
    %cst_192 = arith.constant dense<0.000000e+00> : vector<32x16xf32>
    %185 = tpu.matmul %12, %179, %cst_192 {dimension_numbers = #tpu.dot_dimension_numbers<[1], [0], [0], [1], [0, 0, 1, 1], [], []>} : vector<32x64xf32>, vector<64x16xf32>, vector<32x16xf32> -> vector<32x16xf32>
    %cst_193 = arith.constant dense<0.000000e+00> : vector<32x16xf32>
    %186 = tpu.matmul %185, %31, %cst_193 {dimension_numbers = #tpu.dot_dimension_numbers<[1], [0], [0], [1], [0, 0, 1, 1], [], []>} : vector<32x16xf32>, vector<16x16xf32>, vector<32x16xf32> -> vector<32x16xf32>
    %187 = arith.addf %184, %186 : vector<32x16xf32>
    %cst_194 = arith.constant dense<0.000000e+00> : vector<32x16xf32>
    %188 = tpu.matmul %13, %179, %cst_194 {dimension_numbers = #tpu.dot_dimension_numbers<[1], [0], [0], [1], [0, 0, 1, 1], [], []>} : vector<32x64xf32>, vector<64x16xf32>, vector<32x16xf32> -> vector<32x16xf32>
    %cst_195 = arith.constant dense<0.000000e+00> : vector<32x16xf32>
    %189 = tpu.matmul %188, %32, %cst_195 {dimension_numbers = #tpu.dot_dimension_numbers<[1], [0], [0], [1], [0, 0, 1, 1], [], []>} : vector<32x16xf32>, vector<16x16xf32>, vector<32x16xf32> -> vector<32x16xf32>
    %190 = arith.addf %187, %189 : vector<32x16xf32>
    %191 = vector.broadcast %28 : vector<1x16xf32> to vector<32x16xf32>
    %192 = arith.addf %190, %191 : vector<32x16xf32>
    %193 = arith.negf %192 : vector<32x16xf32>
    %194 = math.exp %193 : vector<32x16xf32>
    %cst_196 = arith.constant 1.000000e+00 : f32
    %195 = vector.broadcast %cst_196 : f32 to vector<32x16xf32>
    %196 = arith.addf %195, %194 : vector<32x16xf32>
    %197 = arith.divf %195, %196 : vector<32x16xf32>
    %198 = arith.mulf %192, %197 : vector<32x16xf32>
    %cst_197 = arith.constant dense<0.000000e+00> : vector<32x16xf32>
    %199 = tpu.matmul %0, %198, %cst_197 {dimension_numbers = #tpu.dot_dimension_numbers<[1], [0], [0], [1], [0, 0, 1, 1], [], []>} : vector<32x32xf32>, vector<32x16xf32>, vector<32x16xf32> -> vector<32x16xf32>
    %cst_198 = arith.constant dense<0.000000e+00> : vector<32x64xf32>
    %200 = tpu.matmul %199, %21, %cst_198 {dimension_numbers = #tpu.dot_dimension_numbers<[1], [0], [0], [1], [0, 0, 1, 1], [], []>} : vector<32x16xf32>, vector<16x64xf32>, vector<32x64xf32> -> vector<32x64xf32>
    %cst_199 = arith.constant dense<0.000000e+00> : vector<32x64xf32>
    %201 = tpu.matmul %198, %22, %cst_199 {dimension_numbers = #tpu.dot_dimension_numbers<[1], [0], [0], [1], [0, 0, 1, 1], [], []>} : vector<32x16xf32>, vector<16x64xf32>, vector<32x64xf32> -> vector<32x64xf32>
    %202 = arith.addf %200, %201 : vector<32x64xf32>
    %cst_200 = arith.constant dense<0.000000e+00> : vector<32x16xf32>
    %203 = tpu.matmul %1, %198, %cst_200 {dimension_numbers = #tpu.dot_dimension_numbers<[1], [0], [0], [1], [0, 0, 1, 1], [], []>} : vector<32x32xf32>, vector<32x16xf32>, vector<32x16xf32> -> vector<32x16xf32>
    %cst_201 = arith.constant dense<0.000000e+00> : vector<32x64xf32>
    %204 = tpu.matmul %203, %23, %cst_201 {dimension_numbers = #tpu.dot_dimension_numbers<[1], [0], [0], [1], [0, 0, 1, 1], [], []>} : vector<32x16xf32>, vector<16x64xf32>, vector<32x64xf32> -> vector<32x64xf32>
    %205 = arith.addf %202, %204 : vector<32x64xf32>
    %206 = vector.broadcast %20 : vector<1x64xf32> to vector<32x64xf32>
    %207 = arith.addf %205, %206 : vector<32x64xf32>
    %208 = arith.negf %207 : vector<32x64xf32>
    %209 = math.exp %208 : vector<32x64xf32>
    %cst_202 = arith.constant 1.000000e+00 : f32
    %210 = vector.broadcast %cst_202 : f32 to vector<32x64xf32>
    %211 = arith.addf %210, %209 : vector<32x64xf32>
    %212 = arith.divf %210, %211 : vector<32x64xf32>
    %213 = arith.mulf %207, %212 : vector<32x64xf32>
    %cst_203 = arith.constant dense<0.000000e+00> : vector<64xf32>
    %214 = vector.multi_reduction <add>, %213, %cst_203 [0] : vector<32x64xf32> to vector<64xf32>
    %215 = vector.shape_cast %214 : vector<64xf32> to vector<1x64xf32>
    %cst_204 = arith.constant 3.200000e+01 : f32
    %216 = vector.broadcast %cst_204 : f32 to vector<1x64xf32>
    %217 = arith.divf %215, %216 : vector<1x64xf32>
    %218 = vector.broadcast %217 : vector<1x64xf32> to vector<32x64xf32>
    %219 = arith.subf %213, %218 : vector<32x64xf32>
    %220 = arith.mulf %219, %219 : vector<32x64xf32>
    %cst_205 = arith.constant dense<0.000000e+00> : vector<64xf32>
    %221 = vector.multi_reduction <add>, %220, %cst_205 [0] : vector<32x64xf32> to vector<64xf32>
    %222 = vector.shape_cast %221 : vector<64xf32> to vector<1x64xf32>
    %cst_206 = arith.constant 3.200000e+01 : f32
    %223 = vector.broadcast %cst_206 : f32 to vector<1x64xf32>
    %224 = arith.divf %222, %223 : vector<1x64xf32>
    %cst_207 = arith.constant 9.99999974E-6 : f32
    %225 = vector.broadcast %cst_207 : f32 to vector<1x64xf32>
    %226 = arith.addf %224, %225 : vector<1x64xf32>
    %227 = math.rsqrt %226 : vector<1x64xf32>
    %228 = vector.broadcast %227 : vector<1x64xf32> to vector<32x64xf32>
    %229 = arith.mulf %219, %228 : vector<32x64xf32>
    %230 = vector.broadcast %43 : vector<1x64xf32> to vector<32x64xf32>
    %231 = arith.mulf %229, %230 : vector<32x64xf32>
    %232 = vector.broadcast %42 : vector<1x64xf32> to vector<32x64xf32>
    %233 = arith.addf %231, %232 : vector<32x64xf32>
    %cst_208 = arith.constant dense<0.000000e+00> : vector<32x64xf32>
    %234 = tpu.matmul %233, %49, %cst_208 {dimension_numbers = #tpu.dot_dimension_numbers<[1], [0], [0], [1], [0, 0, 1, 1], [], []>} : vector<32x64xf32>, vector<64x64xf32>, vector<32x64xf32> -> vector<32x64xf32>
    %235 = vector.broadcast %48 : vector<1x64xf32> to vector<32x64xf32>
    %236 = arith.addf %234, %235 : vector<32x64xf32>
    %cst_209 = arith.constant dense<0.000000e+00> : vector<32x64xf32>
    %237 = tpu.matmul %233, %45, %cst_209 {dimension_numbers = #tpu.dot_dimension_numbers<[1], [0], [0], [1], [0, 0, 1, 1], [], []>} : vector<32x64xf32>, vector<64x64xf32>, vector<32x64xf32> -> vector<32x64xf32>
    %238 = vector.broadcast %44 : vector<1x64xf32> to vector<32x64xf32>
    %239 = arith.addf %237, %238 : vector<32x64xf32>
    %cst_210 = arith.constant dense<0.000000e+00> : vector<32x64xf32>
    %240 = tpu.matmul %233, %51, %cst_210 {dimension_numbers = #tpu.dot_dimension_numbers<[1], [0], [0], [1], [0, 0, 1, 1], [], []>} : vector<32x64xf32>, vector<64x64xf32>, vector<32x64xf32> -> vector<32x64xf32>
    %241 = vector.broadcast %50 : vector<1x64xf32> to vector<32x64xf32>
    %242 = arith.addf %240, %241 : vector<32x64xf32>
    %243 = vector.extract_strided_slice %236 {offsets = [0, 0], sizes = [16, 64], strides = [1, 1]} : vector<32x64xf32> to vector<16x64xf32>
    %244 = vector.extract_strided_slice %239 {offsets = [0, 0], sizes = [16, 64], strides = [1, 1]} : vector<32x64xf32> to vector<16x64xf32>
    %cst_211 = arith.constant dense<0.000000e+00> : vector<16x16xf32>
    %245 = tpu.matmul %243, %244, %cst_211 {dimension_numbers = #tpu.dot_dimension_numbers<[1], [1], [0], [0], [0, 0, 1, 0], [], []>} : vector<16x64xf32>, vector<16x64xf32>, vector<16x16xf32> -> vector<16x16xf32>
    %cst_212 = arith.constant dense<0xFF800000> : vector<16xf32>
    %246 = vector.multi_reduction <maximumf>, %245, %cst_212 [1] : vector<16x16xf32> to vector<16xf32>
    %247 = vector.shape_cast %246 : vector<16xf32> to vector<16x1xf32>
    %248 = vector.broadcast %247 : vector<16x1xf32> to vector<16x16xf32>
    %249 = arith.subf %245, %248 : vector<16x16xf32>
    %250 = math.exp %249 : vector<16x16xf32>
    %cst_213 = arith.constant dense<0.000000e+00> : vector<16xf32>
    %251 = vector.multi_reduction <add>, %250, %cst_213 [1] : vector<16x16xf32> to vector<16xf32>
    %252 = vector.shape_cast %251 : vector<16xf32> to vector<16x1xf32>
    %253 = tpu.reciprocal %252 {approx = true} : vector<16x1xf32> -> vector<16x1xf32>
    %254 = vector.broadcast %253 : vector<16x1xf32> to vector<16x16xf32>
    %255 = arith.mulf %250, %254 : vector<16x16xf32>
    %256 = vector.extract_strided_slice %242 {offsets = [0, 0], sizes = [16, 64], strides = [1, 1]} : vector<32x64xf32> to vector<16x64xf32>
    %cst_214 = arith.constant dense<0.000000e+00> : vector<16x64xf32>
    %257 = tpu.matmul %255, %256, %cst_214 {dimension_numbers = #tpu.dot_dimension_numbers<[1], [0], [0], [1], [0, 0, 1, 1], [], []>} : vector<16x16xf32>, vector<16x64xf32>, vector<16x64xf32> -> vector<16x64xf32>
    %258 = vector.extract_strided_slice %236 {offsets = [16, 0], sizes = [16, 64], strides = [1, 1]} : vector<32x64xf32> to vector<16x64xf32>
    %259 = vector.extract_strided_slice %239 {offsets = [16, 0], sizes = [16, 64], strides = [1, 1]} : vector<32x64xf32> to vector<16x64xf32>
    %cst_215 = arith.constant dense<0.000000e+00> : vector<16x16xf32>
    %260 = tpu.matmul %258, %259, %cst_215 {dimension_numbers = #tpu.dot_dimension_numbers<[1], [1], [0], [0], [0, 0, 1, 0], [], []>} : vector<16x64xf32>, vector<16x64xf32>, vector<16x16xf32> -> vector<16x16xf32>
    %cst_216 = arith.constant dense<0xFF800000> : vector<16xf32>
    %261 = vector.multi_reduction <maximumf>, %260, %cst_216 [1] : vector<16x16xf32> to vector<16xf32>
    %262 = vector.shape_cast %261 : vector<16xf32> to vector<16x1xf32>
    %263 = vector.broadcast %262 : vector<16x1xf32> to vector<16x16xf32>
    %264 = arith.subf %260, %263 : vector<16x16xf32>
    %265 = math.exp %264 : vector<16x16xf32>
    %cst_217 = arith.constant dense<0.000000e+00> : vector<16xf32>
    %266 = vector.multi_reduction <add>, %265, %cst_217 [1] : vector<16x16xf32> to vector<16xf32>
    %267 = vector.shape_cast %266 : vector<16xf32> to vector<16x1xf32>
    %268 = tpu.reciprocal %267 {approx = true} : vector<16x1xf32> -> vector<16x1xf32>
    %269 = vector.broadcast %268 : vector<16x1xf32> to vector<16x16xf32>
    %270 = arith.mulf %265, %269 : vector<16x16xf32>
    %271 = vector.extract_strided_slice %242 {offsets = [16, 0], sizes = [16, 64], strides = [1, 1]} : vector<32x64xf32> to vector<16x64xf32>
    %cst_218 = arith.constant dense<0.000000e+00> : vector<16x64xf32>
    %272 = tpu.matmul %270, %271, %cst_218 {dimension_numbers = #tpu.dot_dimension_numbers<[1], [0], [0], [1], [0, 0, 1, 1], [], []>} : vector<16x16xf32>, vector<16x64xf32>, vector<16x64xf32> -> vector<16x64xf32>
    %273 = tpu.concatenate %257, %272 in 0 : vector<16x64xf32>, vector<16x64xf32> -> vector<32x64xf32>
    %cst_219 = arith.constant dense<0.000000e+00> : vector<32x64xf32>
    %274 = tpu.matmul %273, %47, %cst_219 {dimension_numbers = #tpu.dot_dimension_numbers<[1], [0], [0], [1], [0, 0, 1, 1], [], []>} : vector<32x64xf32>, vector<64x64xf32>, vector<32x64xf32> -> vector<32x64xf32>
    %275 = vector.broadcast %46 : vector<1x64xf32> to vector<32x64xf32>
    %276 = arith.addf %274, %275 : vector<32x64xf32>
    %277 = arith.addf %213, %276 : vector<32x64xf32>
    %278 = arith.negf %277 : vector<32x64xf32>
    %279 = math.exp %278 : vector<32x64xf32>
    %cst_220 = arith.constant 1.000000e+00 : f32
    %280 = vector.broadcast %cst_220 : f32 to vector<32x64xf32>
    %281 = arith.addf %280, %279 : vector<32x64xf32>
    %282 = arith.divf %280, %281 : vector<32x64xf32>
    %283 = arith.mulf %277, %282 : vector<32x64xf32>
    %cst_221 = arith.constant dense<0.000000e+00> : vector<64xf32>
    %284 = vector.multi_reduction <add>, %283, %cst_221 [0] : vector<32x64xf32> to vector<64xf32>
    %285 = vector.shape_cast %284 : vector<64xf32> to vector<1x64xf32>
    %cst_222 = arith.constant 3.200000e+01 : f32
    %286 = vector.broadcast %cst_222 : f32 to vector<1x64xf32>
    %287 = arith.divf %285, %286 : vector<1x64xf32>
    %288 = vector.broadcast %287 : vector<1x64xf32> to vector<32x64xf32>
    %289 = arith.subf %283, %288 : vector<32x64xf32>
    %290 = arith.mulf %289, %289 : vector<32x64xf32>
    %cst_223 = arith.constant dense<0.000000e+00> : vector<64xf32>
    %291 = vector.multi_reduction <add>, %290, %cst_223 [0] : vector<32x64xf32> to vector<64xf32>
    %292 = vector.shape_cast %291 : vector<64xf32> to vector<1x64xf32>
    %cst_224 = arith.constant 3.200000e+01 : f32
    %293 = vector.broadcast %cst_224 : f32 to vector<1x64xf32>
    %294 = arith.divf %292, %293 : vector<1x64xf32>
    %cst_225 = arith.constant 9.99999974E-6 : f32
    %295 = vector.broadcast %cst_225 : f32 to vector<1x64xf32>
    %296 = arith.addf %294, %295 : vector<1x64xf32>
    %297 = math.rsqrt %296 : vector<1x64xf32>
    %298 = vector.broadcast %297 : vector<1x64xf32> to vector<32x64xf32>
    %299 = arith.mulf %289, %298 : vector<32x64xf32>
    %300 = vector.broadcast %15 : vector<1x64xf32> to vector<32x64xf32>
    %301 = arith.mulf %299, %300 : vector<32x64xf32>
    %302 = vector.broadcast %14 : vector<1x64xf32> to vector<32x64xf32>
    %303 = arith.addf %301, %302 : vector<32x64xf32>
    %cst_226 = arith.constant dense<0.000000e+00> : vector<16x64xf32>
    %304 = tpu.matmul %6, %303, %cst_226 {dimension_numbers = #tpu.dot_dimension_numbers<[1], [0], [0], [1], [0, 0, 1, 1], [], []>} : vector<16x32xf32>, vector<32x64xf32>, vector<16x64xf32> -> vector<16x64xf32>
    %cst_227 = arith.constant dense<0.000000e+00> : vector<16x64xf32>
    %305 = tpu.matmul %304, %34, %cst_227 {dimension_numbers = #tpu.dot_dimension_numbers<[1], [0], [0], [1], [0, 0, 1, 1], [], []>} : vector<16x64xf32>, vector<64x64xf32>, vector<16x64xf32> -> vector<16x64xf32>
    %cst_228 = arith.constant dense<0.000000e+00> : vector<16x64xf32>
    %306 = tpu.matmul %7, %303, %cst_228 {dimension_numbers = #tpu.dot_dimension_numbers<[1], [0], [0], [1], [0, 0, 1, 1], [], []>} : vector<16x32xf32>, vector<32x64xf32>, vector<16x64xf32> -> vector<16x64xf32>
    %cst_229 = arith.constant dense<0.000000e+00> : vector<16x64xf32>
    %307 = tpu.matmul %306, %35, %cst_229 {dimension_numbers = #tpu.dot_dimension_numbers<[1], [0], [0], [1], [0, 0, 1, 1], [], []>} : vector<16x64xf32>, vector<64x64xf32>, vector<16x64xf32> -> vector<16x64xf32>
    %308 = arith.addf %305, %307 : vector<16x64xf32>
    %cst_230 = arith.constant dense<0.000000e+00> : vector<16x64xf32>
    %309 = tpu.matmul %8, %303, %cst_230 {dimension_numbers = #tpu.dot_dimension_numbers<[1], [0], [0], [1], [0, 0, 1, 1], [], []>} : vector<16x32xf32>, vector<32x64xf32>, vector<16x64xf32> -> vector<16x64xf32>
    %cst_231 = arith.constant dense<0.000000e+00> : vector<16x64xf32>
    %310 = tpu.matmul %309, %36, %cst_231 {dimension_numbers = #tpu.dot_dimension_numbers<[1], [0], [0], [1], [0, 0, 1, 1], [], []>} : vector<16x64xf32>, vector<64x64xf32>, vector<16x64xf32> -> vector<16x64xf32>
    %311 = arith.addf %308, %310 : vector<16x64xf32>
    %cst_232 = arith.constant dense<0.000000e+00> : vector<16x64xf32>
    %312 = tpu.matmul %9, %303, %cst_232 {dimension_numbers = #tpu.dot_dimension_numbers<[1], [0], [0], [1], [0, 0, 1, 1], [], []>} : vector<16x32xf32>, vector<32x64xf32>, vector<16x64xf32> -> vector<16x64xf32>
    %cst_233 = arith.constant dense<0.000000e+00> : vector<16x64xf32>
    %313 = tpu.matmul %312, %37, %cst_233 {dimension_numbers = #tpu.dot_dimension_numbers<[1], [0], [0], [1], [0, 0, 1, 1], [], []>} : vector<16x64xf32>, vector<64x64xf32>, vector<16x64xf32> -> vector<16x64xf32>
    %314 = arith.addf %311, %313 : vector<16x64xf32>
    %315 = vector.broadcast %33 : vector<1x64xf32> to vector<16x64xf32>
    %316 = arith.addf %314, %315 : vector<16x64xf32>
    %317 = arith.negf %316 : vector<16x64xf32>
    %318 = math.exp %317 : vector<16x64xf32>
    %cst_234 = arith.constant 1.000000e+00 : f32
    %319 = vector.broadcast %cst_234 : f32 to vector<16x64xf32>
    %320 = arith.addf %319, %318 : vector<16x64xf32>
    %321 = arith.divf %319, %320 : vector<16x64xf32>
    %322 = arith.mulf %316, %321 : vector<16x64xf32>
    %cst_235 = arith.constant dense<0.000000e+00> : vector<16x64xf32>
    %323 = tpu.matmul %4, %322, %cst_235 {dimension_numbers = #tpu.dot_dimension_numbers<[1], [0], [0], [1], [0, 0, 1, 1], [], []>} : vector<16x16xf32>, vector<16x64xf32>, vector<16x64xf32> -> vector<16x64xf32>
    %cst_236 = arith.constant dense<0.000000e+00> : vector<16x256xf32>
    %324 = tpu.matmul %323, %25, %cst_236 {dimension_numbers = #tpu.dot_dimension_numbers<[1], [0], [0], [1], [0, 0, 1, 1], [], []>} : vector<16x64xf32>, vector<64x256xf32>, vector<16x256xf32> -> vector<16x256xf32>
    %cst_237 = arith.constant dense<0.000000e+00> : vector<16x256xf32>
    %325 = tpu.matmul %322, %26, %cst_237 {dimension_numbers = #tpu.dot_dimension_numbers<[1], [0], [0], [1], [0, 0, 1, 1], [], []>} : vector<16x64xf32>, vector<64x256xf32>, vector<16x256xf32> -> vector<16x256xf32>
    %326 = arith.addf %324, %325 : vector<16x256xf32>
    %cst_238 = arith.constant dense<0.000000e+00> : vector<16x64xf32>
    %327 = tpu.matmul %5, %322, %cst_238 {dimension_numbers = #tpu.dot_dimension_numbers<[1], [0], [0], [1], [0, 0, 1, 1], [], []>} : vector<16x16xf32>, vector<16x64xf32>, vector<16x64xf32> -> vector<16x64xf32>
    %cst_239 = arith.constant dense<0.000000e+00> : vector<16x256xf32>
    %328 = tpu.matmul %327, %27, %cst_239 {dimension_numbers = #tpu.dot_dimension_numbers<[1], [0], [0], [1], [0, 0, 1, 1], [], []>} : vector<16x64xf32>, vector<64x256xf32>, vector<16x256xf32> -> vector<16x256xf32>
    %329 = arith.addf %326, %328 : vector<16x256xf32>
    %330 = vector.broadcast %24 : vector<1x256xf32> to vector<16x256xf32>
    %331 = arith.addf %329, %330 : vector<16x256xf32>
    %332 = arith.negf %331 : vector<16x256xf32>
    %333 = math.exp %332 : vector<16x256xf32>
    %cst_240 = arith.constant 1.000000e+00 : f32
    %334 = vector.broadcast %cst_240 : f32 to vector<16x256xf32>
    %335 = arith.addf %334, %333 : vector<16x256xf32>
    %336 = arith.divf %334, %335 : vector<16x256xf32>
    %337 = arith.mulf %331, %336 : vector<16x256xf32>
    %cst_241 = arith.constant dense<0.000000e+00> : vector<256xf32>
    %338 = vector.multi_reduction <add>, %337, %cst_241 [0] : vector<16x256xf32> to vector<256xf32>
    %339 = vector.shape_cast %338 : vector<256xf32> to vector<1x256xf32>
    %cst_242 = arith.constant 1.600000e+01 : f32
    %340 = vector.broadcast %cst_242 : f32 to vector<1x256xf32>
    %341 = arith.divf %339, %340 : vector<1x256xf32>
    %342 = vector.broadcast %341 : vector<1x256xf32> to vector<16x256xf32>
    %343 = arith.subf %337, %342 : vector<16x256xf32>
    %344 = arith.mulf %343, %343 : vector<16x256xf32>
    %cst_243 = arith.constant dense<0.000000e+00> : vector<256xf32>
    %345 = vector.multi_reduction <add>, %344, %cst_243 [0] : vector<16x256xf32> to vector<256xf32>
    %346 = vector.shape_cast %345 : vector<256xf32> to vector<1x256xf32>
    %cst_244 = arith.constant 1.600000e+01 : f32
    %347 = vector.broadcast %cst_244 : f32 to vector<1x256xf32>
    %348 = arith.divf %346, %347 : vector<1x256xf32>
    %cst_245 = arith.constant 9.99999974E-6 : f32
    %349 = vector.broadcast %cst_245 : f32 to vector<1x256xf32>
    %350 = arith.addf %348, %349 : vector<1x256xf32>
    %351 = math.rsqrt %350 : vector<1x256xf32>
    %352 = vector.broadcast %351 : vector<1x256xf32> to vector<16x256xf32>
    %353 = arith.mulf %343, %352 : vector<16x256xf32>
    %354 = vector.broadcast %53 : vector<1x256xf32> to vector<16x256xf32>
    %355 = arith.mulf %353, %354 : vector<16x256xf32>
    %356 = vector.broadcast %52 : vector<1x256xf32> to vector<16x256xf32>
    %357 = arith.addf %355, %356 : vector<16x256xf32>
    %cst_246 = arith.constant dense<0.000000e+00> : vector<16x256xf32>
    %358 = tpu.matmul %357, %59, %cst_246 {dimension_numbers = #tpu.dot_dimension_numbers<[1], [0], [0], [1], [0, 0, 1, 1], [], []>} : vector<16x256xf32>, vector<256x256xf32>, vector<16x256xf32> -> vector<16x256xf32>
    %359 = vector.broadcast %58 : vector<1x256xf32> to vector<16x256xf32>
    %360 = arith.addf %358, %359 : vector<16x256xf32>
    %cst_247 = arith.constant dense<0.000000e+00> : vector<16x256xf32>
    %361 = tpu.matmul %357, %55, %cst_247 {dimension_numbers = #tpu.dot_dimension_numbers<[1], [0], [0], [1], [0, 0, 1, 1], [], []>} : vector<16x256xf32>, vector<256x256xf32>, vector<16x256xf32> -> vector<16x256xf32>
    %362 = vector.broadcast %54 : vector<1x256xf32> to vector<16x256xf32>
    %363 = arith.addf %361, %362 : vector<16x256xf32>
    %cst_248 = arith.constant dense<0.000000e+00> : vector<16x256xf32>
    %364 = tpu.matmul %357, %61, %cst_248 {dimension_numbers = #tpu.dot_dimension_numbers<[1], [0], [0], [1], [0, 0, 1, 1], [], []>} : vector<16x256xf32>, vector<256x256xf32>, vector<16x256xf32> -> vector<16x256xf32>
    %365 = vector.broadcast %60 : vector<1x256xf32> to vector<16x256xf32>
    %366 = arith.addf %364, %365 : vector<16x256xf32>
    %367 = vector.extract_strided_slice %360 {offsets = [0, 0], sizes = [8, 256], strides = [1, 1]} : vector<16x256xf32> to vector<8x256xf32>
    %368 = vector.extract_strided_slice %363 {offsets = [0, 0], sizes = [8, 256], strides = [1, 1]} : vector<16x256xf32> to vector<8x256xf32>
    %cst_249 = arith.constant dense<0.000000e+00> : vector<8x8xf32>
    %369 = tpu.matmul %367, %368, %cst_249 {dimension_numbers = #tpu.dot_dimension_numbers<[1], [1], [0], [0], [0, 0, 1, 0], [], []>} : vector<8x256xf32>, vector<8x256xf32>, vector<8x8xf32> -> vector<8x8xf32>
    %cst_250 = arith.constant dense<0xFF800000> : vector<8xf32>
    %370 = vector.multi_reduction <maximumf>, %369, %cst_250 [1] : vector<8x8xf32> to vector<8xf32>
    %371 = vector.shape_cast %370 : vector<8xf32> to vector<8x1xf32>
    %372 = vector.broadcast %371 : vector<8x1xf32> to vector<8x8xf32>
    %373 = arith.subf %369, %372 : vector<8x8xf32>
    %374 = math.exp %373 : vector<8x8xf32>
    %cst_251 = arith.constant dense<0.000000e+00> : vector<8xf32>
    %375 = vector.multi_reduction <add>, %374, %cst_251 [1] : vector<8x8xf32> to vector<8xf32>
    %376 = vector.shape_cast %375 : vector<8xf32> to vector<8x1xf32>
    %377 = tpu.reciprocal %376 {approx = true} : vector<8x1xf32> -> vector<8x1xf32>
    %378 = vector.broadcast %377 : vector<8x1xf32> to vector<8x8xf32>
    %379 = arith.mulf %374, %378 : vector<8x8xf32>
    %380 = vector.extract_strided_slice %366 {offsets = [0, 0], sizes = [8, 256], strides = [1, 1]} : vector<16x256xf32> to vector<8x256xf32>
    %cst_252 = arith.constant dense<0.000000e+00> : vector<8x256xf32>
    %381 = tpu.matmul %379, %380, %cst_252 {dimension_numbers = #tpu.dot_dimension_numbers<[1], [0], [0], [1], [0, 0, 1, 1], [], []>} : vector<8x8xf32>, vector<8x256xf32>, vector<8x256xf32> -> vector<8x256xf32>
    %382 = vector.extract_strided_slice %360 {offsets = [8, 0], sizes = [8, 256], strides = [1, 1]} : vector<16x256xf32> to vector<8x256xf32>
    %383 = vector.extract_strided_slice %363 {offsets = [8, 0], sizes = [8, 256], strides = [1, 1]} : vector<16x256xf32> to vector<8x256xf32>
    %cst_253 = arith.constant dense<0.000000e+00> : vector<8x8xf32>
    %384 = tpu.matmul %382, %383, %cst_253 {dimension_numbers = #tpu.dot_dimension_numbers<[1], [1], [0], [0], [0, 0, 1, 0], [], []>} : vector<8x256xf32>, vector<8x256xf32>, vector<8x8xf32> -> vector<8x8xf32>
    %cst_254 = arith.constant dense<0xFF800000> : vector<8xf32>
    %385 = vector.multi_reduction <maximumf>, %384, %cst_254 [1] : vector<8x8xf32> to vector<8xf32>
    %386 = vector.shape_cast %385 : vector<8xf32> to vector<8x1xf32>
    %387 = vector.broadcast %386 : vector<8x1xf32> to vector<8x8xf32>
    %388 = arith.subf %384, %387 : vector<8x8xf32>
    %389 = math.exp %388 : vector<8x8xf32>
    %cst_255 = arith.constant dense<0.000000e+00> : vector<8xf32>
    %390 = vector.multi_reduction <add>, %389, %cst_255 [1] : vector<8x8xf32> to vector<8xf32>
    %391 = vector.shape_cast %390 : vector<8xf32> to vector<8x1xf32>
    %392 = tpu.reciprocal %391 {approx = true} : vector<8x1xf32> -> vector<8x1xf32>
    %393 = vector.broadcast %392 : vector<8x1xf32> to vector<8x8xf32>
    %394 = arith.mulf %389, %393 : vector<8x8xf32>
    %395 = vector.extract_strided_slice %366 {offsets = [8, 0], sizes = [8, 256], strides = [1, 1]} : vector<16x256xf32> to vector<8x256xf32>
    %cst_256 = arith.constant dense<0.000000e+00> : vector<8x256xf32>
    %396 = tpu.matmul %394, %395, %cst_256 {dimension_numbers = #tpu.dot_dimension_numbers<[1], [0], [0], [1], [0, 0, 1, 1], [], []>} : vector<8x8xf32>, vector<8x256xf32>, vector<8x256xf32> -> vector<8x256xf32>
    %397 = tpu.concatenate %381, %396 in 0 : vector<8x256xf32>, vector<8x256xf32> -> vector<16x256xf32>
    %cst_257 = arith.constant dense<0.000000e+00> : vector<16x256xf32>
    %398 = tpu.matmul %397, %57, %cst_257 {dimension_numbers = #tpu.dot_dimension_numbers<[1], [0], [0], [1], [0, 0, 1, 1], [], []>} : vector<16x256xf32>, vector<256x256xf32>, vector<16x256xf32> -> vector<16x256xf32>
    %399 = vector.broadcast %56 : vector<1x256xf32> to vector<16x256xf32>
    %400 = arith.addf %398, %399 : vector<16x256xf32>
    %401 = arith.addf %337, %400 : vector<16x256xf32>
    %402 = arith.negf %401 : vector<16x256xf32>
    %403 = math.exp %402 : vector<16x256xf32>
    %cst_258 = arith.constant 1.000000e+00 : f32
    %404 = vector.broadcast %cst_258 : f32 to vector<16x256xf32>
    %405 = arith.addf %404, %403 : vector<16x256xf32>
    %406 = arith.divf %404, %405 : vector<16x256xf32>
    %407 = arith.mulf %401, %406 : vector<16x256xf32>
    %cst_259 = arith.constant dense<0.000000e+00> : vector<256xf32>
    %408 = vector.multi_reduction <add>, %407, %cst_259 [0] : vector<16x256xf32> to vector<256xf32>
    %409 = vector.shape_cast %408 : vector<256xf32> to vector<1x256xf32>
    %cst_260 = arith.constant 1.600000e+01 : f32
    %410 = vector.broadcast %cst_260 : f32 to vector<1x256xf32>
    %411 = arith.divf %409, %410 : vector<1x256xf32>
    %412 = vector.broadcast %411 : vector<1x256xf32> to vector<16x256xf32>
    %413 = arith.subf %407, %412 : vector<16x256xf32>
    %414 = arith.mulf %413, %413 : vector<16x256xf32>
    %cst_261 = arith.constant dense<0.000000e+00> : vector<256xf32>
    %415 = vector.multi_reduction <add>, %414, %cst_261 [0] : vector<16x256xf32> to vector<256xf32>
    %416 = vector.shape_cast %415 : vector<256xf32> to vector<1x256xf32>
    %cst_262 = arith.constant 1.600000e+01 : f32
    %417 = vector.broadcast %cst_262 : f32 to vector<1x256xf32>
    %418 = arith.divf %416, %417 : vector<1x256xf32>
    %cst_263 = arith.constant 9.99999974E-6 : f32
    %419 = vector.broadcast %cst_263 : f32 to vector<1x256xf32>
    %420 = arith.addf %418, %419 : vector<1x256xf32>
    %421 = math.rsqrt %420 : vector<1x256xf32>
    %422 = vector.broadcast %421 : vector<1x256xf32> to vector<16x256xf32>
    %423 = arith.mulf %413, %422 : vector<16x256xf32>
    %424 = vector.broadcast %17 : vector<1x256xf32> to vector<16x256xf32>
    %425 = arith.mulf %423, %424 : vector<16x256xf32>
    %426 = vector.broadcast %16 : vector<1x256xf32> to vector<16x256xf32>
    %427 = arith.addf %425, %426 : vector<16x256xf32>
    %cst_264 = arith.constant dense<0.000000e+00> : vector<16x256xf32>
    %428 = tpu.matmul %4, %427, %cst_264 {dimension_numbers = #tpu.dot_dimension_numbers<[1], [0], [0], [1], [0, 0, 1, 1], [], []>} : vector<16x16xf32>, vector<16x256xf32>, vector<16x256xf32> -> vector<16x256xf32>
    %cst_265 = arith.constant dense<0.000000e+00> : vector<16x2xf32>
    %429 = tpu.matmul %428, %73, %cst_265 {dimension_numbers = #tpu.dot_dimension_numbers<[1], [0], [0], [1], [0, 0, 1, 1], [], []>} : vector<16x256xf32>, vector<256x2xf32>, vector<16x2xf32> -> vector<16x2xf32>
    %cst_266 = arith.constant dense<0.000000e+00> : vector<16x2xf32>
    %430 = tpu.matmul %427, %74, %cst_266 {dimension_numbers = #tpu.dot_dimension_numbers<[1], [0], [0], [1], [0, 0, 1, 1], [], []>} : vector<16x256xf32>, vector<256x2xf32>, vector<16x2xf32> -> vector<16x2xf32>
    %431 = arith.addf %429, %430 : vector<16x2xf32>
    %cst_267 = arith.constant dense<0.000000e+00> : vector<16x256xf32>
    %432 = tpu.matmul %5, %427, %cst_267 {dimension_numbers = #tpu.dot_dimension_numbers<[1], [0], [0], [1], [0, 0, 1, 1], [], []>} : vector<16x16xf32>, vector<16x256xf32>, vector<16x256xf32> -> vector<16x256xf32>
    %cst_268 = arith.constant dense<0.000000e+00> : vector<16x2xf32>
    %433 = tpu.matmul %432, %75, %cst_268 {dimension_numbers = #tpu.dot_dimension_numbers<[1], [0], [0], [1], [0, 0, 1, 1], [], []>} : vector<16x256xf32>, vector<256x2xf32>, vector<16x2xf32> -> vector<16x2xf32>
    %434 = arith.addf %431, %433 : vector<16x2xf32>
    %435 = vector.broadcast %72 : vector<1x2xf32> to vector<16x2xf32>
    %436 = arith.addf %434, %435 : vector<16x2xf32>
    %cst_269 = arith.constant dense<0.000000e+00> : vector<16x2xf32>
    %437 = tpu.matmul %4, %436, %cst_269 {dimension_numbers = #tpu.dot_dimension_numbers<[1], [0], [0], [1], [0, 0, 1, 1], [], []>} : vector<16x16xf32>, vector<16x2xf32>, vector<16x2xf32> -> vector<16x2xf32>
    %cst_270 = arith.constant dense<0.000000e+00> : vector<16x4xf32>
    %438 = tpu.matmul %437, %77, %cst_270 {dimension_numbers = #tpu.dot_dimension_numbers<[1], [0], [0], [1], [0, 0, 1, 1], [], []>} : vector<16x2xf32>, vector<2x4xf32>, vector<16x4xf32> -> vector<16x4xf32>
    %cst_271 = arith.constant dense<0.000000e+00> : vector<16x4xf32>
    %439 = tpu.matmul %436, %78, %cst_271 {dimension_numbers = #tpu.dot_dimension_numbers<[1], [0], [0], [1], [0, 0, 1, 1], [], []>} : vector<16x2xf32>, vector<2x4xf32>, vector<16x4xf32> -> vector<16x4xf32>
    %440 = arith.addf %438, %439 : vector<16x4xf32>
    %cst_272 = arith.constant dense<0.000000e+00> : vector<16x2xf32>
    %441 = tpu.matmul %5, %436, %cst_272 {dimension_numbers = #tpu.dot_dimension_numbers<[1], [0], [0], [1], [0, 0, 1, 1], [], []>} : vector<16x16xf32>, vector<16x2xf32>, vector<16x2xf32> -> vector<16x2xf32>
    %cst_273 = arith.constant dense<0.000000e+00> : vector<16x4xf32>
    %442 = tpu.matmul %441, %79, %cst_273 {dimension_numbers = #tpu.dot_dimension_numbers<[1], [0], [0], [1], [0, 0, 1, 1], [], []>} : vector<16x2xf32>, vector<2x4xf32>, vector<16x4xf32> -> vector<16x4xf32>
    %443 = arith.addf %440, %442 : vector<16x4xf32>
    %444 = vector.broadcast %76 : vector<1x4xf32> to vector<16x4xf32>
    %445 = arith.addf %443, %444 : vector<16x4xf32>
    %c0_274 = arith.constant 0 : index
    %c0_275 = arith.constant 0 : index
    %446 = vector.load %arg81[%c0_274, %c0_275] : memref<16x4xf32, #tpu.memory_space<vmem>>, vector<16x4xf32>
    tpu.vector_store %arg81[%c0_274, %c0_275], %445 {strides = array<i32>} : memref<16x4xf32, #tpu.memory_space<vmem>>, vector<16x4xf32>,
    return
  }
}

</mosaic_0001>

<llo_original>
// kernel: _lambda_.1
$region0: #{_lambda_.1}
  #allocation0 [shape = 'u32[]', space=smem, size = 0x4, offset = 0x4, fixed_abs, tag = 'smem constant byte address 0x4 - core index']
  #allocation1 [shape = 'u32[144,128]{1,0:T(1,128)}', space=vmem, size = 0x12000, scoped, tag = 'internal scratch']
  %s0 = inlined_call_operand.smem [shape: u32[82], index: -1, kind: input, shape index: {}]
  %s1 = sld [smem:[%s0]]
  %s2 = scalar_lea.smem %s0, 1
  %s3 = sld [smem:[%s2]]
  %s4 = scalar_lea.smem %s0, 2
  %s5 = sld [smem:[%s4]]
  %s6 = scalar_lea.smem %s0, 3
  %s7 = sld [smem:[%s6]]
  %s8 = scalar_lea.smem %s0, 4
  %s9 = sld [smem:[%s8]]
  %s10 = scalar_lea.smem %s0, 5
  %s11 = sld [smem:[%s10]]
  %s12 = scalar_lea.smem %s0, 6
  %s13 = sld [smem:[%s12]]
  %s14 = scalar_lea.smem %s0, 7
  %s15 = sld [smem:[%s14]]
  %s16 = scalar_lea.smem %s0, 8
  %s17 = sld [smem:[%s16]]
  %s18 = scalar_lea.smem %s0, 9
  %s19 = sld [smem:[%s18]]
  %s20 = scalar_lea.smem %s0, 10
  %s21 = sld [smem:[%s20]]
  %s22 = scalar_lea.smem %s0, 11
  %s23 = sld [smem:[%s22]]
  %s24 = scalar_lea.smem %s0, 12
  %s25 = sld [smem:[%s24]]
  %s26 = scalar_lea.smem %s0, 13
  %s27 = sld [smem:[%s26]]
  %s28 = scalar_lea.smem %s0, 14
  %s29 = sld [smem:[%s28]]
  %s30 = scalar_lea.smem %s0, 15
  %s31 = sld [smem:[%s30]]
  %s32 = scalar_lea.smem %s0, 16
  %s33 = sld [smem:[%s32]]
  %s34 = scalar_lea.smem %s0, 17
  %s35 = sld [smem:[%s34]]
  %s36 = scalar_lea.smem %s0, 18
  %s37 = sld [smem:[%s36]]
  %s38 = scalar_lea.smem %s0, 19
  %s39 = sld [smem:[%s38]]
  %s40 = scalar_lea.smem %s0, 20
  %s41 = sld [smem:[%s40]]
  %s42 = scalar_lea.smem %s0, 21
  %s43 = sld [smem:[%s42]]
  %s44 = scalar_lea.smem %s0, 22
  %s45 = sld [smem:[%s44]]
  %s46 = scalar_lea.smem %s0, 23
  %s47 = sld [smem:[%s46]]
  %s48 = scalar_lea.smem %s0, 24
  %s49 = sld [smem:[%s48]]
  %s50 = scalar_lea.smem %s0, 25
  %s51 = sld [smem:[%s50]]
  %s52 = scalar_lea.smem %s0, 26
  %s53 = sld [smem:[%s52]]
  %s54 = scalar_lea.smem %s0, 27
  %s55 = sld [smem:[%s54]]
  %s56 = scalar_lea.smem %s0, 28
  %s57 = sld [smem:[%s56]]
  %s58 = scalar_lea.smem %s0, 29
  %s59 = sld [smem:[%s58]]
  %s60 = scalar_lea.smem %s0, 30
  %s61 = sld [smem:[%s60]]
  %s62 = scalar_lea.smem %s0, 31
  %s63 = sld [smem:[%s62]]
  %s64 = scalar_lea.smem %s0, 32
  %s65 = sld [smem:[%s64]]
  %s66 = scalar_lea.smem %s0, 33
  %s67 = sld [smem:[%s66]]
  %s68 = scalar_lea.smem %s0, 34
  %s69 = sld [smem:[%s68]]
  %s70 = scalar_lea.smem %s0, 35
  %s71 = sld [smem:[%s70]]
  %s72 = scalar_lea.smem %s0, 36
  %s73 = sld [smem:[%s72]]
  %s74 = scalar_lea.smem %s0, 37
  %s75 = sld [smem:[%s74]]
  %s76 = scalar_lea.smem %s0, 38
  %s77 = sld [smem:[%s76]]
  %s78 = scalar_lea.smem %s0, 39
  %s79 = sld [smem:[%s78]]
  %s80 = scalar_lea.smem %s0, 40
  %s81 = sld [smem:[%s80]]
  %s82 = scalar_lea.smem %s0, 41
  %s83 = sld [smem:[%s82]]
  %s84 = scalar_lea.smem %s0, 42
  %s85 = sld [smem:[%s84]]
  %s86 = scalar_lea.smem %s0, 43
  %s87 = sld [smem:[%s86]]
  %s88 = scalar_lea.smem %s0, 44
  %s89 = sld [smem:[%s88]]
  %s90 = scalar_lea.smem %s0, 45
  %s91 = sld [smem:[%s90]]
  %s92 = scalar_lea.smem %s0, 46
  %s93 = sld [smem:[%s92]]
  %s94 = scalar_lea.smem %s0, 47
  %s95 = sld [smem:[%s94]]
  %s96 = scalar_lea.smem %s0, 48
  %s97 = sld [smem:[%s96]]
  %s98 = scalar_lea.smem %s0, 49
  %s99 = sld [smem:[%s98]]
  %s100 = scalar_lea.smem %s0, 50
  %s101 = sld [smem:[%s100]]
  %s102 = scalar_lea.smem %s0, 51
  %s103 = sld [smem:[%s102]]
  %s104 = scalar_lea.smem %s0, 52
  %s105 = sld [smem:[%s104]]
  %s106 = scalar_lea.smem %s0, 53
  %s107 = sld [smem:[%s106]]
  %s108 = scalar_lea.smem %s0, 54
  %s109 = sld [smem:[%s108]]
  %s110 = scalar_lea.smem %s0, 55
  %s111 = sld [smem:[%s110]]
  %s112 = scalar_lea.smem %s0, 56
  %s113 = sld [smem:[%s112]]
  %s114 = scalar_lea.smem %s0, 57
  %s115 = sld [smem:[%s114]]
  %s116 = scalar_lea.smem %s0, 58
  %s117 = sld [smem:[%s116]]
  %s118 = scalar_lea.smem %s0, 59
  %s119 = sld [smem:[%s118]]
  %s120 = scalar_lea.smem %s0, 60
  %s121 = sld [smem:[%s120]]
  %s122 = scalar_lea.smem %s0, 61
  %s123 = sld [smem:[%s122]]
  %s124 = scalar_lea.smem %s0, 62
  %s125 = sld [smem:[%s124]]
  %s126 = scalar_lea.smem %s0, 63
  %s127 = sld [smem:[%s126]]
  %s128 = scalar_lea.smem %s0, 64
  %s129 = sld [smem:[%s128]]
  %s130 = scalar_lea.smem %s0, 65
  %s131 = sld [smem:[%s130]]
  %s132 = scalar_lea.smem %s0, 66
  %s133 = sld [smem:[%s132]]
  %s134 = scalar_lea.smem %s0, 67
  %s135 = sld [smem:[%s134]]
  %s136 = scalar_lea.smem %s0, 68
  %s137 = sld [smem:[%s136]]
  %s138 = scalar_lea.smem %s0, 69
  %s139 = sld [smem:[%s138]]
  %s140 = scalar_lea.smem %s0, 70
  %s141 = sld [smem:[%s140]]
  %s142 = scalar_lea.smem %s0, 71
  %s143 = sld [smem:[%s142]]
  %s144 = scalar_lea.smem %s0, 72
  %s145 = sld [smem:[%s144]]
  %s146 = scalar_lea.smem %s0, 73
  %s147 = sld [smem:[%s146]]
  %s148 = scalar_lea.smem %s0, 74
  %s149 = sld [smem:[%s148]]
  %s150 = scalar_lea.smem %s0, 75
  %s151 = sld [smem:[%s150]]
  %s152 = scalar_lea.smem %s0, 76
  %s153 = sld [smem:[%s152]]
  %s154 = scalar_lea.smem %s0, 77
  %s155 = sld [smem:[%s154]]
  %s156 = scalar_lea.smem %s0, 78
  %s157 = sld [smem:[%s156]]
  %s158 = scalar_lea.smem %s0, 79
  %s159 = sld [smem:[%s158]]
  %s160 = scalar_lea.smem %s0, 80
  %s161 = sld [smem:[%s160]]
  %s162 = scalar_lea.smem %s0, 81
  %s163 = sld [smem:[%s162]]
  %s164 = sld [smem:[#allocation0]]
  $region346: #{_lambda_.1} parent=0
    _
  %s166 = ssub.s32 1, %s164
  %s167 = scalar_select 0, %s166, %s164
  $region1: #{_lambda_.1} parent=0
    #allocation2 [shape = 'u8[512]{0}', space=vmem, size = 0x400, scoped, tag = 'input window, operand 71, single buffered']
    #allocation3 [shape = 's32[1]{0}', space=sflag, size = 0x4, scoped, tag = 'scoped memory for _lambda_.1']
    #allocation4 [shape = 'u8[512]{0}', space=vmem, size = 0x400, scoped, tag = 'input window, operand 73, single buffered']
    #allocation5 [shape = 's32[1]{0}', space=sflag, size = 0x4, scoped, tag = 'scoped memory for _lambda_.1']
    #allocation6 [shape = 'u8[512]{0}', space=vmem, size = 0x400, scoped, tag = 'input window, operand 77, single buffered']
    %168 = vsyncpa [#allocation3], 0
    %169 = vsyncpa [#allocation5], 0
    // Predicated region
    $region2: #{_lambda_.1} parent=1 // pred_check
      _
    $region3: #{_lambda_.1} parent=1 // pred_check_branch
      %171 = sbr.rel (0) target = $region5
    $region4: #{_lambda_.1} parent=1 // pred_region
      _
    $region5: #{_lambda_.1} parent=1 // pred_fallthru
      _
    // Predicated region
    $region6: #{_lambda_.1} parent=1 // pred_check
      _
    $region7: #{_lambda_.1} parent=1 // pred_check_branch
      %173 = sbr.rel (0) target = $region9
    $region8: #{_lambda_.1} parent=1 // pred_region
      _
    $region9: #{_lambda_.1} parent=1 // pred_fallthru
      _
    // Predicated region
    $region10: #{_lambda_.1} parent=1 // pred_check
      _
    $region11: #{_lambda_.1} parent=1 // pred_check_branch
      %175 = sbr.rel (0) target = $region13
    $region12: #{_lambda_.1} parent=1 // pred_region
      _
    $region13: #{_lambda_.1} parent=1 // pred_fallthru
      _
    // Predicated region
    $region14: #{_lambda_.1} parent=1 // pred_check
      _
    $region15: #{_lambda_.1} parent=1 // pred_check_branch
      %177 = sbr.rel (0) target = $region17
    $region16: #{_lambda_.1} parent=1 // pred_region
      _
    $region17: #{_lambda_.1} parent=1 // pred_fallthru
      _
    // Predicated region
    $region18: #{_lambda_.1} parent=1 // pred_check
      _
    $region19: #{_lambda_.1} parent=1 // pred_check_branch
      %179 = sbr.rel (0) target = $region21
    $region20: #{_lambda_.1} parent=1 // pred_region
      _
    $region21: #{_lambda_.1} parent=1 // pred_fallthru
      _
    // Predicated region
    $region22: #{_lambda_.1} parent=1 // pred_check
      _
    $region23: #{_lambda_.1} parent=1 // pred_check_branch
      %181 = sbr.rel (0) target = $region25
    $region24: #{_lambda_.1} parent=1 // pred_region
      _
    $region25: #{_lambda_.1} parent=1 // pred_fallthru
      _
    // Predicated region
    $region26: #{_lambda_.1} parent=1 // pred_check
      _
    $region27: #{_lambda_.1} parent=1 // pred_check_branch
      %183 = sbr.rel (0) target = $region29
    $region28: #{_lambda_.1} parent=1 // pred_region
      _
    $region29: #{_lambda_.1} parent=1 // pred_fallthru
      _
    // Predicated region
    $region30: #{_lambda_.1} parent=1 // pred_check
      _
    $region31: #{_lambda_.1} parent=1 // pred_check_branch
      %185 = sbr.rel (0) target = $region33
    $region32: #{_lambda_.1} parent=1 // pred_region
      _
    $region33: #{_lambda_.1} parent=1 // pred_fallthru
      _
    // Predicated region
    $region34: #{_lambda_.1} parent=1 // pred_check
      _
    $region35: #{_lambda_.1} parent=1 // pred_check_branch
      %187 = sbr.rel (0) target = $region37
    $region36: #{_lambda_.1} parent=1 // pred_region
      _
    $region37: #{_lambda_.1} parent=1 // pred_fallthru
      _
    // Predicated region
    $region38: #{_lambda_.1} parent=1 // pred_check
      _
    $region39: #{_lambda_.1} parent=1 // pred_check_branch
      %189 = sbr.rel (0) target = $region41
    $region40: #{_lambda_.1} parent=1 // pred_region
      _
    $region41: #{_lambda_.1} parent=1 // pred_fallthru
      _
    // Predicated region
    $region42: #{_lambda_.1} parent=1 // pred_check
      _
    $region43: #{_lambda_.1} parent=1 // pred_check_branch
      %191 = sbr.rel (0) target = $region45
    $region44: #{_lambda_.1} parent=1 // pred_region
      _
    $region45: #{_lambda_.1} parent=1 // pred_fallthru
      _
    // Predicated region
    $region46: #{_lambda_.1} parent=1 // pred_check
      _
    $region47: #{_lambda_.1} parent=1 // pred_check_branch
      %193 = sbr.rel (0) target = $region49
    $region48: #{_lambda_.1} parent=1 // pred_region
      _
    $region49: #{_lambda_.1} parent=1 // pred_fallthru
      _
    // Predicated region
    $region50: #{_lambda_.1} parent=1 // pred_check
      _
    $region51: #{_lambda_.1} parent=1 // pred_check_branch
      %195 = sbr.rel (0) target = $region53
    $region52: #{_lambda_.1} parent=1 // pred_region
      _
    $region53: #{_lambda_.1} parent=1 // pred_fallthru
      _
    // Predicated region
    $region54: #{_lambda_.1} parent=1 // pred_check
      _
    $region55: #{_lambda_.1} parent=1 // pred_check_branch
      %197 = sbr.rel (0) target = $region57
    $region56: #{_lambda_.1} parent=1 // pred_region
      _
    $region57: #{_lambda_.1} parent=1 // pred_fallthru
      _
    // Predicated region
    $region58: #{_lambda_.1} parent=1 // pred_check
      _
    $region59: #{_lambda_.1} parent=1 // pred_check_branch
      %199 = sbr.rel (0) target = $region61
    $region60: #{_lambda_.1} parent=1 // pred_region
      _
    $region61: #{_lambda_.1} parent=1 // pred_fallthru
      _
    // Predicated region
    $region62: #{_lambda_.1} parent=1 // pred_check
      _
    $region63: #{_lambda_.1} parent=1 // pred_check_branch
      %201 = sbr.rel (0) target = $region65
    $region64: #{_lambda_.1} parent=1 // pred_region
      _
    $region65: #{_lambda_.1} parent=1 // pred_fallthru
      _
    // Predicated region
    $region66: #{_lambda_.1} parent=1 // pred_check
      _
    $region67: #{_lambda_.1} parent=1 // pred_check_branch
      %203 = sbr.rel (0) target = $region69
    $region68: #{_lambda_.1} parent=1 // pred_region
      _
    $region69: #{_lambda_.1} parent=1 // pred_fallthru
      _
    // Predicated region
    $region70: #{_lambda_.1} parent=1 // pred_check
      _
    $region71: #{_lambda_.1} parent=1 // pred_check_branch
      %205 = sbr.rel (0) target = $region73
    $region72: #{_lambda_.1} parent=1 // pred_region
      _
    $region73: #{_lambda_.1} parent=1 // pred_fallthru
      _
    // Predicated region
    $region74: #{_lambda_.1} parent=1 // pred_check
      _
    $region75: #{_lambda_.1} parent=1 // pred_check_branch
      %207 = sbr.rel (0) target = $region77
    $region76: #{_lambda_.1} parent=1 // pred_region
      _
    $region77: #{_lambda_.1} parent=1 // pred_fallthru
      _
    // Predicated region
    $region78: #{_lambda_.1} parent=1 // pred_check
      _
    $region79: #{_lambda_.1} parent=1 // pred_check_branch
      %209 = sbr.rel (0) target = $region81
    $region80: #{_lambda_.1} parent=1 // pred_region
      _
    $region81: #{_lambda_.1} parent=1 // pred_fallthru
      _
    // Predicated region
    $region82: #{_lambda_.1} parent=1 // pred_check
      _
    $region83: #{_lambda_.1} parent=1 // pred_check_branch
      %211 = sbr.rel (0) target = $region85
    $region84: #{_lambda_.1} parent=1 // pred_region
      _
    $region85: #{_lambda_.1} parent=1 // pred_fallthru
      _
    // Predicated region
    $region86: #{_lambda_.1} parent=1 // pred_check
      _
    $region87: #{_lambda_.1} parent=1 // pred_check_branch
      %213 = sbr.rel (0) target = $region89
    $region88: #{_lambda_.1} parent=1 // pred_region
      _
    $region89: #{_lambda_.1} parent=1 // pred_fallthru
      _
    // Predicated region
    $region90: #{_lambda_.1} parent=1 // pred_check
      _
    $region91: #{_lambda_.1} parent=1 // pred_check_branch
      %215 = sbr.rel (0) target = $region93
    $region92: #{_lambda_.1} parent=1 // pred_region
      _
    $region93: #{_lambda_.1} parent=1 // pred_fallthru
      _
    // Predicated region
    $region94: #{_lambda_.1} parent=1 // pred_check
      _
    $region95: #{_lambda_.1} parent=1 // pred_check_branch
      %217 = sbr.rel (0) target = $region97
    $region96: #{_lambda_.1} parent=1 // pred_region
      _
    $region97: #{_lambda_.1} parent=1 // pred_fallthru
      _
    // Predicated region
    $region98: #{_lambda_.1} parent=1 // pred_check
      _
    $region99: #{_lambda_.1} parent=1 // pred_check_branch
      %219 = sbr.rel (0) target = $region101
    $region100: #{_lambda_.1} parent=1 // pred_region
      _
    $region101: #{_lambda_.1} parent=1 // pred_fallthru
      _
    // Predicated region
    $region102: #{_lambda_.1} parent=1 // pred_check
      _
    $region103: #{_lambda_.1} parent=1 // pred_check_branch
      %221 = sbr.rel (0) target = $region105
    $region104: #{_lambda_.1} parent=1 // pred_region
      _
    $region105: #{_lambda_.1} parent=1 // pred_fallthru
      _
    // Predicated region
    $region106: #{_lambda_.1} parent=1 // pred_check
      _
    $region107: #{_lambda_.1} parent=1 // pred_check_branch
      %223 = sbr.rel (0) target = $region109
    $region108: #{_lambda_.1} parent=1 // pred_region
      _
    $region109: #{_lambda_.1} parent=1 // pred_fallthru
      _
    // Predicated region
    $region110: #{_lambda_.1} parent=1 // pred_check
      _
    $region111: #{_lambda_.1} parent=1 // pred_check_branch
      %225 = sbr.rel (0) target = $region113
    $region112: #{_lambda_.1} parent=1 // pred_region
      _
    $region113: #{_lambda_.1} parent=1 // pred_fallthru
      _
    // Predicated region
    $region114: #{_lambda_.1} parent=1 // pred_check
      _
    $region115: #{_lambda_.1} parent=1 // pred_check_branch
      %227 = sbr.rel (0) target = $region117
    $region116: #{_lambda_.1} parent=1 // pred_region
      _
    $region117: #{_lambda_.1} parent=1 // pred_fallthru
      _
    // Predicated region
    $region118: #{_lambda_.1} parent=1 // pred_check
      _
    $region119: #{_lambda_.1} parent=1 // pred_check_branch
      %229 = sbr.rel (0) target = $region121
    $region120: #{_lambda_.1} parent=1 // pred_region
      _
    $region121: #{_lambda_.1} parent=1 // pred_fallthru
      _
    // Predicated region
    $region122: #{_lambda_.1} parent=1 // pred_check
      _
    $region123: #{_lambda_.1} parent=1 // pred_check_branch
      %231 = sbr.rel (0) target = $region125
    $region124: #{_lambda_.1} parent=1 // pred_region
      _
    $region125: #{_lambda_.1} parent=1 // pred_fallthru
      _
    // Predicated region
    $region126: #{_lambda_.1} parent=1 // pred_check
      _
    $region127: #{_lambda_.1} parent=1 // pred_check_branch
      %233 = sbr.rel (0) target = $region129
    $region128: #{_lambda_.1} parent=1 // pred_region
      _
    $region129: #{_lambda_.1} parent=1 // pred_fallthru
      _
    // Predicated region
    $region130: #{_lambda_.1} parent=1 // pred_check
      _
    $region131: #{_lambda_.1} parent=1 // pred_check_branch
      %235 = sbr.rel (0) target = $region133
    $region132: #{_lambda_.1} parent=1 // pred_region
      _
    $region133: #{_lambda_.1} parent=1 // pred_fallthru
      _
    // Predicated region
    $region134: #{_lambda_.1} parent=1 // pred_check
      _
    $region135: #{_lambda_.1} parent=1 // pred_check_branch
      %237 = sbr.rel (0) target = $region137
    $region136: #{_lambda_.1} parent=1 // pred_region
      _
    $region137: #{_lambda_.1} parent=1 // pred_fallthru
      _
    // Predicated region
    $region138: #{_lambda_.1} parent=1 // pred_check
      _
    $region139: #{_lambda_.1} parent=1 // pred_check_branch
      %239 = sbr.rel (0) target = $region141
    $region140: #{_lambda_.1} parent=1 // pred_region
      _
    $region141: #{_lambda_.1} parent=1 // pred_fallthru
      _
    // Predicated region
    $region142: #{_lambda_.1} parent=1 // pred_check
      _
    $region143: #{_lambda_.1} parent=1 // pred_check_branch
      %241 = sbr.rel (0) target = $region145
    $region144: #{_lambda_.1} parent=1 // pred_region
      _
    $region145: #{_lambda_.1} parent=1 // pred_fallthru
      _
    // Predicated region
    $region146: #{_lambda_.1} parent=1 // pred_check
      _
    $region147: #{_lambda_.1} parent=1 // pred_check_branch
      %243 = sbr.rel (0) target = $region149
    $region148: #{_lambda_.1} parent=1 // pred_region
      _
    $region149: #{_lambda_.1} parent=1 // pred_fallthru
      _
    // Predicated region
    $region150: #{_lambda_.1} parent=1 // pred_check
      _
    $region151: #{_lambda_.1} parent=1 // pred_check_branch
      %245 = sbr.rel (0) target = $region153
    $region152: #{_lambda_.1} parent=1 // pred_region
      _
    $region153: #{_lambda_.1} parent=1 // pred_fallthru
      _
    // Predicated region
    $region154: #{_lambda_.1} parent=1 // pred_check
      _
    $region155: #{_lambda_.1} parent=1 // pred_check_branch
      %247 = sbr.rel (0) target = $region157
    $region156: #{_lambda_.1} parent=1 // pred_region
      _
    $region157: #{_lambda_.1} parent=1 // pred_fallthru
      _
    // Predicated region
    $region158: #{_lambda_.1} parent=1 // pred_check
      _
    $region159: #{_lambda_.1} parent=1 // pred_check_branch
      %249 = sbr.rel (0) target = $region161
    $region160: #{_lambda_.1} parent=1 // pred_region
      _
    $region161: #{_lambda_.1} parent=1 // pred_fallthru
      _
    // Predicated region
    $region162: #{_lambda_.1} parent=1 // pred_check
      _
    $region163: #{_lambda_.1} parent=1 // pred_check_branch
      %251 = sbr.rel (0) target = $region165
    $region164: #{_lambda_.1} parent=1 // pred_region
      _
    $region165: #{_lambda_.1} parent=1 // pred_fallthru
      _
    // Predicated region
    $region166: #{_lambda_.1} parent=1 // pred_check
      _
    $region167: #{_lambda_.1} parent=1 // pred_check_branch
      %253 = sbr.rel (0) target = $region169
    $region168: #{_lambda_.1} parent=1 // pred_region
      _
    $region169: #{_lambda_.1} parent=1 // pred_fallthru
      _
    // Predicated region
    $region170: #{_lambda_.1} parent=1 // pred_check
      _
    $region171: #{_lambda_.1} parent=1 // pred_check_branch
      %255 = sbr.rel (0) target = $region173
    $region172: #{_lambda_.1} parent=1 // pred_region
      _
    $region173: #{_lambda_.1} parent=1 // pred_fallthru
      _
    // Predicated region
    $region174: #{_lambda_.1} parent=1 // pred_check
      _
    $region175: #{_lambda_.1} parent=1 // pred_check_branch
      %257 = sbr.rel (0) target = $region177
    $region176: #{_lambda_.1} parent=1 // pred_region
      _
    $region177: #{_lambda_.1} parent=1 // pred_fallthru
      _
    // Predicated region
    $region178: #{_lambda_.1} parent=1 // pred_check
      _
    $region179: #{_lambda_.1} parent=1 // pred_check_branch
      %259 = sbr.rel (0) target = $region181
    $region180: #{_lambda_.1} parent=1 // pred_region
      _
    $region181: #{_lambda_.1} parent=1 // pred_fallthru
      _
    // Predicated region
    $region182: #{_lambda_.1} parent=1 // pred_check
      _
    $region183: #{_lambda_.1} parent=1 // pred_check_branch
      %261 = sbr.rel (0) target = $region185
    $region184: #{_lambda_.1} parent=1 // pred_region
      _
    $region185: #{_lambda_.1} parent=1 // pred_fallthru
      _
    // Predicated region
    $region186: #{_lambda_.1} parent=1 // pred_check
      _
    $region187: #{_lambda_.1} parent=1 // pred_check_branch
      %263 = sbr.rel (0) target = $region189
    $region188: #{_lambda_.1} parent=1 // pred_region
      _
    $region189: #{_lambda_.1} parent=1 // pred_fallthru
      _
    // Predicated region
    $region190: #{_lambda_.1} parent=1 // pred_check
      _
    $region191: #{_lambda_.1} parent=1 // pred_check_branch
      %265 = sbr.rel (0) target = $region193
    $region192: #{_lambda_.1} parent=1 // pred_region
      _
    $region193: #{_lambda_.1} parent=1 // pred_fallthru
      _
    // Predicated region
    $region194: #{_lambda_.1} parent=1 // pred_check
      _
    $region195: #{_lambda_.1} parent=1 // pred_check_branch
      %267 = sbr.rel (0) target = $region197
    $region196: #{_lambda_.1} parent=1 // pred_region
      _
    $region197: #{_lambda_.1} parent=1 // pred_fallthru
      _
    // Predicated region
    $region198: #{_lambda_.1} parent=1 // pred_check
      _
    $region199: #{_lambda_.1} parent=1 // pred_check_branch
      %269 = sbr.rel (0) target = $region201
    $region200: #{_lambda_.1} parent=1 // pred_region
      _
    $region201: #{_lambda_.1} parent=1 // pred_fallthru
      _
    // Predicated region
    $region202: #{_lambda_.1} parent=1 // pred_check
      _
    $region203: #{_lambda_.1} parent=1 // pred_check_branch
      %271 = sbr.rel (0) target = $region205
    $region204: #{_lambda_.1} parent=1 // pred_region
      _
    $region205: #{_lambda_.1} parent=1 // pred_fallthru
      _
    // Predicated region
    $region206: #{_lambda_.1} parent=1 // pred_check
      _
    $region207: #{_lambda_.1} parent=1 // pred_check_branch
      %273 = sbr.rel (0) target = $region209
    $region208: #{_lambda_.1} parent=1 // pred_region
      _
    $region209: #{_lambda_.1} parent=1 // pred_fallthru
      _
    // Predicated region
    $region210: #{_lambda_.1} parent=1 // pred_check
      _
    $region211: #{_lambda_.1} parent=1 // pred_check_branch
      %275 = sbr.rel (0) target = $region213
    $region212: #{_lambda_.1} parent=1 // pred_region
      _
    $region213: #{_lambda_.1} parent=1 // pred_fallthru
      _
    // Predicated region
    $region214: #{_lambda_.1} parent=1 // pred_check
      _
    $region215: #{_lambda_.1} parent=1 // pred_check_branch
      %277 = sbr.rel (0) target = $region217
    $region216: #{_lambda_.1} parent=1 // pred_region
      _
    $region217: #{_lambda_.1} parent=1 // pred_fallthru
      _
    // Predicated region
    $region218: #{_lambda_.1} parent=1 // pred_check
      _
    $region219: #{_lambda_.1} parent=1 // pred_check_branch
      %279 = sbr.rel (0) target = $region221
    $region220: #{_lambda_.1} parent=1 // pred_region
      _
    $region221: #{_lambda_.1} parent=1 // pred_fallthru
      _
    // Predicated region
    $region222: #{_lambda_.1} parent=1 // pred_check
      _
    $region223: #{_lambda_.1} parent=1 // pred_check_branch
      %281 = sbr.rel (0) target = $region225
    $region224: #{_lambda_.1} parent=1 // pred_region
      _
    $region225: #{_lambda_.1} parent=1 // pred_fallthru
      _
    // Predicated region
    $region226: #{_lambda_.1} parent=1 // pred_check
      _
    $region227: #{_lambda_.1} parent=1 // pred_check_branch
      %283 = sbr.rel (0) target = $region229
    $region228: #{_lambda_.1} parent=1 // pred_region
      _
    $region229: #{_lambda_.1} parent=1 // pred_fallthru
      _
    // Predicated region
    $region230: #{_lambda_.1} parent=1 // pred_check
      _
    $region231: #{_lambda_.1} parent=1 // pred_check_branch
      %285 = sbr.rel (0) target = $region233
    $region232: #{_lambda_.1} parent=1 // pred_region
      _
    $region233: #{_lambda_.1} parent=1 // pred_fallthru
      _
    // Predicated region
    $region234: #{_lambda_.1} parent=1 // pred_check
      _
    $region235: #{_lambda_.1} parent=1 // pred_check_branch
      %287 = sbr.rel (0) target = $region237
    $region236: #{_lambda_.1} parent=1 // pred_region
      _
    $region237: #{_lambda_.1} parent=1 // pred_fallthru
      _
    // Predicated region
    $region238: #{_lambda_.1} parent=1 // pred_check
      _
    $region239: #{_lambda_.1} parent=1 // pred_check_branch
      %289 = sbr.rel (0) target = $region241
    $region240: #{_lambda_.1} parent=1 // pred_region
      _
    $region241: #{_lambda_.1} parent=1 // pred_fallthru
      _
    // Predicated region
    $region242: #{_lambda_.1} parent=1 // pred_check
      _
    $region243: #{_lambda_.1} parent=1 // pred_check_branch
      %291 = sbr.rel (0) target = $region245
    $region244: #{_lambda_.1} parent=1 // pred_region
      _
    $region245: #{_lambda_.1} parent=1 // pred_fallthru
      _
    // Predicated region
    $region246: #{_lambda_.1} parent=1 // pred_check
      _
    $region247: #{_lambda_.1} parent=1 // pred_check_branch
      %293 = sbr.rel (0) target = $region249
    $region248: #{_lambda_.1} parent=1 // pred_region
      _
    $region249: #{_lambda_.1} parent=1 // pred_fallthru
      _
    // Predicated region
    $region250: #{_lambda_.1} parent=1 // pred_check
      _
    $region251: #{_lambda_.1} parent=1 // pred_check_branch
      %295 = sbr.rel (0) target = $region253
    $region252: #{_lambda_.1} parent=1 // pred_region
      _
    $region253: #{_lambda_.1} parent=1 // pred_fallthru
      _
    // Predicated region
    $region254: #{_lambda_.1} parent=1 // pred_check
      _
    $region255: #{_lambda_.1} parent=1 // pred_check_branch
      %297 = sbr.rel (0) target = $region257
    $region256: #{_lambda_.1} parent=1 // pred_region
      _
    $region257: #{_lambda_.1} parent=1 // pred_fallthru
      _
    // Predicated region
    $region258: #{_lambda_.1} parent=1 // pred_check
      _
    $region259: #{_lambda_.1} parent=1 // pred_check_branch
      %299 = sbr.rel (0) target = $region261
    $region260: #{_lambda_.1} parent=1 // pred_region
      _
    $region261: #{_lambda_.1} parent=1 // pred_fallthru
      _
    // Predicated region
    $region262: #{_lambda_.1} parent=1 // pred_check
      _
    $region263: #{_lambda_.1} parent=1 // pred_check_branch
      %301 = sbr.rel (0) target = $region265
    $region264: #{_lambda_.1} parent=1 // pred_region
      _
    $region265: #{_lambda_.1} parent=1 // pred_fallthru
      _
    // Predicated region
    $region266: #{_lambda_.1} parent=1 // pred_check
      _
    $region267: #{_lambda_.1} parent=1 // pred_check_branch
      %303 = sbr.rel (0) target = $region269
    $region268: #{_lambda_.1} parent=1 // pred_region
      _
    $region269: #{_lambda_.1} parent=1 // pred_fallthru
      _
    // Predicated region
    $region270: #{_lambda_.1} parent=1 // pred_check
      _
    $region271: #{_lambda_.1} parent=1 // pred_check_branch
      %305 = sbr.rel (0) target = $region273
    $region272: #{_lambda_.1} parent=1 // pred_region
      _
    $region273: #{_lambda_.1} parent=1 // pred_fallthru
      _
    // Predicated region
    $region274: #{_lambda_.1} parent=1 // pred_check
      _
    $region275: #{_lambda_.1} parent=1 // pred_check_branch
      %307 = sbr.rel (0) target = $region277
    $region276: #{_lambda_.1} parent=1 // pred_region
      _
    $region277: #{_lambda_.1} parent=1 // pred_fallthru
      _
    // Predicated region
    $region278: #{_lambda_.1} parent=1 // pred_check
      _
    $region279: #{_lambda_.1} parent=1 // pred_check_branch
      %309 = sbr.rel (0) target = $region281
    $region280: #{_lambda_.1} parent=1 // pred_region
      _
    $region281: #{_lambda_.1} parent=1 // pred_fallthru
      _
    // Predicated region
    $region282: #{_lambda_.1} parent=1 // pred_check
      _
    $region283: #{_lambda_.1} parent=1 // pred_check_branch
      %311 = sbr.rel (0) target = $region285
    $region284: #{_lambda_.1} parent=1 // pred_region
      _
    $region285: #{_lambda_.1} parent=1 // pred_fallthru
      _
    // Predicated region
    $region286: #{_lambda_.1} parent=1 // pred_check
      _
    $region287: #{_lambda_.1} parent=1 // pred_check_branch
      %313 = sbr.rel (0) target = $region289
    $region288: #{_lambda_.1} parent=1 // pred_region
      %s315 = ssub.s32 16, 16
      %316 = vsyncadd [#allocation3], %s315
      %s318 = sshll.u32 [#allocation2], 4
      %s319 = int_to_ptr.vmem [resolvable:$true] %s318
      %321 = dma.hbm_to_vmem [thread:$0]  %s143, 16, %s319, [#allocation3]
    $region289: #{_lambda_.1} parent=1 // pred_fallthru
      _
    // Predicated region
    $region290: #{_lambda_.1} parent=1 // pred_check
      _
    $region291: #{_lambda_.1} parent=1 // pred_check_branch
      %323 = sbr.rel (0) target = $region293
    $region292: #{_lambda_.1} parent=1 // pred_region
      _
    $region293: #{_lambda_.1} parent=1 // pred_fallthru
      _
    // Predicated region
    $region294: #{_lambda_.1} parent=1 // pred_check
      _
    $region295: #{_lambda_.1} parent=1 // pred_check_branch
      %325 = sbr.rel (0) target = $region297
    $region296: #{_lambda_.1} parent=1 // pred_region
      %s327 = ssub.s32 16, 16
      %328 = vsyncadd [#allocation5], %s327
      %s330 = sshll.u32 [#allocation4], 4
      %s331 = int_to_ptr.vmem [resolvable:$true] %s330
      %333 = dma.hbm_to_vmem [thread:$0]  %s147, 16, %s331, [#allocation5]
    $region297: #{_lambda_.1} parent=1 // pred_fallthru
      _
    // Predicated region
    $region298: #{_lambda_.1} parent=1 // pred_check
      _
    $region299: #{_lambda_.1} parent=1 // pred_check_branch
      %335 = sbr.rel (0) target = $region301
    $region300: #{_lambda_.1} parent=1 // pred_region
      _
    $region301: #{_lambda_.1} parent=1 // pred_fallthru
      _
    // Predicated region
    $region302: #{_lambda_.1} parent=1 // pred_check
      _
    $region303: #{_lambda_.1} parent=1 // pred_check_branch
      %337 = sbr.rel (0) target = $region305
    $region304: #{_lambda_.1} parent=1 // pred_region
      _
    $region305: #{_lambda_.1} parent=1 // pred_fallthru
      _
    // Predicated region
    $region306: #{_lambda_.1} parent=1 // pred_check
      _
    $region307: #{_lambda_.1} parent=1 // pred_check_branch
      %339 = sbr.rel (0) target = $region309
    $region308: #{_lambda_.1} parent=1 // pred_region
      _
    $region309: #{_lambda_.1} parent=1 // pred_fallthru
      _
    // Predicated region
    $region310: #{_lambda_.1} parent=1 // pred_check
      _
    $region311: #{_lambda_.1} parent=1 // pred_check_branch
      %341 = sbr.rel (0) target = $region313
    $region312: #{_lambda_.1} parent=1 // pred_region
      %s343 = ssub.s32 16, 16
      %344 = vsyncadd [#allocation5], %s343
      %s346 = sshll.u32 [#allocation6], 4
      %s347 = int_to_ptr.vmem [resolvable:$true] %s346
      %349 = dma.hbm_to_vmem [thread:$0]  %s155, 16, %s347, [#allocation5]
    $region313: #{_lambda_.1} parent=1 // pred_fallthru
      _
    // Predicated region
    $region314: #{_lambda_.1} parent=1 // pred_check
      _
    $region315: #{_lambda_.1} parent=1 // pred_check_branch
      %351 = sbr.rel (0) target = $region317
    $region316: #{_lambda_.1} parent=1 // pred_region
      _
    $region317: #{_lambda_.1} parent=1 // pred_fallthru
      _
    // Predicated region
    $region318: #{_lambda_.1} parent=1 // pred_check
      _
    $region319: #{_lambda_.1} parent=1 // pred_check_branch
      %353 = sbr.rel (0) target = $region321
    $region320: #{_lambda_.1} parent=1 // pred_region
      _
    $region321: #{_lambda_.1} parent=1 // pred_fallthru
      _
    // Predicated region
    $region322: #{_lambda_.1} parent=1 // pred_check
      _
    $region323: #{_lambda_.1} parent=1 // pred_check_branch
      %355 = sbr.rel (0) target = $region325
    $region324: #{_lambda_.1} parent=1 // pred_region
      _
    $region325: #{_lambda_.1} parent=1 // pred_fallthru
      _
    // Predicated region
    $region326: #{_lambda_.1} parent=1 // pred_check
      _
    $region327: #{_lambda_.1} parent=1 // pred_check_branch
      %357 = sbr.rel (0) target = $region329
    $region328: #{_lambda_.1} parent=1 // pred_region
      %358 = dma.done [#allocation3], 16
    $region329: #{_lambda_.1} parent=1 // pred_fallthru
      _
    // Predicated region
    $region330: #{_lambda_.1} parent=1 // pred_check
      _
    $region331: #{_lambda_.1} parent=1 // pred_check_branch
      %360 = sbr.rel (0) target = $region333
    $region332: #{_lambda_.1} parent=1 // pred_region
      %361 = dma.done [#allocation5], 16
    $region333: #{_lambda_.1} parent=1 // pred_fallthru
      _
    // Predicated region
    $region334: #{_lambda_.1} parent=1 // pred_check
      _
    $region335: #{_lambda_.1} parent=1 // pred_check_branch
      %363 = sbr.rel (0) target = $region337
    $region336: #{_lambda_.1} parent=1 // pred_region
      %364 = dma.done [#allocation5], 16
    $region337: #{_lambda_.1} parent=1 // pred_fallthru
      _
    %v365 = vld [vmem:[%s3] sm:$0xff]
    %v366 = vld [vmem:[%s3 + $0x8] sm:$0xff]
    %v367 = vld [vmem:[%s3 + $0x10] sm:$0xff]
    %v368 = vld [vmem:[%s3 + $0x18] sm:$0xff]
    %v369 = vld [vmem:[%s5] sm:$0xff]
    %v370 = vld [vmem:[%s5 + $0x8] sm:$0xff]
    %v371 = vld [vmem:[%s5 + $0x10] sm:$0xff]
    %v372 = vld [vmem:[%s5 + $0x18] sm:$0xff]
    %v373 = vld [vmem:[%s7] sm:$0xff]
    %v374 = vld [vmem:[%s7 + $0x8] sm:$0xff]
    %v375 = vld [vmem:[%s7 + $0x10] sm:$0xff]
    %v376 = vld [vmem:[%s7 + $0x18] sm:$0xff]
    %v377 = vld [vmem:[%s7 + $0x20] sm:$0xff]
    %v378 = vld [vmem:[%s7 + $0x28] sm:$0xff]
    %v379 = vld [vmem:[%s7 + $0x30] sm:$0xff]
    %v380 = vld [vmem:[%s7 + $0x38] sm:$0xff]
    %v381 = vld [vmem:[%s9] sm:$0xff]
    %v382 = vld [vmem:[%s9 + $0x8] sm:$0xff]
    %v383 = vld [vmem:[%s9 + $0x10] sm:$0xff]
    %v384 = vld [vmem:[%s9 + $0x18] sm:$0xff]
    %v385 = vld [vmem:[%s9 + $0x20] sm:$0xff]
    %v386 = vld [vmem:[%s9 + $0x28] sm:$0xff]
    %v387 = vld [vmem:[%s9 + $0x30] sm:$0xff]
    %v388 = vld [vmem:[%s9 + $0x38] sm:$0xff]
    %v389 = vld [vmem:[%s11] sm:$0xff]
    %v390 = vld [vmem:[%s11 + $0x8] sm:$0xff]
    %v391 = vld [vmem:[%s13] sm:$0xff]
    %v392 = vld [vmem:[%s13 + $0x8] sm:$0xff]
    %v393 = vld [vmem:[%s15] sm:$0xff]
    %v394 = vld [vmem:[%s15 + $0x8] sm:$0xff]
    %v395 = vld [vmem:[%s17] sm:$0xff]
    %v396 = vld [vmem:[%s17 + $0x8] sm:$0xff]
    %v397 = vld [vmem:[%s19] sm:$0xff]
    %v398 = vld [vmem:[%s19 + $0x8] sm:$0xff]
    %v399 = vld [vmem:[%s21] sm:$0xff]
    %v400 = vld [vmem:[%s21 + $0x8] sm:$0xff]
    %v401 = vld [vmem:[%s23] sm:$0xff]
    %v402 = vld [vmem:[%s23 + $0x8] sm:$0xff]
    %v403 = vld [vmem:[%s23 + $0x10] sm:$0xff]
    %v404 = vld [vmem:[%s23 + $0x18] sm:$0xff]
    %v405 = vld [vmem:[%s25] sm:$0xff]
    %v406 = vld [vmem:[%s25 + $0x8] sm:$0xff]
    %v407 = vld [vmem:[%s25 + $0x10] sm:$0xff]
    %v408 = vld [vmem:[%s25 + $0x18] sm:$0xff]
    %v409 = vld [vmem:[%s27] sm:$0xff]
    %v410 = vld [vmem:[%s27 + $0x8] sm:$0xff]
    %v411 = vld [vmem:[%s27 + $0x10] sm:$0xff]
    %v412 = vld [vmem:[%s27 + $0x18] sm:$0xff]
    %v413 = vld [vmem:[%s29] sm:$0xff]
    %v414 = vld [vmem:[%s29 + $0x8] sm:$0xff]
    %v415 = vld [vmem:[%s29 + $0x10] sm:$0xff]
    %v416 = vld [vmem:[%s29 + $0x18] sm:$0xff]
    %v417 = vld [vmem:[%s31] sm:$0x1]
    %v418 = vld [vmem:[%s33] sm:$0x1]
    %v419 = vld [vmem:[%s35] sm:$0x3]
    %v420 = vld [vmem:[%s37] sm:$0x3]
    %v421 = vld [vmem:[%s39] sm:$0x1]
    %v422 = vld [vmem:[%s41] sm:$0x1]
    %v423 = vld [vmem:[%s43] sm:$0x1]
    %v424 = vld [vmem:[%s45] sm:$0xff]
    %v425 = vld [vmem:[%s45 + $0x8] sm:$0xff]
    %v426 = vld [vmem:[%s47] sm:$0xff]
    %v427 = vld [vmem:[%s47 + $0x8] sm:$0xff]
    %v428 = vld [vmem:[%s49] sm:$0xff]
    %v429 = vld [vmem:[%s49 + $0x8] sm:$0xff]
    %v430 = vld [vmem:[%s51] sm:$0x3]
    %v431 = vld [vmem:[%s53] sm:$0xff]
    %v432 = vld [vmem:[%s53 + $0x8] sm:$0xff]
    %v433 = vld [vmem:[%s53 + $0x10] sm:$0xff]
    %v434 = vld [vmem:[%s53 + $0x18] sm:$0xff]
    %v435 = vld [vmem:[%s53 + $0x20] sm:$0xff]
    %v436 = vld [vmem:[%s53 + $0x28] sm:$0xff]
    %v437 = vld [vmem:[%s53 + $0x30] sm:$0xff]
    %v438 = vld [vmem:[%s53 + $0x38] sm:$0xff]
    %v439 = vld [vmem:[%s53 + $0x40] sm:$0xff]
    %v440 = vld [vmem:[%s53 + $0x48] sm:$0xff]
    %v441 = vld [vmem:[%s53 + $0x50] sm:$0xff]
    %v442 = vld [vmem:[%s53 + $0x58] sm:$0xff]
    %v443 = vld [vmem:[%s53 + $0x60] sm:$0xff]
    %v444 = vld [vmem:[%s53 + $0x68] sm:$0xff]
    %v445 = vld [vmem:[%s53 + $0x70] sm:$0xff]
    %v446 = vld [vmem:[%s53 + $0x78] sm:$0xff]
    %v447 = vld [vmem:[%s55] sm:$0xff]
    %v448 = vld [vmem:[%s55 + $0x8] sm:$0xff]
    %v449 = vld [vmem:[%s55 + $0x10] sm:$0xff]
    %v450 = vld [vmem:[%s55 + $0x18] sm:$0xff]
    %v451 = vld [vmem:[%s55 + $0x20] sm:$0xff]
    %v452 = vld [vmem:[%s55 + $0x28] sm:$0xff]
    %v453 = vld [vmem:[%s55 + $0x30] sm:$0xff]
    %v454 = vld [vmem:[%s55 + $0x38] sm:$0xff]
    %v455 = vld [vmem:[%s55 + $0x40] sm:$0xff]
    %v456 = vld [vmem:[%s55 + $0x48] sm:$0xff]
    %v457 = vld [vmem:[%s55 + $0x50] sm:$0xff]
    %v458 = vld [vmem:[%s55 + $0x58] sm:$0xff]
    %v459 = vld [vmem:[%s55 + $0x60] sm:$0xff]
    %v460 = vld [vmem:[%s55 + $0x68] sm:$0xff]
    %v461 = vld [vmem:[%s55 + $0x70] sm:$0xff]
    %v462 = vld [vmem:[%s55 + $0x78] sm:$0xff]
    %v463 = vld [vmem:[%s57] sm:$0xff]
    %v464 = vld [vmem:[%s57 + $0x8] sm:$0xff]
    %v465 = vld [vmem:[%s57 + $0x10] sm:$0xff]
    %v466 = vld [vmem:[%s57 + $0x18] sm:$0xff]
    %v467 = vld [vmem:[%s57 + $0x20] sm:$0xff]
    %v468 = vld [vmem:[%s57 + $0x28] sm:$0xff]
    %v469 = vld [vmem:[%s57 + $0x30] sm:$0xff]
    %v470 = vld [vmem:[%s57 + $0x38] sm:$0xff]
    %v471 = vld [vmem:[%s57 + $0x40] sm:$0xff]
    %v472 = vld [vmem:[%s57 + $0x48] sm:$0xff]
    %v473 = vld [vmem:[%s57 + $0x50] sm:$0xff]
    %v474 = vld [vmem:[%s57 + $0x58] sm:$0xff]
    %v475 = vld [vmem:[%s57 + $0x60] sm:$0xff]
    %v476 = vld [vmem:[%s57 + $0x68] sm:$0xff]
    %v477 = vld [vmem:[%s57 + $0x70] sm:$0xff]
    %v478 = vld [vmem:[%s57 + $0x78] sm:$0xff]
    %v479 = vld [vmem:[%s59] sm:$0x1]
    %v480 = vld [vmem:[%s61] sm:$0xff]
    %v481 = vld [vmem:[%s61 + $0x8] sm:$0xff]
    %v482 = vld [vmem:[%s63] sm:$0xff]
    %v483 = vld [vmem:[%s63 + $0x8] sm:$0xff]
    %v484 = vld [vmem:[%s65] sm:$0xff]
    %v485 = vld [vmem:[%s65 + $0x8] sm:$0xff]
    %v486 = vld [vmem:[%s67] sm:$0xff]
    %v487 = vld [vmem:[%s67 + $0x8] sm:$0xff]
    %v488 = vld [vmem:[%s69] sm:$0x1]
    %v489 = vld [vmem:[%s71] sm:$0xff]
    %v490 = vld [vmem:[%s71 + $0x8] sm:$0xff]
    %v491 = vld [vmem:[%s71 + $0x10] sm:$0xff]
    %v492 = vld [vmem:[%s71 + $0x18] sm:$0xff]
    %v493 = vld [vmem:[%s71 + $0x20] sm:$0xff]
    %v494 = vld [vmem:[%s71 + $0x28] sm:$0xff]
    %v495 = vld [vmem:[%s71 + $0x30] sm:$0xff]
    %v496 = vld [vmem:[%s71 + $0x38] sm:$0xff]
    %v497 = vld [vmem:[%s73] sm:$0xff]
    %v498 = vld [vmem:[%s73 + $0x8] sm:$0xff]
    %v499 = vld [vmem:[%s73 + $0x10] sm:$0xff]
    %v500 = vld [vmem:[%s73 + $0x18] sm:$0xff]
    %v501 = vld [vmem:[%s73 + $0x20] sm:$0xff]
    %v502 = vld [vmem:[%s73 + $0x28] sm:$0xff]
    %v503 = vld [vmem:[%s73 + $0x30] sm:$0xff]
    %v504 = vld [vmem:[%s73 + $0x38] sm:$0xff]
    %v505 = vld [vmem:[%s75] sm:$0xff]
    %v506 = vld [vmem:[%s75 + $0x8] sm:$0xff]
    %v507 = vld [vmem:[%s75 + $0x10] sm:$0xff]
    %v508 = vld [vmem:[%s75 + $0x18] sm:$0xff]
    %v509 = vld [vmem:[%s75 + $0x20] sm:$0xff]
    %v510 = vld [vmem:[%s75 + $0x28] sm:$0xff]
    %v511 = vld [vmem:[%s75 + $0x30] sm:$0xff]
    %v512 = vld [vmem:[%s75 + $0x38] sm:$0xff]
    %v513 = vld [vmem:[%s77] sm:$0xff]
    %v514 = vld [vmem:[%s77 + $0x8] sm:$0xff]
    %v515 = vld [vmem:[%s77 + $0x10] sm:$0xff]
    %v516 = vld [vmem:[%s77 + $0x18] sm:$0xff]
    %v517 = vld [vmem:[%s77 + $0x20] sm:$0xff]
    %v518 = vld [vmem:[%s77 + $0x28] sm:$0xff]
    %v519 = vld [vmem:[%s77 + $0x30] sm:$0xff]
    %v520 = vld [vmem:[%s77 + $0x38] sm:$0xff]
    %v521 = vld [vmem:[%s79] sm:$0x1]
    %v522 = vld [vmem:[%s81] sm:$0x3f]
    %v523 = vld [vmem:[%s83] sm:$0x3f]
    %v524 = vld [vmem:[%s85] sm:$0x3f]
    %v525 = vld [vmem:[%s87] sm:$0x1]
    %v526 = vld [vmem:[%s89] sm:$0x1]
    %v527 = vld [vmem:[%s91] sm:$0x1]
    %v528 = vld [vmem:[%s93] sm:$0xff]
    %v529 = vld [vmem:[%s93 + $0x8] sm:$0xff]
    %v530 = vld [vmem:[%s93 + $0x10] sm:$0xff]
    %v531 = vld [vmem:[%s93 + $0x18] sm:$0xff]
    %v532 = vld [vmem:[%s93 + $0x20] sm:$0xff]
    %v533 = vld [vmem:[%s93 + $0x28] sm:$0xff]
    %v534 = vld [vmem:[%s93 + $0x30] sm:$0xff]
    %v535 = vld [vmem:[%s93 + $0x38] sm:$0xff]
    %v536 = vld [vmem:[%s95] sm:$0x1]
    %v537 = vld [vmem:[%s97] sm:$0xff]
    %v538 = vld [vmem:[%s97 + $0x8] sm:$0xff]
    %v539 = vld [vmem:[%s97 + $0x10] sm:$0xff]
    %v540 = vld [vmem:[%s97 + $0x18] sm:$0xff]
    %v541 = vld [vmem:[%s97 + $0x20] sm:$0xff]
    %v542 = vld [vmem:[%s97 + $0x28] sm:$0xff]
    %v543 = vld [vmem:[%s97 + $0x30] sm:$0xff]
    %v544 = vld [vmem:[%s97 + $0x38] sm:$0xff]
    %v545 = vld [vmem:[%s99] sm:$0x1]
    %v546 = vld [vmem:[%s101] sm:$0xff]
    %v547 = vld [vmem:[%s101 + $0x8] sm:$0xff]
    %v548 = vld [vmem:[%s101 + $0x10] sm:$0xff]
    %v549 = vld [vmem:[%s101 + $0x18] sm:$0xff]
    %v550 = vld [vmem:[%s101 + $0x20] sm:$0xff]
    %v551 = vld [vmem:[%s101 + $0x28] sm:$0xff]
    %v552 = vld [vmem:[%s101 + $0x30] sm:$0xff]
    %v553 = vld [vmem:[%s101 + $0x38] sm:$0xff]
    %v554 = vld [vmem:[%s103] sm:$0x1]
    %v555 = vld [vmem:[%s105] sm:$0xff]
    %v556 = vld [vmem:[%s105 + $0x8] sm:$0xff]
    %v557 = vld [vmem:[%s105 + $0x10] sm:$0xff]
    %v558 = vld [vmem:[%s105 + $0x18] sm:$0xff]
    %v559 = vld [vmem:[%s105 + $0x20] sm:$0xff]
    %v560 = vld [vmem:[%s105 + $0x28] sm:$0xff]
    %v561 = vld [vmem:[%s105 + $0x30] sm:$0xff]
    %v562 = vld [vmem:[%s105 + $0x38] sm:$0xff]
    %v563 = vld [vmem:[%s107] sm:$0x3]
    %v564 = vld [vmem:[%s109] sm:$0x3]
    %v565 = vld [vmem:[%s111] sm:$0x3]
    %v566 = vld [vmem:[%s113] sm:$0xff]
    %v567 = vld [vmem:[%s113 + $0x8] sm:$0xff]
    %v568 = vld [vmem:[%s113 + $0x10] sm:$0xff]
    %v569 = vld [vmem:[%s113 + $0x18] sm:$0xff]
    %v570 = vld [vmem:[%s113 + $0x20] sm:$0xff]
    %v571 = vld [vmem:[%s113 + $0x28] sm:$0xff]
    %v572 = vld [vmem:[%s113 + $0x30] sm:$0xff]
    %v573 = vld [vmem:[%s113 + $0x38] sm:$0xff]
    %v574 = vld [vmem:[%s113 + $0x40] sm:$0xff]
    %v575 = vld [vmem:[%s113 + $0x48] sm:$0xff]
    %v576 = vld [vmem:[%s113 + $0x50] sm:$0xff]
    %v577 = vld [vmem:[%s113 + $0x58] sm:$0xff]
    %v578 = vld [vmem:[%s113 + $0x60] sm:$0xff]
    %v579 = vld [vmem:[%s113 + $0x68] sm:$0xff]
    %v580 = vld [vmem:[%s113 + $0x70] sm:$0xff]
    %v581 = vld [vmem:[%s113 + $0x78] sm:$0xff]
    %v582 = vld [vmem:[%s113 + $0x80] sm:$0xff]
    %v583 = vld [vmem:[%s113 + $0x88] sm:$0xff]
    %v584 = vld [vmem:[%s113 + $0x90] sm:$0xff]
    %v585 = vld [vmem:[%s113 + $0x98] sm:$0xff]
    %v586 = vld [vmem:[%s113 + $0xa0] sm:$0xff]
    %v587 = vld [vmem:[%s113 + $0xa8] sm:$0xff]
    %v588 = vld [vmem:[%s113 + $0xb0] sm:$0xff]
    %v589 = vld [vmem:[%s113 + $0xb8] sm:$0xff]
    %v590 = vld [vmem:[%s113 + $0xc0] sm:$0xff]
    %v591 = vld [vmem:[%s113 + $0xc8] sm:$0xff]
    %v592 = vld [vmem:[%s113 + $0xd0] sm:$0xff]
    %v593 = vld [vmem:[%s113 + $0xd8] sm:$0xff]
    %v594 = vld [vmem:[%s113 + $0xe0] sm:$0xff]
    %v595 = vld [vmem:[%s113 + $0xe8] sm:$0xff]
    %v596 = vld [vmem:[%s113 + $0xf0] sm:$0xff]
    %v597 = vld [vmem:[%s113 + $0xf8] sm:$0xff]
    %v598 = vld [vmem:[%s113 + $0x100] sm:$0xff]
    %v599 = vld [vmem:[%s113 + $0x108] sm:$0xff]
    %v600 = vld [vmem:[%s113 + $0x110] sm:$0xff]
    %v601 = vld [vmem:[%s113 + $0x118] sm:$0xff]
    %v602 = vld [vmem:[%s113 + $0x120] sm:$0xff]
    %v603 = vld [vmem:[%s113 + $0x128] sm:$0xff]
    %v604 = vld [vmem:[%s113 + $0x130] sm:$0xff]
    %v605 = vld [vmem:[%s113 + $0x138] sm:$0xff]
    %v606 = vld [vmem:[%s113 + $0x140] sm:$0xff]
    %v607 = vld [vmem:[%s113 + $0x148] sm:$0xff]
    %v608 = vld [vmem:[%s113 + $0x150] sm:$0xff]
    %v609 = vld [vmem:[%s113 + $0x158] sm:$0xff]
    %v610 = vld [vmem:[%s113 + $0x160] sm:$0xff]
    %v611 = vld [vmem:[%s113 + $0x168] sm:$0xff]
    %v612 = vld [vmem:[%s113 + $0x170] sm:$0xff]
    %v613 = vld [vmem:[%s113 + $0x178] sm:$0xff]
    %v614 = vld [vmem:[%s113 + $0x180] sm:$0xff]
    %v615 = vld [vmem:[%s113 + $0x188] sm:$0xff]
    %v616 = vld [vmem:[%s113 + $0x190] sm:$0xff]
    %v617 = vld [vmem:[%s113 + $0x198] sm:$0xff]
    %v618 = vld [vmem:[%s113 + $0x1a0] sm:$0xff]
    %v619 = vld [vmem:[%s113 + $0x1a8] sm:$0xff]
    %v620 = vld [vmem:[%s113 + $0x1b0] sm:$0xff]
    %v621 = vld [vmem:[%s113 + $0x1b8] sm:$0xff]
    %v622 = vld [vmem:[%s113 + $0x1c0] sm:$0xff]
    %v623 = vld [vmem:[%s113 + $0x1c8] sm:$0xff]
    %v624 = vld [vmem:[%s113 + $0x1d0] sm:$0xff]
    %v625 = vld [vmem:[%s113 + $0x1d8] sm:$0xff]
    %v626 = vld [vmem:[%s113 + $0x1e0] sm:$0xff]
    %v627 = vld [vmem:[%s113 + $0x1e8] sm:$0xff]
    %v628 = vld [vmem:[%s113 + $0x1f0] sm:$0xff]
    %v629 = vld [vmem:[%s113 + $0x1f8] sm:$0xff]
    %v630 = vld [vmem:[%s115] sm:$0x3]
    %v631 = vld [vmem:[%s117] sm:$0xff]
    %v632 = vld [vmem:[%s117 + $0x8] sm:$0xff]
    %v633 = vld [vmem:[%s117 + $0x10] sm:$0xff]
    %v634 = vld [vmem:[%s117 + $0x18] sm:$0xff]
    %v635 = vld [vmem:[%s117 + $0x20] sm:$0xff]
    %v636 = vld [vmem:[%s117 + $0x28] sm:$0xff]
    %v637 = vld [vmem:[%s117 + $0x30] sm:$0xff]
    %v638 = vld [vmem:[%s117 + $0x38] sm:$0xff]
    %v639 = vld [vmem:[%s117 + $0x40] sm:$0xff]
    %v640 = vld [vmem:[%s117 + $0x48] sm:$0xff]
    %v641 = vld [vmem:[%s117 + $0x50] sm:$0xff]
    %v642 = vld [vmem:[%s117 + $0x58] sm:$0xff]
    %v643 = vld [vmem:[%s117 + $0x60] sm:$0xff]
    %v644 = vld [vmem:[%s117 + $0x68] sm:$0xff]
    %v645 = vld [vmem:[%s117 + $0x70] sm:$0xff]
    %v646 = vld [vmem:[%s117 + $0x78] sm:$0xff]
    %v647 = vld [vmem:[%s117 + $0x80] sm:$0xff]
    %v648 = vld [vmem:[%s117 + $0x88] sm:$0xff]
    %v649 = vld [vmem:[%s117 + $0x90] sm:$0xff]
    %v650 = vld [vmem:[%s117 + $0x98] sm:$0xff]
    %v651 = vld [vmem:[%s117 + $0xa0] sm:$0xff]
    %v652 = vld [vmem:[%s117 + $0xa8] sm:$0xff]
    %v653 = vld [vmem:[%s117 + $0xb0] sm:$0xff]
    %v654 = vld [vmem:[%s117 + $0xb8] sm:$0xff]
    %v655 = vld [vmem:[%s117 + $0xc0] sm:$0xff]
    %v656 = vld [vmem:[%s117 + $0xc8] sm:$0xff]
    %v657 = vld [vmem:[%s117 + $0xd0] sm:$0xff]
    %v658 = vld [vmem:[%s117 + $0xd8] sm:$0xff]
    %v659 = vld [vmem:[%s117 + $0xe0] sm:$0xff]
    %v660 = vld [vmem:[%s117 + $0xe8] sm:$0xff]
    %v661 = vld [vmem:[%s117 + $0xf0] sm:$0xff]
    %v662 = vld [vmem:[%s117 + $0xf8] sm:$0xff]
    %v663 = vld [vmem:[%s117 + $0x100] sm:$0xff]
    %v664 = vld [vmem:[%s117 + $0x108] sm:$0xff]
    %v665 = vld [vmem:[%s117 + $0x110] sm:$0xff]
    %v666 = vld [vmem:[%s117 + $0x118] sm:$0xff]
    %v667 = vld [vmem:[%s117 + $0x120] sm:$0xff]
    %v668 = vld [vmem:[%s117 + $0x128] sm:$0xff]
    %v669 = vld [vmem:[%s117 + $0x130] sm:$0xff]
    %v670 = vld [vmem:[%s117 + $0x138] sm:$0xff]
    %v671 = vld [vmem:[%s117 + $0x140] sm:$0xff]
    %v672 = vld [vmem:[%s117 + $0x148] sm:$0xff]
    %v673 = vld [vmem:[%s117 + $0x150] sm:$0xff]
    %v674 = vld [vmem:[%s117 + $0x158] sm:$0xff]
    %v675 = vld [vmem:[%s117 + $0x160] sm:$0xff]
    %v676 = vld [vmem:[%s117 + $0x168] sm:$0xff]
    %v677 = vld [vmem:[%s117 + $0x170] sm:$0xff]
    %v678 = vld [vmem:[%s117 + $0x178] sm:$0xff]
    %v679 = vld [vmem:[%s117 + $0x180] sm:$0xff]
    %v680 = vld [vmem:[%s117 + $0x188] sm:$0xff]
    %v681 = vld [vmem:[%s117 + $0x190] sm:$0xff]
    %v682 = vld [vmem:[%s117 + $0x198] sm:$0xff]
    %v683 = vld [vmem:[%s117 + $0x1a0] sm:$0xff]
    %v684 = vld [vmem:[%s117 + $0x1a8] sm:$0xff]
    %v685 = vld [vmem:[%s117 + $0x1b0] sm:$0xff]
    %v686 = vld [vmem:[%s117 + $0x1b8] sm:$0xff]
    %v687 = vld [vmem:[%s117 + $0x1c0] sm:$0xff]
    %v688 = vld [vmem:[%s117 + $0x1c8] sm:$0xff]
    %v689 = vld [vmem:[%s117 + $0x1d0] sm:$0xff]
    %v690 = vld [vmem:[%s117 + $0x1d8] sm:$0xff]
    %v691 = vld [vmem:[%s117 + $0x1e0] sm:$0xff]
    %v692 = vld [vmem:[%s117 + $0x1e8] sm:$0xff]
    %v693 = vld [vmem:[%s117 + $0x1f0] sm:$0xff]
    %v694 = vld [vmem:[%s117 + $0x1f8] sm:$0xff]
    %v695 = vld [vmem:[%s119] sm:$0x3]
    %v696 = vld [vmem:[%s121] sm:$0xff]
    %v697 = vld [vmem:[%s121 + $0x8] sm:$0xff]
    %v698 = vld [vmem:[%s121 + $0x10] sm:$0xff]
    %v699 = vld [vmem:[%s121 + $0x18] sm:$0xff]
    %v700 = vld [vmem:[%s121 + $0x20] sm:$0xff]
    %v701 = vld [vmem:[%s121 + $0x28] sm:$0xff]
    %v702 = vld [vmem:[%s121 + $0x30] sm:$0xff]
    %v703 = vld [vmem:[%s121 + $0x38] sm:$0xff]
    %v704 = vld [vmem:[%s121 + $0x40] sm:$0xff]
    %v705 = vld [vmem:[%s121 + $0x48] sm:$0xff]
    %v706 = vld [vmem:[%s121 + $0x50] sm:$0xff]
    %v707 = vld [vmem:[%s121 + $0x58] sm:$0xff]
    %v708 = vld [vmem:[%s121 + $0x60] sm:$0xff]
    %v709 = vld [vmem:[%s121 + $0x68] sm:$0xff]
    %v710 = vld [vmem:[%s121 + $0x70] sm:$0xff]
    %v711 = vld [vmem:[%s121 + $0x78] sm:$0xff]
    %v712 = vld [vmem:[%s121 + $0x80] sm:$0xff]
    %v713 = vld [vmem:[%s121 + $0x88] sm:$0xff]
    %v714 = vld [vmem:[%s121 + $0x90] sm:$0xff]
    %v715 = vld [vmem:[%s121 + $0x98] sm:$0xff]
    %v716 = vld [vmem:[%s121 + $0xa0] sm:$0xff]
    %v717 = vld [vmem:[%s121 + $0xa8] sm:$0xff]
    %v718 = vld [vmem:[%s121 + $0xb0] sm:$0xff]
    %v719 = vld [vmem:[%s121 + $0xb8] sm:$0xff]
    %v720 = vld [vmem:[%s121 + $0xc0] sm:$0xff]
    %v721 = vld [vmem:[%s121 + $0xc8] sm:$0xff]
    %v722 = vld [vmem:[%s121 + $0xd0] sm:$0xff]
    %v723 = vld [vmem:[%s121 + $0xd8] sm:$0xff]
    %v724 = vld [vmem:[%s121 + $0xe0] sm:$0xff]
    %v725 = vld [vmem:[%s121 + $0xe8] sm:$0xff]
    %v726 = vld [vmem:[%s121 + $0xf0] sm:$0xff]
    %v727 = vld [vmem:[%s121 + $0xf8] sm:$0xff]
    %v728 = vld [vmem:[%s121 + $0x100] sm:$0xff]
    %v729 = vld [vmem:[%s121 + $0x108] sm:$0xff]
    %v730 = vld [vmem:[%s121 + $0x110] sm:$0xff]
    %v731 = vld [vmem:[%s121 + $0x118] sm:$0xff]
    %v732 = vld [vmem:[%s121 + $0x120] sm:$0xff]
    %v733 = vld [vmem:[%s121 + $0x128] sm:$0xff]
    %v734 = vld [vmem:[%s121 + $0x130] sm:$0xff]
    %v735 = vld [vmem:[%s121 + $0x138] sm:$0xff]
    %v736 = vld [vmem:[%s121 + $0x140] sm:$0xff]
    %v737 = vld [vmem:[%s121 + $0x148] sm:$0xff]
    %v738 = vld [vmem:[%s121 + $0x150] sm:$0xff]
    %v739 = vld [vmem:[%s121 + $0x158] sm:$0xff]
    %v740 = vld [vmem:[%s121 + $0x160] sm:$0xff]
    %v741 = vld [vmem:[%s121 + $0x168] sm:$0xff]
    %v742 = vld [vmem:[%s121 + $0x170] sm:$0xff]
    %v743 = vld [vmem:[%s121 + $0x178] sm:$0xff]
    %v744 = vld [vmem:[%s121 + $0x180] sm:$0xff]
    %v745 = vld [vmem:[%s121 + $0x188] sm:$0xff]
    %v746 = vld [vmem:[%s121 + $0x190] sm:$0xff]
    %v747 = vld [vmem:[%s121 + $0x198] sm:$0xff]
    %v748 = vld [vmem:[%s121 + $0x1a0] sm:$0xff]
    %v749 = vld [vmem:[%s121 + $0x1a8] sm:$0xff]
    %v750 = vld [vmem:[%s121 + $0x1b0] sm:$0xff]
    %v751 = vld [vmem:[%s121 + $0x1b8] sm:$0xff]
    %v752 = vld [vmem:[%s121 + $0x1c0] sm:$0xff]
    %v753 = vld [vmem:[%s121 + $0x1c8] sm:$0xff]
    %v754 = vld [vmem:[%s121 + $0x1d0] sm:$0xff]
    %v755 = vld [vmem:[%s121 + $0x1d8] sm:$0xff]
    %v756 = vld [vmem:[%s121 + $0x1e0] sm:$0xff]
    %v757 = vld [vmem:[%s121 + $0x1e8] sm:$0xff]
    %v758 = vld [vmem:[%s121 + $0x1f0] sm:$0xff]
    %v759 = vld [vmem:[%s121 + $0x1f8] sm:$0xff]
    %v760 = vld [vmem:[%s123] sm:$0x3]
    %v761 = vld [vmem:[%s125] sm:$0xff]
    %v762 = vld [vmem:[%s125 + $0x8] sm:$0xff]
    %v763 = vld [vmem:[%s125 + $0x10] sm:$0xff]
    %v764 = vld [vmem:[%s125 + $0x18] sm:$0xff]
    %v765 = vld [vmem:[%s125 + $0x20] sm:$0xff]
    %v766 = vld [vmem:[%s125 + $0x28] sm:$0xff]
    %v767 = vld [vmem:[%s125 + $0x30] sm:$0xff]
    %v768 = vld [vmem:[%s125 + $0x38] sm:$0xff]
    %v769 = vld [vmem:[%s125 + $0x40] sm:$0xff]
    %v770 = vld [vmem:[%s125 + $0x48] sm:$0xff]
    %v771 = vld [vmem:[%s125 + $0x50] sm:$0xff]
    %v772 = vld [vmem:[%s125 + $0x58] sm:$0xff]
    %v773 = vld [vmem:[%s125 + $0x60] sm:$0xff]
    %v774 = vld [vmem:[%s125 + $0x68] sm:$0xff]
    %v775 = vld [vmem:[%s125 + $0x70] sm:$0xff]
    %v776 = vld [vmem:[%s125 + $0x78] sm:$0xff]
    %v777 = vld [vmem:[%s125 + $0x80] sm:$0xff]
    %v778 = vld [vmem:[%s125 + $0x88] sm:$0xff]
    %v779 = vld [vmem:[%s125 + $0x90] sm:$0xff]
    %v780 = vld [vmem:[%s125 + $0x98] sm:$0xff]
    %v781 = vld [vmem:[%s125 + $0xa0] sm:$0xff]
    %v782 = vld [vmem:[%s125 + $0xa8] sm:$0xff]
    %v783 = vld [vmem:[%s125 + $0xb0] sm:$0xff]
    %v784 = vld [vmem:[%s125 + $0xb8] sm:$0xff]
    %v785 = vld [vmem:[%s125 + $0xc0] sm:$0xff]
    %v786 = vld [vmem:[%s125 + $0xc8] sm:$0xff]
    %v787 = vld [vmem:[%s125 + $0xd0] sm:$0xff]
    %v788 = vld [vmem:[%s125 + $0xd8] sm:$0xff]
    %v789 = vld [vmem:[%s125 + $0xe0] sm:$0xff]
    %v790 = vld [vmem:[%s125 + $0xe8] sm:$0xff]
    %v791 = vld [vmem:[%s125 + $0xf0] sm:$0xff]
    %v792 = vld [vmem:[%s125 + $0xf8] sm:$0xff]
    %v793 = vld [vmem:[%s125 + $0x100] sm:$0xff]
    %v794 = vld [vmem:[%s125 + $0x108] sm:$0xff]
    %v795 = vld [vmem:[%s125 + $0x110] sm:$0xff]
    %v796 = vld [vmem:[%s125 + $0x118] sm:$0xff]
    %v797 = vld [vmem:[%s125 + $0x120] sm:$0xff]
    %v798 = vld [vmem:[%s125 + $0x128] sm:$0xff]
    %v799 = vld [vmem:[%s125 + $0x130] sm:$0xff]
    %v800 = vld [vmem:[%s125 + $0x138] sm:$0xff]
    %v801 = vld [vmem:[%s125 + $0x140] sm:$0xff]
    %v802 = vld [vmem:[%s125 + $0x148] sm:$0xff]
    %v803 = vld [vmem:[%s125 + $0x150] sm:$0xff]
    %v804 = vld [vmem:[%s125 + $0x158] sm:$0xff]
    %v805 = vld [vmem:[%s125 + $0x160] sm:$0xff]
    %v806 = vld [vmem:[%s125 + $0x168] sm:$0xff]
    %v807 = vld [vmem:[%s125 + $0x170] sm:$0xff]
    %v808 = vld [vmem:[%s125 + $0x178] sm:$0xff]
    %v809 = vld [vmem:[%s125 + $0x180] sm:$0xff]
    %v810 = vld [vmem:[%s125 + $0x188] sm:$0xff]
    %v811 = vld [vmem:[%s125 + $0x190] sm:$0xff]
    %v812 = vld [vmem:[%s125 + $0x198] sm:$0xff]
    %v813 = vld [vmem:[%s125 + $0x1a0] sm:$0xff]
    %v814 = vld [vmem:[%s125 + $0x1a8] sm:$0xff]
    %v815 = vld [vmem:[%s125 + $0x1b0] sm:$0xff]
    %v816 = vld [vmem:[%s125 + $0x1b8] sm:$0xff]
    %v817 = vld [vmem:[%s125 + $0x1c0] sm:$0xff]
    %v818 = vld [vmem:[%s125 + $0x1c8] sm:$0xff]
    %v819 = vld [vmem:[%s125 + $0x1d0] sm:$0xff]
    %v820 = vld [vmem:[%s125 + $0x1d8] sm:$0xff]
    %v821 = vld [vmem:[%s125 + $0x1e0] sm:$0xff]
    %v822 = vld [vmem:[%s125 + $0x1e8] sm:$0xff]
    %v823 = vld [vmem:[%s125 + $0x1f0] sm:$0xff]
    %v824 = vld [vmem:[%s125 + $0x1f8] sm:$0xff]
    %v825 = vld [vmem:[%s127] sm:$0x1]
    %v826 = vld [vmem:[%s129] sm:$0x1]
    %v827 = vld [vmem:[%s131] sm:$0x1]
    %v828 = vld [vmem:[%s133] sm:$0xff]
    %v829 = vld [vmem:[%s133 + $0x8] sm:$0xff]
    %v830 = vld [vmem:[%s135] sm:$0x1]
    %v831 = vld [vmem:[%s137] sm:$0xff]
    %v832 = vld [vmem:[%s137 + $0x8] sm:$0xff]
    %v833 = vld [vmem:[%s139] sm:$0x1]
    %v834 = vld [vmem:[%s141] sm:$0xff]
    %v835 = vld [vmem:[%s141 + $0x8] sm:$0xff]
    %v836 = vld [vmem:[#allocation2] sm:$0x1]
    %v837 = vld [vmem:[%s145] sm:$0xff]
    %v838 = vld [vmem:[%s145 + $0x8] sm:$0xff]
    %v839 = vld [vmem:[#allocation4] sm:$0x1]
    %v840 = vld [vmem:[%s149] sm:$0xff]
    %v841 = vld [vmem:[%s149 + $0x8] sm:$0xff]
    %v842 = vld [vmem:[%s149 + $0x10] sm:$0xff]
    %v843 = vld [vmem:[%s149 + $0x18] sm:$0xff]
    %v844 = vld [vmem:[%s149 + $0x20] sm:$0xff]
    %v845 = vld [vmem:[%s149 + $0x28] sm:$0xff]
    %v846 = vld [vmem:[%s149 + $0x30] sm:$0xff]
    %v847 = vld [vmem:[%s149 + $0x38] sm:$0xff]
    %v848 = vld [vmem:[%s149 + $0x40] sm:$0xff]
    %v849 = vld [vmem:[%s149 + $0x48] sm:$0xff]
    %v850 = vld [vmem:[%s149 + $0x50] sm:$0xff]
    %v851 = vld [vmem:[%s149 + $0x58] sm:$0xff]
    %v852 = vld [vmem:[%s149 + $0x60] sm:$0xff]
    %v853 = vld [vmem:[%s149 + $0x68] sm:$0xff]
    %v854 = vld [vmem:[%s149 + $0x70] sm:$0xff]
    %v855 = vld [vmem:[%s149 + $0x78] sm:$0xff]
    %v856 = vld [vmem:[%s149 + $0x80] sm:$0xff]
    %v857 = vld [vmem:[%s149 + $0x88] sm:$0xff]
    %v858 = vld [vmem:[%s149 + $0x90] sm:$0xff]
    %v859 = vld [vmem:[%s149 + $0x98] sm:$0xff]
    %v860 = vld [vmem:[%s149 + $0xa0] sm:$0xff]
    %v861 = vld [vmem:[%s149 + $0xa8] sm:$0xff]
    %v862 = vld [vmem:[%s149 + $0xb0] sm:$0xff]
    %v863 = vld [vmem:[%s149 + $0xb8] sm:$0xff]
    %v864 = vld [vmem:[%s149 + $0xc0] sm:$0xff]
    %v865 = vld [vmem:[%s149 + $0xc8] sm:$0xff]
    %v866 = vld [vmem:[%s149 + $0xd0] sm:$0xff]
    %v867 = vld [vmem:[%s149 + $0xd8] sm:$0xff]
    %v868 = vld [vmem:[%s149 + $0xe0] sm:$0xff]
    %v869 = vld [vmem:[%s149 + $0xe8] sm:$0xff]
    %v870 = vld [vmem:[%s149 + $0xf0] sm:$0xff]
    %v871 = vld [vmem:[%s149 + $0xf8] sm:$0xff]
    %v872 = vld [vmem:[%s151] sm:$0xff]
    %v873 = vld [vmem:[%s151 + $0x8] sm:$0xff]
    %v874 = vld [vmem:[%s151 + $0x10] sm:$0xff]
    %v875 = vld [vmem:[%s151 + $0x18] sm:$0xff]
    %v876 = vld [vmem:[%s151 + $0x20] sm:$0xff]
    %v877 = vld [vmem:[%s151 + $0x28] sm:$0xff]
    %v878 = vld [vmem:[%s151 + $0x30] sm:$0xff]
    %v879 = vld [vmem:[%s151 + $0x38] sm:$0xff]
    %v880 = vld [vmem:[%s151 + $0x40] sm:$0xff]
    %v881 = vld [vmem:[%s151 + $0x48] sm:$0xff]
    %v882 = vld [vmem:[%s151 + $0x50] sm:$0xff]
    %v883 = vld [vmem:[%s151 + $0x58] sm:$0xff]
    %v884 = vld [vmem:[%s151 + $0x60] sm:$0xff]
    %v885 = vld [vmem:[%s151 + $0x68] sm:$0xff]
    %v886 = vld [vmem:[%s151 + $0x70] sm:$0xff]
    %v887 = vld [vmem:[%s151 + $0x78] sm:$0xff]
    %v888 = vld [vmem:[%s151 + $0x80] sm:$0xff]
    %v889 = vld [vmem:[%s151 + $0x88] sm:$0xff]
    %v890 = vld [vmem:[%s151 + $0x90] sm:$0xff]
    %v891 = vld [vmem:[%s151 + $0x98] sm:$0xff]
    %v892 = vld [vmem:[%s151 + $0xa0] sm:$0xff]
    %v893 = vld [vmem:[%s151 + $0xa8] sm:$0xff]
    %v894 = vld [vmem:[%s151 + $0xb0] sm:$0xff]
    %v895 = vld [vmem:[%s151 + $0xb8] sm:$0xff]
    %v896 = vld [vmem:[%s151 + $0xc0] sm:$0xff]
    %v897 = vld [vmem:[%s151 + $0xc8] sm:$0xff]
    %v898 = vld [vmem:[%s151 + $0xd0] sm:$0xff]
    %v899 = vld [vmem:[%s151 + $0xd8] sm:$0xff]
    %v900 = vld [vmem:[%s151 + $0xe0] sm:$0xff]
    %v901 = vld [vmem:[%s151 + $0xe8] sm:$0xff]
    %v902 = vld [vmem:[%s151 + $0xf0] sm:$0xff]
    %v903 = vld [vmem:[%s151 + $0xf8] sm:$0xff]
    %v904 = vld [vmem:[%s153] sm:$0xff]
    %v905 = vld [vmem:[%s153 + $0x8] sm:$0xff]
    %v906 = vld [vmem:[%s153 + $0x10] sm:$0xff]
    %v907 = vld [vmem:[%s153 + $0x18] sm:$0xff]
    %v908 = vld [vmem:[%s153 + $0x20] sm:$0xff]
    %v909 = vld [vmem:[%s153 + $0x28] sm:$0xff]
    %v910 = vld [vmem:[%s153 + $0x30] sm:$0xff]
    %v911 = vld [vmem:[%s153 + $0x38] sm:$0xff]
    %v912 = vld [vmem:[%s153 + $0x40] sm:$0xff]
    %v913 = vld [vmem:[%s153 + $0x48] sm:$0xff]
    %v914 = vld [vmem:[%s153 + $0x50] sm:$0xff]
    %v915 = vld [vmem:[%s153 + $0x58] sm:$0xff]
    %v916 = vld [vmem:[%s153 + $0x60] sm:$0xff]
    %v917 = vld [vmem:[%s153 + $0x68] sm:$0xff]
    %v918 = vld [vmem:[%s153 + $0x70] sm:$0xff]
    %v919 = vld [vmem:[%s153 + $0x78] sm:$0xff]
    %v920 = vld [vmem:[%s153 + $0x80] sm:$0xff]
    %v921 = vld [vmem:[%s153 + $0x88] sm:$0xff]
    %v922 = vld [vmem:[%s153 + $0x90] sm:$0xff]
    %v923 = vld [vmem:[%s153 + $0x98] sm:$0xff]
    %v924 = vld [vmem:[%s153 + $0xa0] sm:$0xff]
    %v925 = vld [vmem:[%s153 + $0xa8] sm:$0xff]
    %v926 = vld [vmem:[%s153 + $0xb0] sm:$0xff]
    %v927 = vld [vmem:[%s153 + $0xb8] sm:$0xff]
    %v928 = vld [vmem:[%s153 + $0xc0] sm:$0xff]
    %v929 = vld [vmem:[%s153 + $0xc8] sm:$0xff]
    %v930 = vld [vmem:[%s153 + $0xd0] sm:$0xff]
    %v931 = vld [vmem:[%s153 + $0xd8] sm:$0xff]
    %v932 = vld [vmem:[%s153 + $0xe0] sm:$0xff]
    %v933 = vld [vmem:[%s153 + $0xe8] sm:$0xff]
    %v934 = vld [vmem:[%s153 + $0xf0] sm:$0xff]
    %v935 = vld [vmem:[%s153 + $0xf8] sm:$0xff]
    %v936 = vld [vmem:[#allocation6] sm:$0x1]
    %v937 = vld [vmem:[%s157] sm:$0x3]
    %v938 = vld [vmem:[%s159] sm:$0x3]
    %v939 = vld [vmem:[%s161] sm:$0x3]
    %v940 = vld [vmem:[%s1] sm:$0xff]
    %v941 = vld [vmem:[%s1 + $0x8] sm:$0xff]
    %v942 = vld [vmem:[%s1 + $0x10] sm:$0xff]
    %v943 = vld [vmem:[%s1 + $0x18] sm:$0xff]
    %v944 = vld [vmem:[%s1 + $0x20] sm:$0xff]
    %v945 = vld [vmem:[%s1 + $0x28] sm:$0xff]
    %v946 = vld [vmem:[%s1 + $0x30] sm:$0xff]
    %v947 = vld [vmem:[%s1 + $0x38] sm:$0xff]
    %vm948 = vcmask 523264
    %v950 = vsel %vm948, %v373, 0
    %v953 = vsel %vm948, %v374, 0
    %v956 = vsel %vm948, %v375, 0
    %v959 = vsel %vm948, %v376, 0
    %v962 = vsel %vm948, %v377, 0
    %v965 = vsel %vm948, %v378, 0
    %v968 = vsel %vm948, %v379, 0
    %v971 = vsel %vm948, %v380, 0
    %973 = vmatprep.subr.mxu0 0.0
    %974 = vmatpush1.msra.mxu0 0.0
    %975 = vmatprep.subr.mxu0 0.0
    %976 = vmatpush1.msra.mxu0 0.0
    %977 = vmatprep.subr.mxu0 0.0
    %978 = vmatpush1.msra.mxu0 0.0
    %979 = vmatprep.subr.mxu0 0.0
    %980 = vmatpush1.msra.mxu0 0.0
    %981 = vmatprep.subr.mxu0 0.0
    %982 = vmatpush1.msra.mxu0 0.0
    %983 = vmatprep.subr.mxu0 0.0
    %984 = vmatpush1.msra.mxu0 0.0
    %985 = vmatprep.subr.mxu0 0.0
    %986 = vmatpush1.msra.mxu0 0.0
    %987 = vmatprep.subr.mxu0 0.0
    %988 = vmatpush1.msra.mxu0 0.0
    %989 = vmatprep.subr.mxu0 0.0
    %990 = vmatpush1.msra.mxu0 %v947
    %991 = vmatprep.subr.mxu0 0.0
    %992 = vmatpush1.msra.mxu0 %v946
    %993 = vmatprep.subr.mxu0 0.0
    %994 = vmatpush1.msra.mxu0 %v945
    %995 = vmatprep.subr.mxu0 0.0
    %996 = vmatpush1.msra.mxu0 %v944
    %997 = vmatprep.subr.mxu0 0.0
    %998 = vmatpush1.msra.mxu0 %v943
    %999 = vmatprep.subr.mxu0 0.0
    %1000 = vmatpush1.msra.mxu0 %v942
    %1001 = vmatprep.subr.mxu0 0.0
    %1002 = vmatpush1.msra.mxu0 %v941
    %1003 = vmatprep.subr.mxu0 0.0
    %1004 = vmatpush1.msra.mxu0 %v940
    %1005 = vmatprep.subr.mxu0 0.0
    %1006 = vmatpush2.msra.mxu0 0.0
    %1007 = vmatprep.subr.mxu0 0.0
    %1008 = vmatpush2.msra.mxu0 0.0
    %1009 = vmatprep.subr.mxu0 0.0
    %1010 = vmatpush2.msra.mxu0 0.0
    %1011 = vmatprep.subr.mxu0 0.0
    %1012 = vmatpush2.msra.mxu0 0.0
    %1013 = vmatprep.subr.mxu0 0.0
    %1014 = vmatpush2.msra.mxu0 0.0
    %1015 = vmatprep.subr.mxu0 0.0
    %1016 = vmatpush2.msra.mxu0 0.0
    %1017 = vmatprep.subr.mxu0 0.0
    %1018 = vmatpush2.msra.mxu0 0.0
    %1019 = vmatprep.subr.mxu0 0.0
    %1020 = vmatpush2.msra.mxu0 0.0
    %1021 = vmatprep.subr.mxu0 0.0
    %1022 = vmatpush2.msra.mxu0 0.0
    %1023 = vmatprep.subr.mxu0 0.0
    %1024 = vmatpush2.msra.mxu0 0.0
    %1025 = vmatprep.subr.mxu0 0.0
    %1026 = vmatpush2.msra.mxu0 0.0
    %1027 = vmatprep.subr.mxu0 0.0
    %1028 = vmatpush2.msra.mxu0 0.0
    %1029 = vmatprep.subr.mxu0 0.0
    %1030 = vmatpush2.msra.mxu0 0.0
    %1031 = vmatprep.subr.mxu0 0.0
    %1032 = vmatpush2.msra.mxu0 0.0
    %1033 = vmatprep.subr.mxu0 0.0
    %1034 = vmatpush2.msra.mxu0 0.0
    %1035 = vmatprep.subr.mxu0 0.0
    %1036 = vmatpush2.msra.mxu0 0.0
    %1037 = vmatprep.mubr.f32.mxu0 0.0
    %1038 = vmatmul.mubr.f32.gmra.mxu0 %v950
    %v1039 = vpop.f32.mrf.mxu0
    %v1040 = vadd.f32 0.0, %v1039
    %v1041 = vpop.f32.mrf.mxu0
    %1042 = vmatprep.mubr.f32.mxu0 0.0
    %1043 = vmatmul.mubr.f32.gmra.mxu0 %v953
    %v1044 = vpop.f32.mrf.mxu0
    %v1045 = vadd.f32 0.0, %v1044
    %v1046 = vpop.f32.mrf.mxu0
    %1047 = vmatprep.mubr.f32.mxu0 0.0
    %1048 = vmatmul.mubr.f32.gmra.mxu0 %v956
    %v1049 = vpop.f32.mrf.mxu0
    %v1050 = vadd.f32 0.0, %v1049
    %v1051 = vpop.f32.mrf.mxu0
    %1052 = vmatprep.mubr.f32.mxu0 0.0
    %1053 = vmatmul.mubr.f32.gmra.mxu0 %v959
    %v1054 = vpop.f32.mrf.mxu0
    %v1055 = vadd.f32 0.0, %v1054
    %v1056 = vpop.f32.mrf.mxu0
    %1057 = vmatprep.mubr.f32.mxu0 0.0
    %1058 = vmatmul.mubr.f32.gmra.mxu0 %v962
    %v1059 = vpop.f32.mrf.mxu0
    %v1060 = vadd.f32 0.0, %v1059
    %v1061 = vpop.f32.mrf.mxu0
    %1062 = vmatprep.mubr.f32.mxu0 0.0
    %1063 = vmatmul.mubr.f32.gmra.mxu0 %v965
    %v1064 = vpop.f32.mrf.mxu0
    %v1065 = vadd.f32 0.0, %v1064
    %v1066 = vpop.f32.mrf.mxu0
    %1067 = vmatprep.mubr.f32.mxu0 0.0
    %1068 = vmatmul.mubr.f32.gmra.mxu0 %v968
    %v1069 = vpop.f32.mrf.mxu0
    %v1070 = vadd.f32 0.0, %v1069
    %v1071 = vpop.f32.mrf.mxu0
    %1072 = vmatprep.mubr.f32.mxu0 0.0
    %1073 = vmatmul.mubr.f32.gmra.mxu0 %v971
    %v1074 = vpop.f32.mrf.mxu0
    %v1075 = vadd.f32 0.0, %v1074
    %v1076 = vpop.f32.mrf.mxu0
    %1077 = vdwg.mxu0
    %vm1078 = vcmask 48128
    %v1080 = vsel %vm1078, %v940, 0
    %v1083 = vsel %vm1078, %v941, 0
    %v1086 = vsel %vm1078, %v942, 0
    %v1089 = vsel %vm1078, %v943, 0
    %v1092 = vsel %vm1078, %v944, 0
    %v1095 = vsel %vm1078, %v945, 0
    %v1098 = vsel %vm1078, %v946, 0
    %v1101 = vsel %vm1078, %v947, 0
    %vm1103 = vcmask 1045504
    %v1105 = vsel %vm1103, %v523, 0
    %1107 = vmatprep.subr.mxu0 0.0
    %1108 = vmatpush1.msra.mxu0 0.0
    %1109 = vmatprep.subr.mxu0 0.0
    %1110 = vmatpush1.msra.mxu0 0.0
    %1111 = vmatprep.subr.mxu0 0.0
    %1112 = vmatpush1.msra.mxu0 0.0
    %1113 = vmatprep.subr.mxu0 0.0
    %1114 = vmatpush1.msra.mxu0 0.0
    %1115 = vmatprep.subr.mxu0 0.0
    %1116 = vmatpush1.msra.mxu0 0.0
    %1117 = vmatprep.subr.mxu0 0.0
    %1118 = vmatpush1.msra.mxu0 0.0
    %1119 = vmatprep.subr.mxu0 0.0
    %1120 = vmatpush1.msra.mxu0 0.0
    %1121 = vmatprep.subr.mxu0 0.0
    %1122 = vmatpush1.msra.mxu0 0.0
    %1123 = vmatprep.subr.mxu0 0.0
    %1124 = vmatpush1.msra.mxu0 0.0
    %1125 = vmatprep.subr.mxu0 0.0
    %1126 = vmatpush1.msra.mxu0 0.0
    %1127 = vmatprep.subr.mxu0 0.0
    %1128 = vmatpush1.msra.mxu0 0.0
    %1129 = vmatprep.subr.mxu0 0.0
    %1130 = vmatpush1.msra.mxu0 0.0
    %1131 = vmatprep.subr.mxu0 0.0
    %1132 = vmatpush1.msra.mxu0 0.0
    %1133 = vmatprep.subr.mxu0 0.0
    %1134 = vmatpush1.msra.mxu0 0.0
    %1135 = vmatprep.subr.mxu0 0.0
    %1136 = vmatpush1.msra.mxu0 0.0
    %1137 = vmatprep.subr.mxu0 0.0
    %1138 = vmatpush1.msra.mxu0 %v1105
    %1139 = vmatprep.subr.mxu0 0.0
    %1140 = vmatpush2.msra.mxu0 0.0
    %1141 = vmatprep.subr.mxu0 0.0
    %1142 = vmatpush2.msra.mxu0 0.0
    %1143 = vmatprep.subr.mxu0 0.0
    %1144 = vmatpush2.msra.mxu0 0.0
    %1145 = vmatprep.subr.mxu0 0.0
    %1146 = vmatpush2.msra.mxu0 0.0
    %1147 = vmatprep.subr.mxu0 0.0
    %1148 = vmatpush2.msra.mxu0 0.0
    %1149 = vmatprep.subr.mxu0 0.0
    %1150 = vmatpush2.msra.mxu0 0.0
    %1151 = vmatprep.subr.mxu0 0.0
    %1152 = vmatpush2.msra.mxu0 0.0
    %1153 = vmatprep.subr.mxu0 0.0
    %1154 = vmatpush2.msra.mxu0 0.0
    %1155 = vmatprep.subr.mxu0 0.0
    %1156 = vmatpush2.msra.mxu0 0.0
    %1157 = vmatprep.subr.mxu0 0.0
    %1158 = vmatpush2.msra.mxu0 0.0
    %1159 = vmatprep.subr.mxu0 0.0
    %1160 = vmatpush2.msra.mxu0 0.0
    %1161 = vmatprep.subr.mxu0 0.0
    %1162 = vmatpush2.msra.mxu0 0.0
    %1163 = vmatprep.subr.mxu0 0.0
    %1164 = vmatpush2.msra.mxu0 0.0
    %1165 = vmatprep.subr.mxu0 0.0
    %1166 = vmatpush2.msra.mxu0 0.0
    %1167 = vmatprep.subr.mxu0 0.0
    %1168 = vmatpush2.msra.mxu0 0.0
    %1169 = vmatprep.subr.mxu0 0.0
    %1170 = vmatpush2.msra.mxu0 0.0
    %1171 = vmatprep.mubr.f32.mxu0 0.0
    %1172 = vmatmul.mubr.f32.gmra.mxu0 %v1080
    %v1173 = vpop.f32.mrf.mxu0
    %v1174 = vadd.f32 0.0, %v1173
    %v1175 = vpop.f32.mrf.mxu0
    %1176 = vmatprep.mubr.f32.mxu0 0.0
    %1177 = vmatmul.mubr.f32.gmra.mxu0 %v1083
    %v1178 = vpop.f32.mrf.mxu0
    %v1179 = vadd.f32 0.0, %v1178
    %v1180 = vpop.f32.mrf.mxu0
    %1181 = vmatprep.mubr.f32.mxu0 0.0
    %1182 = vmatmul.mubr.f32.gmra.mxu0 %v1086
    %v1183 = vpop.f32.mrf.mxu0
    %v1184 = vadd.f32 0.0, %v1183
    %v1185 = vpop.f32.mrf.mxu0
    %1186 = vmatprep.mubr.f32.mxu0 0.0
    %1187 = vmatmul.mubr.f32.gmra.mxu0 %v1089
    %v1188 = vpop.f32.mrf.mxu0
    %v1189 = vadd.f32 0.0, %v1188
    %v1190 = vpop.f32.mrf.mxu0
    %1191 = vmatprep.mubr.f32.mxu0 0.0
    %1192 = vmatmul.mubr.f32.gmra.mxu0 %v1092
    %v1193 = vpop.f32.mrf.mxu0
    %v1194 = vadd.f32 0.0, %v1193
    %v1195 = vpop.f32.mrf.mxu0
    %1196 = vmatprep.mubr.f32.mxu0 0.0
    %1197 = vmatmul.mubr.f32.gmra.mxu0 %v1095
    %v1198 = vpop.f32.mrf.mxu0
    %v1199 = vadd.f32 0.0, %v1198
    %v1200 = vpop.f32.mrf.mxu0
    %1201 = vmatprep.mubr.f32.mxu0 0.0
    %1202 = vmatmul.mubr.f32.gmra.mxu0 %v1098
    %v1203 = vpop.f32.mrf.mxu0
    %v1204 = vadd.f32 0.0, %v1203
    %v1205 = vpop.f32.mrf.mxu0
    %1206 = vmatprep.mubr.f32.mxu0 0.0
    %1207 = vmatmul.mubr.f32.gmra.mxu0 %v1101
    %v1208 = vpop.f32.mrf.mxu0
    %v1209 = vadd.f32 0.0, %v1208
    %v1210 = vpop.f32.mrf.mxu0
    %1211 = vdwg.mxu0
    %v1213 = vsel %vm1078, %v1040, 0
    %v1216 = vsel %vm1078, %v1045, 0
    %v1219 = vsel %vm1078, %v1050, 0
    %v1222 = vsel %vm1078, %v1055, 0
    %v1225 = vsel %vm1078, %v1060, 0
    %v1228 = vsel %vm1078, %v1065, 0
    %v1231 = vsel %vm1078, %v1070, 0
    %v1234 = vsel %vm1078, %v1075, 0
    %v1237 = vsel %vm1103, %v522, 0
    %1239 = vmatprep.subr.mxu0 0.0
    %1240 = vmatpush1.msra.mxu0 0.0
    %1241 = vmatprep.subr.mxu0 0.0
    %1242 = vmatpush1.msra.mxu0 0.0
    %1243 = vmatprep.subr.mxu0 0.0
    %1244 = vmatpush1.msra.mxu0 0.0
    %1245 = vmatprep.subr.mxu0 0.0
    %1246 = vmatpush1.msra.mxu0 0.0
    %1247 = vmatprep.subr.mxu0 0.0
    %1248 = vmatpush1.msra.mxu0 0.0
    %1249 = vmatprep.subr.mxu0 0.0
    %1250 = vmatpush1.msra.mxu0 0.0
    %1251 = vmatprep.subr.mxu0 0.0
    %1252 = vmatpush1.msra.mxu0 0.0
    %1253 = vmatprep.subr.mxu0 0.0
    %1254 = vmatpush1.msra.mxu0 0.0
    %1255 = vmatprep.subr.mxu0 0.0
    %1256 = vmatpush1.msra.mxu0 0.0
    %1257 = vmatprep.subr.mxu0 0.0
    %1258 = vmatpush1.msra.mxu0 0.0
    %1259 = vmatprep.subr.mxu0 0.0
    %1260 = vmatpush1.msra.mxu0 0.0
    %1261 = vmatprep.subr.mxu0 0.0
    %1262 = vmatpush1.msra.mxu0 0.0
    %1263 = vmatprep.subr.mxu0 0.0
    %1264 = vmatpush1.msra.mxu0 0.0
    %1265 = vmatprep.subr.mxu0 0.0
    %1266 = vmatpush1.msra.mxu0 0.0
    %1267 = vmatprep.subr.mxu0 0.0
    %1268 = vmatpush1.msra.mxu0 0.0
    %1269 = vmatprep.subr.mxu0 0.0
    %1270 = vmatpush1.msra.mxu0 %v1237
    %1271 = vmatprep.subr.mxu0 0.0
    %1272 = vmatpush2.msra.mxu0 0.0
    %1273 = vmatprep.subr.mxu0 0.0
    %1274 = vmatpush2.msra.mxu0 0.0
    %1275 = vmatprep.subr.mxu0 0.0
    %1276 = vmatpush2.msra.mxu0 0.0
    %1277 = vmatprep.subr.mxu0 0.0
    %1278 = vmatpush2.msra.mxu0 0.0
    %1279 = vmatprep.subr.mxu0 0.0
    %1280 = vmatpush2.msra.mxu0 0.0
    %1281 = vmatprep.subr.mxu0 0.0
    %1282 = vmatpush2.msra.mxu0 0.0
    %1283 = vmatprep.subr.mxu0 0.0
    %1284 = vmatpush2.msra.mxu0 0.0
    %1285 = vmatprep.subr.mxu0 0.0
    %1286 = vmatpush2.msra.mxu0 0.0
    %1287 = vmatprep.subr.mxu0 0.0
    %1288 = vmatpush2.msra.mxu0 0.0
    %1289 = vmatprep.subr.mxu0 0.0
    %1290 = vmatpush2.msra.mxu0 0.0
    %1291 = vmatprep.subr.mxu0 0.0
    %1292 = vmatpush2.msra.mxu0 0.0
    %1293 = vmatprep.subr.mxu0 0.0
    %1294 = vmatpush2.msra.mxu0 0.0
    %1295 = vmatprep.subr.mxu0 0.0
    %1296 = vmatpush2.msra.mxu0 0.0
    %1297 = vmatprep.subr.mxu0 0.0
    %1298 = vmatpush2.msra.mxu0 0.0
    %1299 = vmatprep.subr.mxu0 0.0
    %1300 = vmatpush2.msra.mxu0 0.0
    %1301 = vmatprep.subr.mxu0 0.0
    %1302 = vmatpush2.msra.mxu0 0.0
    %1303 = vmatprep.mubr.f32.mxu0 0.0
    %1304 = vmatmul.mubr.f32.gmra.mxu0 %v1213
    %v1305 = vpop.f32.mrf.mxu0
    %v1306 = vadd.f32 %v1174, %v1305
    %v1307 = vpop.f32.mrf.mxu0
    %1308 = vmatprep.mubr.f32.mxu0 0.0
    %1309 = vmatmul.mubr.f32.gmra.mxu0 %v1216
    %v1310 = vpop.f32.mrf.mxu0
    %v1311 = vadd.f32 %v1179, %v1310
    %v1312 = vpop.f32.mrf.mxu0
    %1313 = vmatprep.mubr.f32.mxu0 0.0
    %1314 = vmatmul.mubr.f32.gmra.mxu0 %v1219
    %v1315 = vpop.f32.mrf.mxu0
    %v1316 = vadd.f32 %v1184, %v1315
    %v1317 = vpop.f32.mrf.mxu0
    %1318 = vmatprep.mubr.f32.mxu0 0.0
    %1319 = vmatmul.mubr.f32.gmra.mxu0 %v1222
    %v1320 = vpop.f32.mrf.mxu0
    %v1321 = vadd.f32 %v1189, %v1320
    %v1322 = vpop.f32.mrf.mxu0
    %1323 = vmatprep.mubr.f32.mxu0 0.0
    %1324 = vmatmul.mubr.f32.gmra.mxu0 %v1225
    %v1325 = vpop.f32.mrf.mxu0
    %v1326 = vadd.f32 %v1194, %v1325
    %v1327 = vpop.f32.mrf.mxu0
    %1328 = vmatprep.mubr.f32.mxu0 0.0
    %1329 = vmatmul.mubr.f32.gmra.mxu0 %v1228
    %v1330 = vpop.f32.mrf.mxu0
    %v1331 = vadd.f32 %v1199, %v1330
    %v1332 = vpop.f32.mrf.mxu0
    %1333 = vmatprep.mubr.f32.mxu0 0.0
    %1334 = vmatmul.mubr.f32.gmra.mxu0 %v1231
    %v1335 = vpop.f32.mrf.mxu0
    %v1336 = vadd.f32 %v1204, %v1335
    %v1337 = vpop.f32.mrf.mxu0
    %1338 = vmatprep.mubr.f32.mxu0 0.0
    %1339 = vmatmul.mubr.f32.gmra.mxu0 %v1234
    %v1340 = vpop.f32.mrf.mxu0
    %v1341 = vadd.f32 %v1209, %v1340
    %v1342 = vpop.f32.mrf.mxu0
    %1343 = vdwg.mxu0
    %v1345 = vsel %vm948, %v381, 0
    %v1348 = vsel %vm948, %v382, 0
    %v1351 = vsel %vm948, %v383, 0
    %v1354 = vsel %vm948, %v384, 0
    %v1357 = vsel %vm948, %v385, 0
    %v1360 = vsel %vm948, %v386, 0
    %v1363 = vsel %vm948, %v387, 0
    %v1366 = vsel %vm948, %v388, 0
    %1368 = vmatprep.subr.mxu0 0.0
    %1369 = vmatpush1.msra.mxu0 0.0
    %1370 = vmatprep.subr.mxu0 0.0
    %1371 = vmatpush1.msra.mxu0 0.0
    %1372 = vmatprep.subr.mxu0 0.0
    %1373 = vmatpush1.msra.mxu0 0.0
    %1374 = vmatprep.subr.mxu0 0.0
    %1375 = vmatpush1.msra.mxu0 0.0
    %1376 = vmatprep.subr.mxu0 0.0
    %1377 = vmatpush1.msra.mxu0 0.0
    %1378 = vmatprep.subr.mxu0 0.0
    %1379 = vmatpush1.msra.mxu0 0.0
    %1380 = vmatprep.subr.mxu0 0.0
    %1381 = vmatpush1.msra.mxu0 0.0
    %1382 = vmatprep.subr.mxu0 0.0
    %1383 = vmatpush1.msra.mxu0 0.0
    %1384 = vmatprep.subr.mxu0 0.0
    %1385 = vmatpush1.msra.mxu0 %v947
    %1386 = vmatprep.subr.mxu0 0.0
    %1387 = vmatpush1.msra.mxu0 %v946
    %1388 = vmatprep.subr.mxu0 0.0
    %1389 = vmatpush1.msra.mxu0 %v945
    %1390 = vmatprep.subr.mxu0 0.0
    %1391 = vmatpush1.msra.mxu0 %v944
    %1392 = vmatprep.subr.mxu0 0.0
    %1393 = vmatpush1.msra.mxu0 %v943
    %1394 = vmatprep.subr.mxu0 0.0
    %1395 = vmatpush1.msra.mxu0 %v942
    %1396 = vmatprep.subr.mxu0 0.0
    %1397 = vmatpush1.msra.mxu0 %v941
    %1398 = vmatprep.subr.mxu0 0.0
    %1399 = vmatpush1.msra.mxu0 %v940
    %1400 = vmatprep.subr.mxu0 0.0
    %1401 = vmatpush2.msra.mxu0 0.0
    %1402 = vmatprep.subr.mxu0 0.0
    %1403 = vmatpush2.msra.mxu0 0.0
    %1404 = vmatprep.subr.mxu0 0.0
    %1405 = vmatpush2.msra.mxu0 0.0
    %1406 = vmatprep.subr.mxu0 0.0
    %1407 = vmatpush2.msra.mxu0 0.0
    %1408 = vmatprep.subr.mxu0 0.0
    %1409 = vmatpush2.msra.mxu0 0.0
    %1410 = vmatprep.subr.mxu0 0.0
    %1411 = vmatpush2.msra.mxu0 0.0
    %1412 = vmatprep.subr.mxu0 0.0
    %1413 = vmatpush2.msra.mxu0 0.0
    %1414 = vmatprep.subr.mxu0 0.0
    %1415 = vmatpush2.msra.mxu0 0.0
    %1416 = vmatprep.subr.mxu0 0.0
    %1417 = vmatpush2.msra.mxu0 0.0
    %1418 = vmatprep.subr.mxu0 0.0
    %1419 = vmatpush2.msra.mxu0 0.0
    %1420 = vmatprep.subr.mxu0 0.0
    %1421 = vmatpush2.msra.mxu0 0.0
    %1422 = vmatprep.subr.mxu0 0.0
    %1423 = vmatpush2.msra.mxu0 0.0
    %1424 = vmatprep.subr.mxu0 0.0
    %1425 = vmatpush2.msra.mxu0 0.0
    %1426 = vmatprep.subr.mxu0 0.0
    %1427 = vmatpush2.msra.mxu0 0.0
    %1428 = vmatprep.subr.mxu0 0.0
    %1429 = vmatpush2.msra.mxu0 0.0
    %1430 = vmatprep.subr.mxu0 0.0
    %1431 = vmatpush2.msra.mxu0 0.0
    %1432 = vmatprep.mubr.f32.mxu0 0.0
    %1433 = vmatmul.mubr.f32.gmra.mxu0 %v1345
    %v1434 = vpop.f32.mrf.mxu0
    %v1435 = vadd.f32 0.0, %v1434
    %v1436 = vpop.f32.mrf.mxu0
    %1437 = vmatprep.mubr.f32.mxu0 0.0
    %1438 = vmatmul.mubr.f32.gmra.mxu0 %v1348
    %v1439 = vpop.f32.mrf.mxu0
    %v1440 = vadd.f32 0.0, %v1439
    %v1441 = vpop.f32.mrf.mxu0
    %1442 = vmatprep.mubr.f32.mxu0 0.0
    %1443 = vmatmul.mubr.f32.gmra.mxu0 %v1351
    %v1444 = vpop.f32.mrf.mxu0
    %v1445 = vadd.f32 0.0, %v1444
    %v1446 = vpop.f32.mrf.mxu0
    %1447 = vmatprep.mubr.f32.mxu0 0.0
    %1448 = vmatmul.mubr.f32.gmra.mxu0 %v1354
    %v1449 = vpop.f32.mrf.mxu0
    %v1450 = vadd.f32 0.0, %v1449
    %v1451 = vpop.f32.mrf.mxu0
    %1452 = vmatprep.mubr.f32.mxu0 0.0
    %1453 = vmatmul.mubr.f32.gmra.mxu0 %v1357
    %v1454 = vpop.f32.mrf.mxu0
    %v1455 = vadd.f32 0.0, %v1454
    %v1456 = vpop.f32.mrf.mxu0
    %1457 = vmatprep.mubr.f32.mxu0 0.0
    %1458 = vmatmul.mubr.f32.gmra.mxu0 %v1360
    %v1459 = vpop.f32.mrf.mxu0
    %v1460 = vadd.f32 0.0, %v1459
    %v1461 = vpop.f32.mrf.mxu0
    %1462 = vmatprep.mubr.f32.mxu0 0.0
    %1463 = vmatmul.mubr.f32.gmra.mxu0 %v1363
    %v1464 = vpop.f32.mrf.mxu0
    %v1465 = vadd.f32 0.0, %v1464
    %v1466 = vpop.f32.mrf.mxu0
    %1467 = vmatprep.mubr.f32.mxu0 0.0
    %1468 = vmatmul.mubr.f32.gmra.mxu0 %v1366
    %v1469 = vpop.f32.mrf.mxu0
    %v1470 = vadd.f32 0.0, %v1469
    %v1471 = vpop.f32.mrf.mxu0
    %1472 = vdwg.mxu0
    %v1474 = vsel %vm1078, %v1435, 0
    %v1477 = vsel %vm1078, %v1440, 0
    %v1480 = vsel %vm1078, %v1445, 0
    %v1483 = vsel %vm1078, %v1450, 0
    %v1486 = vsel %vm1078, %v1455, 0
    %v1489 = vsel %vm1078, %v1460, 0
    %v1492 = vsel %vm1078, %v1465, 0
    %v1495 = vsel %vm1078, %v1470, 0
    %v1498 = vsel %vm1103, %v524, 0
    %1500 = vmatprep.subr.mxu0 0.0
    %1501 = vmatpush1.msra.mxu0 0.0
    %1502 = vmatprep.subr.mxu0 0.0
    %1503 = vmatpush1.msra.mxu0 0.0
    %1504 = vmatprep.subr.mxu0 0.0
    %1505 = vmatpush1.msra.mxu0 0.0
    %1506 = vmatprep.subr.mxu0 0.0
    %1507 = vmatpush1.msra.mxu0 0.0
    %1508 = vmatprep.subr.mxu0 0.0
    %1509 = vmatpush1.msra.mxu0 0.0
    %1510 = vmatprep.subr.mxu0 0.0
    %1511 = vmatpush1.msra.mxu0 0.0
    %1512 = vmatprep.subr.mxu0 0.0
    %1513 = vmatpush1.msra.mxu0 0.0
    %1514 = vmatprep.subr.mxu0 0.0
    %1515 = vmatpush1.msra.mxu0 0.0
    %1516 = vmatprep.subr.mxu0 0.0
    %1517 = vmatpush1.msra.mxu0 0.0
    %1518 = vmatprep.subr.mxu0 0.0
    %1519 = vmatpush1.msra.mxu0 0.0
    %1520 = vmatprep.subr.mxu0 0.0
    %1521 = vmatpush1.msra.mxu0 0.0
    %1522 = vmatprep.subr.mxu0 0.0
    %1523 = vmatpush1.msra.mxu0 0.0
    %1524 = vmatprep.subr.mxu0 0.0
    %1525 = vmatpush1.msra.mxu0 0.0
    %1526 = vmatprep.subr.mxu0 0.0
    %1527 = vmatpush1.msra.mxu0 0.0
    %1528 = vmatprep.subr.mxu0 0.0
    %1529 = vmatpush1.msra.mxu0 0.0
    %1530 = vmatprep.subr.mxu0 0.0
    %1531 = vmatpush1.msra.mxu0 %v1498
    %1532 = vmatprep.subr.mxu0 0.0
    %1533 = vmatpush2.msra.mxu0 0.0
    %1534 = vmatprep.subr.mxu0 0.0
    %1535 = vmatpush2.msra.mxu0 0.0
    %1536 = vmatprep.subr.mxu0 0.0
    %1537 = vmatpush2.msra.mxu0 0.0
    %1538 = vmatprep.subr.mxu0 0.0
    %1539 = vmatpush2.msra.mxu0 0.0
    %1540 = vmatprep.subr.mxu0 0.0
    %1541 = vmatpush2.msra.mxu0 0.0
    %1542 = vmatprep.subr.mxu0 0.0
    %1543 = vmatpush2.msra.mxu0 0.0
    %1544 = vmatprep.subr.mxu0 0.0
    %1545 = vmatpush2.msra.mxu0 0.0
    %1546 = vmatprep.subr.mxu0 0.0
    %1547 = vmatpush2.msra.mxu0 0.0
    %1548 = vmatprep.subr.mxu0 0.0
    %1549 = vmatpush2.msra.mxu0 0.0
    %1550 = vmatprep.subr.mxu0 0.0
    %1551 = vmatpush2.msra.mxu0 0.0
    %1552 = vmatprep.subr.mxu0 0.0
    %1553 = vmatpush2.msra.mxu0 0.0
    %1554 = vmatprep.subr.mxu0 0.0
    %1555 = vmatpush2.msra.mxu0 0.0
    %1556 = vmatprep.subr.mxu0 0.0
    %1557 = vmatpush2.msra.mxu0 0.0
    %1558 = vmatprep.subr.mxu0 0.0
    %1559 = vmatpush2.msra.mxu0 0.0
    %1560 = vmatprep.subr.mxu0 0.0
    %1561 = vmatpush2.msra.mxu0 0.0
    %1562 = vmatprep.subr.mxu0 0.0
    %1563 = vmatpush2.msra.mxu0 0.0
    %1564 = vmatprep.mubr.f32.mxu0 0.0
    %1565 = vmatmul.mubr.f32.gmra.mxu0 %v1474
    %v1566 = vpop.f32.mrf.mxu0
    %v1567 = vadd.f32 0.0, %v1566
    %v1568 = vpop.f32.mrf.mxu0
    %1569 = vmatprep.mubr.f32.mxu0 0.0
    %1570 = vmatmul.mubr.f32.gmra.mxu0 %v1477
    %v1571 = vpop.f32.mrf.mxu0
    %v1572 = vadd.f32 0.0, %v1571
    %v1573 = vpop.f32.mrf.mxu0
    %1574 = vmatprep.mubr.f32.mxu0 0.0
    %1575 = vmatmul.mubr.f32.gmra.mxu0 %v1480
    %v1576 = vpop.f32.mrf.mxu0
    %v1577 = vadd.f32 0.0, %v1576
    %v1578 = vpop.f32.mrf.mxu0
    %1579 = vmatprep.mubr.f32.mxu0 0.0
    %1580 = vmatmul.mubr.f32.gmra.mxu0 %v1483
    %v1581 = vpop.f32.mrf.mxu0
    %v1582 = vadd.f32 0.0, %v1581
    %v1583 = vpop.f32.mrf.mxu0
    %1584 = vmatprep.mubr.f32.mxu0 0.0
    %1585 = vmatmul.mubr.f32.gmra.mxu0 %v1486
    %v1586 = vpop.f32.mrf.mxu0
    %v1587 = vadd.f32 0.0, %v1586
    %v1588 = vpop.f32.mrf.mxu0
    %1589 = vmatprep.mubr.f32.mxu0 0.0
    %1590 = vmatmul.mubr.f32.gmra.mxu0 %v1489
    %v1591 = vpop.f32.mrf.mxu0
    %v1592 = vadd.f32 0.0, %v1591
    %v1593 = vpop.f32.mrf.mxu0
    %1594 = vmatprep.mubr.f32.mxu0 0.0
    %1595 = vmatmul.mubr.f32.gmra.mxu0 %v1492
    %v1596 = vpop.f32.mrf.mxu0
    %v1597 = vadd.f32 0.0, %v1596
    %v1598 = vpop.f32.mrf.mxu0
    %1599 = vmatprep.mubr.f32.mxu0 0.0
    %1600 = vmatmul.mubr.f32.gmra.mxu0 %v1495
    %v1601 = vpop.f32.mrf.mxu0
    %v1602 = vadd.f32 0.0, %v1601
    %v1603 = vpop.f32.mrf.mxu0
    %1604 = vdwg.mxu0
    %v1605 = vadd.f32 %v1306, %v1567
    %v1606 = vadd.f32 %v1311, %v1572
    %v1607 = vadd.f32 %v1316, %v1577
    %v1608 = vadd.f32 %v1321, %v1582
    %v1609 = vadd.f32 %v1326, %v1587
    %v1610 = vadd.f32 %v1331, %v1592
    %v1611 = vadd.f32 %v1336, %v1597
    %v1612 = vadd.f32 %v1341, %v1602
    %v1614 = vlaneseq
    %v1615 = vshrl.u32 %v1614, 7
    %v1616 = vsub.s32 0, %v1615
    %v1617 = vrot.slane %v521, %v1616
    %v1619 = vadd.f32 %v1605, %v1617
    %v1620 = vadd.f32 %v1606, %v1617
    %v1621 = vadd.f32 %v1607, %v1617
    %v1622 = vadd.f32 %v1608, %v1617
    %v1623 = vadd.f32 %v1609, %v1617
    %v1624 = vadd.f32 %v1610, %v1617
    %v1625 = vadd.f32 %v1611, %v1617
    %v1626 = vadd.f32 %v1612, %v1617
    %vm1627 = vcmask 130048
    %v1628 = vsel %vm1627, %v1619, 0.0
    %v1629 = vsel %vm1627, %v1620, 0.0
    %v1630 = vadd.f32 %v1628, %v1629
    %v1631 = vsel %vm1627, %v1621, 0.0
    %v1632 = vadd.f32 %v1630, %v1631
    %v1633 = vsel %vm1627, %v1622, 0.0
    %v1634 = vadd.f32 %v1632, %v1633
    %v1635 = vsel %vm1627, %v1623, 0.0
    %v1636 = vadd.f32 %v1634, %v1635
    %v1637 = vsel %vm1627, %v1624, 0.0
    %v1638 = vadd.f32 %v1636, %v1637
    %v1639 = vsel %vm1627, %v1625, 0.0
    %v1640 = vadd.f32 %v1638, %v1639
    %v1641 = vsel %vm1627, %v1626, 0.0
    %v1642 = vadd.f32 %v1640, %v1641
    %v1643 = vrot.slane %v1642, 4
    %v1644 = vadd.f32 %v1642, %v1643
    %v1645 = vrot.slane %v1644, 2
    %v1646 = vadd.f32 %v1644, %v1645
    %v1647 = vrot.slane %v1646, 1
    %v1648 = vadd.f32 %v1646, %v1647
    %v1649 = vrcp.pop 64.0
    %v1650 = vmul.f32 %v1648, %v1649
    %v1651 = vsub.f32 %v1619, %v1650
    %v1652 = vsub.f32 %v1620, %v1650
    %v1653 = vsub.f32 %v1621, %v1650
    %v1654 = vsub.f32 %v1622, %v1650
    %v1655 = vsub.f32 %v1623, %v1650
    %v1656 = vsub.f32 %v1624, %v1650
    %v1657 = vsub.f32 %v1625, %v1650
    %v1658 = vsub.f32 %v1626, %v1650
    %v1659 = vmul.f32 %v1651, %v1651
    %v1660 = vmul.f32 %v1652, %v1652
    %v1661 = vmul.f32 %v1653, %v1653
    %v1662 = vmul.f32 %v1654, %v1654
    %v1663 = vmul.f32 %v1655, %v1655
    %v1664 = vmul.f32 %v1656, %v1656
    %v1665 = vmul.f32 %v1657, %v1657
    %v1666 = vmul.f32 %v1658, %v1658
    %v1667 = vsel %vm1627, %v1659, 0.0
    %v1668 = vsel %vm1627, %v1660, 0.0
    %v1669 = vadd.f32 %v1667, %v1668
    %v1670 = vsel %vm1627, %v1661, 0.0
    %v1671 = vadd.f32 %v1669, %v1670
    %v1672 = vsel %vm1627, %v1662, 0.0
    %v1673 = vadd.f32 %v1671, %v1672
    %v1674 = vsel %vm1627, %v1663, 0.0
    %v1675 = vadd.f32 %v1673, %v1674
    %v1676 = vsel %vm1627, %v1664, 0.0
    %v1677 = vadd.f32 %v1675, %v1676
    %v1678 = vsel %vm1627, %v1665, 0.0
    %v1679 = vadd.f32 %v1677, %v1678
    %v1680 = vsel %vm1627, %v1666, 0.0
    %v1681 = vadd.f32 %v1679, %v1680
    %v1682 = vrot.slane %v1681, 4
    %v1683 = vadd.f32 %v1681, %v1682
    %v1684 = vrot.slane %v1683, 2
    %v1685 = vadd.f32 %v1683, %v1684
    %v1686 = vrot.slane %v1685, 1
    %v1687 = vadd.f32 %v1685, %v1686
    %v1688 = vmul.f32 %v1687, %v1649
    %v1689 = vadd.f32 %v1688, 1e-05
    %v1690 = vrsqrt.pop %v1689
    %v1691 = vmul.f32 %v1651, %v1690
    %v1692 = vmul.f32 %v1652, %v1690
    %v1693 = vmul.f32 %v1653, %v1690
    %v1694 = vmul.f32 %v1654, %v1690
    %v1695 = vmul.f32 %v1655, %v1690
    %v1696 = vmul.f32 %v1656, %v1690
    %v1697 = vmul.f32 %v1657, %v1690
    %v1698 = vmul.f32 %v1658, %v1690
    %v1700 = vlaneseq
    %v1701 = vshrl.u32 %v1700, 7
    %v1702 = vsub.s32 0, %v1701
    %v1703 = vrot.slane %v826, %v1702
    %v1705 = vmul.f32 %v1691, %v1703
    %v1706 = vmul.f32 %v1692, %v1703
    %v1707 = vmul.f32 %v1693, %v1703
    %v1708 = vmul.f32 %v1694, %v1703
    %v1709 = vmul.f32 %v1695, %v1703
    %v1710 = vmul.f32 %v1696, %v1703
    %v1711 = vmul.f32 %v1697, %v1703
    %v1712 = vmul.f32 %v1698, %v1703
    %v1714 = vlaneseq
    %v1715 = vshrl.u32 %v1714, 7
    %v1716 = vsub.s32 0, %v1715
    %v1717 = vrot.slane %v825, %v1716
    %v1719 = vadd.f32 %v1705, %v1717
    %v1720 = vadd.f32 %v1706, %v1717
    %v1721 = vadd.f32 %v1707, %v1717
    %v1722 = vadd.f32 %v1708, %v1717
    %v1723 = vadd.f32 %v1709, %v1717
    %v1724 = vadd.f32 %v1710, %v1717
    %v1725 = vadd.f32 %v1711, %v1717
    %v1726 = vadd.f32 %v1712, %v1717
    %v1728 = vlaneseq
    %v1729 = vshrl.u32 %v1728, 7
    %v1730 = vsub.s32 0, %v1729
    %v1731 = vrot.slane %v833, %v1730
    %v1734 = vsel %vm1627, %v1719, 0
    %v1737 = vsel %vm1627, %v1720, 0
    %v1740 = vsel %vm1627, %v1721, 0
    %v1743 = vsel %vm1627, %v1722, 0
    %v1746 = vsel %vm1627, %v1723, 0
    %v1749 = vsel %vm1627, %v1724, 0
    %v1752 = vsel %vm1627, %v1725, 0
    %v1755 = vsel %vm1627, %v1726, 0
    %1757 = vmatprep.subr.mxu0 0.0
    %1758 = vmatpush1.msra.mxu0 0.0
    %1759 = vmatprep.subr.mxu0 0.0
    %1760 = vmatpush1.msra.mxu0 0.0
    %1761 = vmatprep.subr.mxu0 0.0
    %1762 = vmatpush1.msra.mxu0 0.0
    %1763 = vmatprep.subr.mxu0 0.0
    %1764 = vmatpush1.msra.mxu0 0.0
    %1765 = vmatprep.subr.mxu0 0.0
    %1766 = vmatpush1.msra.mxu0 0.0
    %1767 = vmatprep.subr.mxu0 0.0
    %1768 = vmatpush1.msra.mxu0 0.0
    %1769 = vmatprep.subr.mxu0 0.0
    %1770 = vmatpush1.msra.mxu0 0.0
    %1771 = vmatprep.subr.mxu0 0.0
    %1772 = vmatpush1.msra.mxu0 0.0
    %1773 = vmatprep.subr.mxu0 0.0
    %1774 = vmatpush1.msra.mxu0 0.0
    %1775 = vmatprep.subr.mxu0 0.0
    %1776 = vmatpush1.msra.mxu0 0.0
    %1777 = vmatprep.subr.mxu0 0.0
    %1778 = vmatpush1.msra.mxu0 0.0
    %1779 = vmatprep.subr.mxu0 0.0
    %1780 = vmatpush1.msra.mxu0 0.0
    %1781 = vmatprep.subr.mxu0 0.0
    %1782 = vmatpush1.msra.mxu0 0.0
    %1783 = vmatprep.subr.mxu0 0.0
    %1784 = vmatpush1.msra.mxu0 0.0
    %1785 = vmatprep.subr.mxu0 0.0
    %1786 = vmatpush1.msra.mxu0 %v835
    %1787 = vmatprep.subr.mxu0 0.0
    %1788 = vmatpush1.msra.mxu0 %v834
    %1789 = vmatprep.subr.mxu0 0.0
    %1790 = vmatpush2.msra.mxu0 0.0
    %1791 = vmatprep.subr.mxu0 0.0
    %1792 = vmatpush2.msra.mxu0 0.0
    %1793 = vmatprep.subr.mxu0 0.0
    %1794 = vmatpush2.msra.mxu0 0.0
    %1795 = vmatprep.subr.mxu0 0.0
    %1796 = vmatpush2.msra.mxu0 0.0
    %1797 = vmatprep.subr.mxu0 0.0
    %1798 = vmatpush2.msra.mxu0 0.0
    %1799 = vmatprep.subr.mxu0 0.0
    %1800 = vmatpush2.msra.mxu0 0.0
    %1801 = vmatprep.subr.mxu0 0.0
    %1802 = vmatpush2.msra.mxu0 0.0
    %1803 = vmatprep.subr.mxu0 0.0
    %1804 = vmatpush2.msra.mxu0 0.0
    %1805 = vmatprep.subr.mxu0 0.0
    %1806 = vmatpush2.msra.mxu0 0.0
    %1807 = vmatprep.subr.mxu0 0.0
    %1808 = vmatpush2.msra.mxu0 0.0
    %1809 = vmatprep.subr.mxu0 0.0
    %1810 = vmatpush2.msra.mxu0 0.0
    %1811 = vmatprep.subr.mxu0 0.0
    %1812 = vmatpush2.msra.mxu0 0.0
    %1813 = vmatprep.subr.mxu0 0.0
    %1814 = vmatpush2.msra.mxu0 0.0
    %1815 = vmatprep.subr.mxu0 0.0
    %1816 = vmatpush2.msra.mxu0 0.0
    %1817 = vmatprep.subr.mxu0 0.0
    %1818 = vmatpush2.msra.mxu0 0.0
    %1819 = vmatprep.subr.mxu0 0.0
    %1820 = vmatpush2.msra.mxu0 0.0
    %1821 = vmatprep.mubr.f32.mxu0 0.0
    %1822 = vmatmul.mubr.f32.gmra.mxu0 %v1734
    %v1823 = vpop.f32.mrf.mxu0
    %v1824 = vadd.f32 %v1731, %v1823
    %v1825 = vpop.f32.mrf.mxu0
    %1826 = vmatprep.mubr.f32.mxu0 0.0
    %1827 = vmatmul.mubr.f32.gmra.mxu0 %v1737
    %v1828 = vpop.f32.mrf.mxu0
    %v1829 = vadd.f32 %v1731, %v1828
    %v1830 = vpop.f32.mrf.mxu0
    %1831 = vmatprep.mubr.f32.mxu0 0.0
    %1832 = vmatmul.mubr.f32.gmra.mxu0 %v1740
    %v1833 = vpop.f32.mrf.mxu0
    %v1834 = vadd.f32 %v1731, %v1833
    %v1835 = vpop.f32.mrf.mxu0
    %1836 = vmatprep.mubr.f32.mxu0 0.0
    %1837 = vmatmul.mubr.f32.gmra.mxu0 %v1743
    %v1838 = vpop.f32.mrf.mxu0
    %v1839 = vadd.f32 %v1731, %v1838
    %v1840 = vpop.f32.mrf.mxu0
    %1841 = vmatprep.mubr.f32.mxu0 0.0
    %1842 = vmatmul.mubr.f32.gmra.mxu0 %v1746
    %v1843 = vpop.f32.mrf.mxu0
    %v1844 = vadd.f32 %v1731, %v1843
    %v1845 = vpop.f32.mrf.mxu0
    %1846 = vmatprep.mubr.f32.mxu0 0.0
    %1847 = vmatmul.mubr.f32.gmra.mxu0 %v1749
    %v1848 = vpop.f32.mrf.mxu0
    %v1849 = vadd.f32 %v1731, %v1848
    %v1850 = vpop.f32.mrf.mxu0
    %1851 = vmatprep.mubr.f32.mxu0 0.0
    %1852 = vmatmul.mubr.f32.gmra.mxu0 %v1752
    %v1853 = vpop.f32.mrf.mxu0
    %v1854 = vadd.f32 %v1731, %v1853
    %v1855 = vpop.f32.mrf.mxu0
    %1856 = vmatprep.mubr.f32.mxu0 0.0
    %1857 = vmatmul.mubr.f32.gmra.mxu0 %v1755
    %v1858 = vpop.f32.mrf.mxu0
    %v1859 = vadd.f32 %v1731, %v1858
    %v1860 = vpop.f32.mrf.mxu0
    %1861 = vdwg.mxu0
    %v1863 = vlaneseq
    %v1864 = vshrl.u32 %v1863, 7
    %v1865 = vsub.s32 0, %v1864
    %v1866 = vrot.slane %v827, %v1865
    %1868 = vmatprep.subr.mxu0 0.0
    %1869 = vmatpush1.msra.mxu0 0.0
    %1870 = vmatprep.subr.mxu0 0.0
    %1871 = vmatpush1.msra.mxu0 0.0
    %1872 = vmatprep.subr.mxu0 0.0
    %1873 = vmatpush1.msra.mxu0 0.0
    %1874 = vmatprep.subr.mxu0 0.0
    %1875 = vmatpush1.msra.mxu0 0.0
    %1876 = vmatprep.subr.mxu0 0.0
    %1877 = vmatpush1.msra.mxu0 0.0
    %1878 = vmatprep.subr.mxu0 0.0
    %1879 = vmatpush1.msra.mxu0 0.0
    %1880 = vmatprep.subr.mxu0 0.0
    %1881 = vmatpush1.msra.mxu0 0.0
    %1882 = vmatprep.subr.mxu0 0.0
    %1883 = vmatpush1.msra.mxu0 0.0
    %1884 = vmatprep.subr.mxu0 0.0
    %1885 = vmatpush1.msra.mxu0 0.0
    %1886 = vmatprep.subr.mxu0 0.0
    %1887 = vmatpush1.msra.mxu0 0.0
    %1888 = vmatprep.subr.mxu0 0.0
    %1889 = vmatpush1.msra.mxu0 0.0
    %1890 = vmatprep.subr.mxu0 0.0
    %1891 = vmatpush1.msra.mxu0 0.0
    %1892 = vmatprep.subr.mxu0 0.0
    %1893 = vmatpush1.msra.mxu0 0.0
    %1894 = vmatprep.subr.mxu0 0.0
    %1895 = vmatpush1.msra.mxu0 0.0
    %1896 = vmatprep.subr.mxu0 0.0
    %1897 = vmatpush1.msra.mxu0 %v829
    %1898 = vmatprep.subr.mxu0 0.0
    %1899 = vmatpush1.msra.mxu0 %v828
    %1900 = vmatprep.subr.mxu0 0.0
    %1901 = vmatpush2.msra.mxu0 0.0
    %1902 = vmatprep.subr.mxu0 0.0
    %1903 = vmatpush2.msra.mxu0 0.0
    %1904 = vmatprep.subr.mxu0 0.0
    %1905 = vmatpush2.msra.mxu0 0.0
    %1906 = vmatprep.subr.mxu0 0.0
    %1907 = vmatpush2.msra.mxu0 0.0
    %1908 = vmatprep.subr.mxu0 0.0
    %1909 = vmatpush2.msra.mxu0 0.0
    %1910 = vmatprep.subr.mxu0 0.0
    %1911 = vmatpush2.msra.mxu0 0.0
    %1912 = vmatprep.subr.mxu0 0.0
    %1913 = vmatpush2.msra.mxu0 0.0
    %1914 = vmatprep.subr.mxu0 0.0
    %1915 = vmatpush2.msra.mxu0 0.0
    %1916 = vmatprep.subr.mxu0 0.0
    %1917 = vmatpush2.msra.mxu0 0.0
    %1918 = vmatprep.subr.mxu0 0.0
    %1919 = vmatpush2.msra.mxu0 0.0
    %1920 = vmatprep.subr.mxu0 0.0
    %1921 = vmatpush2.msra.mxu0 0.0
    %1922 = vmatprep.subr.mxu0 0.0
    %1923 = vmatpush2.msra.mxu0 0.0
    %1924 = vmatprep.subr.mxu0 0.0
    %1925 = vmatpush2.msra.mxu0 0.0
    %1926 = vmatprep.subr.mxu0 0.0
    %1927 = vmatpush2.msra.mxu0 0.0
    %1928 = vmatprep.subr.mxu0 0.0
    %1929 = vmatpush2.msra.mxu0 0.0
    %1930 = vmatprep.subr.mxu0 0.0
    %1931 = vmatpush2.msra.mxu0 0.0
    %1932 = vmatprep.mubr.f32.mxu0 0.0
    %1933 = vmatmul.mubr.f32.gmra.mxu0 %v1734
    %v1934 = vpop.f32.mrf.mxu0
    %v1935 = vadd.f32 %v1866, %v1934
    %v1936 = vpop.f32.mrf.mxu0
    %1937 = vmatprep.mubr.f32.mxu0 0.0
    %1938 = vmatmul.mubr.f32.gmra.mxu0 %v1737
    %v1939 = vpop.f32.mrf.mxu0
    %v1940 = vadd.f32 %v1866, %v1939
    %v1941 = vpop.f32.mrf.mxu0
    %1942 = vmatprep.mubr.f32.mxu0 0.0
    %1943 = vmatmul.mubr.f32.gmra.mxu0 %v1740
    %v1944 = vpop.f32.mrf.mxu0
    %v1945 = vadd.f32 %v1866, %v1944
    %v1946 = vpop.f32.mrf.mxu0
    %1947 = vmatprep.mubr.f32.mxu0 0.0
    %1948 = vmatmul.mubr.f32.gmra.mxu0 %v1743
    %v1949 = vpop.f32.mrf.mxu0
    %v1950 = vadd.f32 %v1866, %v1949
    %v1951 = vpop.f32.mrf.mxu0
    %1952 = vmatprep.mubr.f32.mxu0 0.0
    %1953 = vmatmul.mubr.f32.gmra.mxu0 %v1746
    %v1954 = vpop.f32.mrf.mxu0
    %v1955 = vadd.f32 %v1866, %v1954
    %v1956 = vpop.f32.mrf.mxu0
    %1957 = vmatprep.mubr.f32.mxu0 0.0
    %1958 = vmatmul.mubr.f32.gmra.mxu0 %v1749
    %v1959 = vpop.f32.mrf.mxu0
    %v1960 = vadd.f32 %v1866, %v1959
    %v1961 = vpop.f32.mrf.mxu0
    %1962 = vmatprep.mubr.f32.mxu0 0.0
    %1963 = vmatmul.mubr.f32.gmra.mxu0 %v1752
    %v1964 = vpop.f32.mrf.mxu0
    %v1965 = vadd.f32 %v1866, %v1964
    %v1966 = vpop.f32.mrf.mxu0
    %1967 = vmatprep.mubr.f32.mxu0 0.0
    %1968 = vmatmul.mubr.f32.gmra.mxu0 %v1755
    %v1969 = vpop.f32.mrf.mxu0
    %v1970 = vadd.f32 %v1866, %v1969
    %v1971 = vpop.f32.mrf.mxu0
    %1972 = vdwg.mxu0
    %v1974 = vlaneseq
    %v1975 = vshrl.u32 %v1974, 7
    %v1976 = vsub.s32 0, %v1975
    %v1977 = vrot.slane %v836, %v1976
    %1979 = vmatprep.subr.mxu0 0.0
    %1980 = vmatpush1.msra.mxu0 0.0
    %1981 = vmatprep.subr.mxu0 0.0
    %1982 = vmatpush1.msra.mxu0 0.0
    %1983 = vmatprep.subr.mxu0 0.0
    %1984 = vmatpush1.msra.mxu0 0.0
    %1985 = vmatprep.subr.mxu0 0.0
    %1986 = vmatpush1.msra.mxu0 0.0
    %1987 = vmatprep.subr.mxu0 0.0
    %1988 = vmatpush1.msra.mxu0 0.0
    %1989 = vmatprep.subr.mxu0 0.0
    %1990 = vmatpush1.msra.mxu0 0.0
    %1991 = vmatprep.subr.mxu0 0.0
    %1992 = vmatpush1.msra.mxu0 0.0
    %1993 = vmatprep.subr.mxu0 0.0
    %1994 = vmatpush1.msra.mxu0 0.0
    %1995 = vmatprep.subr.mxu0 0.0
    %1996 = vmatpush1.msra.mxu0 0.0
    %1997 = vmatprep.subr.mxu0 0.0
    %1998 = vmatpush1.msra.mxu0 0.0
    %1999 = vmatprep.subr.mxu0 0.0
    %2000 = vmatpush1.msra.mxu0 0.0
    %2001 = vmatprep.subr.mxu0 0.0
    %2002 = vmatpush1.msra.mxu0 0.0
    %2003 = vmatprep.subr.mxu0 0.0
    %2004 = vmatpush1.msra.mxu0 0.0
    %2005 = vmatprep.subr.mxu0 0.0
    %2006 = vmatpush1.msra.mxu0 0.0
    %2007 = vmatprep.subr.mxu0 0.0
    %2008 = vmatpush1.msra.mxu0 %v838
    %2009 = vmatprep.subr.mxu0 0.0
    %2010 = vmatpush1.msra.mxu0 %v837
    %2011 = vmatprep.subr.mxu0 0.0
    %2012 = vmatpush2.msra.mxu0 0.0
    %2013 = vmatprep.subr.mxu0 0.0
    %2014 = vmatpush2.msra.mxu0 0.0
    %2015 = vmatprep.subr.mxu0 0.0
    %2016 = vmatpush2.msra.mxu0 0.0
    %2017 = vmatprep.subr.mxu0 0.0
    %2018 = vmatpush2.msra.mxu0 0.0
    %2019 = vmatprep.subr.mxu0 0.0
    %2020 = vmatpush2.msra.mxu0 0.0
    %2021 = vmatprep.subr.mxu0 0.0
    %2022 = vmatpush2.msra.mxu0 0.0
    %2023 = vmatprep.subr.mxu0 0.0
    %2024 = vmatpush2.msra.mxu0 0.0
    %2025 = vmatprep.subr.mxu0 0.0
    %2026 = vmatpush2.msra.mxu0 0.0
    %2027 = vmatprep.subr.mxu0 0.0
    %2028 = vmatpush2.msra.mxu0 0.0
    %2029 = vmatprep.subr.mxu0 0.0
    %2030 = vmatpush2.msra.mxu0 0.0
    %2031 = vmatprep.subr.mxu0 0.0
    %2032 = vmatpush2.msra.mxu0 0.0
    %2033 = vmatprep.subr.mxu0 0.0
    %2034 = vmatpush2.msra.mxu0 0.0
    %2035 = vmatprep.subr.mxu0 0.0
    %2036 = vmatpush2.msra.mxu0 0.0
    %2037 = vmatprep.subr.mxu0 0.0
    %2038 = vmatpush2.msra.mxu0 0.0
    %2039 = vmatprep.subr.mxu0 0.0
    %2040 = vmatpush2.msra.mxu0 0.0
    %2041 = vmatprep.subr.mxu0 0.0
    %2042 = vmatpush2.msra.mxu0 0.0
    %2043 = vmatprep.mubr.f32.mxu0 0.0
    %2044 = vmatmul.mubr.f32.gmra.mxu0 %v1734
    %v2045 = vpop.f32.mrf.mxu0
    %v2046 = vadd.f32 %v1977, %v2045
    %v2047 = vpop.f32.mrf.mxu0
    %2048 = vmatprep.mubr.f32.mxu0 0.0
    %2049 = vmatmul.mubr.f32.gmra.mxu0 %v1737
    %v2050 = vpop.f32.mrf.mxu0
    %v2051 = vadd.f32 %v1977, %v2050
    %v2052 = vpop.f32.mrf.mxu0
    %2053 = vmatprep.mubr.f32.mxu0 0.0
    %2054 = vmatmul.mubr.f32.gmra.mxu0 %v1740
    %v2055 = vpop.f32.mrf.mxu0
    %v2056 = vadd.f32 %v1977, %v2055
    %v2057 = vpop.f32.mrf.mxu0
    %2058 = vmatprep.mubr.f32.mxu0 0.0
    %2059 = vmatmul.mubr.f32.gmra.mxu0 %v1743
    %v2060 = vpop.f32.mrf.mxu0
    %v2061 = vadd.f32 %v1977, %v2060
    %v2062 = vpop.f32.mrf.mxu0
    %2063 = vmatprep.mubr.f32.mxu0 0.0
    %2064 = vmatmul.mubr.f32.gmra.mxu0 %v1746
    %v2065 = vpop.f32.mrf.mxu0
    %v2066 = vadd.f32 %v1977, %v2065
    %v2067 = vpop.f32.mrf.mxu0
    %2068 = vmatprep.mubr.f32.mxu0 0.0
    %2069 = vmatmul.mubr.f32.gmra.mxu0 %v1749
    %v2070 = vpop.f32.mrf.mxu0
    %v2071 = vadd.f32 %v1977, %v2070
    %v2072 = vpop.f32.mrf.mxu0
    %2073 = vmatprep.mubr.f32.mxu0 0.0
    %2074 = vmatmul.mubr.f32.gmra.mxu0 %v1752
    %v2075 = vpop.f32.mrf.mxu0
    %v2076 = vadd.f32 %v1977, %v2075
    %v2077 = vpop.f32.mrf.mxu0
    %2078 = vmatprep.mubr.f32.mxu0 0.0
    %2079 = vmatmul.mubr.f32.gmra.mxu0 %v1755
    %v2080 = vpop.f32.mrf.mxu0
    %v2081 = vadd.f32 %v1977, %v2080
    %v2082 = vpop.f32.mrf.mxu0
    %2083 = vdwg.mxu0
    %v2085 = vsel %vm1627, %v1824, 0
    %v2088 = vsel %vm1627, %v1829, 0
    %v2091 = vsel %vm1627, %v1834, 0
    %v2094 = vsel %vm1627, %v1839, 0
    %v2097 = vsel %vm1627, %v1935, 0
    %v2100 = vsel %vm1627, %v1940, 0
    %v2103 = vsel %vm1627, %v1945, 0
    %v2106 = vsel %vm1627, %v1950, 0
    %2108 = vmatprep.subr.mxu0 0.0
    %2109 = vmatpush1.xpose.msra.mxu0 0.0
    %2110 = vmatprep.subr.mxu0 0.0
    %2111 = vmatpush1.xpose.msra.mxu0 0.0
    %2112 = vmatprep.subr.mxu0 0.0
    %2113 = vmatpush1.xpose.msra.mxu0 0.0
    %2114 = vmatprep.subr.mxu0 0.0
    %2115 = vmatpush1.xpose.msra.mxu0 0.0
    %2116 = vmatprep.subr.mxu0 0.0
    %2117 = vmatpush1.xpose.msra.mxu0 0.0
    %2118 = vmatprep.subr.mxu0 0.0
    %2119 = vmatpush1.xpose.msra.mxu0 0.0
    %2120 = vmatprep.subr.mxu0 0.0
    %2121 = vmatpush1.xpose.msra.mxu0 0.0
    %2122 = vmatprep.subr.mxu0 0.0
    %2123 = vmatpush1.xpose.msra.mxu0 0.0
    %2124 = vmatprep.subr.mxu0 0.0
    %2125 = vmatpush1.xpose.msra.mxu0 0.0
    %2126 = vmatprep.subr.mxu0 0.0
    %2127 = vmatpush1.xpose.msra.mxu0 0.0
    %2128 = vmatprep.subr.mxu0 0.0
    %2129 = vmatpush1.xpose.msra.mxu0 0.0
    %2130 = vmatprep.subr.mxu0 0.0
    %2131 = vmatpush1.xpose.msra.mxu0 0.0
    %2132 = vmatprep.subr.mxu0 0.0
    %2133 = vmatpush1.xpose.msra.mxu0 %v2106
    %2134 = vmatprep.subr.mxu0 0.0
    %2135 = vmatpush1.xpose.msra.mxu0 %v2103
    %2136 = vmatprep.subr.mxu0 0.0
    %2137 = vmatpush1.xpose.msra.mxu0 %v2100
    %2138 = vmatprep.subr.mxu0 0.0
    %2139 = vmatpush1.xpose.msra.mxu0 %v2097
    %2140 = vmatprep.subr.mxu0 0.0
    %2141 = vmatpush2.xpose.msra.mxu0 0.0
    %2142 = vmatprep.subr.mxu0 0.0
    %2143 = vmatpush2.xpose.msra.mxu0 0.0
    %2144 = vmatprep.subr.mxu0 0.0
    %2145 = vmatpush2.xpose.msra.mxu0 0.0
    %2146 = vmatprep.subr.mxu0 0.0
    %2147 = vmatpush2.xpose.msra.mxu0 0.0
    %2148 = vmatprep.subr.mxu0 0.0
    %2149 = vmatpush2.xpose.msra.mxu0 0.0
    %2150 = vmatprep.subr.mxu0 0.0
    %2151 = vmatpush2.xpose.msra.mxu0 0.0
    %2152 = vmatprep.subr.mxu0 0.0
    %2153 = vmatpush2.xpose.msra.mxu0 0.0
    %2154 = vmatprep.subr.mxu0 0.0
    %2155 = vmatpush2.xpose.msra.mxu0 0.0
    %2156 = vmatprep.subr.mxu0 0.0
    %2157 = vmatpush2.xpose.msra.mxu0 0.0
    %2158 = vmatprep.subr.mxu0 0.0
    %2159 = vmatpush2.xpose.msra.mxu0 0.0
    %2160 = vmatprep.subr.mxu0 0.0
    %2161 = vmatpush2.xpose.msra.mxu0 0.0
    %2162 = vmatprep.subr.mxu0 0.0
    %2163 = vmatpush2.xpose.msra.mxu0 0.0
    %2164 = vmatprep.subr.mxu0 0.0
    %2165 = vmatpush2.xpose.msra.mxu0 0.0
    %2166 = vmatprep.subr.mxu0 0.0
    %2167 = vmatpush2.xpose.msra.mxu0 0.0
    %2168 = vmatprep.subr.mxu0 0.0
    %2169 = vmatpush2.xpose.msra.mxu0 0.0
    %2170 = vmatprep.subr.mxu0 0.0
    %2171 = vmatpush2.xpose.msra.mxu0 0.0
    %2172 = vmatprep.mubr.f32.mxu0 0.0
    %2173 = vmatmul.mubr.f32.gmra.mxu0 %v2085
    %v2174 = vpop.f32.mrf.mxu0
    %v2175 = vadd.f32 0.0, %v2174
    %v2176 = vpop.f32.mrf.mxu0
    %2177 = vmatprep.mubr.f32.mxu0 0.0
    %2178 = vmatmul.mubr.f32.gmra.mxu0 %v2088
    %v2179 = vpop.f32.mrf.mxu0
    %v2180 = vadd.f32 0.0, %v2179
    %v2181 = vpop.f32.mrf.mxu0
    %2182 = vmatprep.mubr.f32.mxu0 0.0
    %2183 = vmatmul.mubr.f32.gmra.mxu0 %v2091
    %v2184 = vpop.f32.mrf.mxu0
    %v2185 = vadd.f32 0.0, %v2184
    %v2186 = vpop.f32.mrf.mxu0
    %2187 = vmatprep.mubr.f32.mxu0 0.0
    %2188 = vmatmul.mubr.f32.gmra.mxu0 %v2094
    %v2189 = vpop.f32.mrf.mxu0
    %v2190 = vadd.f32 0.0, %v2189
    %v2191 = vpop.f32.mrf.mxu0
    %2192 = vdwg.mxu0
    %vm2193 = vcmask 261120
    %v2194 = vsel %vm2193, %v2175, -inf
    %2195 = vmax.xlane.f32.xlu0 %v2194
    %v2196 = vpop.xlane.xlu0 %2195
    %v2197 = vsel %vm2193, %v2180, -inf
    %2198 = vmax.xlane.f32.xlu0 %v2197
    %v2199 = vpop.xlane.xlu0 %2198
    %v2200 = vsel %vm2193, %v2185, -inf
    %2201 = vmax.xlane.f32.xlu0 %v2200
    %v2202 = vpop.xlane.xlu0 %2201
    %v2203 = vsel %vm2193, %v2190, -inf
    %2204 = vmax.xlane.f32.xlu0 %v2203
    %v2205 = vpop.xlane.xlu0 %2204
    %v2206 = vsub.f32 %v2175, %v2196
    %v2207 = vsub.f32 %v2180, %v2199
    %v2208 = vsub.f32 %v2185, %v2202
    %v2209 = vsub.f32 %v2190, %v2205
    %v2210 = vmul.f32 %v2206, 1.442695
    %v2211 = vpow.pop %v2210
    %v2212 = vmul.f32 %v2207, 1.442695
    %v2213 = vpow.pop %v2212
    %v2214 = vmul.f32 %v2208, 1.442695
    %v2215 = vpow.pop %v2214
    %v2216 = vmul.f32 %v2209, 1.442695
    %v2217 = vpow.pop %v2216
    %v2218 = vsel %vm2193, %v2211, 0.0
    %2219 = vadd.xlane.f32.xlu0 %v2218
    %v2220 = vpop.xlane.xlu0 %2219
    %v2221 = vsel %vm2193, %v2213, 0.0
    %2222 = vadd.xlane.f32.xlu0 %v2221
    %v2223 = vpop.xlane.xlu0 %2222
    %v2224 = vsel %vm2193, %v2215, 0.0
    %2225 = vadd.xlane.f32.xlu0 %v2224
    %v2226 = vpop.xlane.xlu0 %2225
    %v2227 = vsel %vm2193, %v2217, 0.0
    %2228 = vadd.xlane.f32.xlu0 %v2227
    %v2229 = vpop.xlane.xlu0 %2228
    %v2230 = vrcp.pop %v2220
    %v2231 = vrcp.pop %v2223
    %v2232 = vrcp.pop %v2226
    %v2233 = vrcp.pop %v2229
    %v2234 = vmul.f32 %v2211, %v2230
    %v2235 = vmul.f32 %v2213, %v2231
    %v2236 = vmul.f32 %v2215, %v2232
    %v2237 = vmul.f32 %v2217, %v2233
    %v2239 = vsel %vm2193, %v2234, 0
    %v2242 = vsel %vm2193, %v2235, 0
    %v2245 = vsel %vm2193, %v2236, 0
    %v2248 = vsel %vm2193, %v2237, 0
    %2250 = vmatprep.subr.mxu0 0.0
    %2251 = vmatpush1.msra.mxu0 0.0
    %2252 = vmatprep.subr.mxu0 0.0
    %2253 = vmatpush1.msra.mxu0 0.0
    %2254 = vmatprep.subr.mxu0 0.0
    %2255 = vmatpush1.msra.mxu0 0.0
    %2256 = vmatprep.subr.mxu0 0.0
    %2257 = vmatpush1.msra.mxu0 0.0
    %2258 = vmatprep.subr.mxu0 0.0
    %2259 = vmatpush1.msra.mxu0 0.0
    %2260 = vmatprep.subr.mxu0 0.0
    %2261 = vmatpush1.msra.mxu0 0.0
    %2262 = vmatprep.subr.mxu0 0.0
    %2263 = vmatpush1.msra.mxu0 0.0
    %2264 = vmatprep.subr.mxu0 0.0
    %2265 = vmatpush1.msra.mxu0 0.0
    %2266 = vmatprep.subr.mxu0 0.0
    %2267 = vmatpush1.msra.mxu0 0.0
    %2268 = vmatprep.subr.mxu0 0.0
    %2269 = vmatpush1.msra.mxu0 0.0
    %2270 = vmatprep.subr.mxu0 0.0
    %2271 = vmatpush1.msra.mxu0 0.0
    %2272 = vmatprep.subr.mxu0 0.0
    %2273 = vmatpush1.msra.mxu0 0.0
    %2274 = vmatprep.subr.mxu0 0.0
    %2275 = vmatpush1.msra.mxu0 %v2061
    %2276 = vmatprep.subr.mxu0 0.0
    %2277 = vmatpush1.msra.mxu0 %v2056
    %2278 = vmatprep.subr.mxu0 0.0
    %2279 = vmatpush1.msra.mxu0 %v2051
    %2280 = vmatprep.subr.mxu0 0.0
    %2281 = vmatpush1.msra.mxu0 %v2046
    %2282 = vmatprep.subr.mxu0 0.0
    %2283 = vmatpush2.msra.mxu0 0.0
    %2284 = vmatprep.subr.mxu0 0.0
    %2285 = vmatpush2.msra.mxu0 0.0
    %2286 = vmatprep.subr.mxu0 0.0
    %2287 = vmatpush2.msra.mxu0 0.0
    %2288 = vmatprep.subr.mxu0 0.0
    %2289 = vmatpush2.msra.mxu0 0.0
    %2290 = vmatprep.subr.mxu0 0.0
    %2291 = vmatpush2.msra.mxu0 0.0
    %2292 = vmatprep.subr.mxu0 0.0
    %2293 = vmatpush2.msra.mxu0 0.0
    %2294 = vmatprep.subr.mxu0 0.0
    %2295 = vmatpush2.msra.mxu0 0.0
    %2296 = vmatprep.subr.mxu0 0.0
    %2297 = vmatpush2.msra.mxu0 0.0
    %2298 = vmatprep.subr.mxu0 0.0
    %2299 = vmatpush2.msra.mxu0 0.0
    %2300 = vmatprep.subr.mxu0 0.0
    %2301 = vmatpush2.msra.mxu0 0.0
    %2302 = vmatprep.subr.mxu0 0.0
    %2303 = vmatpush2.msra.mxu0 0.0
    %2304 = vmatprep.subr.mxu0 0.0
    %2305 = vmatpush2.msra.mxu0 0.0
    %2306 = vmatprep.subr.mxu0 0.0
    %2307 = vmatpush2.msra.mxu0 0.0
    %2308 = vmatprep.subr.mxu0 0.0
    %2309 = vmatpush2.msra.mxu0 0.0
    %2310 = vmatprep.subr.mxu0 0.0
    %2311 = vmatpush2.msra.mxu0 0.0
    %2312 = vmatprep.subr.mxu0 0.0
    %2313 = vmatpush2.msra.mxu0 0.0
    %2314 = vmatprep.mubr.f32.mxu0 0.0
    %2315 = vmatmul.mubr.f32.gmra.mxu0 %v2239
    %v2316 = vpop.f32.mrf.mxu0
    %v2317 = vadd.f32 0.0, %v2316
    %v2318 = vpop.f32.mrf.mxu0
    %2319 = vmatprep.mubr.f32.mxu0 0.0
    %2320 = vmatmul.mubr.f32.gmra.mxu0 %v2242
    %v2321 = vpop.f32.mrf.mxu0
    %v2322 = vadd.f32 0.0, %v2321
    %v2323 = vpop.f32.mrf.mxu0
    %2324 = vmatprep.mubr.f32.mxu0 0.0
    %2325 = vmatmul.mubr.f32.gmra.mxu0 %v2245
    %v2326 = vpop.f32.mrf.mxu0
    %v2327 = vadd.f32 0.0, %v2326
    %v2328 = vpop.f32.mrf.mxu0
    %2329 = vmatprep.mubr.f32.mxu0 0.0
    %2330 = vmatmul.mubr.f32.gmra.mxu0 %v2248
    %v2331 = vpop.f32.mrf.mxu0
    %v2332 = vadd.f32 0.0, %v2331
    %v2333 = vpop.f32.mrf.mxu0
    %2334 = vdwg.mxu0
    %v2336 = vsel %vm1627, %v1844, 0
    %v2339 = vsel %vm1627, %v1849, 0
    %v2342 = vsel %vm1627, %v1854, 0
    %v2345 = vsel %vm1627, %v1859, 0
    %v2348 = vsel %vm1627, %v1955, 0
    %v2351 = vsel %vm1627, %v1960, 0
    %v2354 = vsel %vm1627, %v1965, 0
    %v2357 = vsel %vm1627, %v1970, 0
    %2359 = vmatprep.subr.mxu0 0.0
    %2360 = vmatpush1.xpose.msra.mxu0 0.0
    %2361 = vmatprep.subr.mxu0 0.0
    %2362 = vmatpush1.xpose.msra.mxu0 0.0
    %2363 = vmatprep.subr.mxu0 0.0
    %2364 = vmatpush1.xpose.msra.mxu0 0.0
    %2365 = vmatprep.subr.mxu0 0.0
    %2366 = vmatpush1.xpose.msra.mxu0 0.0
    %2367 = vmatprep.subr.mxu0 0.0
    %2368 = vmatpush1.xpose.msra.mxu0 0.0
    %2369 = vmatprep.subr.mxu0 0.0
    %2370 = vmatpush1.xpose.msra.mxu0 0.0
    %2371 = vmatprep.subr.mxu0 0.0
    %2372 = vmatpush1.xpose.msra.mxu0 0.0
    %2373 = vmatprep.subr.mxu0 0.0
    %2374 = vmatpush1.xpose.msra.mxu0 0.0
    %2375 = vmatprep.subr.mxu0 0.0
    %2376 = vmatpush1.xpose.msra.mxu0 0.0
    %2377 = vmatprep.subr.mxu0 0.0
    %2378 = vmatpush1.xpose.msra.mxu0 0.0
    %2379 = vmatprep.subr.mxu0 0.0
    %2380 = vmatpush1.xpose.msra.mxu0 0.0
    %2381 = vmatprep.subr.mxu0 0.0
    %2382 = vmatpush1.xpose.msra.mxu0 0.0
    %2383 = vmatprep.subr.mxu0 0.0
    %2384 = vmatpush1.xpose.msra.mxu0 %v2357
    %2385 = vmatprep.subr.mxu0 0.0
    %2386 = vmatpush1.xpose.msra.mxu0 %v2354
    %2387 = vmatprep.subr.mxu0 0.0
    %2388 = vmatpush1.xpose.msra.mxu0 %v2351
    %2389 = vmatprep.subr.mxu0 0.0
    %2390 = vmatpush1.xpose.msra.mxu0 %v2348
    %2391 = vmatprep.subr.mxu0 0.0
    %2392 = vmatpush2.xpose.msra.mxu0 0.0
    %2393 = vmatprep.subr.mxu0 0.0
    %2394 = vmatpush2.xpose.msra.mxu0 0.0
    %2395 = vmatprep.subr.mxu0 0.0
    %2396 = vmatpush2.xpose.msra.mxu0 0.0
    %2397 = vmatprep.subr.mxu0 0.0
    %2398 = vmatpush2.xpose.msra.mxu0 0.0
    %2399 = vmatprep.subr.mxu0 0.0
    %2400 = vmatpush2.xpose.msra.mxu0 0.0
    %2401 = vmatprep.subr.mxu0 0.0
    %2402 = vmatpush2.xpose.msra.mxu0 0.0
    %2403 = vmatprep.subr.mxu0 0.0
    %2404 = vmatpush2.xpose.msra.mxu0 0.0
    %2405 = vmatprep.subr.mxu0 0.0
    %2406 = vmatpush2.xpose.msra.mxu0 0.0
    %2407 = vmatprep.subr.mxu0 0.0
    %2408 = vmatpush2.xpose.msra.mxu0 0.0
    %2409 = vmatprep.subr.mxu0 0.0
    %2410 = vmatpush2.xpose.msra.mxu0 0.0
    %2411 = vmatprep.subr.mxu0 0.0
    %2412 = vmatpush2.xpose.msra.mxu0 0.0
    %2413 = vmatprep.subr.mxu0 0.0
    %2414 = vmatpush2.xpose.msra.mxu0 0.0
    %2415 = vmatprep.subr.mxu0 0.0
    %2416 = vmatpush2.xpose.msra.mxu0 0.0
    %2417 = vmatprep.subr.mxu0 0.0
    %2418 = vmatpush2.xpose.msra.mxu0 0.0
    %2419 = vmatprep.subr.mxu0 0.0
    %2420 = vmatpush2.xpose.msra.mxu0 0.0
    %2421 = vmatprep.subr.mxu0 0.0
    %2422 = vmatpush2.xpose.msra.mxu0 0.0
    %2423 = vmatprep.mubr.f32.mxu0 0.0
    %2424 = vmatmul.mubr.f32.gmra.mxu0 %v2336
    %v2425 = vpop.f32.mrf.mxu0
    %v2426 = vadd.f32 0.0, %v2425
    %v2427 = vpop.f32.mrf.mxu0
    %2428 = vmatprep.mubr.f32.mxu0 0.0
    %2429 = vmatmul.mubr.f32.gmra.mxu0 %v2339
    %v2430 = vpop.f32.mrf.mxu0
    %v2431 = vadd.f32 0.0, %v2430
    %v2432 = vpop.f32.mrf.mxu0
    %2433 = vmatprep.mubr.f32.mxu0 0.0
    %2434 = vmatmul.mubr.f32.gmra.mxu0 %v2342
    %v2435 = vpop.f32.mrf.mxu0
    %v2436 = vadd.f32 0.0, %v2435
    %v2437 = vpop.f32.mrf.mxu0
    %2438 = vmatprep.mubr.f32.mxu0 0.0
    %2439 = vmatmul.mubr.f32.gmra.mxu0 %v2345
    %v2440 = vpop.f32.mrf.mxu0
    %v2441 = vadd.f32 0.0, %v2440
    %v2442 = vpop.f32.mrf.mxu0
    %2443 = vdwg.mxu0
    %v2444 = vsel %vm2193, %v2426, -inf
    %2445 = vmax.xlane.f32.xlu0 %v2444
    %v2446 = vpop.xlane.xlu0 %2445
    %v2447 = vsel %vm2193, %v2431, -inf
    %2448 = vmax.xlane.f32.xlu0 %v2447
    %v2449 = vpop.xlane.xlu0 %2448
    %v2450 = vsel %vm2193, %v2436, -inf
    %2451 = vmax.xlane.f32.xlu0 %v2450
    %v2452 = vpop.xlane.xlu0 %2451
    %v2453 = vsel %vm2193, %v2441, -inf
    %2454 = vmax.xlane.f32.xlu0 %v2453
    %v2455 = vpop.xlane.xlu0 %2454
    %v2456 = vsub.f32 %v2426, %v2446
    %v2457 = vsub.f32 %v2431, %v2449
    %v2458 = vsub.f32 %v2436, %v2452
    %v2459 = vsub.f32 %v2441, %v2455
    %v2460 = vmul.f32 %v2456, 1.442695
    %v2461 = vpow.pop %v2460
    %v2462 = vmul.f32 %v2457, 1.442695
    %v2463 = vpow.pop %v2462
    %v2464 = vmul.f32 %v2458, 1.442695
    %v2465 = vpow.pop %v2464
    %v2466 = vmul.f32 %v2459, 1.442695
    %v2467 = vpow.pop %v2466
    %v2468 = vsel %vm2193, %v2461, 0.0
    %2469 = vadd.xlane.f32.xlu0 %v2468
    %v2470 = vpop.xlane.xlu0 %2469
    %v2471 = vsel %vm2193, %v2463, 0.0
    %2472 = vadd.xlane.f32.xlu0 %v2471
    %v2473 = vpop.xlane.xlu0 %2472
    %v2474 = vsel %vm2193, %v2465, 0.0
    %2475 = vadd.xlane.f32.xlu0 %v2474
    %v2476 = vpop.xlane.xlu0 %2475
    %v2477 = vsel %vm2193, %v2467, 0.0
    %2478 = vadd.xlane.f32.xlu0 %v2477
    %v2479 = vpop.xlane.xlu0 %2478
    %v2480 = vrcp.pop %v2470
    %v2481 = vrcp.pop %v2473
    %v2482 = vrcp.pop %v2476
    %v2483 = vrcp.pop %v2479
    %v2484 = vmul.f32 %v2461, %v2480
    %v2485 = vmul.f32 %v2463, %v2481
    %v2486 = vmul.f32 %v2465, %v2482
    %v2487 = vmul.f32 %v2467, %v2483
    %v2489 = vsel %vm2193, %v2484, 0
    %v2492 = vsel %vm2193, %v2485, 0
    %v2495 = vsel %vm2193, %v2486, 0
    %v2498 = vsel %vm2193, %v2487, 0
    %2500 = vmatprep.subr.mxu0 0.0
    %2501 = vmatpush1.msra.mxu0 0.0
    %2502 = vmatprep.subr.mxu0 0.0
    %2503 = vmatpush1.msra.mxu0 0.0
    %2504 = vmatprep.subr.mxu0 0.0
    %2505 = vmatpush1.msra.mxu0 0.0
    %2506 = vmatprep.subr.mxu0 0.0
    %2507 = vmatpush1.msra.mxu0 0.0
    %2508 = vmatprep.subr.mxu0 0.0
    %2509 = vmatpush1.msra.mxu0 0.0
    %2510 = vmatprep.subr.mxu0 0.0
    %2511 = vmatpush1.msra.mxu0 0.0
    %2512 = vmatprep.subr.mxu0 0.0
    %2513 = vmatpush1.msra.mxu0 0.0
    %2514 = vmatprep.subr.mxu0 0.0
    %2515 = vmatpush1.msra.mxu0 0.0
    %2516 = vmatprep.subr.mxu0 0.0
    %2517 = vmatpush1.msra.mxu0 0.0
    %2518 = vmatprep.subr.mxu0 0.0
    %2519 = vmatpush1.msra.mxu0 0.0
    %2520 = vmatprep.subr.mxu0 0.0
    %2521 = vmatpush1.msra.mxu0 0.0
    %2522 = vmatprep.subr.mxu0 0.0
    %2523 = vmatpush1.msra.mxu0 0.0
    %2524 = vmatprep.subr.mxu0 0.0
    %2525 = vmatpush1.msra.mxu0 %v2081
    %2526 = vmatprep.subr.mxu0 0.0
    %2527 = vmatpush1.msra.mxu0 %v2076
    %2528 = vmatprep.subr.mxu0 0.0
    %2529 = vmatpush1.msra.mxu0 %v2071
    %2530 = vmatprep.subr.mxu0 0.0
    %2531 = vmatpush1.msra.mxu0 %v2066
    %2532 = vmatprep.subr.mxu0 0.0
    %2533 = vmatpush2.msra.mxu0 0.0
    %2534 = vmatprep.subr.mxu0 0.0
    %2535 = vmatpush2.msra.mxu0 0.0
    %2536 = vmatprep.subr.mxu0 0.0
    %2537 = vmatpush2.msra.mxu0 0.0
    %2538 = vmatprep.subr.mxu0 0.0
    %2539 = vmatpush2.msra.mxu0 0.0
    %2540 = vmatprep.subr.mxu0 0.0
    %2541 = vmatpush2.msra.mxu0 0.0
    %2542 = vmatprep.subr.mxu0 0.0
    %2543 = vmatpush2.msra.mxu0 0.0
    %2544 = vmatprep.subr.mxu0 0.0
    %2545 = vmatpush2.msra.mxu0 0.0
    %2546 = vmatprep.subr.mxu0 0.0
    %2547 = vmatpush2.msra.mxu0 0.0
    %2548 = vmatprep.subr.mxu0 0.0
    %2549 = vmatpush2.msra.mxu0 0.0
    %2550 = vmatprep.subr.mxu0 0.0
    %2551 = vmatpush2.msra.mxu0 0.0
    %2552 = vmatprep.subr.mxu0 0.0
    %2553 = vmatpush2.msra.mxu0 0.0
    %2554 = vmatprep.subr.mxu0 0.0
    %2555 = vmatpush2.msra.mxu0 0.0
    %2556 = vmatprep.subr.mxu0 0.0
    %2557 = vmatpush2.msra.mxu0 0.0
    %2558 = vmatprep.subr.mxu0 0.0
    %2559 = vmatpush2.msra.mxu0 0.0
    %2560 = vmatprep.subr.mxu0 0.0
    %2561 = vmatpush2.msra.mxu0 0.0
    %2562 = vmatprep.subr.mxu0 0.0
    %2563 = vmatpush2.msra.mxu0 0.0
    %2564 = vmatprep.mubr.f32.mxu0 0.0
    %2565 = vmatmul.mubr.f32.gmra.mxu0 %v2489
    %v2566 = vpop.f32.mrf.mxu0
    %v2567 = vadd.f32 0.0, %v2566
    %v2568 = vpop.f32.mrf.mxu0
    %2569 = vmatprep.mubr.f32.mxu0 0.0
    %2570 = vmatmul.mubr.f32.gmra.mxu0 %v2492
    %v2571 = vpop.f32.mrf.mxu0
    %v2572 = vadd.f32 0.0, %v2571
    %v2573 = vpop.f32.mrf.mxu0
    %2574 = vmatprep.mubr.f32.mxu0 0.0
    %2575 = vmatmul.mubr.f32.gmra.mxu0 %v2495
    %v2576 = vpop.f32.mrf.mxu0
    %v2577 = vadd.f32 0.0, %v2576
    %v2578 = vpop.f32.mrf.mxu0
    %2579 = vmatprep.mubr.f32.mxu0 0.0
    %2580 = vmatmul.mubr.f32.gmra.mxu0 %v2498
    %v2581 = vpop.f32.mrf.mxu0
    %v2582 = vadd.f32 0.0, %v2581
    %v2583 = vpop.f32.mrf.mxu0
    %2584 = vdwg.mxu0
    %v2586 = vlaneseq
    %v2587 = vshrl.u32 %v2586, 7
    %v2588 = vsub.s32 0, %v2587
    %v2589 = vrot.slane %v830, %v2588
    %v2592 = vsel %vm1627, %v2317, 0
    %v2595 = vsel %vm1627, %v2322, 0
    %v2598 = vsel %vm1627, %v2327, 0
    %v2601 = vsel %vm1627, %v2332, 0
    %v2604 = vsel %vm1627, %v2567, 0
    %v2607 = vsel %vm1627, %v2572, 0
    %v2610 = vsel %vm1627, %v2577, 0
    %v2613 = vsel %vm1627, %v2582, 0
    %2615 = vmatprep.subr.mxu0 0.0
    %2616 = vmatpush1.msra.mxu0 0.0
    %2617 = vmatprep.subr.mxu0 0.0
    %2618 = vmatpush1.msra.mxu0 0.0
    %2619 = vmatprep.subr.mxu0 0.0
    %2620 = vmatpush1.msra.mxu0 0.0
    %2621 = vmatprep.subr.mxu0 0.0
    %2622 = vmatpush1.msra.mxu0 0.0
    %2623 = vmatprep.subr.mxu0 0.0
    %2624 = vmatpush1.msra.mxu0 0.0
    %2625 = vmatprep.subr.mxu0 0.0
    %2626 = vmatpush1.msra.mxu0 0.0
    %2627 = vmatprep.subr.mxu0 0.0
    %2628 = vmatpush1.msra.mxu0 0.0
    %2629 = vmatprep.subr.mxu0 0.0
    %2630 = vmatpush1.msra.mxu0 0.0
    %2631 = vmatprep.subr.mxu0 0.0
    %2632 = vmatpush1.msra.mxu0 0.0
    %2633 = vmatprep.subr.mxu0 0.0
    %2634 = vmatpush1.msra.mxu0 0.0
    %2635 = vmatprep.subr.mxu0 0.0
    %2636 = vmatpush1.msra.mxu0 0.0
    %2637 = vmatprep.subr.mxu0 0.0
    %2638 = vmatpush1.msra.mxu0 0.0
    %2639 = vmatprep.subr.mxu0 0.0
    %2640 = vmatpush1.msra.mxu0 0.0
    %2641 = vmatprep.subr.mxu0 0.0
    %2642 = vmatpush1.msra.mxu0 0.0
    %2643 = vmatprep.subr.mxu0 0.0
    %2644 = vmatpush1.msra.mxu0 %v832
    %2645 = vmatprep.subr.mxu0 0.0
    %2646 = vmatpush1.msra.mxu0 %v831
    %2647 = vmatprep.subr.mxu0 0.0
    %2648 = vmatpush2.msra.mxu0 0.0
    %2649 = vmatprep.subr.mxu0 0.0
    %2650 = vmatpush2.msra.mxu0 0.0
    %2651 = vmatprep.subr.mxu0 0.0
    %2652 = vmatpush2.msra.mxu0 0.0
    %2653 = vmatprep.subr.mxu0 0.0
    %2654 = vmatpush2.msra.mxu0 0.0
    %2655 = vmatprep.subr.mxu0 0.0
    %2656 = vmatpush2.msra.mxu0 0.0
    %2657 = vmatprep.subr.mxu0 0.0
    %2658 = vmatpush2.msra.mxu0 0.0
    %2659 = vmatprep.subr.mxu0 0.0
    %2660 = vmatpush2.msra.mxu0 0.0
    %2661 = vmatprep.subr.mxu0 0.0
    %2662 = vmatpush2.msra.mxu0 0.0
    %2663 = vmatprep.subr.mxu0 0.0
    %2664 = vmatpush2.msra.mxu0 0.0
    %2665 = vmatprep.subr.mxu0 0.0
    %2666 = vmatpush2.msra.mxu0 0.0
    %2667 = vmatprep.subr.mxu0 0.0
    %2668 = vmatpush2.msra.mxu0 0.0
    %2669 = vmatprep.subr.mxu0 0.0
    %2670 = vmatpush2.msra.mxu0 0.0
    %2671 = vmatprep.subr.mxu0 0.0
    %2672 = vmatpush2.msra.mxu0 0.0
    %2673 = vmatprep.subr.mxu0 0.0
    %2674 = vmatpush2.msra.mxu0 0.0
    %2675 = vmatprep.subr.mxu0 0.0
    %2676 = vmatpush2.msra.mxu0 0.0
    %2677 = vmatprep.subr.mxu0 0.0
    %2678 = vmatpush2.msra.mxu0 0.0
    %2679 = vmatprep.mubr.f32.mxu0 0.0
    %2680 = vmatmul.mubr.f32.gmra.mxu0 %v2592
    %v2681 = vpop.f32.mrf.mxu0
    %v2682 = vadd.f32 %v2589, %v2681
    %v2683 = vpop.f32.mrf.mxu0
    %2684 = vmatprep.mubr.f32.mxu0 0.0
    %2685 = vmatmul.mubr.f32.gmra.mxu0 %v2595
    %v2686 = vpop.f32.mrf.mxu0
    %v2687 = vadd.f32 %v2589, %v2686
    %v2688 = vpop.f32.mrf.mxu0
    %2689 = vmatprep.mubr.f32.mxu0 0.0
    %2690 = vmatmul.mubr.f32.gmra.mxu0 %v2598
    %v2691 = vpop.f32.mrf.mxu0
    %v2692 = vadd.f32 %v2589, %v2691
    %v2693 = vpop.f32.mrf.mxu0
    %2694 = vmatprep.mubr.f32.mxu0 0.0
    %2695 = vmatmul.mubr.f32.gmra.mxu0 %v2601
    %v2696 = vpop.f32.mrf.mxu0
    %v2697 = vadd.f32 %v2589, %v2696
    %v2698 = vpop.f32.mrf.mxu0
    %2699 = vmatprep.mubr.f32.mxu0 0.0
    %2700 = vmatmul.mubr.f32.gmra.mxu0 %v2604
    %v2701 = vpop.f32.mrf.mxu0
    %v2702 = vadd.f32 %v2589, %v2701
    %v2703 = vpop.f32.mrf.mxu0
    %2704 = vmatprep.mubr.f32.mxu0 0.0
    %2705 = vmatmul.mubr.f32.gmra.mxu0 %v2607
    %v2706 = vpop.f32.mrf.mxu0
    %v2707 = vadd.f32 %v2589, %v2706
    %v2708 = vpop.f32.mrf.mxu0
    %2709 = vmatprep.mubr.f32.mxu0 0.0
    %2710 = vmatmul.mubr.f32.gmra.mxu0 %v2610
    %v2711 = vpop.f32.mrf.mxu0
    %v2712 = vadd.f32 %v2589, %v2711
    %v2713 = vpop.f32.mrf.mxu0
    %2714 = vmatprep.mubr.f32.mxu0 0.0
    %2715 = vmatmul.mubr.f32.gmra.mxu0 %v2613
    %v2716 = vpop.f32.mrf.mxu0
    %v2717 = vadd.f32 %v2589, %v2716
    %v2718 = vpop.f32.mrf.mxu0
    %2719 = vdwg.mxu0
    %v2720 = vadd.f32 %v1619, %v2682
    %v2721 = vadd.f32 %v1620, %v2687
    %v2722 = vadd.f32 %v1621, %v2692
    %v2723 = vadd.f32 %v1622, %v2697
    %v2724 = vadd.f32 %v1623, %v2702
    %v2725 = vadd.f32 %v1624, %v2707
    %v2726 = vadd.f32 %v1625, %v2712
    %v2727 = vadd.f32 %v1626, %v2717
    %v2728 = vxor.u32 %v2720, 2147483648
    %v2729 = vxor.u32 %v2721, 2147483648
    %v2730 = vxor.u32 %v2722, 2147483648
    %v2731 = vxor.u32 %v2723, 2147483648
    %v2732 = vxor.u32 %v2724, 2147483648
    %v2733 = vxor.u32 %v2725, 2147483648
    %v2734 = vxor.u32 %v2726, 2147483648
    %v2735 = vxor.u32 %v2727, 2147483648
    %v2736 = vmul.f32 %v2728, 1.442695
    %v2737 = vpow.pop %v2736
    %v2738 = vmul.f32 %v2729, 1.442695
    %v2739 = vpow.pop %v2738
    %v2740 = vmul.f32 %v2730, 1.442695
    %v2741 = vpow.pop %v2740
    %v2742 = vmul.f32 %v2731, 1.442695
    %v2743 = vpow.pop %v2742
    %v2744 = vmul.f32 %v2732, 1.442695
    %v2745 = vpow.pop %v2744
    %v2746 = vmul.f32 %v2733, 1.442695
    %v2747 = vpow.pop %v2746
    %v2748 = vmul.f32 %v2734, 1.442695
    %v2749 = vpow.pop %v2748
    %v2750 = vmul.f32 %v2735, 1.442695
    %v2751 = vpow.pop %v2750
    %v2752 = vadd.f32 %v2737, 1.0
    %v2753 = vadd.f32 %v2739, 1.0
    %v2754 = vadd.f32 %v2741, 1.0
    %v2755 = vadd.f32 %v2743, 1.0
    %v2756 = vadd.f32 %v2745, 1.0
    %v2757 = vadd.f32 %v2747, 1.0
    %v2758 = vadd.f32 %v2749, 1.0
    %v2759 = vadd.f32 %v2751, 1.0
    %v2760 = vrcp.pop %v2752
    %v2761 = vmul.f32 1.0, %v2760
    %v2762 = vrcp.pop %v2753
    %v2763 = vmul.f32 1.0, %v2762
    %v2764 = vrcp.pop %v2754
    %v2765 = vmul.f32 1.0, %v2764
    %v2766 = vrcp.pop %v2755
    %v2767 = vmul.f32 1.0, %v2766
    %v2768 = vrcp.pop %v2756
    %v2769 = vmul.f32 1.0, %v2768
    %v2770 = vrcp.pop %v2757
    %v2771 = vmul.f32 1.0, %v2770
    %v2772 = vrcp.pop %v2758
    %v2773 = vmul.f32 1.0, %v2772
    %v2774 = vrcp.pop %v2759
    %v2775 = vmul.f32 1.0, %v2774
    %v2776 = vmul.f32 %v2720, %v2761
    %v2777 = vmul.f32 %v2721, %v2763
    %v2778 = vmul.f32 %v2722, %v2765
    %v2779 = vmul.f32 %v2723, %v2767
    %v2780 = vmul.f32 %v2724, %v2769
    %v2781 = vmul.f32 %v2725, %v2771
    %v2782 = vmul.f32 %v2726, %v2773
    %v2783 = vmul.f32 %v2727, %v2775
    %v2784 = vsel %vm1627, %v2776, 0.0
    %v2785 = vsel %vm1627, %v2777, 0.0
    %v2786 = vadd.f32 %v2784, %v2785
    %v2787 = vsel %vm1627, %v2778, 0.0
    %v2788 = vadd.f32 %v2786, %v2787
    %v2789 = vsel %vm1627, %v2779, 0.0
    %v2790 = vadd.f32 %v2788, %v2789
    %v2791 = vsel %vm1627, %v2780, 0.0
    %v2792 = vadd.f32 %v2790, %v2791
    %v2793 = vsel %vm1627, %v2781, 0.0
    %v2794 = vadd.f32 %v2792, %v2793
    %v2795 = vsel %vm1627, %v2782, 0.0
    %v2796 = vadd.f32 %v2794, %v2795
    %v2797 = vsel %vm1627, %v2783, 0.0
    %v2798 = vadd.f32 %v2796, %v2797
    %v2799 = vrot.slane %v2798, 4
    %v2800 = vadd.f32 %v2798, %v2799
    %v2801 = vrot.slane %v2800, 2
    %v2802 = vadd.f32 %v2800, %v2801
    %v2803 = vrot.slane %v2802, 1
    %v2804 = vadd.f32 %v2802, %v2803
    %v2805 = vmul.f32 %v2804, %v1649
    %v2806 = vsub.f32 %v2776, %v2805
    %v2807 = vsub.f32 %v2777, %v2805
    %v2808 = vsub.f32 %v2778, %v2805
    %v2809 = vsub.f32 %v2779, %v2805
    %v2810 = vsub.f32 %v2780, %v2805
    %v2811 = vsub.f32 %v2781, %v2805
    %v2812 = vsub.f32 %v2782, %v2805
    %v2813 = vsub.f32 %v2783, %v2805
    %v2814 = vmul.f32 %v2806, %v2806
    %v2815 = vmul.f32 %v2807, %v2807
    %v2816 = vmul.f32 %v2808, %v2808
    %v2817 = vmul.f32 %v2809, %v2809
    %v2818 = vmul.f32 %v2810, %v2810
    %v2819 = vmul.f32 %v2811, %v2811
    %v2820 = vmul.f32 %v2812, %v2812
    %v2821 = vmul.f32 %v2813, %v2813
    %v2822 = vsel %vm1627, %v2814, 0.0
    %v2823 = vsel %vm1627, %v2815, 0.0
    %v2824 = vadd.f32 %v2822, %v2823
    %v2825 = vsel %vm1627, %v2816, 0.0
    %v2826 = vadd.f32 %v2824, %v2825
    %v2827 = vsel %vm1627, %v2817, 0.0
    %v2828 = vadd.f32 %v2826, %v2827
    %v2829 = vsel %vm1627, %v2818, 0.0
    %v2830 = vadd.f32 %v2828, %v2829
    %v2831 = vsel %vm1627, %v2819, 0.0
    %v2832 = vadd.f32 %v2830, %v2831
    %v2833 = vsel %vm1627, %v2820, 0.0
    %v2834 = vadd.f32 %v2832, %v2833
    %v2835 = vsel %vm1627, %v2821, 0.0
    %v2836 = vadd.f32 %v2834, %v2835
    %v2837 = vrot.slane %v2836, 4
    %v2838 = vadd.f32 %v2836, %v2837
    %v2839 = vrot.slane %v2838, 2
    %v2840 = vadd.f32 %v2838, %v2839
    %v2841 = vrot.slane %v2840, 1
    %v2842 = vadd.f32 %v2840, %v2841
    %v2843 = vmul.f32 %v2842, %v1649
    %v2844 = vadd.f32 %v2843, 1e-05
    %v2845 = vrsqrt.pop %v2844
    %v2846 = vmul.f32 %v2806, %v2845
    %v2847 = vmul.f32 %v2807, %v2845
    %v2848 = vmul.f32 %v2808, %v2845
    %v2849 = vmul.f32 %v2809, %v2845
    %v2850 = vmul.f32 %v2810, %v2845
    %v2851 = vmul.f32 %v2811, %v2845
    %v2852 = vmul.f32 %v2812, %v2845
    %v2853 = vmul.f32 %v2813, %v2845
    %v2855 = vlaneseq
    %v2856 = vshrl.u32 %v2855, 7
    %v2857 = vsub.s32 0, %v2856
    %v2858 = vrot.slane %v422, %v2857
    %v2860 = vmul.f32 %v2846, %v2858
    %v2861 = vmul.f32 %v2847, %v2858
    %v2862 = vmul.f32 %v2848, %v2858
    %v2863 = vmul.f32 %v2849, %v2858
    %v2864 = vmul.f32 %v2850, %v2858
    %v2865 = vmul.f32 %v2851, %v2858
    %v2866 = vmul.f32 %v2852, %v2858
    %v2867 = vmul.f32 %v2853, %v2858
    %v2869 = vlaneseq
    %v2870 = vshrl.u32 %v2869, 7
    %v2871 = vsub.s32 0, %v2870
    %v2872 = vrot.slane %v421, %v2871
    %v2874 = vadd.f32 %v2860, %v2872
    %v2875 = vadd.f32 %v2861, %v2872
    %v2876 = vadd.f32 %v2862, %v2872
    %v2877 = vadd.f32 %v2863, %v2872
    %v2878 = vadd.f32 %v2864, %v2872
    %v2879 = vadd.f32 %v2865, %v2872
    %v2880 = vadd.f32 %v2866, %v2872
    %v2881 = vadd.f32 %v2867, %v2872
    %v2883 = vsel %vm948, %v401, 0
    %v2886 = vsel %vm948, %v402, 0
    %v2889 = vsel %vm948, %v403, 0
    %v2892 = vsel %vm948, %v404, 0
    %2894 = vmatprep.subr.mxu0 0.0
    %2895 = vmatpush1.msra.mxu0 0.0
    %2896 = vmatprep.subr.mxu0 0.0
    %2897 = vmatpush1.msra.mxu0 0.0
    %2898 = vmatprep.subr.mxu0 0.0
    %2899 = vmatpush1.msra.mxu0 0.0
    %2900 = vmatprep.subr.mxu0 0.0
    %2901 = vmatpush1.msra.mxu0 0.0
    %2902 = vmatprep.subr.mxu0 0.0
    %2903 = vmatpush1.msra.mxu0 0.0
    %2904 = vmatprep.subr.mxu0 0.0
    %2905 = vmatpush1.msra.mxu0 0.0
    %2906 = vmatprep.subr.mxu0 0.0
    %2907 = vmatpush1.msra.mxu0 0.0
    %2908 = vmatprep.subr.mxu0 0.0
    %2909 = vmatpush1.msra.mxu0 0.0
    %2910 = vmatprep.subr.mxu0 0.0
    %2911 = vmatpush1.msra.mxu0 %v2881
    %2912 = vmatprep.subr.mxu0 0.0
    %2913 = vmatpush1.msra.mxu0 %v2880
    %2914 = vmatprep.subr.mxu0 0.0
    %2915 = vmatpush1.msra.mxu0 %v2879
    %2916 = vmatprep.subr.mxu0 0.0
    %2917 = vmatpush1.msra.mxu0 %v2878
    %2918 = vmatprep.subr.mxu0 0.0
    %2919 = vmatpush1.msra.mxu0 %v2877
    %2920 = vmatprep.subr.mxu0 0.0
    %2921 = vmatpush1.msra.mxu0 %v2876
    %2922 = vmatprep.subr.mxu0 0.0
    %2923 = vmatpush1.msra.mxu0 %v2875
    %2924 = vmatprep.subr.mxu0 0.0
    %2925 = vmatpush1.msra.mxu0 %v2874
    %2926 = vmatprep.subr.mxu0 0.0
    %2927 = vmatpush2.msra.mxu0 0.0
    %2928 = vmatprep.subr.mxu0 0.0
    %2929 = vmatpush2.msra.mxu0 0.0
    %2930 = vmatprep.subr.mxu0 0.0
    %2931 = vmatpush2.msra.mxu0 0.0
    %2932 = vmatprep.subr.mxu0 0.0
    %2933 = vmatpush2.msra.mxu0 0.0
    %2934 = vmatprep.subr.mxu0 0.0
    %2935 = vmatpush2.msra.mxu0 0.0
    %2936 = vmatprep.subr.mxu0 0.0
    %2937 = vmatpush2.msra.mxu0 0.0
    %2938 = vmatprep.subr.mxu0 0.0
    %2939 = vmatpush2.msra.mxu0 0.0
    %2940 = vmatprep.subr.mxu0 0.0
    %2941 = vmatpush2.msra.mxu0 0.0
    %2942 = vmatprep.subr.mxu0 0.0
    %2943 = vmatpush2.msra.mxu0 0.0
    %2944 = vmatprep.subr.mxu0 0.0
    %2945 = vmatpush2.msra.mxu0 0.0
    %2946 = vmatprep.subr.mxu0 0.0
    %2947 = vmatpush2.msra.mxu0 0.0
    %2948 = vmatprep.subr.mxu0 0.0
    %2949 = vmatpush2.msra.mxu0 0.0
    %2950 = vmatprep.subr.mxu0 0.0
    %2951 = vmatpush2.msra.mxu0 0.0
    %2952 = vmatprep.subr.mxu0 0.0
    %2953 = vmatpush2.msra.mxu0 0.0
    %2954 = vmatprep.subr.mxu0 0.0
    %2955 = vmatpush2.msra.mxu0 0.0
    %2956 = vmatprep.subr.mxu0 0.0
    %2957 = vmatpush2.msra.mxu0 0.0
    %2958 = vmatprep.mubr.f32.mxu0 0.0
    %2959 = vmatmul.mubr.f32.gmra.mxu0 %v2883
    %v2960 = vpop.f32.mrf.mxu0
    %v2961 = vadd.f32 0.0, %v2960
    %v2962 = vpop.f32.mrf.mxu0
    %2963 = vmatprep.mubr.f32.mxu0 0.0
    %2964 = vmatmul.mubr.f32.gmra.mxu0 %v2886
    %v2965 = vpop.f32.mrf.mxu0
    %v2966 = vadd.f32 0.0, %v2965
    %v2967 = vpop.f32.mrf.mxu0
    %2968 = vmatprep.mubr.f32.mxu0 0.0
    %2969 = vmatmul.mubr.f32.gmra.mxu0 %v2889
    %v2970 = vpop.f32.mrf.mxu0
    %v2971 = vadd.f32 0.0, %v2970
    %v2972 = vpop.f32.mrf.mxu0
    %2973 = vmatprep.mubr.f32.mxu0 0.0
    %2974 = vmatmul.mubr.f32.gmra.mxu0 %v2892
    %v2975 = vpop.f32.mrf.mxu0
    %v2976 = vadd.f32 0.0, %v2975
    %v2977 = vpop.f32.mrf.mxu0
    %2978 = vdwg.mxu0
    %v2980 = vsel %vm948, %v405, 0
    %v2983 = vsel %vm948, %v406, 0
    %v2986 = vsel %vm948, %v407, 0
    %v2989 = vsel %vm948, %v408, 0
    %2991 = vmatprep.subr.mxu0 0.0
    %2992 = vmatpush1.msra.mxu0 0.0
    %2993 = vmatprep.subr.mxu0 0.0
    %2994 = vmatpush1.msra.mxu0 0.0
    %2995 = vmatprep.subr.mxu0 0.0
    %2996 = vmatpush1.msra.mxu0 0.0
    %2997 = vmatprep.subr.mxu0 0.0
    %2998 = vmatpush1.msra.mxu0 0.0
    %2999 = vmatprep.subr.mxu0 0.0
    %3000 = vmatpush1.msra.mxu0 0.0
    %3001 = vmatprep.subr.mxu0 0.0
    %3002 = vmatpush1.msra.mxu0 0.0
    %3003 = vmatprep.subr.mxu0 0.0
    %3004 = vmatpush1.msra.mxu0 0.0
    %3005 = vmatprep.subr.mxu0 0.0
    %3006 = vmatpush1.msra.mxu0 0.0
    %3007 = vmatprep.subr.mxu0 0.0
    %3008 = vmatpush1.msra.mxu0 %v2881
    %3009 = vmatprep.subr.mxu0 0.0
    %3010 = vmatpush1.msra.mxu0 %v2880
    %3011 = vmatprep.subr.mxu0 0.0
    %3012 = vmatpush1.msra.mxu0 %v2879
    %3013 = vmatprep.subr.mxu0 0.0
    %3014 = vmatpush1.msra.mxu0 %v2878
    %3015 = vmatprep.subr.mxu0 0.0
    %3016 = vmatpush1.msra.mxu0 %v2877
    %3017 = vmatprep.subr.mxu0 0.0
    %3018 = vmatpush1.msra.mxu0 %v2876
    %3019 = vmatprep.subr.mxu0 0.0
    %3020 = vmatpush1.msra.mxu0 %v2875
    %3021 = vmatprep.subr.mxu0 0.0
    %3022 = vmatpush1.msra.mxu0 %v2874
    %3023 = vmatprep.subr.mxu0 0.0
    %3024 = vmatpush2.msra.mxu0 0.0
    %3025 = vmatprep.subr.mxu0 0.0
    %3026 = vmatpush2.msra.mxu0 0.0
    %3027 = vmatprep.subr.mxu0 0.0
    %3028 = vmatpush2.msra.mxu0 0.0
    %3029 = vmatprep.subr.mxu0 0.0
    %3030 = vmatpush2.msra.mxu0 0.0
    %3031 = vmatprep.subr.mxu0 0.0
    %3032 = vmatpush2.msra.mxu0 0.0
    %3033 = vmatprep.subr.mxu0 0.0
    %3034 = vmatpush2.msra.mxu0 0.0
    %3035 = vmatprep.subr.mxu0 0.0
    %3036 = vmatpush2.msra.mxu0 0.0
    %3037 = vmatprep.subr.mxu0 0.0
    %3038 = vmatpush2.msra.mxu0 0.0
    %3039 = vmatprep.subr.mxu0 0.0
    %3040 = vmatpush2.msra.mxu0 0.0
    %3041 = vmatprep.subr.mxu0 0.0
    %3042 = vmatpush2.msra.mxu0 0.0
    %3043 = vmatprep.subr.mxu0 0.0
    %3044 = vmatpush2.msra.mxu0 0.0
    %3045 = vmatprep.subr.mxu0 0.0
    %3046 = vmatpush2.msra.mxu0 0.0
    %3047 = vmatprep.subr.mxu0 0.0
    %3048 = vmatpush2.msra.mxu0 0.0
    %3049 = vmatprep.subr.mxu0 0.0
    %3050 = vmatpush2.msra.mxu0 0.0
    %3051 = vmatprep.subr.mxu0 0.0
    %3052 = vmatpush2.msra.mxu0 0.0
    %3053 = vmatprep.subr.mxu0 0.0
    %3054 = vmatpush2.msra.mxu0 0.0
    %3055 = vmatprep.mubr.f32.mxu0 0.0
    %3056 = vmatmul.mubr.f32.gmra.mxu0 %v2980
    %v3057 = vpop.f32.mrf.mxu0
    %v3058 = vadd.f32 0.0, %v3057
    %v3059 = vpop.f32.mrf.mxu0
    %3060 = vmatprep.mubr.f32.mxu0 0.0
    %3061 = vmatmul.mubr.f32.gmra.mxu0 %v2983
    %v3062 = vpop.f32.mrf.mxu0
    %v3063 = vadd.f32 0.0, %v3062
    %v3064 = vpop.f32.mrf.mxu0
    %3065 = vmatprep.mubr.f32.mxu0 0.0
    %3066 = vmatmul.mubr.f32.gmra.mxu0 %v2986
    %v3067 = vpop.f32.mrf.mxu0
    %v3068 = vadd.f32 0.0, %v3067
    %v3069 = vpop.f32.mrf.mxu0
    %3070 = vmatprep.mubr.f32.mxu0 0.0
    %3071 = vmatmul.mubr.f32.gmra.mxu0 %v2989
    %v3072 = vpop.f32.mrf.mxu0
    %v3073 = vadd.f32 0.0, %v3072
    %v3074 = vpop.f32.mrf.mxu0
    %3075 = vdwg.mxu0
    %v3077 = vsel %vm1627, %v3058, 0
    %v3080 = vsel %vm1627, %v3063, 0
    %v3083 = vsel %vm1627, %v3068, 0
    %v3086 = vsel %vm1627, %v3073, 0
    %3088 = vmatprep.subr.mxu0 0.0
    %3089 = vmatpush1.msra.mxu0 0.0
    %3090 = vmatprep.subr.mxu0 0.0
    %3091 = vmatpush1.msra.mxu0 0.0
    %3092 = vmatprep.subr.mxu0 0.0
    %3093 = vmatpush1.msra.mxu0 0.0
    %3094 = vmatprep.subr.mxu0 0.0
    %3095 = vmatpush1.msra.mxu0 0.0
    %3096 = vmatprep.subr.mxu0 0.0
    %3097 = vmatpush1.msra.mxu0 0.0
    %3098 = vmatprep.subr.mxu0 0.0
    %3099 = vmatpush1.msra.mxu0 0.0
    %3100 = vmatprep.subr.mxu0 0.0
    %3101 = vmatpush1.msra.mxu0 0.0
    %3102 = vmatprep.subr.mxu0 0.0
    %3103 = vmatpush1.msra.mxu0 0.0
    %3104 = vmatprep.subr.mxu0 0.0
    %3105 = vmatpush1.msra.mxu0 0.0
    %3106 = vmatprep.subr.mxu0 0.0
    %3107 = vmatpush1.msra.mxu0 0.0
    %3108 = vmatprep.subr.mxu0 0.0
    %3109 = vmatpush1.msra.mxu0 0.0
    %3110 = vmatprep.subr.mxu0 0.0
    %3111 = vmatpush1.msra.mxu0 0.0
    %3112 = vmatprep.subr.mxu0 0.0
    %3113 = vmatpush1.msra.mxu0 0.0
    %3114 = vmatprep.subr.mxu0 0.0
    %3115 = vmatpush1.msra.mxu0 0.0
    %3116 = vmatprep.subr.mxu0 0.0
    %3117 = vmatpush1.msra.mxu0 %v483
    %3118 = vmatprep.subr.mxu0 0.0
    %3119 = vmatpush1.msra.mxu0 %v482
    %3120 = vmatprep.subr.mxu0 0.0
    %3121 = vmatpush2.msra.mxu0 0.0
    %3122 = vmatprep.subr.mxu0 0.0
    %3123 = vmatpush2.msra.mxu0 0.0
    %3124 = vmatprep.subr.mxu0 0.0
    %3125 = vmatpush2.msra.mxu0 0.0
    %3126 = vmatprep.subr.mxu0 0.0
    %3127 = vmatpush2.msra.mxu0 0.0
    %3128 = vmatprep.subr.mxu0 0.0
    %3129 = vmatpush2.msra.mxu0 0.0
    %3130 = vmatprep.subr.mxu0 0.0
    %3131 = vmatpush2.msra.mxu0 0.0
    %3132 = vmatprep.subr.mxu0 0.0
    %3133 = vmatpush2.msra.mxu0 0.0
    %3134 = vmatprep.subr.mxu0 0.0
    %3135 = vmatpush2.msra.mxu0 0.0
    %3136 = vmatprep.subr.mxu0 0.0
    %3137 = vmatpush2.msra.mxu0 0.0
    %3138 = vmatprep.subr.mxu0 0.0
    %3139 = vmatpush2.msra.mxu0 0.0
    %3140 = vmatprep.subr.mxu0 0.0
    %3141 = vmatpush2.msra.mxu0 0.0
    %3142 = vmatprep.subr.mxu0 0.0
    %3143 = vmatpush2.msra.mxu0 0.0
    %3144 = vmatprep.subr.mxu0 0.0
    %3145 = vmatpush2.msra.mxu0 0.0
    %3146 = vmatprep.subr.mxu0 0.0
    %3147 = vmatpush2.msra.mxu0 0.0
    %3148 = vmatprep.subr.mxu0 0.0
    %3149 = vmatpush2.msra.mxu0 0.0
    %3150 = vmatprep.subr.mxu0 0.0
    %3151 = vmatpush2.msra.mxu0 0.0
    %3152 = vmatprep.mubr.f32.mxu0 0.0
    %3153 = vmatmul.mubr.f32.gmra.mxu0 %v3077
    %v3154 = vpop.f32.mrf.mxu0
    %v3155 = vadd.f32 0.0, %v3154
    %v3156 = vpop.f32.mrf.mxu0
    %3157 = vmatprep.mubr.f32.mxu0 0.0
    %3158 = vmatmul.mubr.f32.gmra.mxu0 %v3080
    %v3159 = vpop.f32.mrf.mxu0
    %v3160 = vadd.f32 0.0, %v3159
    %v3161 = vpop.f32.mrf.mxu0
    %3162 = vmatprep.mubr.f32.mxu0 0.0
    %3163 = vmatmul.mubr.f32.gmra.mxu0 %v3083
    %v3164 = vpop.f32.mrf.mxu0
    %v3165 = vadd.f32 0.0, %v3164
    %v3166 = vpop.f32.mrf.mxu0
    %3167 = vmatprep.mubr.f32.mxu0 0.0
    %3168 = vmatmul.mubr.f32.gmra.mxu0 %v3086
    %v3169 = vpop.f32.mrf.mxu0
    %v3170 = vadd.f32 0.0, %v3169
    %v3171 = vpop.f32.mrf.mxu0
    %3172 = vdwg.mxu0
    %v3174 = vsel %vm1627, %v2961, 0
    %v3177 = vsel %vm1627, %v2966, 0
    %v3180 = vsel %vm1627, %v2971, 0
    %v3183 = vsel %vm1627, %v2976, 0
    %3185 = vmatprep.subr.mxu0 0.0
    %3186 = vmatpush1.msra.mxu0 0.0
    %3187 = vmatprep.subr.mxu0 0.0
    %3188 = vmatpush1.msra.mxu0 0.0
    %3189 = vmatprep.subr.mxu0 0.0
    %3190 = vmatpush1.msra.mxu0 0.0
    %3191 = vmatprep.subr.mxu0 0.0
    %3192 = vmatpush1.msra.mxu0 0.0
    %3193 = vmatprep.subr.mxu0 0.0
    %3194 = vmatpush1.msra.mxu0 0.0
    %3195 = vmatprep.subr.mxu0 0.0
    %3196 = vmatpush1.msra.mxu0 0.0
    %3197 = vmatprep.subr.mxu0 0.0
    %3198 = vmatpush1.msra.mxu0 0.0
    %3199 = vmatprep.subr.mxu0 0.0
    %3200 = vmatpush1.msra.mxu0 0.0
    %3201 = vmatprep.subr.mxu0 0.0
    %3202 = vmatpush1.msra.mxu0 0.0
    %3203 = vmatprep.subr.mxu0 0.0
    %3204 = vmatpush1.msra.mxu0 0.0
    %3205 = vmatprep.subr.mxu0 0.0
    %3206 = vmatpush1.msra.mxu0 0.0
    %3207 = vmatprep.subr.mxu0 0.0
    %3208 = vmatpush1.msra.mxu0 0.0
    %3209 = vmatprep.subr.mxu0 0.0
    %3210 = vmatpush1.msra.mxu0 0.0
    %3211 = vmatprep.subr.mxu0 0.0
    %3212 = vmatpush1.msra.mxu0 0.0
    %3213 = vmatprep.subr.mxu0 0.0
    %3214 = vmatpush1.msra.mxu0 %v481
    %3215 = vmatprep.subr.mxu0 0.0
    %3216 = vmatpush1.msra.mxu0 %v480
    %3217 = vmatprep.subr.mxu0 0.0
    %3218 = vmatpush2.msra.mxu0 0.0
    %3219 = vmatprep.subr.mxu0 0.0
    %3220 = vmatpush2.msra.mxu0 0.0
    %3221 = vmatprep.subr.mxu0 0.0
    %3222 = vmatpush2.msra.mxu0 0.0
    %3223 = vmatprep.subr.mxu0 0.0
    %3224 = vmatpush2.msra.mxu0 0.0
    %3225 = vmatprep.subr.mxu0 0.0
    %3226 = vmatpush2.msra.mxu0 0.0
    %3227 = vmatprep.subr.mxu0 0.0
    %3228 = vmatpush2.msra.mxu0 0.0
    %3229 = vmatprep.subr.mxu0 0.0
    %3230 = vmatpush2.msra.mxu0 0.0
    %3231 = vmatprep.subr.mxu0 0.0
    %3232 = vmatpush2.msra.mxu0 0.0
    %3233 = vmatprep.subr.mxu0 0.0
    %3234 = vmatpush2.msra.mxu0 0.0
    %3235 = vmatprep.subr.mxu0 0.0
    %3236 = vmatpush2.msra.mxu0 0.0
    %3237 = vmatprep.subr.mxu0 0.0
    %3238 = vmatpush2.msra.mxu0 0.0
    %3239 = vmatprep.subr.mxu0 0.0
    %3240 = vmatpush2.msra.mxu0 0.0
    %3241 = vmatprep.subr.mxu0 0.0
    %3242 = vmatpush2.msra.mxu0 0.0
    %3243 = vmatprep.subr.mxu0 0.0
    %3244 = vmatpush2.msra.mxu0 0.0
    %3245 = vmatprep.subr.mxu0 0.0
    %3246 = vmatpush2.msra.mxu0 0.0
    %3247 = vmatprep.subr.mxu0 0.0
    %3248 = vmatpush2.msra.mxu0 0.0
    %3249 = vmatprep.mubr.f32.mxu0 0.0
    %3250 = vmatmul.mubr.f32.gmra.mxu0 %v3174
    %v3251 = vpop.f32.mrf.mxu0
    %v3252 = vadd.f32 %v3155, %v3251
    %v3253 = vpop.f32.mrf.mxu0
    %3254 = vmatprep.mubr.f32.mxu0 0.0
    %3255 = vmatmul.mubr.f32.gmra.mxu0 %v3177
    %v3256 = vpop.f32.mrf.mxu0
    %v3257 = vadd.f32 %v3160, %v3256
    %v3258 = vpop.f32.mrf.mxu0
    %3259 = vmatprep.mubr.f32.mxu0 0.0
    %3260 = vmatmul.mubr.f32.gmra.mxu0 %v3180
    %v3261 = vpop.f32.mrf.mxu0
    %v3262 = vadd.f32 %v3165, %v3261
    %v3263 = vpop.f32.mrf.mxu0
    %3264 = vmatprep.mubr.f32.mxu0 0.0
    %3265 = vmatmul.mubr.f32.gmra.mxu0 %v3183
    %v3266 = vpop.f32.mrf.mxu0
    %v3267 = vadd.f32 %v3170, %v3266
    %v3268 = vpop.f32.mrf.mxu0
    %3269 = vdwg.mxu0
    %v3271 = vsel %vm948, %v409, 0
    %v3274 = vsel %vm948, %v410, 0
    %v3277 = vsel %vm948, %v411, 0
    %v3280 = vsel %vm948, %v412, 0
    %3282 = vmatprep.subr.mxu0 0.0
    %3283 = vmatpush1.msra.mxu0 0.0
    %3284 = vmatprep.subr.mxu0 0.0
    %3285 = vmatpush1.msra.mxu0 0.0
    %3286 = vmatprep.subr.mxu0 0.0
    %3287 = vmatpush1.msra.mxu0 0.0
    %3288 = vmatprep.subr.mxu0 0.0
    %3289 = vmatpush1.msra.mxu0 0.0
    %3290 = vmatprep.subr.mxu0 0.0
    %3291 = vmatpush1.msra.mxu0 0.0
    %3292 = vmatprep.subr.mxu0 0.0
    %3293 = vmatpush1.msra.mxu0 0.0
    %3294 = vmatprep.subr.mxu0 0.0
    %3295 = vmatpush1.msra.mxu0 0.0
    %3296 = vmatprep.subr.mxu0 0.0
    %3297 = vmatpush1.msra.mxu0 0.0
    %3298 = vmatprep.subr.mxu0 0.0
    %3299 = vmatpush1.msra.mxu0 %v2881
    %3300 = vmatprep.subr.mxu0 0.0
    %3301 = vmatpush1.msra.mxu0 %v2880
    %3302 = vmatprep.subr.mxu0 0.0
    %3303 = vmatpush1.msra.mxu0 %v2879
    %3304 = vmatprep.subr.mxu0 0.0
    %3305 = vmatpush1.msra.mxu0 %v2878
    %3306 = vmatprep.subr.mxu0 0.0
    %3307 = vmatpush1.msra.mxu0 %v2877
    %3308 = vmatprep.subr.mxu0 0.0
    %3309 = vmatpush1.msra.mxu0 %v2876
    %3310 = vmatprep.subr.mxu0 0.0
    %3311 = vmatpush1.msra.mxu0 %v2875
    %3312 = vmatprep.subr.mxu0 0.0
    %3313 = vmatpush1.msra.mxu0 %v2874
    %3314 = vmatprep.subr.mxu0 0.0
    %3315 = vmatpush2.msra.mxu0 0.0
    %3316 = vmatprep.subr.mxu0 0.0
    %3317 = vmatpush2.msra.mxu0 0.0
    %3318 = vmatprep.subr.mxu0 0.0
    %3319 = vmatpush2.msra.mxu0 0.0
    %3320 = vmatprep.subr.mxu0 0.0
    %3321 = vmatpush2.msra.mxu0 0.0
    %3322 = vmatprep.subr.mxu0 0.0
    %3323 = vmatpush2.msra.mxu0 0.0
    %3324 = vmatprep.subr.mxu0 0.0
    %3325 = vmatpush2.msra.mxu0 0.0
    %3326 = vmatprep.subr.mxu0 0.0
    %3327 = vmatpush2.msra.mxu0 0.0
    %3328 = vmatprep.subr.mxu0 0.0
    %3329 = vmatpush2.msra.mxu0 0.0
    %3330 = vmatprep.subr.mxu0 0.0
    %3331 = vmatpush2.msra.mxu0 0.0
    %3332 = vmatprep.subr.mxu0 0.0
    %3333 = vmatpush2.msra.mxu0 0.0
    %3334 = vmatprep.subr.mxu0 0.0
    %3335 = vmatpush2.msra.mxu0 0.0
    %3336 = vmatprep.subr.mxu0 0.0
    %3337 = vmatpush2.msra.mxu0 0.0
    %3338 = vmatprep.subr.mxu0 0.0
    %3339 = vmatpush2.msra.mxu0 0.0
    %3340 = vmatprep.subr.mxu0 0.0
    %3341 = vmatpush2.msra.mxu0 0.0
    %3342 = vmatprep.subr.mxu0 0.0
    %3343 = vmatpush2.msra.mxu0 0.0
    %3344 = vmatprep.subr.mxu0 0.0
    %3345 = vmatpush2.msra.mxu0 0.0
    %3346 = vmatprep.mubr.f32.mxu0 0.0
    %3347 = vmatmul.mubr.f32.gmra.mxu0 %v3271
    %v3348 = vpop.f32.mrf.mxu0
    %v3349 = vadd.f32 0.0, %v3348
    %v3350 = vpop.f32.mrf.mxu0
    %3351 = vmatprep.mubr.f32.mxu0 0.0
    %3352 = vmatmul.mubr.f32.gmra.mxu0 %v3274
    %v3353 = vpop.f32.mrf.mxu0
    %v3354 = vadd.f32 0.0, %v3353
    %v3355 = vpop.f32.mrf.mxu0
    %3356 = vmatprep.mubr.f32.mxu0 0.0
    %3357 = vmatmul.mubr.f32.gmra.mxu0 %v3277
    %v3358 = vpop.f32.mrf.mxu0
    %v3359 = vadd.f32 0.0, %v3358
    %v3360 = vpop.f32.mrf.mxu0
    %3361 = vmatprep.mubr.f32.mxu0 0.0
    %3362 = vmatmul.mubr.f32.gmra.mxu0 %v3280
    %v3363 = vpop.f32.mrf.mxu0
    %v3364 = vadd.f32 0.0, %v3363
    %v3365 = vpop.f32.mrf.mxu0
    %3366 = vdwg.mxu0
    %v3368 = vsel %vm1627, %v3349, 0
    %v3371 = vsel %vm1627, %v3354, 0
    %v3374 = vsel %vm1627, %v3359, 0
    %v3377 = vsel %vm1627, %v3364, 0
    %3379 = vmatprep.subr.mxu0 0.0
    %3380 = vmatpush1.msra.mxu0 0.0
    %3381 = vmatprep.subr.mxu0 0.0
    %3382 = vmatpush1.msra.mxu0 0.0
    %3383 = vmatprep.subr.mxu0 0.0
    %3384 = vmatpush1.msra.mxu0 0.0
    %3385 = vmatprep.subr.mxu0 0.0
    %3386 = vmatpush1.msra.mxu0 0.0
    %3387 = vmatprep.subr.mxu0 0.0
    %3388 = vmatpush1.msra.mxu0 0.0
    %3389 = vmatprep.subr.mxu0 0.0
    %3390 = vmatpush1.msra.mxu0 0.0
    %3391 = vmatprep.subr.mxu0 0.0
    %3392 = vmatpush1.msra.mxu0 0.0
    %3393 = vmatprep.subr.mxu0 0.0
    %3394 = vmatpush1.msra.mxu0 0.0
    %3395 = vmatprep.subr.mxu0 0.0
    %3396 = vmatpush1.msra.mxu0 0.0
    %3397 = vmatprep.subr.mxu0 0.0
    %3398 = vmatpush1.msra.mxu0 0.0
    %3399 = vmatprep.subr.mxu0 0.0
    %3400 = vmatpush1.msra.mxu0 0.0
    %3401 = vmatprep.subr.mxu0 0.0
    %3402 = vmatpush1.msra.mxu0 0.0
    %3403 = vmatprep.subr.mxu0 0.0
    %3404 = vmatpush1.msra.mxu0 0.0
    %3405 = vmatprep.subr.mxu0 0.0
    %3406 = vmatpush1.msra.mxu0 0.0
    %3407 = vmatprep.subr.mxu0 0.0
    %3408 = vmatpush1.msra.mxu0 %v485
    %3409 = vmatprep.subr.mxu0 0.0
    %3410 = vmatpush1.msra.mxu0 %v484
    %3411 = vmatprep.subr.mxu0 0.0
    %3412 = vmatpush2.msra.mxu0 0.0
    %3413 = vmatprep.subr.mxu0 0.0
    %3414 = vmatpush2.msra.mxu0 0.0
    %3415 = vmatprep.subr.mxu0 0.0
    %3416 = vmatpush2.msra.mxu0 0.0
    %3417 = vmatprep.subr.mxu0 0.0
    %3418 = vmatpush2.msra.mxu0 0.0
    %3419 = vmatprep.subr.mxu0 0.0
    %3420 = vmatpush2.msra.mxu0 0.0
    %3421 = vmatprep.subr.mxu0 0.0
    %3422 = vmatpush2.msra.mxu0 0.0
    %3423 = vmatprep.subr.mxu0 0.0
    %3424 = vmatpush2.msra.mxu0 0.0
    %3425 = vmatprep.subr.mxu0 0.0
    %3426 = vmatpush2.msra.mxu0 0.0
    %3427 = vmatprep.subr.mxu0 0.0
    %3428 = vmatpush2.msra.mxu0 0.0
    %3429 = vmatprep.subr.mxu0 0.0
    %3430 = vmatpush2.msra.mxu0 0.0
    %3431 = vmatprep.subr.mxu0 0.0
    %3432 = vmatpush2.msra.mxu0 0.0
    %3433 = vmatprep.subr.mxu0 0.0
    %3434 = vmatpush2.msra.mxu0 0.0
    %3435 = vmatprep.subr.mxu0 0.0
    %3436 = vmatpush2.msra.mxu0 0.0
    %3437 = vmatprep.subr.mxu0 0.0
    %3438 = vmatpush2.msra.mxu0 0.0
    %3439 = vmatprep.subr.mxu0 0.0
    %3440 = vmatpush2.msra.mxu0 0.0
    %3441 = vmatprep.subr.mxu0 0.0
    %3442 = vmatpush2.msra.mxu0 0.0
    %3443 = vmatprep.mubr.f32.mxu0 0.0
    %3444 = vmatmul.mubr.f32.gmra.mxu0 %v3368
    %v3445 = vpop.f32.mrf.mxu0
    %v3446 = vadd.f32 0.0, %v3445
    %v3447 = vpop.f32.mrf.mxu0
    %3448 = vmatprep.mubr.f32.mxu0 0.0
    %3449 = vmatmul.mubr.f32.gmra.mxu0 %v3371
    %v3450 = vpop.f32.mrf.mxu0
    %v3451 = vadd.f32 0.0, %v3450
    %v3452 = vpop.f32.mrf.mxu0
    %3453 = vmatprep.mubr.f32.mxu0 0.0
    %3454 = vmatmul.mubr.f32.gmra.mxu0 %v3374
    %v3455 = vpop.f32.mrf.mxu0
    %v3456 = vadd.f32 0.0, %v3455
    %v3457 = vpop.f32.mrf.mxu0
    %3458 = vmatprep.mubr.f32.mxu0 0.0
    %3459 = vmatmul.mubr.f32.gmra.mxu0 %v3377
    %v3460 = vpop.f32.mrf.mxu0
    %v3461 = vadd.f32 0.0, %v3460
    %v3462 = vpop.f32.mrf.mxu0
    %3463 = vdwg.mxu0
    %v3464 = vadd.f32 %v3252, %v3446
    %v3465 = vadd.f32 %v3257, %v3451
    %v3466 = vadd.f32 %v3262, %v3456
    %v3467 = vadd.f32 %v3267, %v3461
    %v3469 = vsel %vm948, %v413, 0
    %v3472 = vsel %vm948, %v414, 0
    %v3475 = vsel %vm948, %v415, 0
    %v3478 = vsel %vm948, %v416, 0
    %3480 = vmatprep.subr.mxu0 0.0
    %3481 = vmatpush1.msra.mxu0 0.0
    %3482 = vmatprep.subr.mxu0 0.0
    %3483 = vmatpush1.msra.mxu0 0.0
    %3484 = vmatprep.subr.mxu0 0.0
    %3485 = vmatpush1.msra.mxu0 0.0
    %3486 = vmatprep.subr.mxu0 0.0
    %3487 = vmatpush1.msra.mxu0 0.0
    %3488 = vmatprep.subr.mxu0 0.0
    %3489 = vmatpush1.msra.mxu0 0.0
    %3490 = vmatprep.subr.mxu0 0.0
    %3491 = vmatpush1.msra.mxu0 0.0
    %3492 = vmatprep.subr.mxu0 0.0
    %3493 = vmatpush1.msra.mxu0 0.0
    %3494 = vmatprep.subr.mxu0 0.0
    %3495 = vmatpush1.msra.mxu0 0.0
    %3496 = vmatprep.subr.mxu0 0.0
    %3497 = vmatpush1.msra.mxu0 %v2881
    %3498 = vmatprep.subr.mxu0 0.0
    %3499 = vmatpush1.msra.mxu0 %v2880
    %3500 = vmatprep.subr.mxu0 0.0
    %3501 = vmatpush1.msra.mxu0 %v2879
    %3502 = vmatprep.subr.mxu0 0.0
    %3503 = vmatpush1.msra.mxu0 %v2878
    %3504 = vmatprep.subr.mxu0 0.0
    %3505 = vmatpush1.msra.mxu0 %v2877
    %3506 = vmatprep.subr.mxu0 0.0
    %3507 = vmatpush1.msra.mxu0 %v2876
    %3508 = vmatprep.subr.mxu0 0.0
    %3509 = vmatpush1.msra.mxu0 %v2875
    %3510 = vmatprep.subr.mxu0 0.0
    %3511 = vmatpush1.msra.mxu0 %v2874
    %3512 = vmatprep.subr.mxu0 0.0
    %3513 = vmatpush2.msra.mxu0 0.0
    %3514 = vmatprep.subr.mxu0 0.0
    %3515 = vmatpush2.msra.mxu0 0.0
    %3516 = vmatprep.subr.mxu0 0.0
    %3517 = vmatpush2.msra.mxu0 0.0
    %3518 = vmatprep.subr.mxu0 0.0
    %3519 = vmatpush2.msra.mxu0 0.0
    %3520 = vmatprep.subr.mxu0 0.0
    %3521 = vmatpush2.msra.mxu0 0.0
    %3522 = vmatprep.subr.mxu0 0.0
    %3523 = vmatpush2.msra.mxu0 0.0
    %3524 = vmatprep.subr.mxu0 0.0
    %3525 = vmatpush2.msra.mxu0 0.0
    %3526 = vmatprep.subr.mxu0 0.0
    %3527 = vmatpush2.msra.mxu0 0.0
    %3528 = vmatprep.subr.mxu0 0.0
    %3529 = vmatpush2.msra.mxu0 0.0
    %3530 = vmatprep.subr.mxu0 0.0
    %3531 = vmatpush2.msra.mxu0 0.0
    %3532 = vmatprep.subr.mxu0 0.0
    %3533 = vmatpush2.msra.mxu0 0.0
    %3534 = vmatprep.subr.mxu0 0.0
    %3535 = vmatpush2.msra.mxu0 0.0
    %3536 = vmatprep.subr.mxu0 0.0
    %3537 = vmatpush2.msra.mxu0 0.0
    %3538 = vmatprep.subr.mxu0 0.0
    %3539 = vmatpush2.msra.mxu0 0.0
    %3540 = vmatprep.subr.mxu0 0.0
    %3541 = vmatpush2.msra.mxu0 0.0
    %3542 = vmatprep.subr.mxu0 0.0
    %3543 = vmatpush2.msra.mxu0 0.0
    %3544 = vmatprep.mubr.f32.mxu0 0.0
    %3545 = vmatmul.mubr.f32.gmra.mxu0 %v3469
    %v3546 = vpop.f32.mrf.mxu0
    %v3547 = vadd.f32 0.0, %v3546
    %v3548 = vpop.f32.mrf.mxu0
    %3549 = vmatprep.mubr.f32.mxu0 0.0
    %3550 = vmatmul.mubr.f32.gmra.mxu0 %v3472
    %v3551 = vpop.f32.mrf.mxu0
    %v3552 = vadd.f32 0.0, %v3551
    %v3553 = vpop.f32.mrf.mxu0
    %3554 = vmatprep.mubr.f32.mxu0 0.0
    %3555 = vmatmul.mubr.f32.gmra.mxu0 %v3475
    %v3556 = vpop.f32.mrf.mxu0
    %v3557 = vadd.f32 0.0, %v3556
    %v3558 = vpop.f32.mrf.mxu0
    %3559 = vmatprep.mubr.f32.mxu0 0.0
    %3560 = vmatmul.mubr.f32.gmra.mxu0 %v3478
    %v3561 = vpop.f32.mrf.mxu0
    %v3562 = vadd.f32 0.0, %v3561
    %v3563 = vpop.f32.mrf.mxu0
    %3564 = vdwg.mxu0
    %v3566 = vsel %vm1627, %v3547, 0
    %v3569 = vsel %vm1627, %v3552, 0
    %v3572 = vsel %vm1627, %v3557, 0
    %v3575 = vsel %vm1627, %v3562, 0
    %3577 = vmatprep.subr.mxu0 0.0
    %3578 = vmatpush1.msra.mxu0 0.0
    %3579 = vmatprep.subr.mxu0 0.0
    %3580 = vmatpush1.msra.mxu0 0.0
    %3581 = vmatprep.subr.mxu0 0.0
    %3582 = vmatpush1.msra.mxu0 0.0
    %3583 = vmatprep.subr.mxu0 0.0
    %3584 = vmatpush1.msra.mxu0 0.0
    %3585 = vmatprep.subr.mxu0 0.0
    %3586 = vmatpush1.msra.mxu0 0.0
    %3587 = vmatprep.subr.mxu0 0.0
    %3588 = vmatpush1.msra.mxu0 0.0
    %3589 = vmatprep.subr.mxu0 0.0
    %3590 = vmatpush1.msra.mxu0 0.0
    %3591 = vmatprep.subr.mxu0 0.0
    %3592 = vmatpush1.msra.mxu0 0.0
    %3593 = vmatprep.subr.mxu0 0.0
    %3594 = vmatpush1.msra.mxu0 0.0
    %3595 = vmatprep.subr.mxu0 0.0
    %3596 = vmatpush1.msra.mxu0 0.0
    %3597 = vmatprep.subr.mxu0 0.0
    %3598 = vmatpush1.msra.mxu0 0.0
    %3599 = vmatprep.subr.mxu0 0.0
    %3600 = vmatpush1.msra.mxu0 0.0
    %3601 = vmatprep.subr.mxu0 0.0
    %3602 = vmatpush1.msra.mxu0 0.0
    %3603 = vmatprep.subr.mxu0 0.0
    %3604 = vmatpush1.msra.mxu0 0.0
    %3605 = vmatprep.subr.mxu0 0.0
    %3606 = vmatpush1.msra.mxu0 %v487
    %3607 = vmatprep.subr.mxu0 0.0
    %3608 = vmatpush1.msra.mxu0 %v486
    %3609 = vmatprep.subr.mxu0 0.0
    %3610 = vmatpush2.msra.mxu0 0.0
    %3611 = vmatprep.subr.mxu0 0.0
    %3612 = vmatpush2.msra.mxu0 0.0
    %3613 = vmatprep.subr.mxu0 0.0
    %3614 = vmatpush2.msra.mxu0 0.0
    %3615 = vmatprep.subr.mxu0 0.0
    %3616 = vmatpush2.msra.mxu0 0.0
    %3617 = vmatprep.subr.mxu0 0.0
    %3618 = vmatpush2.msra.mxu0 0.0
    %3619 = vmatprep.subr.mxu0 0.0
    %3620 = vmatpush2.msra.mxu0 0.0
    %3621 = vmatprep.subr.mxu0 0.0
    %3622 = vmatpush2.msra.mxu0 0.0
    %3623 = vmatprep.subr.mxu0 0.0
    %3624 = vmatpush2.msra.mxu0 0.0
    %3625 = vmatprep.subr.mxu0 0.0
    %3626 = vmatpush2.msra.mxu0 0.0
    %3627 = vmatprep.subr.mxu0 0.0
    %3628 = vmatpush2.msra.mxu0 0.0
    %3629 = vmatprep.subr.mxu0 0.0
    %3630 = vmatpush2.msra.mxu0 0.0
    %3631 = vmatprep.subr.mxu0 0.0
    %3632 = vmatpush2.msra.mxu0 0.0
    %3633 = vmatprep.subr.mxu0 0.0
    %3634 = vmatpush2.msra.mxu0 0.0
    %3635 = vmatprep.subr.mxu0 0.0
    %3636 = vmatpush2.msra.mxu0 0.0
    %3637 = vmatprep.subr.mxu0 0.0
    %3638 = vmatpush2.msra.mxu0 0.0
    %3639 = vmatprep.subr.mxu0 0.0
    %3640 = vmatpush2.msra.mxu0 0.0
    %3641 = vmatprep.mubr.f32.mxu0 0.0
    %3642 = vmatmul.mubr.f32.gmra.mxu0 %v3566
    %v3643 = vpop.f32.mrf.mxu0
    %v3644 = vadd.f32 0.0, %v3643
    %v3645 = vpop.f32.mrf.mxu0
    %3646 = vmatprep.mubr.f32.mxu0 0.0
    %3647 = vmatmul.mubr.f32.gmra.mxu0 %v3569
    %v3648 = vpop.f32.mrf.mxu0
    %v3649 = vadd.f32 0.0, %v3648
    %v3650 = vpop.f32.mrf.mxu0
    %3651 = vmatprep.mubr.f32.mxu0 0.0
    %3652 = vmatmul.mubr.f32.gmra.mxu0 %v3572
    %v3653 = vpop.f32.mrf.mxu0
    %v3654 = vadd.f32 0.0, %v3653
    %v3655 = vpop.f32.mrf.mxu0
    %3656 = vmatprep.mubr.f32.mxu0 0.0
    %3657 = vmatmul.mubr.f32.gmra.mxu0 %v3575
    %v3658 = vpop.f32.mrf.mxu0
    %v3659 = vadd.f32 0.0, %v3658
    %v3660 = vpop.f32.mrf.mxu0
    %3661 = vdwg.mxu0
    %v3662 = vadd.f32 %v3464, %v3644
    %v3663 = vadd.f32 %v3465, %v3649
    %v3664 = vadd.f32 %v3466, %v3654
    %v3665 = vadd.f32 %v3467, %v3659
    %v3667 = vlaneseq
    %v3668 = vshrl.u32 %v3667, 7
    %v3669 = vsub.s32 0, %v3668
    %v3670 = vrot.slane %v479, %v3669
    %v3672 = vadd.f32 %v3662, %v3670
    %v3673 = vadd.f32 %v3663, %v3670
    %v3674 = vadd.f32 %v3664, %v3670
    %v3675 = vadd.f32 %v3665, %v3670
    %v3676 = vxor.u32 %v3672, 2147483648
    %v3677 = vxor.u32 %v3673, 2147483648
    %v3678 = vxor.u32 %v3674, 2147483648
    %v3679 = vxor.u32 %v3675, 2147483648
    %v3680 = vmul.f32 %v3676, 1.442695
    %v3681 = vpow.pop %v3680
    %v3682 = vmul.f32 %v3677, 1.442695
    %v3683 = vpow.pop %v3682
    %v3684 = vmul.f32 %v3678, 1.442695
    %v3685 = vpow.pop %v3684
    %v3686 = vmul.f32 %v3679, 1.442695
    %v3687 = vpow.pop %v3686
    %v3688 = vadd.f32 %v3681, 1.0
    %v3689 = vadd.f32 %v3683, 1.0
    %v3690 = vadd.f32 %v3685, 1.0
    %v3691 = vadd.f32 %v3687, 1.0
    %v3692 = vrcp.pop %v3688
    %v3693 = vmul.f32 1.0, %v3692
    %v3694 = vrcp.pop %v3689
    %v3695 = vmul.f32 1.0, %v3694
    %v3696 = vrcp.pop %v3690
    %v3697 = vmul.f32 1.0, %v3696
    %v3698 = vrcp.pop %v3691
    %v3699 = vmul.f32 1.0, %v3698
    %v3700 = vmul.f32 %v3672, %v3693
    %v3701 = vmul.f32 %v3673, %v3695
    %v3702 = vmul.f32 %v3674, %v3697
    %v3703 = vmul.f32 %v3675, %v3699
    %v3705 = vsel %vm2193, %v365, 0
    %v3708 = vsel %vm2193, %v366, 0
    %v3711 = vsel %vm2193, %v367, 0
    %v3714 = vsel %vm2193, %v368, 0
    %3716 = vmatprep.subr.mxu0 0.0
    %3717 = vmatpush1.msra.mxu0 0.0
    %3718 = vmatprep.subr.mxu0 0.0
    %3719 = vmatpush1.msra.mxu0 0.0
    %3720 = vmatprep.subr.mxu0 0.0
    %3721 = vmatpush1.msra.mxu0 0.0
    %3722 = vmatprep.subr.mxu0 0.0
    %3723 = vmatpush1.msra.mxu0 0.0
    %3724 = vmatprep.subr.mxu0 0.0
    %3725 = vmatpush1.msra.mxu0 0.0
    %3726 = vmatprep.subr.mxu0 0.0
    %3727 = vmatpush1.msra.mxu0 0.0
    %3728 = vmatprep.subr.mxu0 0.0
    %3729 = vmatpush1.msra.mxu0 0.0
    %3730 = vmatprep.subr.mxu0 0.0
    %3731 = vmatpush1.msra.mxu0 0.0
    %3732 = vmatprep.subr.mxu0 0.0
    %3733 = vmatpush1.msra.mxu0 0.0
    %3734 = vmatprep.subr.mxu0 0.0
    %3735 = vmatpush1.msra.mxu0 0.0
    %3736 = vmatprep.subr.mxu0 0.0
    %3737 = vmatpush1.msra.mxu0 0.0
    %3738 = vmatprep.subr.mxu0 0.0
    %3739 = vmatpush1.msra.mxu0 0.0
    %3740 = vmatprep.subr.mxu0 0.0
    %3741 = vmatpush1.msra.mxu0 %v3703
    %3742 = vmatprep.subr.mxu0 0.0
    %3743 = vmatpush1.msra.mxu0 %v3702
    %3744 = vmatprep.subr.mxu0 0.0
    %3745 = vmatpush1.msra.mxu0 %v3701
    %3746 = vmatprep.subr.mxu0 0.0
    %3747 = vmatpush1.msra.mxu0 %v3700
    %3748 = vmatprep.subr.mxu0 0.0
    %3749 = vmatpush2.msra.mxu0 0.0
    %3750 = vmatprep.subr.mxu0 0.0
    %3751 = vmatpush2.msra.mxu0 0.0
    %3752 = vmatprep.subr.mxu0 0.0
    %3753 = vmatpush2.msra.mxu0 0.0
    %3754 = vmatprep.subr.mxu0 0.0
    %3755 = vmatpush2.msra.mxu0 0.0
    %3756 = vmatprep.subr.mxu0 0.0
    %3757 = vmatpush2.msra.mxu0 0.0
    %3758 = vmatprep.subr.mxu0 0.0
    %3759 = vmatpush2.msra.mxu0 0.0
    %3760 = vmatprep.subr.mxu0 0.0
    %3761 = vmatpush2.msra.mxu0 0.0
    %3762 = vmatprep.subr.mxu0 0.0
    %3763 = vmatpush2.msra.mxu0 0.0
    %3764 = vmatprep.subr.mxu0 0.0
    %3765 = vmatpush2.msra.mxu0 0.0
    %3766 = vmatprep.subr.mxu0 0.0
    %3767 = vmatpush2.msra.mxu0 0.0
    %3768 = vmatprep.subr.mxu0 0.0
    %3769 = vmatpush2.msra.mxu0 0.0
    %3770 = vmatprep.subr.mxu0 0.0
    %3771 = vmatpush2.msra.mxu0 0.0
    %3772 = vmatprep.subr.mxu0 0.0
    %3773 = vmatpush2.msra.mxu0 0.0
    %3774 = vmatprep.subr.mxu0 0.0
    %3775 = vmatpush2.msra.mxu0 0.0
    %3776 = vmatprep.subr.mxu0 0.0
    %3777 = vmatpush2.msra.mxu0 0.0
    %3778 = vmatprep.subr.mxu0 0.0
    %3779 = vmatpush2.msra.mxu0 0.0
    %3780 = vmatprep.mubr.f32.mxu0 0.0
    %3781 = vmatmul.mubr.f32.gmra.mxu0 %v3705
    %v3782 = vpop.f32.mrf.mxu0
    %v3783 = vadd.f32 0.0, %v3782
    %v3784 = vpop.f32.mrf.mxu0
    %3785 = vmatprep.mubr.f32.mxu0 0.0
    %3786 = vmatmul.mubr.f32.gmra.mxu0 %v3708
    %v3787 = vpop.f32.mrf.mxu0
    %v3788 = vadd.f32 0.0, %v3787
    %v3789 = vpop.f32.mrf.mxu0
    %3790 = vmatprep.mubr.f32.mxu0 0.0
    %3791 = vmatmul.mubr.f32.gmra.mxu0 %v3711
    %v3792 = vpop.f32.mrf.mxu0
    %v3793 = vadd.f32 0.0, %v3792
    %v3794 = vpop.f32.mrf.mxu0
    %3795 = vmatprep.mubr.f32.mxu0 0.0
    %3796 = vmatmul.mubr.f32.gmra.mxu0 %v3714
    %v3797 = vpop.f32.mrf.mxu0
    %v3798 = vadd.f32 0.0, %v3797
    %v3799 = vpop.f32.mrf.mxu0
    %3800 = vdwg.mxu0
    %v3802 = vsel %vm1627, %v3700, 0
    %v3805 = vsel %vm1627, %v3701, 0
    %v3808 = vsel %vm1627, %v3702, 0
    %v3811 = vsel %vm1627, %v3703, 0
    %3813 = vmatprep.subr.mxu0 0.0
    %3814 = vmatpush1.msra.mxu0 0.0
    %3815 = vmatprep.subr.mxu0 0.0
    %3816 = vmatpush1.msra.mxu0 0.0
    %3817 = vmatprep.subr.mxu0 0.0
    %3818 = vmatpush1.msra.mxu0 0.0
    %3819 = vmatprep.subr.mxu0 0.0
    %3820 = vmatpush1.msra.mxu0 0.0
    %3821 = vmatprep.subr.mxu0 0.0
    %3822 = vmatpush1.msra.mxu0 0.0
    %3823 = vmatprep.subr.mxu0 0.0
    %3824 = vmatpush1.msra.mxu0 0.0
    %3825 = vmatprep.subr.mxu0 0.0
    %3826 = vmatpush1.msra.mxu0 0.0
    %3827 = vmatprep.subr.mxu0 0.0
    %3828 = vmatpush1.msra.mxu0 0.0
    %3829 = vmatprep.subr.mxu0 0.0
    %3830 = vmatpush1.msra.mxu0 0.0
    %3831 = vmatprep.subr.mxu0 0.0
    %3832 = vmatpush1.msra.mxu0 0.0
    %3833 = vmatprep.subr.mxu0 0.0
    %3834 = vmatpush1.msra.mxu0 0.0
    %3835 = vmatprep.subr.mxu0 0.0
    %3836 = vmatpush1.msra.mxu0 0.0
    %3837 = vmatprep.subr.mxu0 0.0
    %3838 = vmatpush1.msra.mxu0 0.0
    %3839 = vmatprep.subr.mxu0 0.0
    %3840 = vmatpush1.msra.mxu0 0.0
    %3841 = vmatprep.subr.mxu0 0.0
    %3842 = vmatpush1.msra.mxu0 %v427
    %3843 = vmatprep.subr.mxu0 0.0
    %3844 = vmatpush1.msra.mxu0 %v426
    %3845 = vmatprep.subr.mxu0 0.0
    %3846 = vmatpush2.msra.mxu0 0.0
    %3847 = vmatprep.subr.mxu0 0.0
    %3848 = vmatpush2.msra.mxu0 0.0
    %3849 = vmatprep.subr.mxu0 0.0
    %3850 = vmatpush2.msra.mxu0 0.0
    %3851 = vmatprep.subr.mxu0 0.0
    %3852 = vmatpush2.msra.mxu0 0.0
    %3853 = vmatprep.subr.mxu0 0.0
    %3854 = vmatpush2.msra.mxu0 0.0
    %3855 = vmatprep.subr.mxu0 0.0
    %3856 = vmatpush2.msra.mxu0 0.0
    %3857 = vmatprep.subr.mxu0 0.0
    %3858 = vmatpush2.msra.mxu0 0.0
    %3859 = vmatprep.subr.mxu0 0.0
    %3860 = vmatpush2.msra.mxu0 0.0
    %3861 = vmatprep.subr.mxu0 0.0
    %3862 = vmatpush2.msra.mxu0 0.0
    %3863 = vmatprep.subr.mxu0 0.0
    %3864 = vmatpush2.msra.mxu0 0.0
    %3865 = vmatprep.subr.mxu0 0.0
    %3866 = vmatpush2.msra.mxu0 0.0
    %3867 = vmatprep.subr.mxu0 0.0
    %3868 = vmatpush2.msra.mxu0 0.0
    %3869 = vmatprep.subr.mxu0 0.0
    %3870 = vmatpush2.msra.mxu0 0.0
    %3871 = vmatprep.subr.mxu0 0.0
    %3872 = vmatpush2.msra.mxu0 0.0
    %3873 = vmatprep.subr.mxu0 0.0
    %3874 = vmatpush2.msra.mxu0 0.0
    %3875 = vmatprep.subr.mxu0 0.0
    %3876 = vmatpush2.msra.mxu0 0.0
    %3877 = vmatprep.mubr.f32.mxu0 0.0
    %3878 = vmatmul.mubr.f32.gmra.mxu0 %v3802
    %v3879 = vpop.f32.mrf.mxu0
    %v3880 = vadd.f32 0.0, %v3879
    %v3881 = vpop.f32.mrf.mxu0
    %3882 = vmatprep.mubr.f32.mxu0 0.0
    %3883 = vmatmul.mubr.f32.gmra.mxu0 %v3805
    %v3884 = vpop.f32.mrf.mxu0
    %v3885 = vadd.f32 0.0, %v3884
    %v3886 = vpop.f32.mrf.mxu0
    %3887 = vmatprep.mubr.f32.mxu0 0.0
    %3888 = vmatmul.mubr.f32.gmra.mxu0 %v3808
    %v3889 = vpop.f32.mrf.mxu0
    %v3890 = vadd.f32 0.0, %v3889
    %v3891 = vpop.f32.mrf.mxu0
    %3892 = vmatprep.mubr.f32.mxu0 0.0
    %3893 = vmatmul.mubr.f32.gmra.mxu0 %v3811
    %v3894 = vpop.f32.mrf.mxu0
    %v3895 = vadd.f32 0.0, %v3894
    %v3896 = vpop.f32.mrf.mxu0
    %3897 = vdwg.mxu0
    %v3899 = vsel %vm1627, %v3783, 0
    %v3902 = vsel %vm1627, %v3788, 0
    %v3905 = vsel %vm1627, %v3793, 0
    %v3908 = vsel %vm1627, %v3798, 0
    %3910 = vmatprep.subr.mxu0 0.0
    %3911 = vmatpush1.msra.mxu0 0.0
    %3912 = vmatprep.subr.mxu0 0.0
    %3913 = vmatpush1.msra.mxu0 0.0
    %3914 = vmatprep.subr.mxu0 0.0
    %3915 = vmatpush1.msra.mxu0 0.0
    %3916 = vmatprep.subr.mxu0 0.0
    %3917 = vmatpush1.msra.mxu0 0.0
    %3918 = vmatprep.subr.mxu0 0.0
    %3919 = vmatpush1.msra.mxu0 0.0
    %3920 = vmatprep.subr.mxu0 0.0
    %3921 = vmatpush1.msra.mxu0 0.0
    %3922 = vmatprep.subr.mxu0 0.0
    %3923 = vmatpush1.msra.mxu0 0.0
    %3924 = vmatprep.subr.mxu0 0.0
    %3925 = vmatpush1.msra.mxu0 0.0
    %3926 = vmatprep.subr.mxu0 0.0
    %3927 = vmatpush1.msra.mxu0 0.0
    %3928 = vmatprep.subr.mxu0 0.0
    %3929 = vmatpush1.msra.mxu0 0.0
    %3930 = vmatprep.subr.mxu0 0.0
    %3931 = vmatpush1.msra.mxu0 0.0
    %3932 = vmatprep.subr.mxu0 0.0
    %3933 = vmatpush1.msra.mxu0 0.0
    %3934 = vmatprep.subr.mxu0 0.0
    %3935 = vmatpush1.msra.mxu0 0.0
    %3936 = vmatprep.subr.mxu0 0.0
    %3937 = vmatpush1.msra.mxu0 0.0
    %3938 = vmatprep.subr.mxu0 0.0
    %3939 = vmatpush1.msra.mxu0 %v425
    %3940 = vmatprep.subr.mxu0 0.0
    %3941 = vmatpush1.msra.mxu0 %v424
    %3942 = vmatprep.subr.mxu0 0.0
    %3943 = vmatpush2.msra.mxu0 0.0
    %3944 = vmatprep.subr.mxu0 0.0
    %3945 = vmatpush2.msra.mxu0 0.0
    %3946 = vmatprep.subr.mxu0 0.0
    %3947 = vmatpush2.msra.mxu0 0.0
    %3948 = vmatprep.subr.mxu0 0.0
    %3949 = vmatpush2.msra.mxu0 0.0
    %3950 = vmatprep.subr.mxu0 0.0
    %3951 = vmatpush2.msra.mxu0 0.0
    %3952 = vmatprep.subr.mxu0 0.0
    %3953 = vmatpush2.msra.mxu0 0.0
    %3954 = vmatprep.subr.mxu0 0.0
    %3955 = vmatpush2.msra.mxu0 0.0
    %3956 = vmatprep.subr.mxu0 0.0
    %3957 = vmatpush2.msra.mxu0 0.0
    %3958 = vmatprep.subr.mxu0 0.0
    %3959 = vmatpush2.msra.mxu0 0.0
    %3960 = vmatprep.subr.mxu0 0.0
    %3961 = vmatpush2.msra.mxu0 0.0
    %3962 = vmatprep.subr.mxu0 0.0
    %3963 = vmatpush2.msra.mxu0 0.0
    %3964 = vmatprep.subr.mxu0 0.0
    %3965 = vmatpush2.msra.mxu0 0.0
    %3966 = vmatprep.subr.mxu0 0.0
    %3967 = vmatpush2.msra.mxu0 0.0
    %3968 = vmatprep.subr.mxu0 0.0
    %3969 = vmatpush2.msra.mxu0 0.0
    %3970 = vmatprep.subr.mxu0 0.0
    %3971 = vmatpush2.msra.mxu0 0.0
    %3972 = vmatprep.subr.mxu0 0.0
    %3973 = vmatpush2.msra.mxu0 0.0
    %3974 = vmatprep.mubr.f32.mxu0 0.0
    %3975 = vmatmul.mubr.f32.gmra.mxu0 %v3899
    %v3976 = vpop.f32.mrf.mxu0
    %v3977 = vadd.f32 %v3880, %v3976
    %v3978 = vpop.f32.mrf.mxu0
    %3979 = vmatprep.mubr.f32.mxu0 0.0
    %3980 = vmatmul.mubr.f32.gmra.mxu0 %v3902
    %v3981 = vpop.f32.mrf.mxu0
    %v3982 = vadd.f32 %v3885, %v3981
    %v3983 = vpop.f32.mrf.mxu0
    %3984 = vmatprep.mubr.f32.mxu0 0.0
    %3985 = vmatmul.mubr.f32.gmra.mxu0 %v3905
    %v3986 = vpop.f32.mrf.mxu0
    %v3987 = vadd.f32 %v3890, %v3986
    %v3988 = vpop.f32.mrf.mxu0
    %3989 = vmatprep.mubr.f32.mxu0 0.0
    %3990 = vmatmul.mubr.f32.gmra.mxu0 %v3908
    %v3991 = vpop.f32.mrf.mxu0
    %v3992 = vadd.f32 %v3895, %v3991
    %v3993 = vpop.f32.mrf.mxu0
    %3994 = vdwg.mxu0
    %v3996 = vsel %vm2193, %v369, 0
    %v3999 = vsel %vm2193, %v370, 0
    %v4002 = vsel %vm2193, %v371, 0
    %v4005 = vsel %vm2193, %v372, 0
    %4007 = vmatprep.subr.mxu0 0.0
    %4008 = vmatpush1.msra.mxu0 0.0
    %4009 = vmatprep.subr.mxu0 0.0
    %4010 = vmatpush1.msra.mxu0 0.0
    %4011 = vmatprep.subr.mxu0 0.0
    %4012 = vmatpush1.msra.mxu0 0.0
    %4013 = vmatprep.subr.mxu0 0.0
    %4014 = vmatpush1.msra.mxu0 0.0
    %4015 = vmatprep.subr.mxu0 0.0
    %4016 = vmatpush1.msra.mxu0 0.0
    %4017 = vmatprep.subr.mxu0 0.0
    %4018 = vmatpush1.msra.mxu0 0.0
    %4019 = vmatprep.subr.mxu0 0.0
    %4020 = vmatpush1.msra.mxu0 0.0
    %4021 = vmatprep.subr.mxu0 0.0
    %4022 = vmatpush1.msra.mxu0 0.0
    %4023 = vmatprep.subr.mxu0 0.0
    %4024 = vmatpush1.msra.mxu0 0.0
    %4025 = vmatprep.subr.mxu0 0.0
    %4026 = vmatpush1.msra.mxu0 0.0
    %4027 = vmatprep.subr.mxu0 0.0
    %4028 = vmatpush1.msra.mxu0 0.0
    %4029 = vmatprep.subr.mxu0 0.0
    %4030 = vmatpush1.msra.mxu0 0.0
    %4031 = vmatprep.subr.mxu0 0.0
    %4032 = vmatpush1.msra.mxu0 %v3703
    %4033 = vmatprep.subr.mxu0 0.0
    %4034 = vmatpush1.msra.mxu0 %v3702
    %4035 = vmatprep.subr.mxu0 0.0
    %4036 = vmatpush1.msra.mxu0 %v3701
    %4037 = vmatprep.subr.mxu0 0.0
    %4038 = vmatpush1.msra.mxu0 %v3700
    %4039 = vmatprep.subr.mxu0 0.0
    %4040 = vmatpush2.msra.mxu0 0.0
    %4041 = vmatprep.subr.mxu0 0.0
    %4042 = vmatpush2.msra.mxu0 0.0
    %4043 = vmatprep.subr.mxu0 0.0
    %4044 = vmatpush2.msra.mxu0 0.0
    %4045 = vmatprep.subr.mxu0 0.0
    %4046 = vmatpush2.msra.mxu0 0.0
    %4047 = vmatprep.subr.mxu0 0.0
    %4048 = vmatpush2.msra.mxu0 0.0
    %4049 = vmatprep.subr.mxu0 0.0
    %4050 = vmatpush2.msra.mxu0 0.0
    %4051 = vmatprep.subr.mxu0 0.0
    %4052 = vmatpush2.msra.mxu0 0.0
    %4053 = vmatprep.subr.mxu0 0.0
    %4054 = vmatpush2.msra.mxu0 0.0
    %4055 = vmatprep.subr.mxu0 0.0
    %4056 = vmatpush2.msra.mxu0 0.0
    %4057 = vmatprep.subr.mxu0 0.0
    %4058 = vmatpush2.msra.mxu0 0.0
    %4059 = vmatprep.subr.mxu0 0.0
    %4060 = vmatpush2.msra.mxu0 0.0
    %4061 = vmatprep.subr.mxu0 0.0
    %4062 = vmatpush2.msra.mxu0 0.0
    %4063 = vmatprep.subr.mxu0 0.0
    %4064 = vmatpush2.msra.mxu0 0.0
    %4065 = vmatprep.subr.mxu0 0.0
    %4066 = vmatpush2.msra.mxu0 0.0
    %4067 = vmatprep.subr.mxu0 0.0
    %4068 = vmatpush2.msra.mxu0 0.0
    %4069 = vmatprep.subr.mxu0 0.0
    %4070 = vmatpush2.msra.mxu0 0.0
    %4071 = vmatprep.mubr.f32.mxu0 0.0
    %4072 = vmatmul.mubr.f32.gmra.mxu0 %v3996
    %v4073 = vpop.f32.mrf.mxu0
    %v4074 = vadd.f32 0.0, %v4073
    %v4075 = vpop.f32.mrf.mxu0
    %4076 = vmatprep.mubr.f32.mxu0 0.0
    %4077 = vmatmul.mubr.f32.gmra.mxu0 %v3999
    %v4078 = vpop.f32.mrf.mxu0
    %v4079 = vadd.f32 0.0, %v4078
    %v4080 = vpop.f32.mrf.mxu0
    %4081 = vmatprep.mubr.f32.mxu0 0.0
    %4082 = vmatmul.mubr.f32.gmra.mxu0 %v4002
    %v4083 = vpop.f32.mrf.mxu0
    %v4084 = vadd.f32 0.0, %v4083
    %v4085 = vpop.f32.mrf.mxu0
    %4086 = vmatprep.mubr.f32.mxu0 0.0
    %4087 = vmatmul.mubr.f32.gmra.mxu0 %v4005
    %v4088 = vpop.f32.mrf.mxu0
    %v4089 = vadd.f32 0.0, %v4088
    %v4090 = vpop.f32.mrf.mxu0
    %4091 = vdwg.mxu0
    %v4093 = vsel %vm1627, %v4074, 0
    %v4096 = vsel %vm1627, %v4079, 0
    %v4099 = vsel %vm1627, %v4084, 0
    %v4102 = vsel %vm1627, %v4089, 0
    %4104 = vmatprep.subr.mxu0 0.0
    %4105 = vmatpush1.msra.mxu0 0.0
    %4106 = vmatprep.subr.mxu0 0.0
    %4107 = vmatpush1.msra.mxu0 0.0
    %4108 = vmatprep.subr.mxu0 0.0
    %4109 = vmatpush1.msra.mxu0 0.0
    %4110 = vmatprep.subr.mxu0 0.0
    %4111 = vmatpush1.msra.mxu0 0.0
    %4112 = vmatprep.subr.mxu0 0.0
    %4113 = vmatpush1.msra.mxu0 0.0
    %4114 = vmatprep.subr.mxu0 0.0
    %4115 = vmatpush1.msra.mxu0 0.0
    %4116 = vmatprep.subr.mxu0 0.0
    %4117 = vmatpush1.msra.mxu0 0.0
    %4118 = vmatprep.subr.mxu0 0.0
    %4119 = vmatpush1.msra.mxu0 0.0
    %4120 = vmatprep.subr.mxu0 0.0
    %4121 = vmatpush1.msra.mxu0 0.0
    %4122 = vmatprep.subr.mxu0 0.0
    %4123 = vmatpush1.msra.mxu0 0.0
    %4124 = vmatprep.subr.mxu0 0.0
    %4125 = vmatpush1.msra.mxu0 0.0
    %4126 = vmatprep.subr.mxu0 0.0
    %4127 = vmatpush1.msra.mxu0 0.0
    %4128 = vmatprep.subr.mxu0 0.0
    %4129 = vmatpush1.msra.mxu0 0.0
    %4130 = vmatprep.subr.mxu0 0.0
    %4131 = vmatpush1.msra.mxu0 0.0
    %4132 = vmatprep.subr.mxu0 0.0
    %4133 = vmatpush1.msra.mxu0 %v429
    %4134 = vmatprep.subr.mxu0 0.0
    %4135 = vmatpush1.msra.mxu0 %v428
    %4136 = vmatprep.subr.mxu0 0.0
    %4137 = vmatpush2.msra.mxu0 0.0
    %4138 = vmatprep.subr.mxu0 0.0
    %4139 = vmatpush2.msra.mxu0 0.0
    %4140 = vmatprep.subr.mxu0 0.0
    %4141 = vmatpush2.msra.mxu0 0.0
    %4142 = vmatprep.subr.mxu0 0.0
    %4143 = vmatpush2.msra.mxu0 0.0
    %4144 = vmatprep.subr.mxu0 0.0
    %4145 = vmatpush2.msra.mxu0 0.0
    %4146 = vmatprep.subr.mxu0 0.0
    %4147 = vmatpush2.msra.mxu0 0.0
    %4148 = vmatprep.subr.mxu0 0.0
    %4149 = vmatpush2.msra.mxu0 0.0
    %4150 = vmatprep.subr.mxu0 0.0
    %4151 = vmatpush2.msra.mxu0 0.0
    %4152 = vmatprep.subr.mxu0 0.0
    %4153 = vmatpush2.msra.mxu0 0.0
    %4154 = vmatprep.subr.mxu0 0.0
    %4155 = vmatpush2.msra.mxu0 0.0
    %4156 = vmatprep.subr.mxu0 0.0
    %4157 = vmatpush2.msra.mxu0 0.0
    %4158 = vmatprep.subr.mxu0 0.0
    %4159 = vmatpush2.msra.mxu0 0.0
    %4160 = vmatprep.subr.mxu0 0.0
    %4161 = vmatpush2.msra.mxu0 0.0
    %4162 = vmatprep.subr.mxu0 0.0
    %4163 = vmatpush2.msra.mxu0 0.0
    %4164 = vmatprep.subr.mxu0 0.0
    %4165 = vmatpush2.msra.mxu0 0.0
    %4166 = vmatprep.subr.mxu0 0.0
    %4167 = vmatpush2.msra.mxu0 0.0
    %4168 = vmatprep.mubr.f32.mxu0 0.0
    %4169 = vmatmul.mubr.f32.gmra.mxu0 %v4093
    %v4170 = vpop.f32.mrf.mxu0
    %v4171 = vadd.f32 0.0, %v4170
    %v4172 = vpop.f32.mrf.mxu0
    %4173 = vmatprep.mubr.f32.mxu0 0.0
    %4174 = vmatmul.mubr.f32.gmra.mxu0 %v4096
    %v4175 = vpop.f32.mrf.mxu0
    %v4176 = vadd.f32 0.0, %v4175
    %v4177 = vpop.f32.mrf.mxu0
    %4178 = vmatprep.mubr.f32.mxu0 0.0
    %4179 = vmatmul.mubr.f32.gmra.mxu0 %v4099
    %v4180 = vpop.f32.mrf.mxu0
    %v4181 = vadd.f32 0.0, %v4180
    %v4182 = vpop.f32.mrf.mxu0
    %4183 = vmatprep.mubr.f32.mxu0 0.0
    %4184 = vmatmul.mubr.f32.gmra.mxu0 %v4102
    %v4185 = vpop.f32.mrf.mxu0
    %v4186 = vadd.f32 0.0, %v4185
    %v4187 = vpop.f32.mrf.mxu0
    %4188 = vdwg.mxu0
    %v4189 = vadd.f32 %v3977, %v4171
    %v4190 = vadd.f32 %v3982, %v4176
    %v4191 = vadd.f32 %v3987, %v4181
    %v4192 = vadd.f32 %v3992, %v4186
    %v4194 = vlaneseq
    %v4195 = vshrl.u32 %v4194, 7
    %v4196 = vsub.s32 0, %v4195
    %v4197 = vrot.slane %v423, %v4196
    %v4199 = vadd.f32 %v4189, %v4197
    %v4200 = vadd.f32 %v4190, %v4197
    %v4201 = vadd.f32 %v4191, %v4197
    %v4202 = vadd.f32 %v4192, %v4197
    %v4203 = vxor.u32 %v4199, 2147483648
    %v4204 = vxor.u32 %v4200, 2147483648
    %v4205 = vxor.u32 %v4201, 2147483648
    %v4206 = vxor.u32 %v4202, 2147483648
    %v4207 = vmul.f32 %v4203, 1.442695
    %v4208 = vpow.pop %v4207
    %v4209 = vmul.f32 %v4204, 1.442695
    %v4210 = vpow.pop %v4209
    %v4211 = vmul.f32 %v4205, 1.442695
    %v4212 = vpow.pop %v4211
    %v4213 = vmul.f32 %v4206, 1.442695
    %v4214 = vpow.pop %v4213
    %v4215 = vadd.f32 %v4208, 1.0
    %v4216 = vadd.f32 %v4210, 1.0
    %v4217 = vadd.f32 %v4212, 1.0
    %v4218 = vadd.f32 %v4214, 1.0
    %v4219 = vrcp.pop %v4215
    %v4220 = vmul.f32 1.0, %v4219
    %v4221 = vrcp.pop %v4216
    %v4222 = vmul.f32 1.0, %v4221
    %v4223 = vrcp.pop %v4217
    %v4224 = vmul.f32 1.0, %v4223
    %v4225 = vrcp.pop %v4218
    %v4226 = vmul.f32 1.0, %v4225
    %v4227 = vmul.f32 %v4199, %v4220
    %v4228 = vmul.f32 %v4200, %v4222
    %v4229 = vmul.f32 %v4201, %v4224
    %v4230 = vmul.f32 %v4202, %v4226
    %v4231 = vsel %vm948, %v4227, 0.0
    %v4232 = vsel %vm948, %v4228, 0.0
    %v4233 = vadd.f32 %v4231, %v4232
    %v4234 = vsel %vm948, %v4229, 0.0
    %v4235 = vadd.f32 %v4233, %v4234
    %v4236 = vsel %vm948, %v4230, 0.0
    %v4237 = vadd.f32 %v4235, %v4236
    %v4238 = vrot.slane %v4237, 4
    %v4239 = vadd.f32 %v4237, %v4238
    %v4240 = vrot.slane %v4239, 2
    %v4241 = vadd.f32 %v4239, %v4240
    %v4242 = vrot.slane %v4241, 1
    %v4243 = vadd.f32 %v4241, %v4242
    %v4244 = vrcp.pop 32.0
    %v4245 = vmul.f32 %v4243, %v4244
    %v4246 = vsub.f32 %v4227, %v4245
    %v4247 = vsub.f32 %v4228, %v4245
    %v4248 = vsub.f32 %v4229, %v4245
    %v4249 = vsub.f32 %v4230, %v4245
    %v4250 = vmul.f32 %v4246, %v4246
    %v4251 = vmul.f32 %v4247, %v4247
    %v4252 = vmul.f32 %v4248, %v4248
    %v4253 = vmul.f32 %v4249, %v4249
    %v4254 = vsel %vm948, %v4250, 0.0
    %v4255 = vsel %vm948, %v4251, 0.0
    %v4256 = vadd.f32 %v4254, %v4255
    %v4257 = vsel %vm948, %v4252, 0.0
    %v4258 = vadd.f32 %v4256, %v4257
    %v4259 = vsel %vm948, %v4253, 0.0
    %v4260 = vadd.f32 %v4258, %v4259
    %v4261 = vrot.slane %v4260, 4
    %v4262 = vadd.f32 %v4260, %v4261
    %v4263 = vrot.slane %v4262, 2
    %v4264 = vadd.f32 %v4262, %v4263
    %v4265 = vrot.slane %v4264, 1
    %v4266 = vadd.f32 %v4264, %v4265
    %v4267 = vmul.f32 %v4266, %v4244
    %v4268 = vadd.f32 %v4267, 1e-05
    %v4269 = vrsqrt.pop %v4268
    %v4270 = vmul.f32 %v4246, %v4269
    %v4271 = vmul.f32 %v4247, %v4269
    %v4272 = vmul.f32 %v4248, %v4269
    %v4273 = vmul.f32 %v4249, %v4269
    %v4275 = vlaneseq
    %v4276 = vshrl.u32 %v4275, 7
    %v4277 = vsub.s32 0, %v4276
    %v4278 = vrot.slane %v526, %v4277
    %v4280 = vmul.f32 %v4270, %v4278
    %v4281 = vmul.f32 %v4271, %v4278
    %v4282 = vmul.f32 %v4272, %v4278
    %v4283 = vmul.f32 %v4273, %v4278
    %v4285 = vlaneseq
    %v4286 = vshrl.u32 %v4285, 7
    %v4287 = vsub.s32 0, %v4286
    %v4288 = vrot.slane %v525, %v4287
    %v4290 = vadd.f32 %v4280, %v4288
    %v4291 = vadd.f32 %v4281, %v4288
    %v4292 = vadd.f32 %v4282, %v4288
    %v4293 = vadd.f32 %v4283, %v4288
    %v4295 = vlaneseq
    %v4296 = vshrl.u32 %v4295, 7
    %v4297 = vsub.s32 0, %v4296
    %v4298 = vrot.slane %v545, %v4297
    %v4301 = vsel %vm948, %v4290, 0
    %v4304 = vsel %vm948, %v4291, 0
    %v4307 = vsel %vm948, %v4292, 0
    %v4310 = vsel %vm948, %v4293, 0
    %4312 = vmatprep.subr.mxu0 0.0
    %4313 = vmatpush1.msra.mxu0 0.0
    %4314 = vmatprep.subr.mxu0 0.0
    %4315 = vmatpush1.msra.mxu0 0.0
    %4316 = vmatprep.subr.mxu0 0.0
    %4317 = vmatpush1.msra.mxu0 0.0
    %4318 = vmatprep.subr.mxu0 0.0
    %4319 = vmatpush1.msra.mxu0 0.0
    %4320 = vmatprep.subr.mxu0 0.0
    %4321 = vmatpush1.msra.mxu0 0.0
    %4322 = vmatprep.subr.mxu0 0.0
    %4323 = vmatpush1.msra.mxu0 0.0
    %4324 = vmatprep.subr.mxu0 0.0
    %4325 = vmatpush1.msra.mxu0 0.0
    %4326 = vmatprep.subr.mxu0 0.0
    %4327 = vmatpush1.msra.mxu0 0.0
    %4328 = vmatprep.subr.mxu0 0.0
    %4329 = vmatpush1.msra.mxu0 %v553
    %4330 = vmatprep.subr.mxu0 0.0
    %4331 = vmatpush1.msra.mxu0 %v552
    %4332 = vmatprep.subr.mxu0 0.0
    %4333 = vmatpush1.msra.mxu0 %v551
    %4334 = vmatprep.subr.mxu0 0.0
    %4335 = vmatpush1.msra.mxu0 %v550
    %4336 = vmatprep.subr.mxu0 0.0
    %4337 = vmatpush1.msra.mxu0 %v549
    %4338 = vmatprep.subr.mxu0 0.0
    %4339 = vmatpush1.msra.mxu0 %v548
    %4340 = vmatprep.subr.mxu0 0.0
    %4341 = vmatpush1.msra.mxu0 %v547
    %4342 = vmatprep.subr.mxu0 0.0
    %4343 = vmatpush1.msra.mxu0 %v546
    %4344 = vmatprep.subr.mxu0 0.0
    %4345 = vmatpush2.msra.mxu0 0.0
    %4346 = vmatprep.subr.mxu0 0.0
    %4347 = vmatpush2.msra.mxu0 0.0
    %4348 = vmatprep.subr.mxu0 0.0
    %4349 = vmatpush2.msra.mxu0 0.0
    %4350 = vmatprep.subr.mxu0 0.0
    %4351 = vmatpush2.msra.mxu0 0.0
    %4352 = vmatprep.subr.mxu0 0.0
    %4353 = vmatpush2.msra.mxu0 0.0
    %4354 = vmatprep.subr.mxu0 0.0
    %4355 = vmatpush2.msra.mxu0 0.0
    %4356 = vmatprep.subr.mxu0 0.0
    %4357 = vmatpush2.msra.mxu0 0.0
    %4358 = vmatprep.subr.mxu0 0.0
    %4359 = vmatpush2.msra.mxu0 0.0
    %4360 = vmatprep.subr.mxu0 0.0
    %4361 = vmatpush2.msra.mxu0 0.0
    %4362 = vmatprep.subr.mxu0 0.0
    %4363 = vmatpush2.msra.mxu0 0.0
    %4364 = vmatprep.subr.mxu0 0.0
    %4365 = vmatpush2.msra.mxu0 0.0
    %4366 = vmatprep.subr.mxu0 0.0
    %4367 = vmatpush2.msra.mxu0 0.0
    %4368 = vmatprep.subr.mxu0 0.0
    %4369 = vmatpush2.msra.mxu0 0.0
    %4370 = vmatprep.subr.mxu0 0.0
    %4371 = vmatpush2.msra.mxu0 0.0
    %4372 = vmatprep.subr.mxu0 0.0
    %4373 = vmatpush2.msra.mxu0 0.0
    %4374 = vmatprep.subr.mxu0 0.0
    %4375 = vmatpush2.msra.mxu0 0.0
    %4376 = vmatprep.mubr.f32.mxu0 0.0
    %4377 = vmatmul.mubr.f32.gmra.mxu0 %v4301
    %v4378 = vpop.f32.mrf.mxu0
    %v4379 = vadd.f32 %v4298, %v4378
    %v4380 = vpop.f32.mrf.mxu0
    %4381 = vmatprep.mubr.f32.mxu0 0.0
    %4382 = vmatmul.mubr.f32.gmra.mxu0 %v4304
    %v4383 = vpop.f32.mrf.mxu0
    %v4384 = vadd.f32 %v4298, %v4383
    %v4385 = vpop.f32.mrf.mxu0
    %4386 = vmatprep.mubr.f32.mxu0 0.0
    %4387 = vmatmul.mubr.f32.gmra.mxu0 %v4307
    %v4388 = vpop.f32.mrf.mxu0
    %v4389 = vadd.f32 %v4298, %v4388
    %v4390 = vpop.f32.mrf.mxu0
    %4391 = vmatprep.mubr.f32.mxu0 0.0
    %4392 = vmatmul.mubr.f32.gmra.mxu0 %v4310
    %v4393 = vpop.f32.mrf.mxu0
    %v4394 = vadd.f32 %v4298, %v4393
    %v4395 = vpop.f32.mrf.mxu0
    %4396 = vdwg.mxu0
    %v4398 = vlaneseq
    %v4399 = vshrl.u32 %v4398, 7
    %v4400 = vsub.s32 0, %v4399
    %v4401 = vrot.slane %v527, %v4400
    %4403 = vmatprep.subr.mxu0 0.0
    %4404 = vmatpush1.msra.mxu0 0.0
    %4405 = vmatprep.subr.mxu0 0.0
    %4406 = vmatpush1.msra.mxu0 0.0
    %4407 = vmatprep.subr.mxu0 0.0
    %4408 = vmatpush1.msra.mxu0 0.0
    %4409 = vmatprep.subr.mxu0 0.0
    %4410 = vmatpush1.msra.mxu0 0.0
    %4411 = vmatprep.subr.mxu0 0.0
    %4412 = vmatpush1.msra.mxu0 0.0
    %4413 = vmatprep.subr.mxu0 0.0
    %4414 = vmatpush1.msra.mxu0 0.0
    %4415 = vmatprep.subr.mxu0 0.0
    %4416 = vmatpush1.msra.mxu0 0.0
    %4417 = vmatprep.subr.mxu0 0.0
    %4418 = vmatpush1.msra.mxu0 0.0
    %4419 = vmatprep.subr.mxu0 0.0
    %4420 = vmatpush1.msra.mxu0 %v535
    %4421 = vmatprep.subr.mxu0 0.0
    %4422 = vmatpush1.msra.mxu0 %v534
    %4423 = vmatprep.subr.mxu0 0.0
    %4424 = vmatpush1.msra.mxu0 %v533
    %4425 = vmatprep.subr.mxu0 0.0
    %4426 = vmatpush1.msra.mxu0 %v532
    %4427 = vmatprep.subr.mxu0 0.0
    %4428 = vmatpush1.msra.mxu0 %v531
    %4429 = vmatprep.subr.mxu0 0.0
    %4430 = vmatpush1.msra.mxu0 %v530
    %4431 = vmatprep.subr.mxu0 0.0
    %4432 = vmatpush1.msra.mxu0 %v529
    %4433 = vmatprep.subr.mxu0 0.0
    %4434 = vmatpush1.msra.mxu0 %v528
    %4435 = vmatprep.subr.mxu0 0.0
    %4436 = vmatpush2.msra.mxu0 0.0
    %4437 = vmatprep.subr.mxu0 0.0
    %4438 = vmatpush2.msra.mxu0 0.0
    %4439 = vmatprep.subr.mxu0 0.0
    %4440 = vmatpush2.msra.mxu0 0.0
    %4441 = vmatprep.subr.mxu0 0.0
    %4442 = vmatpush2.msra.mxu0 0.0
    %4443 = vmatprep.subr.mxu0 0.0
    %4444 = vmatpush2.msra.mxu0 0.0
    %4445 = vmatprep.subr.mxu0 0.0
    %4446 = vmatpush2.msra.mxu0 0.0
    %4447 = vmatprep.subr.mxu0 0.0
    %4448 = vmatpush2.msra.mxu0 0.0
    %4449 = vmatprep.subr.mxu0 0.0
    %4450 = vmatpush2.msra.mxu0 0.0
    %4451 = vmatprep.subr.mxu0 0.0
    %4452 = vmatpush2.msra.mxu0 0.0
    %4453 = vmatprep.subr.mxu0 0.0
    %4454 = vmatpush2.msra.mxu0 0.0
    %4455 = vmatprep.subr.mxu0 0.0
    %4456 = vmatpush2.msra.mxu0 0.0
    %4457 = vmatprep.subr.mxu0 0.0
    %4458 = vmatpush2.msra.mxu0 0.0
    %4459 = vmatprep.subr.mxu0 0.0
    %4460 = vmatpush2.msra.mxu0 0.0
    %4461 = vmatprep.subr.mxu0 0.0
    %4462 = vmatpush2.msra.mxu0 0.0
    %4463 = vmatprep.subr.mxu0 0.0
    %4464 = vmatpush2.msra.mxu0 0.0
    %4465 = vmatprep.subr.mxu0 0.0
    %4466 = vmatpush2.msra.mxu0 0.0
    %4467 = vmatprep.mubr.f32.mxu0 0.0
    %4468 = vmatmul.mubr.f32.gmra.mxu0 %v4301
    %v4469 = vpop.f32.mrf.mxu0
    %v4470 = vadd.f32 %v4401, %v4469
    %v4471 = vpop.f32.mrf.mxu0
    %4472 = vmatprep.mubr.f32.mxu0 0.0
    %4473 = vmatmul.mubr.f32.gmra.mxu0 %v4304
    %v4474 = vpop.f32.mrf.mxu0
    %v4475 = vadd.f32 %v4401, %v4474
    %v4476 = vpop.f32.mrf.mxu0
    %4477 = vmatprep.mubr.f32.mxu0 0.0
    %4478 = vmatmul.mubr.f32.gmra.mxu0 %v4307
    %v4479 = vpop.f32.mrf.mxu0
    %v4480 = vadd.f32 %v4401, %v4479
    %v4481 = vpop.f32.mrf.mxu0
    %4482 = vmatprep.mubr.f32.mxu0 0.0
    %4483 = vmatmul.mubr.f32.gmra.mxu0 %v4310
    %v4484 = vpop.f32.mrf.mxu0
    %v4485 = vadd.f32 %v4401, %v4484
    %v4486 = vpop.f32.mrf.mxu0
    %4487 = vdwg.mxu0
    %v4489 = vlaneseq
    %v4490 = vshrl.u32 %v4489, 7
    %v4491 = vsub.s32 0, %v4490
    %v4492 = vrot.slane %v554, %v4491
    %4494 = vmatprep.subr.mxu0 0.0
    %4495 = vmatpush1.msra.mxu0 0.0
    %4496 = vmatprep.subr.mxu0 0.0
    %4497 = vmatpush1.msra.mxu0 0.0
    %4498 = vmatprep.subr.mxu0 0.0
    %4499 = vmatpush1.msra.mxu0 0.0
    %4500 = vmatprep.subr.mxu0 0.0
    %4501 = vmatpush1.msra.mxu0 0.0
    %4502 = vmatprep.subr.mxu0 0.0
    %4503 = vmatpush1.msra.mxu0 0.0
    %4504 = vmatprep.subr.mxu0 0.0
    %4505 = vmatpush1.msra.mxu0 0.0
    %4506 = vmatprep.subr.mxu0 0.0
    %4507 = vmatpush1.msra.mxu0 0.0
    %4508 = vmatprep.subr.mxu0 0.0
    %4509 = vmatpush1.msra.mxu0 0.0
    %4510 = vmatprep.subr.mxu0 0.0
    %4511 = vmatpush1.msra.mxu0 %v562
    %4512 = vmatprep.subr.mxu0 0.0
    %4513 = vmatpush1.msra.mxu0 %v561
    %4514 = vmatprep.subr.mxu0 0.0
    %4515 = vmatpush1.msra.mxu0 %v560
    %4516 = vmatprep.subr.mxu0 0.0
    %4517 = vmatpush1.msra.mxu0 %v559
    %4518 = vmatprep.subr.mxu0 0.0
    %4519 = vmatpush1.msra.mxu0 %v558
    %4520 = vmatprep.subr.mxu0 0.0
    %4521 = vmatpush1.msra.mxu0 %v557
    %4522 = vmatprep.subr.mxu0 0.0
    %4523 = vmatpush1.msra.mxu0 %v556
    %4524 = vmatprep.subr.mxu0 0.0
    %4525 = vmatpush1.msra.mxu0 %v555
    %4526 = vmatprep.subr.mxu0 0.0
    %4527 = vmatpush2.msra.mxu0 0.0
    %4528 = vmatprep.subr.mxu0 0.0
    %4529 = vmatpush2.msra.mxu0 0.0
    %4530 = vmatprep.subr.mxu0 0.0
    %4531 = vmatpush2.msra.mxu0 0.0
    %4532 = vmatprep.subr.mxu0 0.0
    %4533 = vmatpush2.msra.mxu0 0.0
    %4534 = vmatprep.subr.mxu0 0.0
    %4535 = vmatpush2.msra.mxu0 0.0
    %4536 = vmatprep.subr.mxu0 0.0
    %4537 = vmatpush2.msra.mxu0 0.0
    %4538 = vmatprep.subr.mxu0 0.0
    %4539 = vmatpush2.msra.mxu0 0.0
    %4540 = vmatprep.subr.mxu0 0.0
    %4541 = vmatpush2.msra.mxu0 0.0
    %4542 = vmatprep.subr.mxu0 0.0
    %4543 = vmatpush2.msra.mxu0 0.0
    %4544 = vmatprep.subr.mxu0 0.0
    %4545 = vmatpush2.msra.mxu0 0.0
    %4546 = vmatprep.subr.mxu0 0.0
    %4547 = vmatpush2.msra.mxu0 0.0
    %4548 = vmatprep.subr.mxu0 0.0
    %4549 = vmatpush2.msra.mxu0 0.0
    %4550 = vmatprep.subr.mxu0 0.0
    %4551 = vmatpush2.msra.mxu0 0.0
    %4552 = vmatprep.subr.mxu0 0.0
    %4553 = vmatpush2.msra.mxu0 0.0
    %4554 = vmatprep.subr.mxu0 0.0
    %4555 = vmatpush2.msra.mxu0 0.0
    %4556 = vmatprep.subr.mxu0 0.0
    %4557 = vmatpush2.msra.mxu0 0.0
    %4558 = vmatprep.mubr.f32.mxu0 0.0
    %4559 = vmatmul.mubr.f32.gmra.mxu0 %v4301
    %v4560 = vpop.f32.mrf.mxu0
    %v4561 = vadd.f32 %v4492, %v4560
    %v4562 = vpop.f32.mrf.mxu0
    %4563 = vmatprep.mubr.f32.mxu0 0.0
    %4564 = vmatmul.mubr.f32.gmra.mxu0 %v4304
    %v4565 = vpop.f32.mrf.mxu0
    %v4566 = vadd.f32 %v4492, %v4565
    %v4567 = vpop.f32.mrf.mxu0
    %4568 = vmatprep.mubr.f32.mxu0 0.0
    %4569 = vmatmul.mubr.f32.gmra.mxu0 %v4307
    %v4570 = vpop.f32.mrf.mxu0
    %v4571 = vadd.f32 %v4492, %v4570
    %v4572 = vpop.f32.mrf.mxu0
    %4573 = vmatprep.mubr.f32.mxu0 0.0
    %4574 = vmatmul.mubr.f32.gmra.mxu0 %v4310
    %v4575 = vpop.f32.mrf.mxu0
    %v4576 = vadd.f32 %v4492, %v4575
    %v4577 = vpop.f32.mrf.mxu0
    %4578 = vdwg.mxu0
    %v4580 = vsel %vm948, %v4379, 0
    %v4583 = vsel %vm948, %v4384, 0
    %v4586 = vsel %vm948, %v4470, 0
    %v4589 = vsel %vm948, %v4475, 0
    %4591 = vmatprep.subr.mxu0 0.0
    %4592 = vmatpush1.xpose.msra.mxu0 0.0
    %4593 = vmatprep.subr.mxu0 0.0
    %4594 = vmatpush1.xpose.msra.mxu0 0.0
    %4595 = vmatprep.subr.mxu0 0.0
    %4596 = vmatpush1.xpose.msra.mxu0 0.0
    %4597 = vmatprep.subr.mxu0 0.0
    %4598 = vmatpush1.xpose.msra.mxu0 0.0
    %4599 = vmatprep.subr.mxu0 0.0
    %4600 = vmatpush1.xpose.msra.mxu0 0.0
    %4601 = vmatprep.subr.mxu0 0.0
    %4602 = vmatpush1.xpose.msra.mxu0 0.0
    %4603 = vmatprep.subr.mxu0 0.0
    %4604 = vmatpush1.xpose.msra.mxu0 0.0
    %4605 = vmatprep.subr.mxu0 0.0
    %4606 = vmatpush1.xpose.msra.mxu0 0.0
    %4607 = vmatprep.subr.mxu0 0.0
    %4608 = vmatpush1.xpose.msra.mxu0 0.0
    %4609 = vmatprep.subr.mxu0 0.0
    %4610 = vmatpush1.xpose.msra.mxu0 0.0
    %4611 = vmatprep.subr.mxu0 0.0
    %4612 = vmatpush1.xpose.msra.mxu0 0.0
    %4613 = vmatprep.subr.mxu0 0.0
    %4614 = vmatpush1.xpose.msra.mxu0 0.0
    %4615 = vmatprep.subr.mxu0 0.0
    %4616 = vmatpush1.xpose.msra.mxu0 0.0
    %4617 = vmatprep.subr.mxu0 0.0
    %4618 = vmatpush1.xpose.msra.mxu0 0.0
    %4619 = vmatprep.subr.mxu0 0.0
    %4620 = vmatpush1.xpose.msra.mxu0 %v4589
    %4621 = vmatprep.subr.mxu0 0.0
    %4622 = vmatpush1.xpose.msra.mxu0 %v4586
    %4623 = vmatprep.subr.mxu0 0.0
    %4624 = vmatpush2.xpose.msra.mxu0 0.0
    %4625 = vmatprep.subr.mxu0 0.0
    %4626 = vmatpush2.xpose.msra.mxu0 0.0
    %4627 = vmatprep.subr.mxu0 0.0
    %4628 = vmatpush2.xpose.msra.mxu0 0.0
    %4629 = vmatprep.subr.mxu0 0.0
    %4630 = vmatpush2.xpose.msra.mxu0 0.0
    %4631 = vmatprep.subr.mxu0 0.0
    %4632 = vmatpush2.xpose.msra.mxu0 0.0
    %4633 = vmatprep.subr.mxu0 0.0
    %4634 = vmatpush2.xpose.msra.mxu0 0.0
    %4635 = vmatprep.subr.mxu0 0.0
    %4636 = vmatpush2.xpose.msra.mxu0 0.0
    %4637 = vmatprep.subr.mxu0 0.0
    %4638 = vmatpush2.xpose.msra.mxu0 0.0
    %4639 = vmatprep.subr.mxu0 0.0
    %4640 = vmatpush2.xpose.msra.mxu0 0.0
    %4641 = vmatprep.subr.mxu0 0.0
    %4642 = vmatpush2.xpose.msra.mxu0 0.0
    %4643 = vmatprep.subr.mxu0 0.0
    %4644 = vmatpush2.xpose.msra.mxu0 0.0
    %4645 = vmatprep.subr.mxu0 0.0
    %4646 = vmatpush2.xpose.msra.mxu0 0.0
    %4647 = vmatprep.subr.mxu0 0.0
    %4648 = vmatpush2.xpose.msra.mxu0 0.0
    %4649 = vmatprep.subr.mxu0 0.0
    %4650 = vmatpush2.xpose.msra.mxu0 0.0
    %4651 = vmatprep.subr.mxu0 0.0
    %4652 = vmatpush2.xpose.msra.mxu0 0.0
    %4653 = vmatprep.subr.mxu0 0.0
    %4654 = vmatpush2.xpose.msra.mxu0 0.0
    %4655 = vmatprep.mubr.f32.mxu0 0.0
    %4656 = vmatmul.mubr.f32.gmra.mxu0 %v4580
    %v4657 = vpop.f32.mrf.mxu0
    %v4658 = vadd.f32 0.0, %v4657
    %v4659 = vpop.f32.mrf.mxu0
    %4660 = vmatprep.mubr.f32.mxu0 0.0
    %4661 = vmatmul.mubr.f32.gmra.mxu0 %v4583
    %v4662 = vpop.f32.mrf.mxu0
    %v4663 = vadd.f32 0.0, %v4662
    %v4664 = vpop.f32.mrf.mxu0
    %4665 = vdwg.mxu0
    %v4666 = vsel %vm1627, %v4658, -inf
    %4667 = vmax.xlane.f32.xlu0 %v4666
    %v4668 = vpop.xlane.xlu0 %4667
    %v4669 = vsel %vm1627, %v4663, -inf
    %4670 = vmax.xlane.f32.xlu0 %v4669
    %v4671 = vpop.xlane.xlu0 %4670
    %v4672 = vsub.f32 %v4658, %v4668
    %v4673 = vsub.f32 %v4663, %v4671
    %v4674 = vmul.f32 %v4672, 1.442695
    %v4675 = vpow.pop %v4674
    %v4676 = vmul.f32 %v4673, 1.442695
    %v4677 = vpow.pop %v4676
    %v4678 = vsel %vm1627, %v4675, 0.0
    %4679 = vadd.xlane.f32.xlu0 %v4678
    %v4680 = vpop.xlane.xlu0 %4679
    %v4681 = vsel %vm1627, %v4677, 0.0
    %4682 = vadd.xlane.f32.xlu0 %v4681
    %v4683 = vpop.xlane.xlu0 %4682
    %v4684 = vrcp.pop %v4680
    %v4685 = vrcp.pop %v4683
    %v4686 = vmul.f32 %v4675, %v4684
    %v4687 = vmul.f32 %v4677, %v4685
    %v4689 = vsel %vm1627, %v4686, 0
    %v4692 = vsel %vm1627, %v4687, 0
    %4694 = vmatprep.subr.mxu0 0.0
    %4695 = vmatpush1.msra.mxu0 0.0
    %4696 = vmatprep.subr.mxu0 0.0
    %4697 = vmatpush1.msra.mxu0 0.0
    %4698 = vmatprep.subr.mxu0 0.0
    %4699 = vmatpush1.msra.mxu0 0.0
    %4700 = vmatprep.subr.mxu0 0.0
    %4701 = vmatpush1.msra.mxu0 0.0
    %4702 = vmatprep.subr.mxu0 0.0
    %4703 = vmatpush1.msra.mxu0 0.0
    %4704 = vmatprep.subr.mxu0 0.0
    %4705 = vmatpush1.msra.mxu0 0.0
    %4706 = vmatprep.subr.mxu0 0.0
    %4707 = vmatpush1.msra.mxu0 0.0
    %4708 = vmatprep.subr.mxu0 0.0
    %4709 = vmatpush1.msra.mxu0 0.0
    %4710 = vmatprep.subr.mxu0 0.0
    %4711 = vmatpush1.msra.mxu0 0.0
    %4712 = vmatprep.subr.mxu0 0.0
    %4713 = vmatpush1.msra.mxu0 0.0
    %4714 = vmatprep.subr.mxu0 0.0
    %4715 = vmatpush1.msra.mxu0 0.0
    %4716 = vmatprep.subr.mxu0 0.0
    %4717 = vmatpush1.msra.mxu0 0.0
    %4718 = vmatprep.subr.mxu0 0.0
    %4719 = vmatpush1.msra.mxu0 0.0
    %4720 = vmatprep.subr.mxu0 0.0
    %4721 = vmatpush1.msra.mxu0 0.0
    %4722 = vmatprep.subr.mxu0 0.0
    %4723 = vmatpush1.msra.mxu0 %v4566
    %4724 = vmatprep.subr.mxu0 0.0
    %4725 = vmatpush1.msra.mxu0 %v4561
    %4726 = vmatprep.subr.mxu0 0.0
    %4727 = vmatpush2.msra.mxu0 0.0
    %4728 = vmatprep.subr.mxu0 0.0
    %4729 = vmatpush2.msra.mxu0 0.0
    %4730 = vmatprep.subr.mxu0 0.0
    %4731 = vmatpush2.msra.mxu0 0.0
    %4732 = vmatprep.subr.mxu0 0.0
    %4733 = vmatpush2.msra.mxu0 0.0
    %4734 = vmatprep.subr.mxu0 0.0
    %4735 = vmatpush2.msra.mxu0 0.0
    %4736 = vmatprep.subr.mxu0 0.0
    %4737 = vmatpush2.msra.mxu0 0.0
    %4738 = vmatprep.subr.mxu0 0.0
    %4739 = vmatpush2.msra.mxu0 0.0
    %4740 = vmatprep.subr.mxu0 0.0
    %4741 = vmatpush2.msra.mxu0 0.0
    %4742 = vmatprep.subr.mxu0 0.0
    %4743 = vmatpush2.msra.mxu0 0.0
    %4744 = vmatprep.subr.mxu0 0.0
    %4745 = vmatpush2.msra.mxu0 0.0
    %4746 = vmatprep.subr.mxu0 0.0
    %4747 = vmatpush2.msra.mxu0 0.0
    %4748 = vmatprep.subr.mxu0 0.0
    %4749 = vmatpush2.msra.mxu0 0.0
    %4750 = vmatprep.subr.mxu0 0.0
    %4751 = vmatpush2.msra.mxu0 0.0
    %4752 = vmatprep.subr.mxu0 0.0
    %4753 = vmatpush2.msra.mxu0 0.0
    %4754 = vmatprep.subr.mxu0 0.0
    %4755 = vmatpush2.msra.mxu0 0.0
    %4756 = vmatprep.subr.mxu0 0.0
    %4757 = vmatpush2.msra.mxu0 0.0
    %4758 = vmatprep.mubr.f32.mxu0 0.0
    %4759 = vmatmul.mubr.f32.gmra.mxu0 %v4689
    %v4760 = vpop.f32.mrf.mxu0
    %v4761 = vadd.f32 0.0, %v4760
    %v4762 = vpop.f32.mrf.mxu0
    %4763 = vmatprep.mubr.f32.mxu0 0.0
    %4764 = vmatmul.mubr.f32.gmra.mxu0 %v4692
    %v4765 = vpop.f32.mrf.mxu0
    %v4766 = vadd.f32 0.0, %v4765
    %v4767 = vpop.f32.mrf.mxu0
    %4768 = vdwg.mxu0
    %v4770 = vsel %vm948, %v4389, 0
    %v4773 = vsel %vm948, %v4394, 0
    %v4776 = vsel %vm948, %v4480, 0
    %v4779 = vsel %vm948, %v4485, 0
    %4781 = vmatprep.subr.mxu0 0.0
    %4782 = vmatpush1.xpose.msra.mxu0 0.0
    %4783 = vmatprep.subr.mxu0 0.0
    %4784 = vmatpush1.xpose.msra.mxu0 0.0
    %4785 = vmatprep.subr.mxu0 0.0
    %4786 = vmatpush1.xpose.msra.mxu0 0.0
    %4787 = vmatprep.subr.mxu0 0.0
    %4788 = vmatpush1.xpose.msra.mxu0 0.0
    %4789 = vmatprep.subr.mxu0 0.0
    %4790 = vmatpush1.xpose.msra.mxu0 0.0
    %4791 = vmatprep.subr.mxu0 0.0
    %4792 = vmatpush1.xpose.msra.mxu0 0.0
    %4793 = vmatprep.subr.mxu0 0.0
    %4794 = vmatpush1.xpose.msra.mxu0 0.0
    %4795 = vmatprep.subr.mxu0 0.0
    %4796 = vmatpush1.xpose.msra.mxu0 0.0
    %4797 = vmatprep.subr.mxu0 0.0
    %4798 = vmatpush1.xpose.msra.mxu0 0.0
    %4799 = vmatprep.subr.mxu0 0.0
    %4800 = vmatpush1.xpose.msra.mxu0 0.0
    %4801 = vmatprep.subr.mxu0 0.0
    %4802 = vmatpush1.xpose.msra.mxu0 0.0
    %4803 = vmatprep.subr.mxu0 0.0
    %4804 = vmatpush1.xpose.msra.mxu0 0.0
    %4805 = vmatprep.subr.mxu0 0.0
    %4806 = vmatpush1.xpose.msra.mxu0 0.0
    %4807 = vmatprep.subr.mxu0 0.0
    %4808 = vmatpush1.xpose.msra.mxu0 0.0
    %4809 = vmatprep.subr.mxu0 0.0
    %4810 = vmatpush1.xpose.msra.mxu0 %v4779
    %4811 = vmatprep.subr.mxu0 0.0
    %4812 = vmatpush1.xpose.msra.mxu0 %v4776
    %4813 = vmatprep.subr.mxu0 0.0
    %4814 = vmatpush2.xpose.msra.mxu0 0.0
    %4815 = vmatprep.subr.mxu0 0.0
    %4816 = vmatpush2.xpose.msra.mxu0 0.0
    %4817 = vmatprep.subr.mxu0 0.0
    %4818 = vmatpush2.xpose.msra.mxu0 0.0
    %4819 = vmatprep.subr.mxu0 0.0
    %4820 = vmatpush2.xpose.msra.mxu0 0.0
    %4821 = vmatprep.subr.mxu0 0.0
    %4822 = vmatpush2.xpose.msra.mxu0 0.0
    %4823 = vmatprep.subr.mxu0 0.0
    %4824 = vmatpush2.xpose.msra.mxu0 0.0
    %4825 = vmatprep.subr.mxu0 0.0
    %4826 = vmatpush2.xpose.msra.mxu0 0.0
    %4827 = vmatprep.subr.mxu0 0.0
    %4828 = vmatpush2.xpose.msra.mxu0 0.0
    %4829 = vmatprep.subr.mxu0 0.0
    %4830 = vmatpush2.xpose.msra.mxu0 0.0
    %4831 = vmatprep.subr.mxu0 0.0
    %4832 = vmatpush2.xpose.msra.mxu0 0.0
    %4833 = vmatprep.subr.mxu0 0.0
    %4834 = vmatpush2.xpose.msra.mxu0 0.0
    %4835 = vmatprep.subr.mxu0 0.0
    %4836 = vmatpush2.xpose.msra.mxu0 0.0
    %4837 = vmatprep.subr.mxu0 0.0
    %4838 = vmatpush2.xpose.msra.mxu0 0.0
    %4839 = vmatprep.subr.mxu0 0.0
    %4840 = vmatpush2.xpose.msra.mxu0 0.0
    %4841 = vmatprep.subr.mxu0 0.0
    %4842 = vmatpush2.xpose.msra.mxu0 0.0
    %4843 = vmatprep.subr.mxu0 0.0
    %4844 = vmatpush2.xpose.msra.mxu0 0.0
    %4845 = vmatprep.mubr.f32.mxu0 0.0
    %4846 = vmatmul.mubr.f32.gmra.mxu0 %v4770
    %v4847 = vpop.f32.mrf.mxu0
    %v4848 = vadd.f32 0.0, %v4847
    %v4849 = vpop.f32.mrf.mxu0
    %4850 = vmatprep.mubr.f32.mxu0 0.0
    %4851 = vmatmul.mubr.f32.gmra.mxu0 %v4773
    %v4852 = vpop.f32.mrf.mxu0
    %v4853 = vadd.f32 0.0, %v4852
    %v4854 = vpop.f32.mrf.mxu0
    %4855 = vdwg.mxu0
    %v4856 = vsel %vm1627, %v4848, -inf
    %4857 = vmax.xlane.f32.xlu0 %v4856
    %v4858 = vpop.xlane.xlu0 %4857
    %v4859 = vsel %vm1627, %v4853, -inf
    %4860 = vmax.xlane.f32.xlu0 %v4859
    %v4861 = vpop.xlane.xlu0 %4860
    %v4862 = vsub.f32 %v4848, %v4858
    %v4863 = vsub.f32 %v4853, %v4861
    %v4864 = vmul.f32 %v4862, 1.442695
    %v4865 = vpow.pop %v4864
    %v4866 = vmul.f32 %v4863, 1.442695
    %v4867 = vpow.pop %v4866
    %v4868 = vsel %vm1627, %v4865, 0.0
    %4869 = vadd.xlane.f32.xlu0 %v4868
    %v4870 = vpop.xlane.xlu0 %4869
    %v4871 = vsel %vm1627, %v4867, 0.0
    %4872 = vadd.xlane.f32.xlu0 %v4871
    %v4873 = vpop.xlane.xlu0 %4872
    %v4874 = vrcp.pop %v4870
    %v4875 = vrcp.pop %v4873
    %v4876 = vmul.f32 %v4865, %v4874
    %v4877 = vmul.f32 %v4867, %v4875
    %v4879 = vsel %vm1627, %v4876, 0
    %v4882 = vsel %vm1627, %v4877, 0
    %4884 = vmatprep.subr.mxu0 0.0
    %4885 = vmatpush1.msra.mxu0 0.0
    %4886 = vmatprep.subr.mxu0 0.0
    %4887 = vmatpush1.msra.mxu0 0.0
    %4888 = vmatprep.subr.mxu0 0.0
    %4889 = vmatpush1.msra.mxu0 0.0
    %4890 = vmatprep.subr.mxu0 0.0
    %4891 = vmatpush1.msra.mxu0 0.0
    %4892 = vmatprep.subr.mxu0 0.0
    %4893 = vmatpush1.msra.mxu0 0.0
    %4894 = vmatprep.subr.mxu0 0.0
    %4895 = vmatpush1.msra.mxu0 0.0
    %4896 = vmatprep.subr.mxu0 0.0
    %4897 = vmatpush1.msra.mxu0 0.0
    %4898 = vmatprep.subr.mxu0 0.0
    %4899 = vmatpush1.msra.mxu0 0.0
    %4900 = vmatprep.subr.mxu0 0.0
    %4901 = vmatpush1.msra.mxu0 0.0
    %4902 = vmatprep.subr.mxu0 0.0
    %4903 = vmatpush1.msra.mxu0 0.0
    %4904 = vmatprep.subr.mxu0 0.0
    %4905 = vmatpush1.msra.mxu0 0.0
    %4906 = vmatprep.subr.mxu0 0.0
    %4907 = vmatpush1.msra.mxu0 0.0
    %4908 = vmatprep.subr.mxu0 0.0
    %4909 = vmatpush1.msra.mxu0 0.0
    %4910 = vmatprep.subr.mxu0 0.0
    %4911 = vmatpush1.msra.mxu0 0.0
    %4912 = vmatprep.subr.mxu0 0.0
    %4913 = vmatpush1.msra.mxu0 %v4576
    %4914 = vmatprep.subr.mxu0 0.0
    %4915 = vmatpush1.msra.mxu0 %v4571
    %4916 = vmatprep.subr.mxu0 0.0
    %4917 = vmatpush2.msra.mxu0 0.0
    %4918 = vmatprep.subr.mxu0 0.0
    %4919 = vmatpush2.msra.mxu0 0.0
    %4920 = vmatprep.subr.mxu0 0.0
    %4921 = vmatpush2.msra.mxu0 0.0
    %4922 = vmatprep.subr.mxu0 0.0
    %4923 = vmatpush2.msra.mxu0 0.0
    %4924 = vmatprep.subr.mxu0 0.0
    %4925 = vmatpush2.msra.mxu0 0.0
    %4926 = vmatprep.subr.mxu0 0.0
    %4927 = vmatpush2.msra.mxu0 0.0
    %4928 = vmatprep.subr.mxu0 0.0
    %4929 = vmatpush2.msra.mxu0 0.0
    %4930 = vmatprep.subr.mxu0 0.0
    %4931 = vmatpush2.msra.mxu0 0.0
    %4932 = vmatprep.subr.mxu0 0.0
    %4933 = vmatpush2.msra.mxu0 0.0
    %4934 = vmatprep.subr.mxu0 0.0
    %4935 = vmatpush2.msra.mxu0 0.0
    %4936 = vmatprep.subr.mxu0 0.0
    %4937 = vmatpush2.msra.mxu0 0.0
    %4938 = vmatprep.subr.mxu0 0.0
    %4939 = vmatpush2.msra.mxu0 0.0
    %4940 = vmatprep.subr.mxu0 0.0
    %4941 = vmatpush2.msra.mxu0 0.0
    %4942 = vmatprep.subr.mxu0 0.0
    %4943 = vmatpush2.msra.mxu0 0.0
    %4944 = vmatprep.subr.mxu0 0.0
    %4945 = vmatpush2.msra.mxu0 0.0
    %4946 = vmatprep.subr.mxu0 0.0
    %4947 = vmatpush2.msra.mxu0 0.0
    %4948 = vmatprep.mubr.f32.mxu0 0.0
    %4949 = vmatmul.mubr.f32.gmra.mxu0 %v4879
    %v4950 = vpop.f32.mrf.mxu0
    %v4951 = vadd.f32 0.0, %v4950
    %v4952 = vpop.f32.mrf.mxu0
    %4953 = vmatprep.mubr.f32.mxu0 0.0
    %4954 = vmatmul.mubr.f32.gmra.mxu0 %v4882
    %v4955 = vpop.f32.mrf.mxu0
    %v4956 = vadd.f32 0.0, %v4955
    %v4957 = vpop.f32.mrf.mxu0
    %4958 = vdwg.mxu0
    %v4960 = vlaneseq
    %v4961 = vshrl.u32 %v4960, 7
    %v4962 = vsub.s32 0, %v4961
    %v4963 = vrot.slane %v536, %v4962
    %v4966 = vsel %vm948, %v4761, 0
    %v4969 = vsel %vm948, %v4766, 0
    %v4972 = vsel %vm948, %v4951, 0
    %v4975 = vsel %vm948, %v4956, 0
    %4977 = vmatprep.subr.mxu0 0.0
    %4978 = vmatpush1.msra.mxu0 0.0
    %4979 = vmatprep.subr.mxu0 0.0
    %4980 = vmatpush1.msra.mxu0 0.0
    %4981 = vmatprep.subr.mxu0 0.0
    %4982 = vmatpush1.msra.mxu0 0.0
    %4983 = vmatprep.subr.mxu0 0.0
    %4984 = vmatpush1.msra.mxu0 0.0
    %4985 = vmatprep.subr.mxu0 0.0
    %4986 = vmatpush1.msra.mxu0 0.0
    %4987 = vmatprep.subr.mxu0 0.0
    %4988 = vmatpush1.msra.mxu0 0.0
    %4989 = vmatprep.subr.mxu0 0.0
    %4990 = vmatpush1.msra.mxu0 0.0
    %4991 = vmatprep.subr.mxu0 0.0
    %4992 = vmatpush1.msra.mxu0 0.0
    %4993 = vmatprep.subr.mxu0 0.0
    %4994 = vmatpush1.msra.mxu0 %v544
    %4995 = vmatprep.subr.mxu0 0.0
    %4996 = vmatpush1.msra.mxu0 %v543
    %4997 = vmatprep.subr.mxu0 0.0
    %4998 = vmatpush1.msra.mxu0 %v542
    %4999 = vmatprep.subr.mxu0 0.0
    %5000 = vmatpush1.msra.mxu0 %v541
    %5001 = vmatprep.subr.mxu0 0.0
    %5002 = vmatpush1.msra.mxu0 %v540
    %5003 = vmatprep.subr.mxu0 0.0
    %5004 = vmatpush1.msra.mxu0 %v539
    %5005 = vmatprep.subr.mxu0 0.0
    %5006 = vmatpush1.msra.mxu0 %v538
    %5007 = vmatprep.subr.mxu0 0.0
    %5008 = vmatpush1.msra.mxu0 %v537
    %5009 = vmatprep.subr.mxu0 0.0
    %5010 = vmatpush2.msra.mxu0 0.0
    %5011 = vmatprep.subr.mxu0 0.0
    %5012 = vmatpush2.msra.mxu0 0.0
    %5013 = vmatprep.subr.mxu0 0.0
    %5014 = vmatpush2.msra.mxu0 0.0
    %5015 = vmatprep.subr.mxu0 0.0
    %5016 = vmatpush2.msra.mxu0 0.0
    %5017 = vmatprep.subr.mxu0 0.0
    %5018 = vmatpush2.msra.mxu0 0.0
    %5019 = vmatprep.subr.mxu0 0.0
    %5020 = vmatpush2.msra.mxu0 0.0
    %5021 = vmatprep.subr.mxu0 0.0
    %5022 = vmatpush2.msra.mxu0 0.0
    %5023 = vmatprep.subr.mxu0 0.0
    %5024 = vmatpush2.msra.mxu0 0.0
    %5025 = vmatprep.subr.mxu0 0.0
    %5026 = vmatpush2.msra.mxu0 0.0
    %5027 = vmatprep.subr.mxu0 0.0
    %5028 = vmatpush2.msra.mxu0 0.0
    %5029 = vmatprep.subr.mxu0 0.0
    %5030 = vmatpush2.msra.mxu0 0.0
    %5031 = vmatprep.subr.mxu0 0.0
    %5032 = vmatpush2.msra.mxu0 0.0
    %5033 = vmatprep.subr.mxu0 0.0
    %5034 = vmatpush2.msra.mxu0 0.0
    %5035 = vmatprep.subr.mxu0 0.0
    %5036 = vmatpush2.msra.mxu0 0.0
    %5037 = vmatprep.subr.mxu0 0.0
    %5038 = vmatpush2.msra.mxu0 0.0
    %5039 = vmatprep.subr.mxu0 0.0
    %5040 = vmatpush2.msra.mxu0 0.0
    %5041 = vmatprep.mubr.f32.mxu0 0.0
    %5042 = vmatmul.mubr.f32.gmra.mxu0 %v4966
    %v5043 = vpop.f32.mrf.mxu0
    %v5044 = vadd.f32 %v4963, %v5043
    %v5045 = vpop.f32.mrf.mxu0
    %5046 = vmatprep.mubr.f32.mxu0 0.0
    %5047 = vmatmul.mubr.f32.gmra.mxu0 %v4969
    %v5048 = vpop.f32.mrf.mxu0
    %v5049 = vadd.f32 %v4963, %v5048
    %v5050 = vpop.f32.mrf.mxu0
    %5051 = vmatprep.mubr.f32.mxu0 0.0
    %5052 = vmatmul.mubr.f32.gmra.mxu0 %v4972
    %v5053 = vpop.f32.mrf.mxu0
    %v5054 = vadd.f32 %v4963, %v5053
    %v5055 = vpop.f32.mrf.mxu0
    %5056 = vmatprep.mubr.f32.mxu0 0.0
    %5057 = vmatmul.mubr.f32.gmra.mxu0 %v4975
    %v5058 = vpop.f32.mrf.mxu0
    %v5059 = vadd.f32 %v4963, %v5058
    %v5060 = vpop.f32.mrf.mxu0
    %5061 = vdwg.mxu0
    %v5062 = vadd.f32 %v4227, %v5044
    %v5063 = vadd.f32 %v4228, %v5049
    %v5064 = vadd.f32 %v4229, %v5054
    %v5065 = vadd.f32 %v4230, %v5059
    %v5066 = vxor.u32 %v5062, 2147483648
    %v5067 = vxor.u32 %v5063, 2147483648
    %v5068 = vxor.u32 %v5064, 2147483648
    %v5069 = vxor.u32 %v5065, 2147483648
    %v5070 = vmul.f32 %v5066, 1.442695
    %v5071 = vpow.pop %v5070
    %v5072 = vmul.f32 %v5067, 1.442695
    %v5073 = vpow.pop %v5072
    %v5074 = vmul.f32 %v5068, 1.442695
    %v5075 = vpow.pop %v5074
    %v5076 = vmul.f32 %v5069, 1.442695
    %v5077 = vpow.pop %v5076
    %v5078 = vadd.f32 %v5071, 1.0
    %v5079 = vadd.f32 %v5073, 1.0
    %v5080 = vadd.f32 %v5075, 1.0
    %v5081 = vadd.f32 %v5077, 1.0
    %v5082 = vrcp.pop %v5078
    %v5083 = vmul.f32 1.0, %v5082
    %v5084 = vrcp.pop %v5079
    %v5085 = vmul.f32 1.0, %v5084
    %v5086 = vrcp.pop %v5080
    %v5087 = vmul.f32 1.0, %v5086
    %v5088 = vrcp.pop %v5081
    %v5089 = vmul.f32 1.0, %v5088
    %v5090 = vmul.f32 %v5062, %v5083
    %v5091 = vmul.f32 %v5063, %v5085
    %v5092 = vmul.f32 %v5064, %v5087
    %v5093 = vmul.f32 %v5065, %v5089
    %v5094 = vsel %vm948, %v5090, 0.0
    %v5095 = vsel %vm948, %v5091, 0.0
    %v5096 = vadd.f32 %v5094, %v5095
    %v5097 = vsel %vm948, %v5092, 0.0
    %v5098 = vadd.f32 %v5096, %v5097
    %v5099 = vsel %vm948, %v5093, 0.0
    %v5100 = vadd.f32 %v5098, %v5099
    %v5101 = vrot.slane %v5100, 4
    %v5102 = vadd.f32 %v5100, %v5101
    %v5103 = vrot.slane %v5102, 2
    %v5104 = vadd.f32 %v5102, %v5103
    %v5105 = vrot.slane %v5104, 1
    %v5106 = vadd.f32 %v5104, %v5105
    %v5107 = vmul.f32 %v5106, %v4244
    %v5108 = vsub.f32 %v5090, %v5107
    %v5109 = vsub.f32 %v5091, %v5107
    %v5110 = vsub.f32 %v5092, %v5107
    %v5111 = vsub.f32 %v5093, %v5107
    %v5112 = vmul.f32 %v5108, %v5108
    %v5113 = vmul.f32 %v5109, %v5109
    %v5114 = vmul.f32 %v5110, %v5110
    %v5115 = vmul.f32 %v5111, %v5111
    %v5116 = vsel %vm948, %v5112, 0.0
    %v5117 = vsel %vm948, %v5113, 0.0
    %v5118 = vadd.f32 %v5116, %v5117
    %v5119 = vsel %vm948, %v5114, 0.0
    %v5120 = vadd.f32 %v5118, %v5119
    %v5121 = vsel %vm948, %v5115, 0.0
    %v5122 = vadd.f32 %v5120, %v5121
    %v5123 = vrot.slane %v5122, 4
    %v5124 = vadd.f32 %v5122, %v5123
    %v5125 = vrot.slane %v5124, 2
    %v5126 = vadd.f32 %v5124, %v5125
    %v5127 = vrot.slane %v5126, 1
    %v5128 = vadd.f32 %v5126, %v5127
    %v5129 = vmul.f32 %v5128, %v4244
    %v5130 = vadd.f32 %v5129, 1e-05
    %v5131 = vrsqrt.pop %v5130
    %v5132 = vmul.f32 %v5108, %v5131
    %v5133 = vmul.f32 %v5109, %v5131
    %v5134 = vmul.f32 %v5110, %v5131
    %v5135 = vmul.f32 %v5111, %v5131
    %v5137 = vlaneseq
    %v5138 = vshrl.u32 %v5137, 7
    %v5139 = vsub.s32 0, %v5138
    %v5140 = vrot.slane %v418, %v5139
    %v5142 = vmul.f32 %v5132, %v5140
    %v5143 = vmul.f32 %v5133, %v5140
    %v5144 = vmul.f32 %v5134, %v5140
    %v5145 = vmul.f32 %v5135, %v5140
    %v5147 = vlaneseq
    %v5148 = vshrl.u32 %v5147, 7
    %v5149 = vsub.s32 0, %v5148
    %v5150 = vrot.slane %v417, %v5149
    %v5152 = vadd.f32 %v5142, %v5150
    %v5153 = vadd.f32 %v5143, %v5150
    %v5154 = vadd.f32 %v5144, %v5150
    %v5155 = vadd.f32 %v5145, %v5150
    %v5157 = vsel %vm2193, %v393, 0
    %v5160 = vsel %vm2193, %v394, 0
    %5162 = vmatprep.subr.mxu0 0.0
    %5163 = vmatpush1.msra.mxu0 0.0
    %5164 = vmatprep.subr.mxu0 0.0
    %5165 = vmatpush1.msra.mxu0 0.0
    %5166 = vmatprep.subr.mxu0 0.0
    %5167 = vmatpush1.msra.mxu0 0.0
    %5168 = vmatprep.subr.mxu0 0.0
    %5169 = vmatpush1.msra.mxu0 0.0
    %5170 = vmatprep.subr.mxu0 0.0
    %5171 = vmatpush1.msra.mxu0 0.0
    %5172 = vmatprep.subr.mxu0 0.0
    %5173 = vmatpush1.msra.mxu0 0.0
    %5174 = vmatprep.subr.mxu0 0.0
    %5175 = vmatpush1.msra.mxu0 0.0
    %5176 = vmatprep.subr.mxu0 0.0
    %5177 = vmatpush1.msra.mxu0 0.0
    %5178 = vmatprep.subr.mxu0 0.0
    %5179 = vmatpush1.msra.mxu0 0.0
    %5180 = vmatprep.subr.mxu0 0.0
    %5181 = vmatpush1.msra.mxu0 0.0
    %5182 = vmatprep.subr.mxu0 0.0
    %5183 = vmatpush1.msra.mxu0 0.0
    %5184 = vmatprep.subr.mxu0 0.0
    %5185 = vmatpush1.msra.mxu0 0.0
    %5186 = vmatprep.subr.mxu0 0.0
    %5187 = vmatpush1.msra.mxu0 %v5155
    %5188 = vmatprep.subr.mxu0 0.0
    %5189 = vmatpush1.msra.mxu0 %v5154
    %5190 = vmatprep.subr.mxu0 0.0
    %5191 = vmatpush1.msra.mxu0 %v5153
    %5192 = vmatprep.subr.mxu0 0.0
    %5193 = vmatpush1.msra.mxu0 %v5152
    %5194 = vmatprep.subr.mxu0 0.0
    %5195 = vmatpush2.msra.mxu0 0.0
    %5196 = vmatprep.subr.mxu0 0.0
    %5197 = vmatpush2.msra.mxu0 0.0
    %5198 = vmatprep.subr.mxu0 0.0
    %5199 = vmatpush2.msra.mxu0 0.0
    %5200 = vmatprep.subr.mxu0 0.0
    %5201 = vmatpush2.msra.mxu0 0.0
    %5202 = vmatprep.subr.mxu0 0.0
    %5203 = vmatpush2.msra.mxu0 0.0
    %5204 = vmatprep.subr.mxu0 0.0
    %5205 = vmatpush2.msra.mxu0 0.0
    %5206 = vmatprep.subr.mxu0 0.0
    %5207 = vmatpush2.msra.mxu0 0.0
    %5208 = vmatprep.subr.mxu0 0.0
    %5209 = vmatpush2.msra.mxu0 0.0
    %5210 = vmatprep.subr.mxu0 0.0
    %5211 = vmatpush2.msra.mxu0 0.0
    %5212 = vmatprep.subr.mxu0 0.0
    %5213 = vmatpush2.msra.mxu0 0.0
    %5214 = vmatprep.subr.mxu0 0.0
    %5215 = vmatpush2.msra.mxu0 0.0
    %5216 = vmatprep.subr.mxu0 0.0
    %5217 = vmatpush2.msra.mxu0 0.0
    %5218 = vmatprep.subr.mxu0 0.0
    %5219 = vmatpush2.msra.mxu0 0.0
    %5220 = vmatprep.subr.mxu0 0.0
    %5221 = vmatpush2.msra.mxu0 0.0
    %5222 = vmatprep.subr.mxu0 0.0
    %5223 = vmatpush2.msra.mxu0 0.0
    %5224 = vmatprep.subr.mxu0 0.0
    %5225 = vmatpush2.msra.mxu0 0.0
    %5226 = vmatprep.mubr.f32.mxu0 0.0
    %5227 = vmatmul.mubr.f32.gmra.mxu0 %v5157
    %v5228 = vpop.f32.mrf.mxu0
    %v5229 = vadd.f32 0.0, %v5228
    %v5230 = vpop.f32.mrf.mxu0
    %5231 = vmatprep.mubr.f32.mxu0 0.0
    %5232 = vmatmul.mubr.f32.gmra.mxu0 %v5160
    %v5233 = vpop.f32.mrf.mxu0
    %v5234 = vadd.f32 0.0, %v5233
    %v5235 = vpop.f32.mrf.mxu0
    %5236 = vdwg.mxu0
    %v5238 = vsel %vm2193, %v395, 0
    %v5241 = vsel %vm2193, %v396, 0
    %5243 = vmatprep.subr.mxu0 0.0
    %5244 = vmatpush1.msra.mxu0 0.0
    %5245 = vmatprep.subr.mxu0 0.0
    %5246 = vmatpush1.msra.mxu0 0.0
    %5247 = vmatprep.subr.mxu0 0.0
    %5248 = vmatpush1.msra.mxu0 0.0
    %5249 = vmatprep.subr.mxu0 0.0
    %5250 = vmatpush1.msra.mxu0 0.0
    %5251 = vmatprep.subr.mxu0 0.0
    %5252 = vmatpush1.msra.mxu0 0.0
    %5253 = vmatprep.subr.mxu0 0.0
    %5254 = vmatpush1.msra.mxu0 0.0
    %5255 = vmatprep.subr.mxu0 0.0
    %5256 = vmatpush1.msra.mxu0 0.0
    %5257 = vmatprep.subr.mxu0 0.0
    %5258 = vmatpush1.msra.mxu0 0.0
    %5259 = vmatprep.subr.mxu0 0.0
    %5260 = vmatpush1.msra.mxu0 0.0
    %5261 = vmatprep.subr.mxu0 0.0
    %5262 = vmatpush1.msra.mxu0 0.0
    %5263 = vmatprep.subr.mxu0 0.0
    %5264 = vmatpush1.msra.mxu0 0.0
    %5265 = vmatprep.subr.mxu0 0.0
    %5266 = vmatpush1.msra.mxu0 0.0
    %5267 = vmatprep.subr.mxu0 0.0
    %5268 = vmatpush1.msra.mxu0 %v5155
    %5269 = vmatprep.subr.mxu0 0.0
    %5270 = vmatpush1.msra.mxu0 %v5154
    %5271 = vmatprep.subr.mxu0 0.0
    %5272 = vmatpush1.msra.mxu0 %v5153
    %5273 = vmatprep.subr.mxu0 0.0
    %5274 = vmatpush1.msra.mxu0 %v5152
    %5275 = vmatprep.subr.mxu0 0.0
    %5276 = vmatpush2.msra.mxu0 0.0
    %5277 = vmatprep.subr.mxu0 0.0
    %5278 = vmatpush2.msra.mxu0 0.0
    %5279 = vmatprep.subr.mxu0 0.0
    %5280 = vmatpush2.msra.mxu0 0.0
    %5281 = vmatprep.subr.mxu0 0.0
    %5282 = vmatpush2.msra.mxu0 0.0
    %5283 = vmatprep.subr.mxu0 0.0
    %5284 = vmatpush2.msra.mxu0 0.0
    %5285 = vmatprep.subr.mxu0 0.0
    %5286 = vmatpush2.msra.mxu0 0.0
    %5287 = vmatprep.subr.mxu0 0.0
    %5288 = vmatpush2.msra.mxu0 0.0
    %5289 = vmatprep.subr.mxu0 0.0
    %5290 = vmatpush2.msra.mxu0 0.0
    %5291 = vmatprep.subr.mxu0 0.0
    %5292 = vmatpush2.msra.mxu0 0.0
    %5293 = vmatprep.subr.mxu0 0.0
    %5294 = vmatpush2.msra.mxu0 0.0
    %5295 = vmatprep.subr.mxu0 0.0
    %5296 = vmatpush2.msra.mxu0 0.0
    %5297 = vmatprep.subr.mxu0 0.0
    %5298 = vmatpush2.msra.mxu0 0.0
    %5299 = vmatprep.subr.mxu0 0.0
    %5300 = vmatpush2.msra.mxu0 0.0
    %5301 = vmatprep.subr.mxu0 0.0
    %5302 = vmatpush2.msra.mxu0 0.0
    %5303 = vmatprep.subr.mxu0 0.0
    %5304 = vmatpush2.msra.mxu0 0.0
    %5305 = vmatprep.subr.mxu0 0.0
    %5306 = vmatpush2.msra.mxu0 0.0
    %5307 = vmatprep.mubr.f32.mxu0 0.0
    %5308 = vmatmul.mubr.f32.gmra.mxu0 %v5238
    %v5309 = vpop.f32.mrf.mxu0
    %v5310 = vadd.f32 0.0, %v5309
    %v5311 = vpop.f32.mrf.mxu0
    %5312 = vmatprep.mubr.f32.mxu0 0.0
    %5313 = vmatmul.mubr.f32.gmra.mxu0 %v5241
    %v5314 = vpop.f32.mrf.mxu0
    %v5315 = vadd.f32 0.0, %v5314
    %v5316 = vpop.f32.mrf.mxu0
    %5317 = vdwg.mxu0
    %v5319 = vsel %vm948, %v5310, 0
    %v5322 = vsel %vm948, %v5315, 0
    %5324 = vmatprep.subr.mxu0 0.0
    %5325 = vmatpush1.msra.mxu0 0.0
    %5326 = vmatprep.subr.mxu0 0.0
    %5327 = vmatpush1.msra.mxu0 0.0
    %5328 = vmatprep.subr.mxu0 0.0
    %5329 = vmatpush1.msra.mxu0 0.0
    %5330 = vmatprep.subr.mxu0 0.0
    %5331 = vmatpush1.msra.mxu0 0.0
    %5332 = vmatprep.subr.mxu0 0.0
    %5333 = vmatpush1.msra.mxu0 0.0
    %5334 = vmatprep.subr.mxu0 0.0
    %5335 = vmatpush1.msra.mxu0 0.0
    %5336 = vmatprep.subr.mxu0 0.0
    %5337 = vmatpush1.msra.mxu0 0.0
    %5338 = vmatprep.subr.mxu0 0.0
    %5339 = vmatpush1.msra.mxu0 0.0
    %5340 = vmatprep.subr.mxu0 0.0
    %5341 = vmatpush1.msra.mxu0 %v504
    %5342 = vmatprep.subr.mxu0 0.0
    %5343 = vmatpush1.msra.mxu0 %v503
    %5344 = vmatprep.subr.mxu0 0.0
    %5345 = vmatpush1.msra.mxu0 %v502
    %5346 = vmatprep.subr.mxu0 0.0
    %5347 = vmatpush1.msra.mxu0 %v501
    %5348 = vmatprep.subr.mxu0 0.0
    %5349 = vmatpush1.msra.mxu0 %v500
    %5350 = vmatprep.subr.mxu0 0.0
    %5351 = vmatpush1.msra.mxu0 %v499
    %5352 = vmatprep.subr.mxu0 0.0
    %5353 = vmatpush1.msra.mxu0 %v498
    %5354 = vmatprep.subr.mxu0 0.0
    %5355 = vmatpush1.msra.mxu0 %v497
    %5356 = vmatprep.subr.mxu0 0.0
    %5357 = vmatpush2.msra.mxu0 0.0
    %5358 = vmatprep.subr.mxu0 0.0
    %5359 = vmatpush2.msra.mxu0 0.0
    %5360 = vmatprep.subr.mxu0 0.0
    %5361 = vmatpush2.msra.mxu0 0.0
    %5362 = vmatprep.subr.mxu0 0.0
    %5363 = vmatpush2.msra.mxu0 0.0
    %5364 = vmatprep.subr.mxu0 0.0
    %5365 = vmatpush2.msra.mxu0 0.0
    %5366 = vmatprep.subr.mxu0 0.0
    %5367 = vmatpush2.msra.mxu0 0.0
    %5368 = vmatprep.subr.mxu0 0.0
    %5369 = vmatpush2.msra.mxu0 0.0
    %5370 = vmatprep.subr.mxu0 0.0
    %5371 = vmatpush2.msra.mxu0 0.0
    %5372 = vmatprep.subr.mxu0 0.0
    %5373 = vmatpush2.msra.mxu0 0.0
    %5374 = vmatprep.subr.mxu0 0.0
    %5375 = vmatpush2.msra.mxu0 0.0
    %5376 = vmatprep.subr.mxu0 0.0
    %5377 = vmatpush2.msra.mxu0 0.0
    %5378 = vmatprep.subr.mxu0 0.0
    %5379 = vmatpush2.msra.mxu0 0.0
    %5380 = vmatprep.subr.mxu0 0.0
    %5381 = vmatpush2.msra.mxu0 0.0
    %5382 = vmatprep.subr.mxu0 0.0
    %5383 = vmatpush2.msra.mxu0 0.0
    %5384 = vmatprep.subr.mxu0 0.0
    %5385 = vmatpush2.msra.mxu0 0.0
    %5386 = vmatprep.subr.mxu0 0.0
    %5387 = vmatpush2.msra.mxu0 0.0
    %5388 = vmatprep.mubr.f32.mxu0 0.0
    %5389 = vmatmul.mubr.f32.gmra.mxu0 %v5319
    %v5390 = vpop.f32.mrf.mxu0
    %v5391 = vadd.f32 0.0, %v5390
    %v5392 = vpop.f32.mrf.mxu0
    %5393 = vmatprep.mubr.f32.mxu0 0.0
    %5394 = vmatmul.mubr.f32.gmra.mxu0 %v5322
    %v5395 = vpop.f32.mrf.mxu0
    %v5396 = vadd.f32 0.0, %v5395
    %v5397 = vpop.f32.mrf.mxu0
    %5398 = vdwg.mxu0
    %v5400 = vsel %vm948, %v5229, 0
    %v5403 = vsel %vm948, %v5234, 0
    %5405 = vmatprep.subr.mxu0 0.0
    %5406 = vmatpush1.msra.mxu0 0.0
    %5407 = vmatprep.subr.mxu0 0.0
    %5408 = vmatpush1.msra.mxu0 0.0
    %5409 = vmatprep.subr.mxu0 0.0
    %5410 = vmatpush1.msra.mxu0 0.0
    %5411 = vmatprep.subr.mxu0 0.0
    %5412 = vmatpush1.msra.mxu0 0.0
    %5413 = vmatprep.subr.mxu0 0.0
    %5414 = vmatpush1.msra.mxu0 0.0
    %5415 = vmatprep.subr.mxu0 0.0
    %5416 = vmatpush1.msra.mxu0 0.0
    %5417 = vmatprep.subr.mxu0 0.0
    %5418 = vmatpush1.msra.mxu0 0.0
    %5419 = vmatprep.subr.mxu0 0.0
    %5420 = vmatpush1.msra.mxu0 0.0
    %5421 = vmatprep.subr.mxu0 0.0
    %5422 = vmatpush1.msra.mxu0 %v496
    %5423 = vmatprep.subr.mxu0 0.0
    %5424 = vmatpush1.msra.mxu0 %v495
    %5425 = vmatprep.subr.mxu0 0.0
    %5426 = vmatpush1.msra.mxu0 %v494
    %5427 = vmatprep.subr.mxu0 0.0
    %5428 = vmatpush1.msra.mxu0 %v493
    %5429 = vmatprep.subr.mxu0 0.0
    %5430 = vmatpush1.msra.mxu0 %v492
    %5431 = vmatprep.subr.mxu0 0.0
    %5432 = vmatpush1.msra.mxu0 %v491
    %5433 = vmatprep.subr.mxu0 0.0
    %5434 = vmatpush1.msra.mxu0 %v490
    %5435 = vmatprep.subr.mxu0 0.0
    %5436 = vmatpush1.msra.mxu0 %v489
    %5437 = vmatprep.subr.mxu0 0.0
    %5438 = vmatpush2.msra.mxu0 0.0
    %5439 = vmatprep.subr.mxu0 0.0
    %5440 = vmatpush2.msra.mxu0 0.0
    %5441 = vmatprep.subr.mxu0 0.0
    %5442 = vmatpush2.msra.mxu0 0.0
    %5443 = vmatprep.subr.mxu0 0.0
    %5444 = vmatpush2.msra.mxu0 0.0
    %5445 = vmatprep.subr.mxu0 0.0
    %5446 = vmatpush2.msra.mxu0 0.0
    %5447 = vmatprep.subr.mxu0 0.0
    %5448 = vmatpush2.msra.mxu0 0.0
    %5449 = vmatprep.subr.mxu0 0.0
    %5450 = vmatpush2.msra.mxu0 0.0
    %5451 = vmatprep.subr.mxu0 0.0
    %5452 = vmatpush2.msra.mxu0 0.0
    %5453 = vmatprep.subr.mxu0 0.0
    %5454 = vmatpush2.msra.mxu0 0.0
    %5455 = vmatprep.subr.mxu0 0.0
    %5456 = vmatpush2.msra.mxu0 0.0
    %5457 = vmatprep.subr.mxu0 0.0
    %5458 = vmatpush2.msra.mxu0 0.0
    %5459 = vmatprep.subr.mxu0 0.0
    %5460 = vmatpush2.msra.mxu0 0.0
    %5461 = vmatprep.subr.mxu0 0.0
    %5462 = vmatpush2.msra.mxu0 0.0
    %5463 = vmatprep.subr.mxu0 0.0
    %5464 = vmatpush2.msra.mxu0 0.0
    %5465 = vmatprep.subr.mxu0 0.0
    %5466 = vmatpush2.msra.mxu0 0.0
    %5467 = vmatprep.subr.mxu0 0.0
    %5468 = vmatpush2.msra.mxu0 0.0
    %5469 = vmatprep.mubr.f32.mxu0 0.0
    %5470 = vmatmul.mubr.f32.gmra.mxu0 %v5400
    %v5471 = vpop.f32.mrf.mxu0
    %v5472 = vadd.f32 %v5391, %v5471
    %v5473 = vpop.f32.mrf.mxu0
    %5474 = vmatprep.mubr.f32.mxu0 0.0
    %5475 = vmatmul.mubr.f32.gmra.mxu0 %v5403
    %v5476 = vpop.f32.mrf.mxu0
    %v5477 = vadd.f32 %v5396, %v5476
    %v5478 = vpop.f32.mrf.mxu0
    %5479 = vdwg.mxu0
    %v5481 = vsel %vm2193, %v397, 0
    %v5484 = vsel %vm2193, %v398, 0
    %5486 = vmatprep.subr.mxu0 0.0
    %5487 = vmatpush1.msra.mxu0 0.0
    %5488 = vmatprep.subr.mxu0 0.0
    %5489 = vmatpush1.msra.mxu0 0.0
    %5490 = vmatprep.subr.mxu0 0.0
    %5491 = vmatpush1.msra.mxu0 0.0
    %5492 = vmatprep.subr.mxu0 0.0
    %5493 = vmatpush1.msra.mxu0 0.0
    %5494 = vmatprep.subr.mxu0 0.0
    %5495 = vmatpush1.msra.mxu0 0.0
    %5496 = vmatprep.subr.mxu0 0.0
    %5497 = vmatpush1.msra.mxu0 0.0
    %5498 = vmatprep.subr.mxu0 0.0
    %5499 = vmatpush1.msra.mxu0 0.0
    %5500 = vmatprep.subr.mxu0 0.0
    %5501 = vmatpush1.msra.mxu0 0.0
    %5502 = vmatprep.subr.mxu0 0.0
    %5503 = vmatpush1.msra.mxu0 0.0
    %5504 = vmatprep.subr.mxu0 0.0
    %5505 = vmatpush1.msra.mxu0 0.0
    %5506 = vmatprep.subr.mxu0 0.0
    %5507 = vmatpush1.msra.mxu0 0.0
    %5508 = vmatprep.subr.mxu0 0.0
    %5509 = vmatpush1.msra.mxu0 0.0
    %5510 = vmatprep.subr.mxu0 0.0
    %5511 = vmatpush1.msra.mxu0 %v5155
    %5512 = vmatprep.subr.mxu0 0.0
    %5513 = vmatpush1.msra.mxu0 %v5154
    %5514 = vmatprep.subr.mxu0 0.0
    %5515 = vmatpush1.msra.mxu0 %v5153
    %5516 = vmatprep.subr.mxu0 0.0
    %5517 = vmatpush1.msra.mxu0 %v5152
    %5518 = vmatprep.subr.mxu0 0.0
    %5519 = vmatpush2.msra.mxu0 0.0
    %5520 = vmatprep.subr.mxu0 0.0
    %5521 = vmatpush2.msra.mxu0 0.0
    %5522 = vmatprep.subr.mxu0 0.0
    %5523 = vmatpush2.msra.mxu0 0.0
    %5524 = vmatprep.subr.mxu0 0.0
    %5525 = vmatpush2.msra.mxu0 0.0
    %5526 = vmatprep.subr.mxu0 0.0
    %5527 = vmatpush2.msra.mxu0 0.0
    %5528 = vmatprep.subr.mxu0 0.0
    %5529 = vmatpush2.msra.mxu0 0.0
    %5530 = vmatprep.subr.mxu0 0.0
    %5531 = vmatpush2.msra.mxu0 0.0
    %5532 = vmatprep.subr.mxu0 0.0
    %5533 = vmatpush2.msra.mxu0 0.0
    %5534 = vmatprep.subr.mxu0 0.0
    %5535 = vmatpush2.msra.mxu0 0.0
    %5536 = vmatprep.subr.mxu0 0.0
    %5537 = vmatpush2.msra.mxu0 0.0
    %5538 = vmatprep.subr.mxu0 0.0
    %5539 = vmatpush2.msra.mxu0 0.0
    %5540 = vmatprep.subr.mxu0 0.0
    %5541 = vmatpush2.msra.mxu0 0.0
    %5542 = vmatprep.subr.mxu0 0.0
    %5543 = vmatpush2.msra.mxu0 0.0
    %5544 = vmatprep.subr.mxu0 0.0
    %5545 = vmatpush2.msra.mxu0 0.0
    %5546 = vmatprep.subr.mxu0 0.0
    %5547 = vmatpush2.msra.mxu0 0.0
    %5548 = vmatprep.subr.mxu0 0.0
    %5549 = vmatpush2.msra.mxu0 0.0
    %5550 = vmatprep.mubr.f32.mxu0 0.0
    %5551 = vmatmul.mubr.f32.gmra.mxu0 %v5481
    %v5552 = vpop.f32.mrf.mxu0
    %v5553 = vadd.f32 0.0, %v5552
    %v5554 = vpop.f32.mrf.mxu0
    %5555 = vmatprep.mubr.f32.mxu0 0.0
    %5556 = vmatmul.mubr.f32.gmra.mxu0 %v5484
    %v5557 = vpop.f32.mrf.mxu0
    %v5558 = vadd.f32 0.0, %v5557
    %v5559 = vpop.f32.mrf.mxu0
    %5560 = vdwg.mxu0
    %v5562 = vsel %vm948, %v5553, 0
    %v5565 = vsel %vm948, %v5558, 0
    %5567 = vmatprep.subr.mxu0 0.0
    %5568 = vmatpush1.msra.mxu0 0.0
    %5569 = vmatprep.subr.mxu0 0.0
    %5570 = vmatpush1.msra.mxu0 0.0
    %5571 = vmatprep.subr.mxu0 0.0
    %5572 = vmatpush1.msra.mxu0 0.0
    %5573 = vmatprep.subr.mxu0 0.0
    %5574 = vmatpush1.msra.mxu0 0.0
    %5575 = vmatprep.subr.mxu0 0.0
    %5576 = vmatpush1.msra.mxu0 0.0
    %5577 = vmatprep.subr.mxu0 0.0
    %5578 = vmatpush1.msra.mxu0 0.0
    %5579 = vmatprep.subr.mxu0 0.0
    %5580 = vmatpush1.msra.mxu0 0.0
    %5581 = vmatprep.subr.mxu0 0.0
    %5582 = vmatpush1.msra.mxu0 0.0
    %5583 = vmatprep.subr.mxu0 0.0
    %5584 = vmatpush1.msra.mxu0 %v512
    %5585 = vmatprep.subr.mxu0 0.0
    %5586 = vmatpush1.msra.mxu0 %v511
    %5587 = vmatprep.subr.mxu0 0.0
    %5588 = vmatpush1.msra.mxu0 %v510
    %5589 = vmatprep.subr.mxu0 0.0
    %5590 = vmatpush1.msra.mxu0 %v509
    %5591 = vmatprep.subr.mxu0 0.0
    %5592 = vmatpush1.msra.mxu0 %v508
    %5593 = vmatprep.subr.mxu0 0.0
    %5594 = vmatpush1.msra.mxu0 %v507
    %5595 = vmatprep.subr.mxu0 0.0
    %5596 = vmatpush1.msra.mxu0 %v506
    %5597 = vmatprep.subr.mxu0 0.0
    %5598 = vmatpush1.msra.mxu0 %v505
    %5599 = vmatprep.subr.mxu0 0.0
    %5600 = vmatpush2.msra.mxu0 0.0
    %5601 = vmatprep.subr.mxu0 0.0
    %5602 = vmatpush2.msra.mxu0 0.0
    %5603 = vmatprep.subr.mxu0 0.0
    %5604 = vmatpush2.msra.mxu0 0.0
    %5605 = vmatprep.subr.mxu0 0.0
    %5606 = vmatpush2.msra.mxu0 0.0
    %5607 = vmatprep.subr.mxu0 0.0
    %5608 = vmatpush2.msra.mxu0 0.0
    %5609 = vmatprep.subr.mxu0 0.0
    %5610 = vmatpush2.msra.mxu0 0.0
    %5611 = vmatprep.subr.mxu0 0.0
    %5612 = vmatpush2.msra.mxu0 0.0
    %5613 = vmatprep.subr.mxu0 0.0
    %5614 = vmatpush2.msra.mxu0 0.0
    %5615 = vmatprep.subr.mxu0 0.0
    %5616 = vmatpush2.msra.mxu0 0.0
    %5617 = vmatprep.subr.mxu0 0.0
    %5618 = vmatpush2.msra.mxu0 0.0
    %5619 = vmatprep.subr.mxu0 0.0
    %5620 = vmatpush2.msra.mxu0 0.0
    %5621 = vmatprep.subr.mxu0 0.0
    %5622 = vmatpush2.msra.mxu0 0.0
    %5623 = vmatprep.subr.mxu0 0.0
    %5624 = vmatpush2.msra.mxu0 0.0
    %5625 = vmatprep.subr.mxu0 0.0
    %5626 = vmatpush2.msra.mxu0 0.0
    %5627 = vmatprep.subr.mxu0 0.0
    %5628 = vmatpush2.msra.mxu0 0.0
    %5629 = vmatprep.subr.mxu0 0.0
    %5630 = vmatpush2.msra.mxu0 0.0
    %5631 = vmatprep.mubr.f32.mxu0 0.0
    %5632 = vmatmul.mubr.f32.gmra.mxu0 %v5562
    %v5633 = vpop.f32.mrf.mxu0
    %v5634 = vadd.f32 0.0, %v5633
    %v5635 = vpop.f32.mrf.mxu0
    %5636 = vmatprep.mubr.f32.mxu0 0.0
    %5637 = vmatmul.mubr.f32.gmra.mxu0 %v5565
    %v5638 = vpop.f32.mrf.mxu0
    %v5639 = vadd.f32 0.0, %v5638
    %v5640 = vpop.f32.mrf.mxu0
    %5641 = vdwg.mxu0
    %v5642 = vadd.f32 %v5472, %v5634
    %v5643 = vadd.f32 %v5477, %v5639
    %v5645 = vsel %vm2193, %v399, 0
    %v5648 = vsel %vm2193, %v400, 0
    %5650 = vmatprep.subr.mxu0 0.0
    %5651 = vmatpush1.msra.mxu0 0.0
    %5652 = vmatprep.subr.mxu0 0.0
    %5653 = vmatpush1.msra.mxu0 0.0
    %5654 = vmatprep.subr.mxu0 0.0
    %5655 = vmatpush1.msra.mxu0 0.0
    %5656 = vmatprep.subr.mxu0 0.0
    %5657 = vmatpush1.msra.mxu0 0.0
    %5658 = vmatprep.subr.mxu0 0.0
    %5659 = vmatpush1.msra.mxu0 0.0
    %5660 = vmatprep.subr.mxu0 0.0
    %5661 = vmatpush1.msra.mxu0 0.0
    %5662 = vmatprep.subr.mxu0 0.0
    %5663 = vmatpush1.msra.mxu0 0.0
    %5664 = vmatprep.subr.mxu0 0.0
    %5665 = vmatpush1.msra.mxu0 0.0
    %5666 = vmatprep.subr.mxu0 0.0
    %5667 = vmatpush1.msra.mxu0 0.0
    %5668 = vmatprep.subr.mxu0 0.0
    %5669 = vmatpush1.msra.mxu0 0.0
    %5670 = vmatprep.subr.mxu0 0.0
    %5671 = vmatpush1.msra.mxu0 0.0
    %5672 = vmatprep.subr.mxu0 0.0
    %5673 = vmatpush1.msra.mxu0 0.0
    %5674 = vmatprep.subr.mxu0 0.0
    %5675 = vmatpush1.msra.mxu0 %v5155
    %5676 = vmatprep.subr.mxu0 0.0
    %5677 = vmatpush1.msra.mxu0 %v5154
    %5678 = vmatprep.subr.mxu0 0.0
    %5679 = vmatpush1.msra.mxu0 %v5153
    %5680 = vmatprep.subr.mxu0 0.0
    %5681 = vmatpush1.msra.mxu0 %v5152
    %5682 = vmatprep.subr.mxu0 0.0
    %5683 = vmatpush2.msra.mxu0 0.0
    %5684 = vmatprep.subr.mxu0 0.0
    %5685 = vmatpush2.msra.mxu0 0.0
    %5686 = vmatprep.subr.mxu0 0.0
    %5687 = vmatpush2.msra.mxu0 0.0
    %5688 = vmatprep.subr.mxu0 0.0
    %5689 = vmatpush2.msra.mxu0 0.0
    %5690 = vmatprep.subr.mxu0 0.0
    %5691 = vmatpush2.msra.mxu0 0.0
    %5692 = vmatprep.subr.mxu0 0.0
    %5693 = vmatpush2.msra.mxu0 0.0
    %5694 = vmatprep.subr.mxu0 0.0
    %5695 = vmatpush2.msra.mxu0 0.0
    %5696 = vmatprep.subr.mxu0 0.0
    %5697 = vmatpush2.msra.mxu0 0.0
    %5698 = vmatprep.subr.mxu0 0.0
    %5699 = vmatpush2.msra.mxu0 0.0
    %5700 = vmatprep.subr.mxu0 0.0
    %5701 = vmatpush2.msra.mxu0 0.0
    %5702 = vmatprep.subr.mxu0 0.0
    %5703 = vmatpush2.msra.mxu0 0.0
    %5704 = vmatprep.subr.mxu0 0.0
    %5705 = vmatpush2.msra.mxu0 0.0
    %5706 = vmatprep.subr.mxu0 0.0
    %5707 = vmatpush2.msra.mxu0 0.0
    %5708 = vmatprep.subr.mxu0 0.0
    %5709 = vmatpush2.msra.mxu0 0.0
    %5710 = vmatprep.subr.mxu0 0.0
    %5711 = vmatpush2.msra.mxu0 0.0
    %5712 = vmatprep.subr.mxu0 0.0
    %5713 = vmatpush2.msra.mxu0 0.0
    %5714 = vmatprep.mubr.f32.mxu0 0.0
    %5715 = vmatmul.mubr.f32.gmra.mxu0 %v5645
    %v5716 = vpop.f32.mrf.mxu0
    %v5717 = vadd.f32 0.0, %v5716
    %v5718 = vpop.f32.mrf.mxu0
    %5719 = vmatprep.mubr.f32.mxu0 0.0
    %5720 = vmatmul.mubr.f32.gmra.mxu0 %v5648
    %v5721 = vpop.f32.mrf.mxu0
    %v5722 = vadd.f32 0.0, %v5721
    %v5723 = vpop.f32.mrf.mxu0
    %5724 = vdwg.mxu0
    %v5726 = vsel %vm948, %v5717, 0
    %v5729 = vsel %vm948, %v5722, 0
    %5731 = vmatprep.subr.mxu0 0.0
    %5732 = vmatpush1.msra.mxu0 0.0
    %5733 = vmatprep.subr.mxu0 0.0
    %5734 = vmatpush1.msra.mxu0 0.0
    %5735 = vmatprep.subr.mxu0 0.0
    %5736 = vmatpush1.msra.mxu0 0.0
    %5737 = vmatprep.subr.mxu0 0.0
    %5738 = vmatpush1.msra.mxu0 0.0
    %5739 = vmatprep.subr.mxu0 0.0
    %5740 = vmatpush1.msra.mxu0 0.0
    %5741 = vmatprep.subr.mxu0 0.0
    %5742 = vmatpush1.msra.mxu0 0.0
    %5743 = vmatprep.subr.mxu0 0.0
    %5744 = vmatpush1.msra.mxu0 0.0
    %5745 = vmatprep.subr.mxu0 0.0
    %5746 = vmatpush1.msra.mxu0 0.0
    %5747 = vmatprep.subr.mxu0 0.0
    %5748 = vmatpush1.msra.mxu0 %v520
    %5749 = vmatprep.subr.mxu0 0.0
    %5750 = vmatpush1.msra.mxu0 %v519
    %5751 = vmatprep.subr.mxu0 0.0
    %5752 = vmatpush1.msra.mxu0 %v518
    %5753 = vmatprep.subr.mxu0 0.0
    %5754 = vmatpush1.msra.mxu0 %v517
    %5755 = vmatprep.subr.mxu0 0.0
    %5756 = vmatpush1.msra.mxu0 %v516
    %5757 = vmatprep.subr.mxu0 0.0
    %5758 = vmatpush1.msra.mxu0 %v515
    %5759 = vmatprep.subr.mxu0 0.0
    %5760 = vmatpush1.msra.mxu0 %v514
    %5761 = vmatprep.subr.mxu0 0.0
    %5762 = vmatpush1.msra.mxu0 %v513
    %5763 = vmatprep.subr.mxu0 0.0
    %5764 = vmatpush2.msra.mxu0 0.0
    %5765 = vmatprep.subr.mxu0 0.0
    %5766 = vmatpush2.msra.mxu0 0.0
    %5767 = vmatprep.subr.mxu0 0.0
    %5768 = vmatpush2.msra.mxu0 0.0
    %5769 = vmatprep.subr.mxu0 0.0
    %5770 = vmatpush2.msra.mxu0 0.0
    %5771 = vmatprep.subr.mxu0 0.0
    %5772 = vmatpush2.msra.mxu0 0.0
    %5773 = vmatprep.subr.mxu0 0.0
    %5774 = vmatpush2.msra.mxu0 0.0
    %5775 = vmatprep.subr.mxu0 0.0
    %5776 = vmatpush2.msra.mxu0 0.0
    %5777 = vmatprep.subr.mxu0 0.0
    %5778 = vmatpush2.msra.mxu0 0.0
    %5779 = vmatprep.subr.mxu0 0.0
    %5780 = vmatpush2.msra.mxu0 0.0
    %5781 = vmatprep.subr.mxu0 0.0
    %5782 = vmatpush2.msra.mxu0 0.0
    %5783 = vmatprep.subr.mxu0 0.0
    %5784 = vmatpush2.msra.mxu0 0.0
    %5785 = vmatprep.subr.mxu0 0.0
    %5786 = vmatpush2.msra.mxu0 0.0
    %5787 = vmatprep.subr.mxu0 0.0
    %5788 = vmatpush2.msra.mxu0 0.0
    %5789 = vmatprep.subr.mxu0 0.0
    %5790 = vmatpush2.msra.mxu0 0.0
    %5791 = vmatprep.subr.mxu0 0.0
    %5792 = vmatpush2.msra.mxu0 0.0
    %5793 = vmatprep.subr.mxu0 0.0
    %5794 = vmatpush2.msra.mxu0 0.0
    %5795 = vmatprep.mubr.f32.mxu0 0.0
    %5796 = vmatmul.mubr.f32.gmra.mxu0 %v5726
    %v5797 = vpop.f32.mrf.mxu0
    %v5798 = vadd.f32 0.0, %v5797
    %v5799 = vpop.f32.mrf.mxu0
    %5800 = vmatprep.mubr.f32.mxu0 0.0
    %5801 = vmatmul.mubr.f32.gmra.mxu0 %v5729
    %v5802 = vpop.f32.mrf.mxu0
    %v5803 = vadd.f32 0.0, %v5802
    %v5804 = vpop.f32.mrf.mxu0
    %5805 = vdwg.mxu0
    %v5806 = vadd.f32 %v5642, %v5798
    %v5807 = vadd.f32 %v5643, %v5803
    %v5809 = vlaneseq
    %v5810 = vshrl.u32 %v5809, 7
    %v5811 = vsub.s32 0, %v5810
    %v5812 = vrot.slane %v488, %v5811
    %v5814 = vadd.f32 %v5806, %v5812
    %v5815 = vadd.f32 %v5807, %v5812
    %v5816 = vxor.u32 %v5814, 2147483648
    %v5817 = vxor.u32 %v5815, 2147483648
    %v5818 = vmul.f32 %v5816, 1.442695
    %v5819 = vpow.pop %v5818
    %v5820 = vmul.f32 %v5817, 1.442695
    %v5821 = vpow.pop %v5820
    %v5822 = vadd.f32 %v5819, 1.0
    %v5823 = vadd.f32 %v5821, 1.0
    %v5824 = vrcp.pop %v5822
    %v5825 = vmul.f32 1.0, %v5824
    %v5826 = vrcp.pop %v5823
    %v5827 = vmul.f32 1.0, %v5826
    %v5828 = vmul.f32 %v5814, %v5825
    %v5829 = vmul.f32 %v5815, %v5827
    %v5831 = vsel %vm1627, %v389, 0
    %v5834 = vsel %vm1627, %v390, 0
    %5836 = vmatprep.subr.mxu0 0.0
    %5837 = vmatpush1.msra.mxu0 0.0
    %5838 = vmatprep.subr.mxu0 0.0
    %5839 = vmatpush1.msra.mxu0 0.0
    %5840 = vmatprep.subr.mxu0 0.0
    %5841 = vmatpush1.msra.mxu0 0.0
    %5842 = vmatprep.subr.mxu0 0.0
    %5843 = vmatpush1.msra.mxu0 0.0
    %5844 = vmatprep.subr.mxu0 0.0
    %5845 = vmatpush1.msra.mxu0 0.0
    %5846 = vmatprep.subr.mxu0 0.0
    %5847 = vmatpush1.msra.mxu0 0.0
    %5848 = vmatprep.subr.mxu0 0.0
    %5849 = vmatpush1.msra.mxu0 0.0
    %5850 = vmatprep.subr.mxu0 0.0
    %5851 = vmatpush1.msra.mxu0 0.0
    %5852 = vmatprep.subr.mxu0 0.0
    %5853 = vmatpush1.msra.mxu0 0.0
    %5854 = vmatprep.subr.mxu0 0.0
    %5855 = vmatpush1.msra.mxu0 0.0
    %5856 = vmatprep.subr.mxu0 0.0
    %5857 = vmatpush1.msra.mxu0 0.0
    %5858 = vmatprep.subr.mxu0 0.0
    %5859 = vmatpush1.msra.mxu0 0.0
    %5860 = vmatprep.subr.mxu0 0.0
    %5861 = vmatpush1.msra.mxu0 0.0
    %5862 = vmatprep.subr.mxu0 0.0
    %5863 = vmatpush1.msra.mxu0 0.0
    %5864 = vmatprep.subr.mxu0 0.0
    %5865 = vmatpush1.msra.mxu0 %v5829
    %5866 = vmatprep.subr.mxu0 0.0
    %5867 = vmatpush1.msra.mxu0 %v5828
    %5868 = vmatprep.subr.mxu0 0.0
    %5869 = vmatpush2.msra.mxu0 0.0
    %5870 = vmatprep.subr.mxu0 0.0
    %5871 = vmatpush2.msra.mxu0 0.0
    %5872 = vmatprep.subr.mxu0 0.0
    %5873 = vmatpush2.msra.mxu0 0.0
    %5874 = vmatprep.subr.mxu0 0.0
    %5875 = vmatpush2.msra.mxu0 0.0
    %5876 = vmatprep.subr.mxu0 0.0
    %5877 = vmatpush2.msra.mxu0 0.0
    %5878 = vmatprep.subr.mxu0 0.0
    %5879 = vmatpush2.msra.mxu0 0.0
    %5880 = vmatprep.subr.mxu0 0.0
    %5881 = vmatpush2.msra.mxu0 0.0
    %5882 = vmatprep.subr.mxu0 0.0
    %5883 = vmatpush2.msra.mxu0 0.0
    %5884 = vmatprep.subr.mxu0 0.0
    %5885 = vmatpush2.msra.mxu0 0.0
    %5886 = vmatprep.subr.mxu0 0.0
    %5887 = vmatpush2.msra.mxu0 0.0
    %5888 = vmatprep.subr.mxu0 0.0
    %5889 = vmatpush2.msra.mxu0 0.0
    %5890 = vmatprep.subr.mxu0 0.0
    %5891 = vmatpush2.msra.mxu0 0.0
    %5892 = vmatprep.subr.mxu0 0.0
    %5893 = vmatpush2.msra.mxu0 0.0
    %5894 = vmatprep.subr.mxu0 0.0
    %5895 = vmatpush2.msra.mxu0 0.0
    %5896 = vmatprep.subr.mxu0 0.0
    %5897 = vmatpush2.msra.mxu0 0.0
    %5898 = vmatprep.subr.mxu0 0.0
    %5899 = vmatpush2.msra.mxu0 0.0
    %5900 = vmatprep.mubr.f32.mxu0 0.0
    %5901 = vmatmul.mubr.f32.gmra.mxu0 %v5831
    %v5902 = vpop.f32.mrf.mxu0
    %v5903 = vadd.f32 0.0, %v5902
    %v5904 = vpop.f32.mrf.mxu0
    %5905 = vmatprep.mubr.f32.mxu0 0.0
    %5906 = vmatmul.mubr.f32.gmra.mxu0 %v5834
    %v5907 = vpop.f32.mrf.mxu0
    %v5908 = vadd.f32 0.0, %v5907
    %v5909 = vpop.f32.mrf.mxu0
    %5910 = vdwg.mxu0
    %v5912 = vsel %vm948, %v5828, 0
    %v5915 = vsel %vm948, %v5829, 0
    %5917 = vmatprep.subr.mxu0 0.0
    %5918 = vmatpush1.msra.mxu0 0.0
    %5919 = vmatprep.subr.mxu0 0.0
    %5920 = vmatpush1.msra.mxu0 0.0
    %5921 = vmatprep.subr.mxu0 0.0
    %5922 = vmatpush1.msra.mxu0 0.0
    %5923 = vmatprep.subr.mxu0 0.0
    %5924 = vmatpush1.msra.mxu0 0.0
    %5925 = vmatprep.subr.mxu0 0.0
    %5926 = vmatpush1.msra.mxu0 0.0
    %5927 = vmatprep.subr.mxu0 0.0
    %5928 = vmatpush1.msra.mxu0 0.0
    %5929 = vmatprep.subr.mxu0 0.0
    %5930 = vmatpush1.msra.mxu0 0.0
    %5931 = vmatprep.subr.mxu0 0.0
    %5932 = vmatpush1.msra.mxu0 0.0
    %5933 = vmatprep.subr.mxu0 %v462
    %5934 = vmatpush1.msra.mxu0 %v461
    %5935 = vmatprep.subr.mxu0 %v460
    %5936 = vmatpush1.msra.mxu0 %v459
    %5937 = vmatprep.subr.mxu0 %v458
    %5938 = vmatpush1.msra.mxu0 %v457
    %5939 = vmatprep.subr.mxu0 %v456
    %5940 = vmatpush1.msra.mxu0 %v455
    %5941 = vmatprep.subr.mxu0 %v454
    %5942 = vmatpush1.msra.mxu0 %v453
    %5943 = vmatprep.subr.mxu0 %v452
    %5944 = vmatpush1.msra.mxu0 %v451
    %5945 = vmatprep.subr.mxu0 %v450
    %5946 = vmatpush1.msra.mxu0 %v449
    %5947 = vmatprep.subr.mxu0 %v448
    %5948 = vmatpush1.msra.mxu0 %v447
    %5949 = vmatprep.subr.mxu0 0.0
    %5950 = vmatpush2.msra.mxu0 0.0
    %5951 = vmatprep.subr.mxu0 0.0
    %5952 = vmatpush2.msra.mxu0 0.0
    %5953 = vmatprep.subr.mxu0 0.0
    %5954 = vmatpush2.msra.mxu0 0.0
    %5955 = vmatprep.subr.mxu0 0.0
    %5956 = vmatpush2.msra.mxu0 0.0
    %5957 = vmatprep.subr.mxu0 0.0
    %5958 = vmatpush2.msra.mxu0 0.0
    %5959 = vmatprep.subr.mxu0 0.0
    %5960 = vmatpush2.msra.mxu0 0.0
    %5961 = vmatprep.subr.mxu0 0.0
    %5962 = vmatpush2.msra.mxu0 0.0
    %5963 = vmatprep.subr.mxu0 0.0
    %5964 = vmatpush2.msra.mxu0 0.0
    %5965 = vmatprep.subr.mxu0 0.0
    %5966 = vmatpush2.msra.mxu0 0.0
    %5967 = vmatprep.subr.mxu0 0.0
    %5968 = vmatpush2.msra.mxu0 0.0
    %5969 = vmatprep.subr.mxu0 0.0
    %5970 = vmatpush2.msra.mxu0 0.0
    %5971 = vmatprep.subr.mxu0 0.0
    %5972 = vmatpush2.msra.mxu0 0.0
    %5973 = vmatprep.subr.mxu0 0.0
    %5974 = vmatpush2.msra.mxu0 0.0
    %5975 = vmatprep.subr.mxu0 0.0
    %5976 = vmatpush2.msra.mxu0 0.0
    %5977 = vmatprep.subr.mxu0 0.0
    %5978 = vmatpush2.msra.mxu0 0.0
    %5979 = vmatprep.subr.mxu0 0.0
    %5980 = vmatpush2.msra.mxu0 0.0
    %5981 = vmatprep.mubr.f32.mxu0 0.0
    %5982 = vmatmul.mubr.f32.gmra.mxu0 %v5912
    %v5983 = vpop.f32.mrf.mxu0
    %v5984 = vadd.f32 0.0, %v5983
    %v5985 = vpop.f32.mrf.mxu0
    %v5986 = vadd.f32 0.0, %v5985
    %5987 = vmatprep.mubr.f32.mxu0 0.0
    %5988 = vmatmul.mubr.f32.gmra.mxu0 %v5915
    %v5989 = vpop.f32.mrf.mxu0
    %v5990 = vadd.f32 0.0, %v5989
    %v5991 = vpop.f32.mrf.mxu0
    %v5992 = vadd.f32 0.0, %v5991
    %5993 = vdwg.mxu0
    %v5995 = vsel %vm948, %v5903, 0
    %v5998 = vsel %vm948, %v5908, 0
    %6000 = vmatprep.subr.mxu0 0.0
    %6001 = vmatpush1.msra.mxu0 0.0
    %6002 = vmatprep.subr.mxu0 0.0
    %6003 = vmatpush1.msra.mxu0 0.0
    %6004 = vmatprep.subr.mxu0 0.0
    %6005 = vmatpush1.msra.mxu0 0.0
    %6006 = vmatprep.subr.mxu0 0.0
    %6007 = vmatpush1.msra.mxu0 0.0
    %6008 = vmatprep.subr.mxu0 0.0
    %6009 = vmatpush1.msra.mxu0 0.0
    %6010 = vmatprep.subr.mxu0 0.0
    %6011 = vmatpush1.msra.mxu0 0.0
    %6012 = vmatprep.subr.mxu0 0.0
    %6013 = vmatpush1.msra.mxu0 0.0
    %6014 = vmatprep.subr.mxu0 0.0
    %6015 = vmatpush1.msra.mxu0 0.0
    %6016 = vmatprep.subr.mxu0 %v446
    %6017 = vmatpush1.msra.mxu0 %v445
    %6018 = vmatprep.subr.mxu0 %v444
    %6019 = vmatpush1.msra.mxu0 %v443
    %6020 = vmatprep.subr.mxu0 %v442
    %6021 = vmatpush1.msra.mxu0 %v441
    %6022 = vmatprep.subr.mxu0 %v440
    %6023 = vmatpush1.msra.mxu0 %v439
    %6024 = vmatprep.subr.mxu0 %v438
    %6025 = vmatpush1.msra.mxu0 %v437
    %6026 = vmatprep.subr.mxu0 %v436
    %6027 = vmatpush1.msra.mxu0 %v435
    %6028 = vmatprep.subr.mxu0 %v434
    %6029 = vmatpush1.msra.mxu0 %v433
    %6030 = vmatprep.subr.mxu0 %v432
    %6031 = vmatpush1.msra.mxu0 %v431
    %6032 = vmatprep.subr.mxu0 0.0
    %6033 = vmatpush2.msra.mxu0 0.0
    %6034 = vmatprep.subr.mxu0 0.0
    %6035 = vmatpush2.msra.mxu0 0.0
    %6036 = vmatprep.subr.mxu0 0.0
    %6037 = vmatpush2.msra.mxu0 0.0
    %6038 = vmatprep.subr.mxu0 0.0
    %6039 = vmatpush2.msra.mxu0 0.0
    %6040 = vmatprep.subr.mxu0 0.0
    %6041 = vmatpush2.msra.mxu0 0.0
    %6042 = vmatprep.subr.mxu0 0.0
    %6043 = vmatpush2.msra.mxu0 0.0
    %6044 = vmatprep.subr.mxu0 0.0
    %6045 = vmatpush2.msra.mxu0 0.0
    %6046 = vmatprep.subr.mxu0 0.0
    %6047 = vmatpush2.msra.mxu0 0.0
    %6048 = vmatprep.subr.mxu0 0.0
    %6049 = vmatpush2.msra.mxu0 0.0
    %6050 = vmatprep.subr.mxu0 0.0
    %6051 = vmatpush2.msra.mxu0 0.0
    %6052 = vmatprep.subr.mxu0 0.0
    %6053 = vmatpush2.msra.mxu0 0.0
    %6054 = vmatprep.subr.mxu0 0.0
    %6055 = vmatpush2.msra.mxu0 0.0
    %6056 = vmatprep.subr.mxu0 0.0
    %6057 = vmatpush2.msra.mxu0 0.0
    %6058 = vmatprep.subr.mxu0 0.0
    %6059 = vmatpush2.msra.mxu0 0.0
    %6060 = vmatprep.subr.mxu0 0.0
    %6061 = vmatpush2.msra.mxu0 0.0
    %6062 = vmatprep.subr.mxu0 0.0
    %6063 = vmatpush2.msra.mxu0 0.0
    %6064 = vmatprep.mubr.f32.mxu0 0.0
    %6065 = vmatmul.mubr.f32.gmra.mxu0 %v5995
    %v6066 = vpop.f32.mrf.mxu0
    %v6067 = vadd.f32 %v5984, %v6066
    %v6068 = vpop.f32.mrf.mxu0
    %v6069 = vadd.f32 %v5986, %v6068
    %6070 = vmatprep.mubr.f32.mxu0 0.0
    %6071 = vmatmul.mubr.f32.gmra.mxu0 %v5998
    %v6072 = vpop.f32.mrf.mxu0
    %v6073 = vadd.f32 %v5990, %v6072
    %v6074 = vpop.f32.mrf.mxu0
    %v6075 = vadd.f32 %v5992, %v6074
    %6076 = vdwg.mxu0
    %v6078 = vsel %vm1627, %v391, 0
    %v6081 = vsel %vm1627, %v392, 0
    %6083 = vmatprep.subr.mxu0 0.0
    %6084 = vmatpush1.msra.mxu0 0.0
    %6085 = vmatprep.subr.mxu0 0.0
    %6086 = vmatpush1.msra.mxu0 0.0
    %6087 = vmatprep.subr.mxu0 0.0
    %6088 = vmatpush1.msra.mxu0 0.0
    %6089 = vmatprep.subr.mxu0 0.0
    %6090 = vmatpush1.msra.mxu0 0.0
    %6091 = vmatprep.subr.mxu0 0.0
    %6092 = vmatpush1.msra.mxu0 0.0
    %6093 = vmatprep.subr.mxu0 0.0
    %6094 = vmatpush1.msra.mxu0 0.0
    %6095 = vmatprep.subr.mxu0 0.0
    %6096 = vmatpush1.msra.mxu0 0.0
    %6097 = vmatprep.subr.mxu0 0.0
    %6098 = vmatpush1.msra.mxu0 0.0
    %6099 = vmatprep.subr.mxu0 0.0
    %6100 = vmatpush1.msra.mxu0 0.0
    %6101 = vmatprep.subr.mxu0 0.0
    %6102 = vmatpush1.msra.mxu0 0.0
    %6103 = vmatprep.subr.mxu0 0.0
    %6104 = vmatpush1.msra.mxu0 0.0
    %6105 = vmatprep.subr.mxu0 0.0
    %6106 = vmatpush1.msra.mxu0 0.0
    %6107 = vmatprep.subr.mxu0 0.0
    %6108 = vmatpush1.msra.mxu0 0.0
    %6109 = vmatprep.subr.mxu0 0.0
    %6110 = vmatpush1.msra.mxu0 0.0
    %6111 = vmatprep.subr.mxu0 0.0
    %6112 = vmatpush1.msra.mxu0 %v5829
    %6113 = vmatprep.subr.mxu0 0.0
    %6114 = vmatpush1.msra.mxu0 %v5828
    %6115 = vmatprep.subr.mxu0 0.0
    %6116 = vmatpush2.msra.mxu0 0.0
    %6117 = vmatprep.subr.mxu0 0.0
    %6118 = vmatpush2.msra.mxu0 0.0
    %6119 = vmatprep.subr.mxu0 0.0
    %6120 = vmatpush2.msra.mxu0 0.0
    %6121 = vmatprep.subr.mxu0 0.0
    %6122 = vmatpush2.msra.mxu0 0.0
    %6123 = vmatprep.subr.mxu0 0.0
    %6124 = vmatpush2.msra.mxu0 0.0
    %6125 = vmatprep.subr.mxu0 0.0
    %6126 = vmatpush2.msra.mxu0 0.0
    %6127 = vmatprep.subr.mxu0 0.0
    %6128 = vmatpush2.msra.mxu0 0.0
    %6129 = vmatprep.subr.mxu0 0.0
    %6130 = vmatpush2.msra.mxu0 0.0
    %6131 = vmatprep.subr.mxu0 0.0
    %6132 = vmatpush2.msra.mxu0 0.0
    %6133 = vmatprep.subr.mxu0 0.0
    %6134 = vmatpush2.msra.mxu0 0.0
    %6135 = vmatprep.subr.mxu0 0.0
    %6136 = vmatpush2.msra.mxu0 0.0
    %6137 = vmatprep.subr.mxu0 0.0
    %6138 = vmatpush2.msra.mxu0 0.0
    %6139 = vmatprep.subr.mxu0 0.0
    %6140 = vmatpush2.msra.mxu0 0.0
    %6141 = vmatprep.subr.mxu0 0.0
    %6142 = vmatpush2.msra.mxu0 0.0
    %6143 = vmatprep.subr.mxu0 0.0
    %6144 = vmatpush2.msra.mxu0 0.0
    %6145 = vmatprep.subr.mxu0 0.0
    %6146 = vmatpush2.msra.mxu0 0.0
    %6147 = vmatprep.mubr.f32.mxu0 0.0
    %6148 = vmatmul.mubr.f32.gmra.mxu0 %v6078
    %v6149 = vpop.f32.mrf.mxu0
    %v6150 = vadd.f32 0.0, %v6149
    %v6151 = vpop.f32.mrf.mxu0
    %6152 = vmatprep.mubr.f32.mxu0 0.0
    %6153 = vmatmul.mubr.f32.gmra.mxu0 %v6081
    %v6154 = vpop.f32.mrf.mxu0
    %v6155 = vadd.f32 0.0, %v6154
    %v6156 = vpop.f32.mrf.mxu0
    %6157 = vdwg.mxu0
    %v6159 = vsel %vm948, %v6150, 0
    %v6162 = vsel %vm948, %v6155, 0
    %6164 = vmatprep.subr.mxu0 0.0
    %6165 = vmatpush1.msra.mxu0 0.0
    %6166 = vmatprep.subr.mxu0 0.0
    %6167 = vmatpush1.msra.mxu0 0.0
    %6168 = vmatprep.subr.mxu0 0.0
    %6169 = vmatpush1.msra.mxu0 0.0
    %6170 = vmatprep.subr.mxu0 0.0
    %6171 = vmatpush1.msra.mxu0 0.0
    %6172 = vmatprep.subr.mxu0 0.0
    %6173 = vmatpush1.msra.mxu0 0.0
    %6174 = vmatprep.subr.mxu0 0.0
    %6175 = vmatpush1.msra.mxu0 0.0
    %6176 = vmatprep.subr.mxu0 0.0
    %6177 = vmatpush1.msra.mxu0 0.0
    %6178 = vmatprep.subr.mxu0 0.0
    %6179 = vmatpush1.msra.mxu0 0.0
    %6180 = vmatprep.subr.mxu0 %v478
    %6181 = vmatpush1.msra.mxu0 %v477
    %6182 = vmatprep.subr.mxu0 %v476
    %6183 = vmatpush1.msra.mxu0 %v475
    %6184 = vmatprep.subr.mxu0 %v474
    %6185 = vmatpush1.msra.mxu0 %v473
    %6186 = vmatprep.subr.mxu0 %v472
    %6187 = vmatpush1.msra.mxu0 %v471
    %6188 = vmatprep.subr.mxu0 %v470
    %6189 = vmatpush1.msra.mxu0 %v469
    %6190 = vmatprep.subr.mxu0 %v468
    %6191 = vmatpush1.msra.mxu0 %v467
    %6192 = vmatprep.subr.mxu0 %v466
    %6193 = vmatpush1.msra.mxu0 %v465
    %6194 = vmatprep.subr.mxu0 %v464
    %6195 = vmatpush1.msra.mxu0 %v463
    %6196 = vmatprep.subr.mxu0 0.0
    %6197 = vmatpush2.msra.mxu0 0.0
    %6198 = vmatprep.subr.mxu0 0.0
    %6199 = vmatpush2.msra.mxu0 0.0
    %6200 = vmatprep.subr.mxu0 0.0
    %6201 = vmatpush2.msra.mxu0 0.0
    %6202 = vmatprep.subr.mxu0 0.0
    %6203 = vmatpush2.msra.mxu0 0.0
    %6204 = vmatprep.subr.mxu0 0.0
    %6205 = vmatpush2.msra.mxu0 0.0
    %6206 = vmatprep.subr.mxu0 0.0
    %6207 = vmatpush2.msra.mxu0 0.0
    %6208 = vmatprep.subr.mxu0 0.0
    %6209 = vmatpush2.msra.mxu0 0.0
    %6210 = vmatprep.subr.mxu0 0.0
    %6211 = vmatpush2.msra.mxu0 0.0
    %6212 = vmatprep.subr.mxu0 0.0
    %6213 = vmatpush2.msra.mxu0 0.0
    %6214 = vmatprep.subr.mxu0 0.0
    %6215 = vmatpush2.msra.mxu0 0.0
    %6216 = vmatprep.subr.mxu0 0.0
    %6217 = vmatpush2.msra.mxu0 0.0
    %6218 = vmatprep.subr.mxu0 0.0
    %6219 = vmatpush2.msra.mxu0 0.0
    %6220 = vmatprep.subr.mxu0 0.0
    %6221 = vmatpush2.msra.mxu0 0.0
    %6222 = vmatprep.subr.mxu0 0.0
    %6223 = vmatpush2.msra.mxu0 0.0
    %6224 = vmatprep.subr.mxu0 0.0
    %6225 = vmatpush2.msra.mxu0 0.0
    %6226 = vmatprep.subr.mxu0 0.0
    %6227 = vmatpush2.msra.mxu0 0.0
    %6228 = vmatprep.mubr.f32.mxu0 0.0
    %6229 = vmatmul.mubr.f32.gmra.mxu0 %v6159
    %v6230 = vpop.f32.mrf.mxu0
    %v6231 = vadd.f32 0.0, %v6230
    %v6232 = vpop.f32.mrf.mxu0
    %v6233 = vadd.f32 0.0, %v6232
    %6234 = vmatprep.mubr.f32.mxu0 0.0
    %6235 = vmatmul.mubr.f32.gmra.mxu0 %v6162
    %v6236 = vpop.f32.mrf.mxu0
    %v6237 = vadd.f32 0.0, %v6236
    %v6238 = vpop.f32.mrf.mxu0
    %v6239 = vadd.f32 0.0, %v6238
    %6240 = vdwg.mxu0
    %v6241 = vadd.f32 %v6067, %v6231
    %v6242 = vadd.f32 %v6069, %v6233
    %v6243 = vadd.f32 %v6073, %v6237
    %v6244 = vadd.f32 %v6075, %v6239
    %v6246 = vlaneseq
    %v6247 = vshrl.u32 %v6246, 7
    %v6248 = vsub.s32 0, %v6247
    %v6249 = vrot.slane %v430, %v6248
    %v6250 = vlaneseq
    %v6251 = vshrl.u32 %v6250, 7
    %v6252 = vsub.s32 1, %v6251
    %v6253 = vrot.slane %v430, %v6252
    %v6256 = vadd.f32 %v6241, %v6249
    %v6257 = vadd.f32 %v6242, %v6253
    %v6258 = vadd.f32 %v6243, %v6249
    %v6259 = vadd.f32 %v6244, %v6253
    %v6260 = vxor.u32 %v6256, 2147483648
    %v6261 = vxor.u32 %v6257, 2147483648
    %v6262 = vxor.u32 %v6258, 2147483648
    %v6263 = vxor.u32 %v6259, 2147483648
    %v6264 = vmul.f32 %v6260, 1.442695
    %v6265 = vpow.pop %v6264
    %v6266 = vmul.f32 %v6261, 1.442695
    %v6267 = vpow.pop %v6266
    %v6268 = vmul.f32 %v6262, 1.442695
    %v6269 = vpow.pop %v6268
    %v6270 = vmul.f32 %v6263, 1.442695
    %v6271 = vpow.pop %v6270
    %v6272 = vadd.f32 %v6265, 1.0
    %v6273 = vadd.f32 %v6267, 1.0
    %v6274 = vadd.f32 %v6269, 1.0
    %v6275 = vadd.f32 %v6271, 1.0
    %v6276 = vrcp.pop %v6272
    %v6277 = vmul.f32 1.0, %v6276
    %v6278 = vrcp.pop %v6273
    %v6279 = vmul.f32 1.0, %v6278
    %v6280 = vrcp.pop %v6274
    %v6281 = vmul.f32 1.0, %v6280
    %v6282 = vrcp.pop %v6275
    %v6283 = vmul.f32 1.0, %v6282
    %v6284 = vmul.f32 %v6256, %v6277
    %v6285 = vmul.f32 %v6257, %v6279
    %v6286 = vmul.f32 %v6258, %v6281
    %v6287 = vmul.f32 %v6259, %v6283
    %v6288 = vadd.f32 %v6284, %v6286
    %v6289 = vrot.slane %v6288, 4
    %v6290 = vadd.f32 %v6288, %v6289
    %v6291 = vrot.slane %v6290, 2
    %v6292 = vadd.f32 %v6290, %v6291
    %v6293 = vrot.slane %v6292, 1
    %v6294 = vadd.f32 %v6292, %v6293
    %v6295 = vadd.f32 %v6285, %v6287
    %v6296 = vrot.slane %v6295, 4
    %v6297 = vadd.f32 %v6295, %v6296
    %v6298 = vrot.slane %v6297, 2
    %v6299 = vadd.f32 %v6297, %v6298
    %v6300 = vrot.slane %v6299, 1
    %v6301 = vadd.f32 %v6299, %v6300
    %v6302 = vrcp.pop 16.0
    %v6303 = vmul.f32 %v6294, %v6302
    %v6304 = vmul.f32 %v6301, %v6302
    %v6305 = vsub.f32 %v6284, %v6303
    %v6306 = vsub.f32 %v6285, %v6304
    %v6307 = vsub.f32 %v6286, %v6303
    %v6308 = vsub.f32 %v6287, %v6304
    %v6309 = vmul.f32 %v6305, %v6305
    %v6310 = vmul.f32 %v6306, %v6306
    %v6311 = vmul.f32 %v6307, %v6307
    %v6312 = vmul.f32 %v6308, %v6308
    %v6313 = vadd.f32 %v6309, %v6311
    %v6314 = vrot.slane %v6313, 4
    %v6315 = vadd.f32 %v6313, %v6314
    %v6316 = vrot.slane %v6315, 2
    %v6317 = vadd.f32 %v6315, %v6316
    %v6318 = vrot.slane %v6317, 1
    %v6319 = vadd.f32 %v6317, %v6318
    %v6320 = vadd.f32 %v6310, %v6312
    %v6321 = vrot.slane %v6320, 4
    %v6322 = vadd.f32 %v6320, %v6321
    %v6323 = vrot.slane %v6322, 2
    %v6324 = vadd.f32 %v6322, %v6323
    %v6325 = vrot.slane %v6324, 1
    %v6326 = vadd.f32 %v6324, %v6325
    %v6327 = vmul.f32 %v6319, %v6302
    %v6328 = vmul.f32 %v6326, %v6302
    %v6329 = vadd.f32 %v6327, 1e-05
    %v6330 = vadd.f32 %v6328, 1e-05
    %v6331 = vrsqrt.pop %v6329
    %v6332 = vrsqrt.pop %v6330
    %v6333 = vmul.f32 %v6305, %v6331
    %v6334 = vmul.f32 %v6306, %v6332
    %v6335 = vmul.f32 %v6307, %v6331
    %v6336 = vmul.f32 %v6308, %v6332
    %v6338 = vlaneseq
    %v6339 = vshrl.u32 %v6338, 7
    %v6340 = vsub.s32 0, %v6339
    %v6341 = vrot.slane %v564, %v6340
    %v6342 = vlaneseq
    %v6343 = vshrl.u32 %v6342, 7
    %v6344 = vsub.s32 1, %v6343
    %v6345 = vrot.slane %v564, %v6344
    %v6348 = vmul.f32 %v6333, %v6341
    %v6349 = vmul.f32 %v6334, %v6345
    %v6350 = vmul.f32 %v6335, %v6341
    %v6351 = vmul.f32 %v6336, %v6345
    %v6353 = vlaneseq
    %v6354 = vshrl.u32 %v6353, 7
    %v6355 = vsub.s32 0, %v6354
    %v6356 = vrot.slane %v563, %v6355
    %v6357 = vlaneseq
    %v6358 = vshrl.u32 %v6357, 7
    %v6359 = vsub.s32 1, %v6358
    %v6360 = vrot.slane %v563, %v6359
    %v6363 = vadd.f32 %v6348, %v6356
    %v6364 = vadd.f32 %v6349, %v6360
    %v6365 = vadd.f32 %v6350, %v6356
    %v6366 = vadd.f32 %v6351, %v6360
    %v6368 = vlaneseq
    %v6369 = vshrl.u32 %v6368, 7
    %v6370 = vsub.s32 0, %v6369
    %v6371 = vrot.slane %v695, %v6370
    %v6372 = vlaneseq
    %v6373 = vshrl.u32 %v6372, 7
    %v6374 = vsub.s32 1, %v6373
    %v6375 = vrot.slane %v695, %v6374
    %6378 = vmatprep.subr.mxu0 %v727
    %6379 = vmatpush1.msra.mxu0 %v726
    %6380 = vmatprep.subr.mxu0 %v725
    %6381 = vmatpush1.msra.mxu0 %v724
    %6382 = vmatprep.subr.mxu0 %v723
    %6383 = vmatpush1.msra.mxu0 %v722
    %6384 = vmatprep.subr.mxu0 %v721
    %6385 = vmatpush1.msra.mxu0 %v720
    %6386 = vmatprep.subr.mxu0 %v719
    %6387 = vmatpush1.msra.mxu0 %v718
    %6388 = vmatprep.subr.mxu0 %v717
    %6389 = vmatpush1.msra.mxu0 %v716
    %6390 = vmatprep.subr.mxu0 %v715
    %6391 = vmatpush1.msra.mxu0 %v714
    %6392 = vmatprep.subr.mxu0 %v713
    %6393 = vmatpush1.msra.mxu0 %v712
    %6394 = vmatprep.subr.mxu0 %v711
    %6395 = vmatpush1.msra.mxu0 %v710
    %6396 = vmatprep.subr.mxu0 %v709
    %6397 = vmatpush1.msra.mxu0 %v708
    %6398 = vmatprep.subr.mxu0 %v707
    %6399 = vmatpush1.msra.mxu0 %v706
    %6400 = vmatprep.subr.mxu0 %v705
    %6401 = vmatpush1.msra.mxu0 %v704
    %6402 = vmatprep.subr.mxu0 %v703
    %6403 = vmatpush1.msra.mxu0 %v702
    %6404 = vmatprep.subr.mxu0 %v701
    %6405 = vmatpush1.msra.mxu0 %v700
    %6406 = vmatprep.subr.mxu0 %v699
    %6407 = vmatpush1.msra.mxu0 %v698
    %6408 = vmatprep.subr.mxu0 %v697
    %6409 = vmatpush1.msra.mxu0 %v696
    %6410 = vmatprep.subr.mxu0 %v759
    %6411 = vmatpush2.msra.mxu0 %v758
    %6412 = vmatprep.subr.mxu0 %v757
    %6413 = vmatpush2.msra.mxu0 %v756
    %6414 = vmatprep.subr.mxu0 %v755
    %6415 = vmatpush2.msra.mxu0 %v754
    %6416 = vmatprep.subr.mxu0 %v753
    %6417 = vmatpush2.msra.mxu0 %v752
    %6418 = vmatprep.subr.mxu0 %v751
    %6419 = vmatpush2.msra.mxu0 %v750
    %6420 = vmatprep.subr.mxu0 %v749
    %6421 = vmatpush2.msra.mxu0 %v748
    %6422 = vmatprep.subr.mxu0 %v747
    %6423 = vmatpush2.msra.mxu0 %v746
    %6424 = vmatprep.subr.mxu0 %v745
    %6425 = vmatpush2.msra.mxu0 %v744
    %6426 = vmatprep.subr.mxu0 %v743
    %6427 = vmatpush2.msra.mxu0 %v742
    %6428 = vmatprep.subr.mxu0 %v741
    %6429 = vmatpush2.msra.mxu0 %v740
    %6430 = vmatprep.subr.mxu0 %v739
    %6431 = vmatpush2.msra.mxu0 %v738
    %6432 = vmatprep.subr.mxu0 %v737
    %6433 = vmatpush2.msra.mxu0 %v736
    %6434 = vmatprep.subr.mxu0 %v735
    %6435 = vmatpush2.msra.mxu0 %v734
    %6436 = vmatprep.subr.mxu0 %v733
    %6437 = vmatpush2.msra.mxu0 %v732
    %6438 = vmatprep.subr.mxu0 %v731
    %6439 = vmatpush2.msra.mxu0 %v730
    %6440 = vmatprep.subr.mxu0 %v729
    %6441 = vmatpush2.msra.mxu0 %v728
    %6442 = vmatprep.mubr.f32.mxu0 %v6364
    %6443 = vmatmul.mubr.f32.gmra.mxu0 %v6363
    %v6444 = vpop.f32.mrf.mxu0
    %v6445 = vadd.f32 %v6371, %v6444
    %v6446 = vpop.f32.mrf.mxu0
    %v6447 = vadd.f32 %v6375, %v6446
    %6448 = vmatprep.mubr.f32.mxu0 %v6366
    %6449 = vmatmul.mubr.f32.gmra.mxu0 %v6365
    %v6450 = vpop.f32.mrf.mxu0
    %v6451 = vadd.f32 %v6371, %v6450
    %v6452 = vpop.f32.mrf.mxu0
    %v6453 = vadd.f32 %v6375, %v6452
    %6454 = vdwg.mxu0
    %v6456 = vlaneseq
    %v6457 = vshrl.u32 %v6456, 7
    %v6458 = vsub.s32 0, %v6457
    %v6459 = vrot.slane %v565, %v6458
    %v6460 = vlaneseq
    %v6461 = vshrl.u32 %v6460, 7
    %v6462 = vsub.s32 1, %v6461
    %v6463 = vrot.slane %v565, %v6462
    %6466 = vmatprep.subr.mxu0 %v597
    %6467 = vmatpush1.msra.mxu0 %v596
    %6468 = vmatprep.subr.mxu0 %v595
    %6469 = vmatpush1.msra.mxu0 %v594
    %6470 = vmatprep.subr.mxu0 %v593
    %6471 = vmatpush1.msra.mxu0 %v592
    %6472 = vmatprep.subr.mxu0 %v591
    %6473 = vmatpush1.msra.mxu0 %v590
    %6474 = vmatprep.subr.mxu0 %v589
    %6475 = vmatpush1.msra.mxu0 %v588
    %6476 = vmatprep.subr.mxu0 %v587
    %6477 = vmatpush1.msra.mxu0 %v586
    %6478 = vmatprep.subr.mxu0 %v585
    %6479 = vmatpush1.msra.mxu0 %v584
    %6480 = vmatprep.subr.mxu0 %v583
    %6481 = vmatpush1.msra.mxu0 %v582
    %6482 = vmatprep.subr.mxu0 %v581
    %6483 = vmatpush1.msra.mxu0 %v580
    %6484 = vmatprep.subr.mxu0 %v579
    %6485 = vmatpush1.msra.mxu0 %v578
    %6486 = vmatprep.subr.mxu0 %v577
    %6487 = vmatpush1.msra.mxu0 %v576
    %6488 = vmatprep.subr.mxu0 %v575
    %6489 = vmatpush1.msra.mxu0 %v574
    %6490 = vmatprep.subr.mxu0 %v573
    %6491 = vmatpush1.msra.mxu0 %v572
    %6492 = vmatprep.subr.mxu0 %v571
    %6493 = vmatpush1.msra.mxu0 %v570
    %6494 = vmatprep.subr.mxu0 %v569
    %6495 = vmatpush1.msra.mxu0 %v568
    %6496 = vmatprep.subr.mxu0 %v567
    %6497 = vmatpush1.msra.mxu0 %v566
    %6498 = vmatprep.subr.mxu0 %v629
    %6499 = vmatpush2.msra.mxu0 %v628
    %6500 = vmatprep.subr.mxu0 %v627
    %6501 = vmatpush2.msra.mxu0 %v626
    %6502 = vmatprep.subr.mxu0 %v625
    %6503 = vmatpush2.msra.mxu0 %v624
    %6504 = vmatprep.subr.mxu0 %v623
    %6505 = vmatpush2.msra.mxu0 %v622
    %6506 = vmatprep.subr.mxu0 %v621
    %6507 = vmatpush2.msra.mxu0 %v620
    %6508 = vmatprep.subr.mxu0 %v619
    %6509 = vmatpush2.msra.mxu0 %v618
    %6510 = vmatprep.subr.mxu0 %v617
    %6511 = vmatpush2.msra.mxu0 %v616
    %6512 = vmatprep.subr.mxu0 %v615
    %6513 = vmatpush2.msra.mxu0 %v614
    %6514 = vmatprep.subr.mxu0 %v613
    %6515 = vmatpush2.msra.mxu0 %v612
    %6516 = vmatprep.subr.mxu0 %v611
    %6517 = vmatpush2.msra.mxu0 %v610
    %6518 = vmatprep.subr.mxu0 %v609
    %6519 = vmatpush2.msra.mxu0 %v608
    %6520 = vmatprep.subr.mxu0 %v607
    %6521 = vmatpush2.msra.mxu0 %v606
    %6522 = vmatprep.subr.mxu0 %v605
    %6523 = vmatpush2.msra.mxu0 %v604
    %6524 = vmatprep.subr.mxu0 %v603
    %6525 = vmatpush2.msra.mxu0 %v602
    %6526 = vmatprep.subr.mxu0 %v601
    %6527 = vmatpush2.msra.mxu0 %v600
    %6528 = vmatprep.subr.mxu0 %v599
    %6529 = vmatpush2.msra.mxu0 %v598
    %6530 = vmatprep.mubr.f32.mxu0 %v6364
    %6531 = vmatmul.mubr.f32.gmra.mxu0 %v6363
    %v6532 = vpop.f32.mrf.mxu0
    %v6533 = vadd.f32 %v6459, %v6532
    %v6534 = vpop.f32.mrf.mxu0
    %v6535 = vadd.f32 %v6463, %v6534
    %6536 = vmatprep.mubr.f32.mxu0 %v6366
    %6537 = vmatmul.mubr.f32.gmra.mxu0 %v6365
    %v6538 = vpop.f32.mrf.mxu0
    %v6539 = vadd.f32 %v6459, %v6538
    %v6540 = vpop.f32.mrf.mxu0
    %v6541 = vadd.f32 %v6463, %v6540
    %6542 = vdwg.mxu0
    %v6544 = vlaneseq
    %v6545 = vshrl.u32 %v6544, 7
    %v6546 = vsub.s32 0, %v6545
    %v6547 = vrot.slane %v760, %v6546
    %v6548 = vlaneseq
    %v6549 = vshrl.u32 %v6548, 7
    %v6550 = vsub.s32 1, %v6549
    %v6551 = vrot.slane %v760, %v6550
    %6554 = vmatprep.subr.mxu0 %v792
    %6555 = vmatpush1.msra.mxu0 %v791
    %6556 = vmatprep.subr.mxu0 %v790
    %6557 = vmatpush1.msra.mxu0 %v789
    %6558 = vmatprep.subr.mxu0 %v788
    %6559 = vmatpush1.msra.mxu0 %v787
    %6560 = vmatprep.subr.mxu0 %v786
    %6561 = vmatpush1.msra.mxu0 %v785
    %6562 = vmatprep.subr.mxu0 %v784
    %6563 = vmatpush1.msra.mxu0 %v783
    %6564 = vmatprep.subr.mxu0 %v782
    %6565 = vmatpush1.msra.mxu0 %v781
    %6566 = vmatprep.subr.mxu0 %v780
    %6567 = vmatpush1.msra.mxu0 %v779
    %6568 = vmatprep.subr.mxu0 %v778
    %6569 = vmatpush1.msra.mxu0 %v777
    %6570 = vmatprep.subr.mxu0 %v776
    %6571 = vmatpush1.msra.mxu0 %v775
    %6572 = vmatprep.subr.mxu0 %v774
    %6573 = vmatpush1.msra.mxu0 %v773
    %6574 = vmatprep.subr.mxu0 %v772
    %6575 = vmatpush1.msra.mxu0 %v771
    %6576 = vmatprep.subr.mxu0 %v770
    %6577 = vmatpush1.msra.mxu0 %v769
    %6578 = vmatprep.subr.mxu0 %v768
    %6579 = vmatpush1.msra.mxu0 %v767
    %6580 = vmatprep.subr.mxu0 %v766
    %6581 = vmatpush1.msra.mxu0 %v765
    %6582 = vmatprep.subr.mxu0 %v764
    %6583 = vmatpush1.msra.mxu0 %v763
    %6584 = vmatprep.subr.mxu0 %v762
    %6585 = vmatpush1.msra.mxu0 %v761
    %6586 = vmatprep.subr.mxu0 %v824
    %6587 = vmatpush2.msra.mxu0 %v823
    %6588 = vmatprep.subr.mxu0 %v822
    %6589 = vmatpush2.msra.mxu0 %v821
    %6590 = vmatprep.subr.mxu0 %v820
    %6591 = vmatpush2.msra.mxu0 %v819
    %6592 = vmatprep.subr.mxu0 %v818
    %6593 = vmatpush2.msra.mxu0 %v817
    %6594 = vmatprep.subr.mxu0 %v816
    %6595 = vmatpush2.msra.mxu0 %v815
    %6596 = vmatprep.subr.mxu0 %v814
    %6597 = vmatpush2.msra.mxu0 %v813
    %6598 = vmatprep.subr.mxu0 %v812
    %6599 = vmatpush2.msra.mxu0 %v811
    %6600 = vmatprep.subr.mxu0 %v810
    %6601 = vmatpush2.msra.mxu0 %v809
    %6602 = vmatprep.subr.mxu0 %v808
    %6603 = vmatpush2.msra.mxu0 %v807
    %6604 = vmatprep.subr.mxu0 %v806
    %6605 = vmatpush2.msra.mxu0 %v805
    %6606 = vmatprep.subr.mxu0 %v804
    %6607 = vmatpush2.msra.mxu0 %v803
    %6608 = vmatprep.subr.mxu0 %v802
    %6609 = vmatpush2.msra.mxu0 %v801
    %6610 = vmatprep.subr.mxu0 %v800
    %6611 = vmatpush2.msra.mxu0 %v799
    %6612 = vmatprep.subr.mxu0 %v798
    %6613 = vmatpush2.msra.mxu0 %v797
    %6614 = vmatprep.subr.mxu0 %v796
    %6615 = vmatpush2.msra.mxu0 %v795
    %6616 = vmatprep.subr.mxu0 %v794
    %6617 = vmatpush2.msra.mxu0 %v793
    %6618 = vmatprep.mubr.f32.mxu0 %v6364
    %6619 = vmatmul.mubr.f32.gmra.mxu0 %v6363
    %v6620 = vpop.f32.mrf.mxu0
    %v6621 = vadd.f32 %v6547, %v6620
    %v6622 = vpop.f32.mrf.mxu0
    %v6623 = vadd.f32 %v6551, %v6622
    %6624 = vmatprep.mubr.f32.mxu0 %v6366
    %6625 = vmatmul.mubr.f32.gmra.mxu0 %v6365
    %v6626 = vpop.f32.mrf.mxu0
    %v6627 = vadd.f32 %v6547, %v6626
    %v6628 = vpop.f32.mrf.mxu0
    %v6629 = vadd.f32 %v6551, %v6628
    %6630 = vdwg.mxu0
    %6631 = vmatprep.subr.mxu0 0.0
    %6632 = vmatpush1.xpose.msra.mxu0 0.0
    %6633 = vmatprep.subr.mxu0 0.0
    %6634 = vmatpush1.xpose.msra.mxu0 0.0
    %6635 = vmatprep.subr.mxu0 0.0
    %6636 = vmatpush1.xpose.msra.mxu0 0.0
    %6637 = vmatprep.subr.mxu0 0.0
    %6638 = vmatpush1.xpose.msra.mxu0 0.0
    %6639 = vmatprep.subr.mxu0 0.0
    %6640 = vmatpush1.xpose.msra.mxu0 0.0
    %6641 = vmatprep.subr.mxu0 0.0
    %6642 = vmatpush1.xpose.msra.mxu0 0.0
    %6643 = vmatprep.subr.mxu0 0.0
    %6644 = vmatpush1.xpose.msra.mxu0 0.0
    %6645 = vmatprep.subr.mxu0 0.0
    %6646 = vmatpush1.xpose.msra.mxu0 0.0
    %6647 = vmatprep.subr.mxu0 0.0
    %6648 = vmatpush1.xpose.msra.mxu0 0.0
    %6649 = vmatprep.subr.mxu0 0.0
    %6650 = vmatpush1.xpose.msra.mxu0 0.0
    %6651 = vmatprep.subr.mxu0 0.0
    %6652 = vmatpush1.xpose.msra.mxu0 0.0
    %6653 = vmatprep.subr.mxu0 0.0
    %6654 = vmatpush1.xpose.msra.mxu0 0.0
    %6655 = vmatprep.subr.mxu0 0.0
    %6656 = vmatpush1.xpose.msra.mxu0 0.0
    %6657 = vmatprep.subr.mxu0 0.0
    %6658 = vmatpush1.xpose.msra.mxu0 0.0
    %6659 = vmatprep.subr.mxu0 0.0
    %6660 = vmatpush1.xpose.msra.mxu0 0.0
    %6661 = vmatprep.subr.mxu0 %v6535
    %6662 = vmatpush1.xpose.msra.mxu0 %v6533
    %6663 = vmatprep.subr.mxu0 0.0
    %6664 = vmatpush2.xpose.msra.mxu0 0.0
    %6665 = vmatprep.subr.mxu0 0.0
    %6666 = vmatpush2.xpose.msra.mxu0 0.0
    %6667 = vmatprep.subr.mxu0 0.0
    %6668 = vmatpush2.xpose.msra.mxu0 0.0
    %6669 = vmatprep.subr.mxu0 0.0
    %6670 = vmatpush2.xpose.msra.mxu0 0.0
    %6671 = vmatprep.subr.mxu0 0.0
    %6672 = vmatpush2.xpose.msra.mxu0 0.0
    %6673 = vmatprep.subr.mxu0 0.0
    %6674 = vmatpush2.xpose.msra.mxu0 0.0
    %6675 = vmatprep.subr.mxu0 0.0
    %6676 = vmatpush2.xpose.msra.mxu0 0.0
    %6677 = vmatprep.subr.mxu0 0.0
    %6678 = vmatpush2.xpose.msra.mxu0 0.0
    %6679 = vmatprep.subr.mxu0 0.0
    %6680 = vmatpush2.xpose.msra.mxu0 0.0
    %6681 = vmatprep.subr.mxu0 0.0
    %6682 = vmatpush2.xpose.msra.mxu0 0.0
    %6683 = vmatprep.subr.mxu0 0.0
    %6684 = vmatpush2.xpose.msra.mxu0 0.0
    %6685 = vmatprep.subr.mxu0 0.0
    %6686 = vmatpush2.xpose.msra.mxu0 0.0
    %6687 = vmatprep.subr.mxu0 0.0
    %6688 = vmatpush2.xpose.msra.mxu0 0.0
    %6689 = vmatprep.subr.mxu0 0.0
    %6690 = vmatpush2.xpose.msra.mxu0 0.0
    %6691 = vmatprep.subr.mxu0 0.0
    %6692 = vmatpush2.xpose.msra.mxu0 0.0
    %6693 = vmatprep.subr.mxu0 0.0
    %6694 = vmatpush2.xpose.msra.mxu0 0.0
    %6695 = vmatprep.mubr.f32.mxu0 %v6447
    %6696 = vmatmul.mubr.f32.gmra.mxu0 %v6445
    %v6697 = vpop.f32.mrf.mxu0
    %v6698 = vadd.f32 0.0, %v6697
    %v6699 = vpop.f32.mrf.mxu0
    %6700 = vdwg.mxu0
    %vm6701 = vcmask 64512
    %v6702 = vsel %vm6701, %v6698, -inf
    %6703 = vmax.xlane.f32.xlu0 %v6702
    %v6704 = vpop.xlane.xlu0 %6703
    %v6705 = vsub.f32 %v6698, %v6704
    %v6706 = vmul.f32 %v6705, 1.442695
    %v6707 = vpow.pop %v6706
    %v6708 = vsel %vm6701, %v6707, 0.0
    %6709 = vadd.xlane.f32.xlu0 %v6708
    %v6710 = vpop.xlane.xlu0 %6709
    %v6711 = vrcp.pop %v6710
    %v6712 = vmul.f32 %v6707, %v6711
    %v6714 = vsel %vm6701, %v6712, 0
    %6716 = vmatprep.subr.mxu0 0.0
    %6717 = vmatpush1.msra.mxu0 0.0
    %6718 = vmatprep.subr.mxu0 0.0
    %6719 = vmatpush1.msra.mxu0 0.0
    %6720 = vmatprep.subr.mxu0 0.0
    %6721 = vmatpush1.msra.mxu0 0.0
    %6722 = vmatprep.subr.mxu0 0.0
    %6723 = vmatpush1.msra.mxu0 0.0
    %6724 = vmatprep.subr.mxu0 0.0
    %6725 = vmatpush1.msra.mxu0 0.0
    %6726 = vmatprep.subr.mxu0 0.0
    %6727 = vmatpush1.msra.mxu0 0.0
    %6728 = vmatprep.subr.mxu0 0.0
    %6729 = vmatpush1.msra.mxu0 0.0
    %6730 = vmatprep.subr.mxu0 0.0
    %6731 = vmatpush1.msra.mxu0 0.0
    %6732 = vmatprep.subr.mxu0 0.0
    %6733 = vmatpush1.msra.mxu0 0.0
    %6734 = vmatprep.subr.mxu0 0.0
    %6735 = vmatpush1.msra.mxu0 0.0
    %6736 = vmatprep.subr.mxu0 0.0
    %6737 = vmatpush1.msra.mxu0 0.0
    %6738 = vmatprep.subr.mxu0 0.0
    %6739 = vmatpush1.msra.mxu0 0.0
    %6740 = vmatprep.subr.mxu0 0.0
    %6741 = vmatpush1.msra.mxu0 0.0
    %6742 = vmatprep.subr.mxu0 0.0
    %6743 = vmatpush1.msra.mxu0 0.0
    %6744 = vmatprep.subr.mxu0 0.0
    %6745 = vmatpush1.msra.mxu0 0.0
    %6746 = vmatprep.subr.mxu0 %v6623
    %6747 = vmatpush1.msra.mxu0 %v6621
    %6748 = vmatprep.subr.mxu0 0.0
    %6749 = vmatpush2.msra.mxu0 0.0
    %6750 = vmatprep.subr.mxu0 0.0
    %6751 = vmatpush2.msra.mxu0 0.0
    %6752 = vmatprep.subr.mxu0 0.0
    %6753 = vmatpush2.msra.mxu0 0.0
    %6754 = vmatprep.subr.mxu0 0.0
    %6755 = vmatpush2.msra.mxu0 0.0
    %6756 = vmatprep.subr.mxu0 0.0
    %6757 = vmatpush2.msra.mxu0 0.0
    %6758 = vmatprep.subr.mxu0 0.0
    %6759 = vmatpush2.msra.mxu0 0.0
    %6760 = vmatprep.subr.mxu0 0.0
    %6761 = vmatpush2.msra.mxu0 0.0
    %6762 = vmatprep.subr.mxu0 0.0
    %6763 = vmatpush2.msra.mxu0 0.0
    %6764 = vmatprep.subr.mxu0 0.0
    %6765 = vmatpush2.msra.mxu0 0.0
    %6766 = vmatprep.subr.mxu0 0.0
    %6767 = vmatpush2.msra.mxu0 0.0
    %6768 = vmatprep.subr.mxu0 0.0
    %6769 = vmatpush2.msra.mxu0 0.0
    %6770 = vmatprep.subr.mxu0 0.0
    %6771 = vmatpush2.msra.mxu0 0.0
    %6772 = vmatprep.subr.mxu0 0.0
    %6773 = vmatpush2.msra.mxu0 0.0
    %6774 = vmatprep.subr.mxu0 0.0
    %6775 = vmatpush2.msra.mxu0 0.0
    %6776 = vmatprep.subr.mxu0 0.0
    %6777 = vmatpush2.msra.mxu0 0.0
    %6778 = vmatprep.subr.mxu0 0.0
    %6779 = vmatpush2.msra.mxu0 0.0
    %6780 = vmatprep.mubr.f32.mxu0 0.0
    %6781 = vmatmul.mubr.f32.gmra.mxu0 %v6714
    %v6782 = vpop.f32.mrf.mxu0
    %v6783 = vadd.f32 0.0, %v6782
    %v6784 = vpop.f32.mrf.mxu0
    %v6785 = vadd.f32 0.0, %v6784
    %6786 = vdwg.mxu0
    %6787 = vmatprep.subr.mxu0 0.0
    %6788 = vmatpush1.xpose.msra.mxu0 0.0
    %6789 = vmatprep.subr.mxu0 0.0
    %6790 = vmatpush1.xpose.msra.mxu0 0.0
    %6791 = vmatprep.subr.mxu0 0.0
    %6792 = vmatpush1.xpose.msra.mxu0 0.0
    %6793 = vmatprep.subr.mxu0 0.0
    %6794 = vmatpush1.xpose.msra.mxu0 0.0
    %6795 = vmatprep.subr.mxu0 0.0
    %6796 = vmatpush1.xpose.msra.mxu0 0.0
    %6797 = vmatprep.subr.mxu0 0.0
    %6798 = vmatpush1.xpose.msra.mxu0 0.0
    %6799 = vmatprep.subr.mxu0 0.0
    %6800 = vmatpush1.xpose.msra.mxu0 0.0
    %6801 = vmatprep.subr.mxu0 0.0
    %6802 = vmatpush1.xpose.msra.mxu0 0.0
    %6803 = vmatprep.subr.mxu0 0.0
    %6804 = vmatpush1.xpose.msra.mxu0 0.0
    %6805 = vmatprep.subr.mxu0 0.0
    %6806 = vmatpush1.xpose.msra.mxu0 0.0
    %6807 = vmatprep.subr.mxu0 0.0
    %6808 = vmatpush1.xpose.msra.mxu0 0.0
    %6809 = vmatprep.subr.mxu0 0.0
    %6810 = vmatpush1.xpose.msra.mxu0 0.0
    %6811 = vmatprep.subr.mxu0 0.0
    %6812 = vmatpush1.xpose.msra.mxu0 0.0
    %6813 = vmatprep.subr.mxu0 0.0
    %6814 = vmatpush1.xpose.msra.mxu0 0.0
    %6815 = vmatprep.subr.mxu0 0.0
    %6816 = vmatpush1.xpose.msra.mxu0 0.0
    %6817 = vmatprep.subr.mxu0 %v6541
    %6818 = vmatpush1.xpose.msra.mxu0 %v6539
    %6819 = vmatprep.subr.mxu0 0.0
    %6820 = vmatpush2.xpose.msra.mxu0 0.0
    %6821 = vmatprep.subr.mxu0 0.0
    %6822 = vmatpush2.xpose.msra.mxu0 0.0
    %6823 = vmatprep.subr.mxu0 0.0
    %6824 = vmatpush2.xpose.msra.mxu0 0.0
    %6825 = vmatprep.subr.mxu0 0.0
    %6826 = vmatpush2.xpose.msra.mxu0 0.0
    %6827 = vmatprep.subr.mxu0 0.0
    %6828 = vmatpush2.xpose.msra.mxu0 0.0
    %6829 = vmatprep.subr.mxu0 0.0
    %6830 = vmatpush2.xpose.msra.mxu0 0.0
    %6831 = vmatprep.subr.mxu0 0.0
    %6832 = vmatpush2.xpose.msra.mxu0 0.0
    %6833 = vmatprep.subr.mxu0 0.0
    %6834 = vmatpush2.xpose.msra.mxu0 0.0
    %6835 = vmatprep.subr.mxu0 0.0
    %6836 = vmatpush2.xpose.msra.mxu0 0.0
    %6837 = vmatprep.subr.mxu0 0.0
    %6838 = vmatpush2.xpose.msra.mxu0 0.0
    %6839 = vmatprep.subr.mxu0 0.0
    %6840 = vmatpush2.xpose.msra.mxu0 0.0
    %6841 = vmatprep.subr.mxu0 0.0
    %6842 = vmatpush2.xpose.msra.mxu0 0.0
    %6843 = vmatprep.subr.mxu0 0.0
    %6844 = vmatpush2.xpose.msra.mxu0 0.0
    %6845 = vmatprep.subr.mxu0 0.0
    %6846 = vmatpush2.xpose.msra.mxu0 0.0
    %6847 = vmatprep.subr.mxu0 0.0
    %6848 = vmatpush2.xpose.msra.mxu0 0.0
    %6849 = vmatprep.subr.mxu0 0.0
    %6850 = vmatpush2.xpose.msra.mxu0 0.0
    %6851 = vmatprep.mubr.f32.mxu0 %v6453
    %6852 = vmatmul.mubr.f32.gmra.mxu0 %v6451
    %v6853 = vpop.f32.mrf.mxu0
    %v6854 = vadd.f32 0.0, %v6853
    %v6855 = vpop.f32.mrf.mxu0
    %6856 = vdwg.mxu0
    %v6857 = vsel %vm6701, %v6854, -inf
    %6858 = vmax.xlane.f32.xlu0 %v6857
    %v6859 = vpop.xlane.xlu0 %6858
    %v6860 = vsub.f32 %v6854, %v6859
    %v6861 = vmul.f32 %v6860, 1.442695
    %v6862 = vpow.pop %v6861
    %v6863 = vsel %vm6701, %v6862, 0.0
    %6864 = vadd.xlane.f32.xlu0 %v6863
    %v6865 = vpop.xlane.xlu0 %6864
    %v6866 = vrcp.pop %v6865
    %v6867 = vmul.f32 %v6862, %v6866
    %v6869 = vsel %vm6701, %v6867, 0
    %6871 = vmatprep.subr.mxu0 0.0
    %6872 = vmatpush1.msra.mxu0 0.0
    %6873 = vmatprep.subr.mxu0 0.0
    %6874 = vmatpush1.msra.mxu0 0.0
    %6875 = vmatprep.subr.mxu0 0.0
    %6876 = vmatpush1.msra.mxu0 0.0
    %6877 = vmatprep.subr.mxu0 0.0
    %6878 = vmatpush1.msra.mxu0 0.0
    %6879 = vmatprep.subr.mxu0 0.0
    %6880 = vmatpush1.msra.mxu0 0.0
    %6881 = vmatprep.subr.mxu0 0.0
    %6882 = vmatpush1.msra.mxu0 0.0
    %6883 = vmatprep.subr.mxu0 0.0
    %6884 = vmatpush1.msra.mxu0 0.0
    %6885 = vmatprep.subr.mxu0 0.0
    %6886 = vmatpush1.msra.mxu0 0.0
    %6887 = vmatprep.subr.mxu0 0.0
    %6888 = vmatpush1.msra.mxu0 0.0
    %6889 = vmatprep.subr.mxu0 0.0
    %6890 = vmatpush1.msra.mxu0 0.0
    %6891 = vmatprep.subr.mxu0 0.0
    %6892 = vmatpush1.msra.mxu0 0.0
    %6893 = vmatprep.subr.mxu0 0.0
    %6894 = vmatpush1.msra.mxu0 0.0
    %6895 = vmatprep.subr.mxu0 0.0
    %6896 = vmatpush1.msra.mxu0 0.0
    %6897 = vmatprep.subr.mxu0 0.0
    %6898 = vmatpush1.msra.mxu0 0.0
    %6899 = vmatprep.subr.mxu0 0.0
    %6900 = vmatpush1.msra.mxu0 0.0
    %6901 = vmatprep.subr.mxu0 %v6629
    %6902 = vmatpush1.msra.mxu0 %v6627
    %6903 = vmatprep.subr.mxu0 0.0
    %6904 = vmatpush2.msra.mxu0 0.0
    %6905 = vmatprep.subr.mxu0 0.0
    %6906 = vmatpush2.msra.mxu0 0.0
    %6907 = vmatprep.subr.mxu0 0.0
    %6908 = vmatpush2.msra.mxu0 0.0
    %6909 = vmatprep.subr.mxu0 0.0
    %6910 = vmatpush2.msra.mxu0 0.0
    %6911 = vmatprep.subr.mxu0 0.0
    %6912 = vmatpush2.msra.mxu0 0.0
    %6913 = vmatprep.subr.mxu0 0.0
    %6914 = vmatpush2.msra.mxu0 0.0
    %6915 = vmatprep.subr.mxu0 0.0
    %6916 = vmatpush2.msra.mxu0 0.0
    %6917 = vmatprep.subr.mxu0 0.0
    %6918 = vmatpush2.msra.mxu0 0.0
    %6919 = vmatprep.subr.mxu0 0.0
    %6920 = vmatpush2.msra.mxu0 0.0
    %6921 = vmatprep.subr.mxu0 0.0
    %6922 = vmatpush2.msra.mxu0 0.0
    %6923 = vmatprep.subr.mxu0 0.0
    %6924 = vmatpush2.msra.mxu0 0.0
    %6925 = vmatprep.subr.mxu0 0.0
    %6926 = vmatpush2.msra.mxu0 0.0
    %6927 = vmatprep.subr.mxu0 0.0
    %6928 = vmatpush2.msra.mxu0 0.0
    %6929 = vmatprep.subr.mxu0 0.0
    %6930 = vmatpush2.msra.mxu0 0.0
    %6931 = vmatprep.subr.mxu0 0.0
    %6932 = vmatpush2.msra.mxu0 0.0
    %6933 = vmatprep.subr.mxu0 0.0
    %6934 = vmatpush2.msra.mxu0 0.0
    %6935 = vmatprep.mubr.f32.mxu0 0.0
    %6936 = vmatmul.mubr.f32.gmra.mxu0 %v6869
    %v6937 = vpop.f32.mrf.mxu0
    %v6938 = vadd.f32 0.0, %v6937
    %v6939 = vpop.f32.mrf.mxu0
    %v6940 = vadd.f32 0.0, %v6939
    %6941 = vdwg.mxu0
    %v6943 = vlaneseq
    %v6944 = vshrl.u32 %v6943, 7
    %v6945 = vsub.s32 0, %v6944
    %v6946 = vrot.slane %v630, %v6945
    %v6947 = vlaneseq
    %v6948 = vshrl.u32 %v6947, 7
    %v6949 = vsub.s32 1, %v6948
    %v6950 = vrot.slane %v630, %v6949
    %6953 = vmatprep.subr.mxu0 %v662
    %6954 = vmatpush1.msra.mxu0 %v661
    %6955 = vmatprep.subr.mxu0 %v660
    %6956 = vmatpush1.msra.mxu0 %v659
    %6957 = vmatprep.subr.mxu0 %v658
    %6958 = vmatpush1.msra.mxu0 %v657
    %6959 = vmatprep.subr.mxu0 %v656
    %6960 = vmatpush1.msra.mxu0 %v655
    %6961 = vmatprep.subr.mxu0 %v654
    %6962 = vmatpush1.msra.mxu0 %v653
    %6963 = vmatprep.subr.mxu0 %v652
    %6964 = vmatpush1.msra.mxu0 %v651
    %6965 = vmatprep.subr.mxu0 %v650
    %6966 = vmatpush1.msra.mxu0 %v649
    %6967 = vmatprep.subr.mxu0 %v648
    %6968 = vmatpush1.msra.mxu0 %v647
    %6969 = vmatprep.subr.mxu0 %v646
    %6970 = vmatpush1.msra.mxu0 %v645
    %6971 = vmatprep.subr.mxu0 %v644
    %6972 = vmatpush1.msra.mxu0 %v643
    %6973 = vmatprep.subr.mxu0 %v642
    %6974 = vmatpush1.msra.mxu0 %v641
    %6975 = vmatprep.subr.mxu0 %v640
    %6976 = vmatpush1.msra.mxu0 %v639
    %6977 = vmatprep.subr.mxu0 %v638
    %6978 = vmatpush1.msra.mxu0 %v637
    %6979 = vmatprep.subr.mxu0 %v636
    %6980 = vmatpush1.msra.mxu0 %v635
    %6981 = vmatprep.subr.mxu0 %v634
    %6982 = vmatpush1.msra.mxu0 %v633
    %6983 = vmatprep.subr.mxu0 %v632
    %6984 = vmatpush1.msra.mxu0 %v631
    %6985 = vmatprep.subr.mxu0 %v694
    %6986 = vmatpush2.msra.mxu0 %v693
    %6987 = vmatprep.subr.mxu0 %v692
    %6988 = vmatpush2.msra.mxu0 %v691
    %6989 = vmatprep.subr.mxu0 %v690
    %6990 = vmatpush2.msra.mxu0 %v689
    %6991 = vmatprep.subr.mxu0 %v688
    %6992 = vmatpush2.msra.mxu0 %v687
    %6993 = vmatprep.subr.mxu0 %v686
    %6994 = vmatpush2.msra.mxu0 %v685
    %6995 = vmatprep.subr.mxu0 %v684
    %6996 = vmatpush2.msra.mxu0 %v683
    %6997 = vmatprep.subr.mxu0 %v682
    %6998 = vmatpush2.msra.mxu0 %v681
    %6999 = vmatprep.subr.mxu0 %v680
    %7000 = vmatpush2.msra.mxu0 %v679
    %7001 = vmatprep.subr.mxu0 %v678
    %7002 = vmatpush2.msra.mxu0 %v677
    %7003 = vmatprep.subr.mxu0 %v676
    %7004 = vmatpush2.msra.mxu0 %v675
    %7005 = vmatprep.subr.mxu0 %v674
    %7006 = vmatpush2.msra.mxu0 %v673
    %7007 = vmatprep.subr.mxu0 %v672
    %7008 = vmatpush2.msra.mxu0 %v671
    %7009 = vmatprep.subr.mxu0 %v670
    %7010 = vmatpush2.msra.mxu0 %v669
    %7011 = vmatprep.subr.mxu0 %v668
    %7012 = vmatpush2.msra.mxu0 %v667
    %7013 = vmatprep.subr.mxu0 %v666
    %7014 = vmatpush2.msra.mxu0 %v665
    %7015 = vmatprep.subr.mxu0 %v664
    %7016 = vmatpush2.msra.mxu0 %v663
    %7017 = vmatprep.mubr.f32.mxu0 %v6785
    %7018 = vmatmul.mubr.f32.gmra.mxu0 %v6783
    %v7019 = vpop.f32.mrf.mxu0
    %v7020 = vadd.f32 %v6946, %v7019
    %v7021 = vpop.f32.mrf.mxu0
    %v7022 = vadd.f32 %v6950, %v7021
    %7023 = vmatprep.mubr.f32.mxu0 %v6940
    %7024 = vmatmul.mubr.f32.gmra.mxu0 %v6938
    %v7025 = vpop.f32.mrf.mxu0
    %v7026 = vadd.f32 %v6946, %v7025
    %v7027 = vpop.f32.mrf.mxu0
    %v7028 = vadd.f32 %v6950, %v7027
    %7029 = vdwg.mxu0
    %v7030 = vadd.f32 %v6284, %v7020
    %v7031 = vadd.f32 %v6285, %v7022
    %v7032 = vadd.f32 %v6286, %v7026
    %v7033 = vadd.f32 %v6287, %v7028
    %v7034 = vxor.u32 %v7030, 2147483648
    %v7035 = vxor.u32 %v7031, 2147483648
    %v7036 = vxor.u32 %v7032, 2147483648
    %v7037 = vxor.u32 %v7033, 2147483648
    %v7038 = vmul.f32 %v7034, 1.442695
    %v7039 = vpow.pop %v7038
    %v7040 = vmul.f32 %v7035, 1.442695
    %v7041 = vpow.pop %v7040
    %v7042 = vmul.f32 %v7036, 1.442695
    %v7043 = vpow.pop %v7042
    %v7044 = vmul.f32 %v7037, 1.442695
    %v7045 = vpow.pop %v7044
    %v7046 = vadd.f32 %v7039, 1.0
    %v7047 = vadd.f32 %v7041, 1.0
    %v7048 = vadd.f32 %v7043, 1.0
    %v7049 = vadd.f32 %v7045, 1.0
    %v7050 = vrcp.pop %v7046
    %v7051 = vmul.f32 1.0, %v7050
    %v7052 = vrcp.pop %v7047
    %v7053 = vmul.f32 1.0, %v7052
    %v7054 = vrcp.pop %v7048
    %v7055 = vmul.f32 1.0, %v7054
    %v7056 = vrcp.pop %v7049
    %v7057 = vmul.f32 1.0, %v7056
    %v7058 = vmul.f32 %v7030, %v7051
    %v7059 = vmul.f32 %v7031, %v7053
    %v7060 = vmul.f32 %v7032, %v7055
    %v7061 = vmul.f32 %v7033, %v7057
    %v7062 = vadd.f32 %v7058, %v7060
    %v7063 = vrot.slane %v7062, 4
    %v7064 = vadd.f32 %v7062, %v7063
    %v7065 = vrot.slane %v7064, 2
    %v7066 = vadd.f32 %v7064, %v7065
    %v7067 = vrot.slane %v7066, 1
    %v7068 = vadd.f32 %v7066, %v7067
    %v7069 = vadd.f32 %v7059, %v7061
    %v7070 = vrot.slane %v7069, 4
    %v7071 = vadd.f32 %v7069, %v7070
    %v7072 = vrot.slane %v7071, 2
    %v7073 = vadd.f32 %v7071, %v7072
    %v7074 = vrot.slane %v7073, 1
    %v7075 = vadd.f32 %v7073, %v7074
    %v7076 = vmul.f32 %v7068, %v6302
    %v7077 = vmul.f32 %v7075, %v6302
    %v7078 = vsub.f32 %v7058, %v7076
    %v7079 = vsub.f32 %v7059, %v7077
    %v7080 = vsub.f32 %v7060, %v7076
    %v7081 = vsub.f32 %v7061, %v7077
    %v7082 = vmul.f32 %v7078, %v7078
    %v7083 = vmul.f32 %v7079, %v7079
    %v7084 = vmul.f32 %v7080, %v7080
    %v7085 = vmul.f32 %v7081, %v7081
    %v7086 = vadd.f32 %v7082, %v7084
    %v7087 = vrot.slane %v7086, 4
    %v7088 = vadd.f32 %v7086, %v7087
    %v7089 = vrot.slane %v7088, 2
    %v7090 = vadd.f32 %v7088, %v7089
    %v7091 = vrot.slane %v7090, 1
    %v7092 = vadd.f32 %v7090, %v7091
    %v7093 = vadd.f32 %v7083, %v7085
    %v7094 = vrot.slane %v7093, 4
    %v7095 = vadd.f32 %v7093, %v7094
    %v7096 = vrot.slane %v7095, 2
    %v7097 = vadd.f32 %v7095, %v7096
    %v7098 = vrot.slane %v7097, 1
    %v7099 = vadd.f32 %v7097, %v7098
    %v7100 = vmul.f32 %v7092, %v6302
    %v7101 = vmul.f32 %v7099, %v6302
    %v7102 = vadd.f32 %v7100, 1e-05
    %v7103 = vadd.f32 %v7101, 1e-05
    %v7104 = vrsqrt.pop %v7102
    %v7105 = vrsqrt.pop %v7103
    %v7106 = vmul.f32 %v7078, %v7104
    %v7107 = vmul.f32 %v7079, %v7105
    %v7108 = vmul.f32 %v7080, %v7104
    %v7109 = vmul.f32 %v7081, %v7105
    %v7111 = vlaneseq
    %v7112 = vshrl.u32 %v7111, 7
    %v7113 = vsub.s32 0, %v7112
    %v7114 = vrot.slane %v420, %v7113
    %v7115 = vlaneseq
    %v7116 = vshrl.u32 %v7115, 7
    %v7117 = vsub.s32 1, %v7116
    %v7118 = vrot.slane %v420, %v7117
    %v7121 = vmul.f32 %v7106, %v7114
    %v7122 = vmul.f32 %v7107, %v7118
    %v7123 = vmul.f32 %v7108, %v7114
    %v7124 = vmul.f32 %v7109, %v7118
    %v7126 = vlaneseq
    %v7127 = vshrl.u32 %v7126, 7
    %v7128 = vsub.s32 0, %v7127
    %v7129 = vrot.slane %v419, %v7128
    %v7130 = vlaneseq
    %v7131 = vshrl.u32 %v7130, 7
    %v7132 = vsub.s32 1, %v7131
    %v7133 = vrot.slane %v419, %v7132
    %v7136 = vadd.f32 %v7121, %v7129
    %v7137 = vadd.f32 %v7122, %v7133
    %v7138 = vadd.f32 %v7123, %v7129
    %v7139 = vadd.f32 %v7124, %v7133
    %7140 = vmatprep.subr.mxu0 0.0
    %7141 = vmatpush1.msra.mxu0 0.0
    %7142 = vmatprep.subr.mxu0 0.0
    %7143 = vmatpush1.msra.mxu0 0.0
    %7144 = vmatprep.subr.mxu0 0.0
    %7145 = vmatpush1.msra.mxu0 0.0
    %7146 = vmatprep.subr.mxu0 0.0
    %7147 = vmatpush1.msra.mxu0 0.0
    %7148 = vmatprep.subr.mxu0 0.0
    %7149 = vmatpush1.msra.mxu0 0.0
    %7150 = vmatprep.subr.mxu0 0.0
    %7151 = vmatpush1.msra.mxu0 0.0
    %7152 = vmatprep.subr.mxu0 0.0
    %7153 = vmatpush1.msra.mxu0 0.0
    %7154 = vmatprep.subr.mxu0 0.0
    %7155 = vmatpush1.msra.mxu0 0.0
    %7156 = vmatprep.subr.mxu0 0.0
    %7157 = vmatpush1.msra.mxu0 0.0
    %7158 = vmatprep.subr.mxu0 0.0
    %7159 = vmatpush1.msra.mxu0 0.0
    %7160 = vmatprep.subr.mxu0 0.0
    %7161 = vmatpush1.msra.mxu0 0.0
    %7162 = vmatprep.subr.mxu0 0.0
    %7163 = vmatpush1.msra.mxu0 0.0
    %7164 = vmatprep.subr.mxu0 0.0
    %7165 = vmatpush1.msra.mxu0 0.0
    %7166 = vmatprep.subr.mxu0 0.0
    %7167 = vmatpush1.msra.mxu0 0.0
    %7168 = vmatprep.subr.mxu0 %v7139
    %7169 = vmatpush1.msra.mxu0 %v7138
    %7170 = vmatprep.subr.mxu0 %v7137
    %7171 = vmatpush1.msra.mxu0 %v7136
    %7172 = vmatprep.subr.mxu0 0.0
    %7173 = vmatpush2.msra.mxu0 0.0
    %7174 = vmatprep.subr.mxu0 0.0
    %7175 = vmatpush2.msra.mxu0 0.0
    %7176 = vmatprep.subr.mxu0 0.0
    %7177 = vmatpush2.msra.mxu0 0.0
    %7178 = vmatprep.subr.mxu0 0.0
    %7179 = vmatpush2.msra.mxu0 0.0
    %7180 = vmatprep.subr.mxu0 0.0
    %7181 = vmatpush2.msra.mxu0 0.0
    %7182 = vmatprep.subr.mxu0 0.0
    %7183 = vmatpush2.msra.mxu0 0.0
    %7184 = vmatprep.subr.mxu0 0.0
    %7185 = vmatpush2.msra.mxu0 0.0
    %7186 = vmatprep.subr.mxu0 0.0
    %7187 = vmatpush2.msra.mxu0 0.0
    %7188 = vmatprep.subr.mxu0 0.0
    %7189 = vmatpush2.msra.mxu0 0.0
    %7190 = vmatprep.subr.mxu0 0.0
    %7191 = vmatpush2.msra.mxu0 0.0
    %7192 = vmatprep.subr.mxu0 0.0
    %7193 = vmatpush2.msra.mxu0 0.0
    %7194 = vmatprep.subr.mxu0 0.0
    %7195 = vmatpush2.msra.mxu0 0.0
    %7196 = vmatprep.subr.mxu0 0.0
    %7197 = vmatpush2.msra.mxu0 0.0
    %7198 = vmatprep.subr.mxu0 0.0
    %7199 = vmatpush2.msra.mxu0 0.0
    %7200 = vmatprep.subr.mxu0 0.0
    %7201 = vmatpush2.msra.mxu0 0.0
    %7202 = vmatprep.subr.mxu0 0.0
    %7203 = vmatpush2.msra.mxu0 0.0
    %7204 = vmatprep.mubr.f32.mxu0 0.0
    %7205 = vmatmul.mubr.f32.gmra.mxu0 %v5831
    %v7206 = vpop.f32.mrf.mxu0
    %v7207 = vadd.f32 0.0, %v7206
    %v7208 = vpop.f32.mrf.mxu0
    %v7209 = vadd.f32 0.0, %v7208
    %7210 = vmatprep.mubr.f32.mxu0 0.0
    %7211 = vmatmul.mubr.f32.gmra.mxu0 %v5834
    %v7212 = vpop.f32.mrf.mxu0
    %v7213 = vadd.f32 0.0, %v7212
    %v7214 = vpop.f32.mrf.mxu0
    %v7215 = vadd.f32 0.0, %v7214
    %7216 = vdwg.mxu0
    %7217 = vmatprep.subr.mxu0 0.0
    %7218 = vmatpush1.msra.mxu0 %v887
    %7219 = vmatprep.subr.mxu0 0.0
    %7220 = vmatpush1.msra.mxu0 %v886
    %7221 = vmatprep.subr.mxu0 0.0
    %7222 = vmatpush1.msra.mxu0 %v885
    %7223 = vmatprep.subr.mxu0 0.0
    %7224 = vmatpush1.msra.mxu0 %v884
    %7225 = vmatprep.subr.mxu0 0.0
    %7226 = vmatpush1.msra.mxu0 %v883
    %7227 = vmatprep.subr.mxu0 0.0
    %7228 = vmatpush1.msra.mxu0 %v882
    %7229 = vmatprep.subr.mxu0 0.0
    %7230 = vmatpush1.msra.mxu0 %v881
    %7231 = vmatprep.subr.mxu0 0.0
    %7232 = vmatpush1.msra.mxu0 %v880
    %7233 = vmatprep.subr.mxu0 0.0
    %7234 = vmatpush1.msra.mxu0 %v879
    %7235 = vmatprep.subr.mxu0 0.0
    %7236 = vmatpush1.msra.mxu0 %v878
    %7237 = vmatprep.subr.mxu0 0.0
    %7238 = vmatpush1.msra.mxu0 %v877
    %7239 = vmatprep.subr.mxu0 0.0
    %7240 = vmatpush1.msra.mxu0 %v876
    %7241 = vmatprep.subr.mxu0 0.0
    %7242 = vmatpush1.msra.mxu0 %v875
    %7243 = vmatprep.subr.mxu0 0.0
    %7244 = vmatpush1.msra.mxu0 %v874
    %7245 = vmatprep.subr.mxu0 0.0
    %7246 = vmatpush1.msra.mxu0 %v873
    %7247 = vmatprep.subr.mxu0 0.0
    %7248 = vmatpush1.msra.mxu0 %v872
    %7249 = vmatprep.subr.mxu0 0.0
    %7250 = vmatpush2.msra.mxu0 %v903
    %7251 = vmatprep.subr.mxu0 0.0
    %7252 = vmatpush2.msra.mxu0 %v902
    %7253 = vmatprep.subr.mxu0 0.0
    %7254 = vmatpush2.msra.mxu0 %v901
    %7255 = vmatprep.subr.mxu0 0.0
    %7256 = vmatpush2.msra.mxu0 %v900
    %7257 = vmatprep.subr.mxu0 0.0
    %7258 = vmatpush2.msra.mxu0 %v899
    %7259 = vmatprep.subr.mxu0 0.0
    %7260 = vmatpush2.msra.mxu0 %v898
    %7261 = vmatprep.subr.mxu0 0.0
    %7262 = vmatpush2.msra.mxu0 %v897
    %7263 = vmatprep.subr.mxu0 0.0
    %7264 = vmatpush2.msra.mxu0 %v896
    %7265 = vmatprep.subr.mxu0 0.0
    %7266 = vmatpush2.msra.mxu0 %v895
    %7267 = vmatprep.subr.mxu0 0.0
    %7268 = vmatpush2.msra.mxu0 %v894
    %7269 = vmatprep.subr.mxu0 0.0
    %7270 = vmatpush2.msra.mxu0 %v893
    %7271 = vmatprep.subr.mxu0 0.0
    %7272 = vmatpush2.msra.mxu0 %v892
    %7273 = vmatprep.subr.mxu0 0.0
    %7274 = vmatpush2.msra.mxu0 %v891
    %7275 = vmatprep.subr.mxu0 0.0
    %7276 = vmatpush2.msra.mxu0 %v890
    %7277 = vmatprep.subr.mxu0 0.0
    %7278 = vmatpush2.msra.mxu0 %v889
    %7279 = vmatprep.subr.mxu0 0.0
    %7280 = vmatpush2.msra.mxu0 %v888
    %7281 = vmatprep.mubr.f32.mxu0 %v7137
    %7282 = vmatmul.mubr.f32.gmra.mxu0 %v7136
    %v7283 = vpop.f32.mrf.mxu0
    %v7284 = vadd.f32 0.0, %v7283
    %v7285 = vpop.f32.mrf.mxu0
    %7286 = vmatprep.mubr.f32.mxu0 %v7139
    %7287 = vmatmul.mubr.f32.gmra.mxu0 %v7138
    %v7288 = vpop.f32.mrf.mxu0
    %v7289 = vadd.f32 0.0, %v7288
    %v7290 = vpop.f32.mrf.mxu0
    %7291 = vdwg.mxu0
    %7292 = vmatprep.subr.mxu0 0.0
    %7293 = vmatpush1.msra.mxu0 %v855
    %7294 = vmatprep.subr.mxu0 0.0
    %7295 = vmatpush1.msra.mxu0 %v854
    %7296 = vmatprep.subr.mxu0 0.0
    %7297 = vmatpush1.msra.mxu0 %v853
    %7298 = vmatprep.subr.mxu0 0.0
    %7299 = vmatpush1.msra.mxu0 %v852
    %7300 = vmatprep.subr.mxu0 0.0
    %7301 = vmatpush1.msra.mxu0 %v851
    %7302 = vmatprep.subr.mxu0 0.0
    %7303 = vmatpush1.msra.mxu0 %v850
    %7304 = vmatprep.subr.mxu0 0.0
    %7305 = vmatpush1.msra.mxu0 %v849
    %7306 = vmatprep.subr.mxu0 0.0
    %7307 = vmatpush1.msra.mxu0 %v848
    %7308 = vmatprep.subr.mxu0 0.0
    %7309 = vmatpush1.msra.mxu0 %v847
    %7310 = vmatprep.subr.mxu0 0.0
    %7311 = vmatpush1.msra.mxu0 %v846
    %7312 = vmatprep.subr.mxu0 0.0
    %7313 = vmatpush1.msra.mxu0 %v845
    %7314 = vmatprep.subr.mxu0 0.0
    %7315 = vmatpush1.msra.mxu0 %v844
    %7316 = vmatprep.subr.mxu0 0.0
    %7317 = vmatpush1.msra.mxu0 %v843
    %7318 = vmatprep.subr.mxu0 0.0
    %7319 = vmatpush1.msra.mxu0 %v842
    %7320 = vmatprep.subr.mxu0 0.0
    %7321 = vmatpush1.msra.mxu0 %v841
    %7322 = vmatprep.subr.mxu0 0.0
    %7323 = vmatpush1.msra.mxu0 %v840
    %7324 = vmatprep.subr.mxu0 0.0
    %7325 = vmatpush2.msra.mxu0 %v871
    %7326 = vmatprep.subr.mxu0 0.0
    %7327 = vmatpush2.msra.mxu0 %v870
    %7328 = vmatprep.subr.mxu0 0.0
    %7329 = vmatpush2.msra.mxu0 %v869
    %7330 = vmatprep.subr.mxu0 0.0
    %7331 = vmatpush2.msra.mxu0 %v868
    %7332 = vmatprep.subr.mxu0 0.0
    %7333 = vmatpush2.msra.mxu0 %v867
    %7334 = vmatprep.subr.mxu0 0.0
    %7335 = vmatpush2.msra.mxu0 %v866
    %7336 = vmatprep.subr.mxu0 0.0
    %7337 = vmatpush2.msra.mxu0 %v865
    %7338 = vmatprep.subr.mxu0 0.0
    %7339 = vmatpush2.msra.mxu0 %v864
    %7340 = vmatprep.subr.mxu0 0.0
    %7341 = vmatpush2.msra.mxu0 %v863
    %7342 = vmatprep.subr.mxu0 0.0
    %7343 = vmatpush2.msra.mxu0 %v862
    %7344 = vmatprep.subr.mxu0 0.0
    %7345 = vmatpush2.msra.mxu0 %v861
    %7346 = vmatprep.subr.mxu0 0.0
    %7347 = vmatpush2.msra.mxu0 %v860
    %7348 = vmatprep.subr.mxu0 0.0
    %7349 = vmatpush2.msra.mxu0 %v859
    %7350 = vmatprep.subr.mxu0 0.0
    %7351 = vmatpush2.msra.mxu0 %v858
    %7352 = vmatprep.subr.mxu0 0.0
    %7353 = vmatpush2.msra.mxu0 %v857
    %7354 = vmatprep.subr.mxu0 0.0
    %7355 = vmatpush2.msra.mxu0 %v856
    %7356 = vmatprep.mubr.f32.mxu0 %v7209
    %7357 = vmatmul.mubr.f32.gmra.mxu0 %v7207
    %v7358 = vpop.f32.mrf.mxu0
    %v7359 = vadd.f32 %v7284, %v7358
    %v7360 = vpop.f32.mrf.mxu0
    %7361 = vmatprep.mubr.f32.mxu0 %v7215
    %7362 = vmatmul.mubr.f32.gmra.mxu0 %v7213
    %v7363 = vpop.f32.mrf.mxu0
    %v7364 = vadd.f32 %v7289, %v7363
    %v7365 = vpop.f32.mrf.mxu0
    %7366 = vdwg.mxu0
    %7367 = vmatprep.subr.mxu0 0.0
    %7368 = vmatpush1.msra.mxu0 0.0
    %7369 = vmatprep.subr.mxu0 0.0
    %7370 = vmatpush1.msra.mxu0 0.0
    %7371 = vmatprep.subr.mxu0 0.0
    %7372 = vmatpush1.msra.mxu0 0.0
    %7373 = vmatprep.subr.mxu0 0.0
    %7374 = vmatpush1.msra.mxu0 0.0
    %7375 = vmatprep.subr.mxu0 0.0
    %7376 = vmatpush1.msra.mxu0 0.0
    %7377 = vmatprep.subr.mxu0 0.0
    %7378 = vmatpush1.msra.mxu0 0.0
    %7379 = vmatprep.subr.mxu0 0.0
    %7380 = vmatpush1.msra.mxu0 0.0
    %7381 = vmatprep.subr.mxu0 0.0
    %7382 = vmatpush1.msra.mxu0 0.0
    %7383 = vmatprep.subr.mxu0 0.0
    %7384 = vmatpush1.msra.mxu0 0.0
    %7385 = vmatprep.subr.mxu0 0.0
    %7386 = vmatpush1.msra.mxu0 0.0
    %7387 = vmatprep.subr.mxu0 0.0
    %7388 = vmatpush1.msra.mxu0 0.0
    %7389 = vmatprep.subr.mxu0 0.0
    %7390 = vmatpush1.msra.mxu0 0.0
    %7391 = vmatprep.subr.mxu0 0.0
    %7392 = vmatpush1.msra.mxu0 0.0
    %7393 = vmatprep.subr.mxu0 0.0
    %7394 = vmatpush1.msra.mxu0 0.0
    %7395 = vmatprep.subr.mxu0 %v7139
    %7396 = vmatpush1.msra.mxu0 %v7138
    %7397 = vmatprep.subr.mxu0 %v7137
    %7398 = vmatpush1.msra.mxu0 %v7136
    %7399 = vmatprep.subr.mxu0 0.0
    %7400 = vmatpush2.msra.mxu0 0.0
    %7401 = vmatprep.subr.mxu0 0.0
    %7402 = vmatpush2.msra.mxu0 0.0
    %7403 = vmatprep.subr.mxu0 0.0
    %7404 = vmatpush2.msra.mxu0 0.0
    %7405 = vmatprep.subr.mxu0 0.0
    %7406 = vmatpush2.msra.mxu0 0.0
    %7407 = vmatprep.subr.mxu0 0.0
    %7408 = vmatpush2.msra.mxu0 0.0
    %7409 = vmatprep.subr.mxu0 0.0
    %7410 = vmatpush2.msra.mxu0 0.0
    %7411 = vmatprep.subr.mxu0 0.0
    %7412 = vmatpush2.msra.mxu0 0.0
    %7413 = vmatprep.subr.mxu0 0.0
    %7414 = vmatpush2.msra.mxu0 0.0
    %7415 = vmatprep.subr.mxu0 0.0
    %7416 = vmatpush2.msra.mxu0 0.0
    %7417 = vmatprep.subr.mxu0 0.0
    %7418 = vmatpush2.msra.mxu0 0.0
    %7419 = vmatprep.subr.mxu0 0.0
    %7420 = vmatpush2.msra.mxu0 0.0
    %7421 = vmatprep.subr.mxu0 0.0
    %7422 = vmatpush2.msra.mxu0 0.0
    %7423 = vmatprep.subr.mxu0 0.0
    %7424 = vmatpush2.msra.mxu0 0.0
    %7425 = vmatprep.subr.mxu0 0.0
    %7426 = vmatpush2.msra.mxu0 0.0
    %7427 = vmatprep.subr.mxu0 0.0
    %7428 = vmatpush2.msra.mxu0 0.0
    %7429 = vmatprep.subr.mxu0 0.0
    %7430 = vmatpush2.msra.mxu0 0.0
    %7431 = vmatprep.mubr.f32.mxu0 0.0
    %7432 = vmatmul.mubr.f32.gmra.mxu0 %v6078
    %v7433 = vpop.f32.mrf.mxu0
    %v7434 = vadd.f32 0.0, %v7433
    %v7435 = vpop.f32.mrf.mxu0
    %v7436 = vadd.f32 0.0, %v7435
    %7437 = vmatprep.mubr.f32.mxu0 0.0
    %7438 = vmatmul.mubr.f32.gmra.mxu0 %v6081
    %v7439 = vpop.f32.mrf.mxu0
    %v7440 = vadd.f32 0.0, %v7439
    %v7441 = vpop.f32.mrf.mxu0
    %v7442 = vadd.f32 0.0, %v7441
    %7443 = vdwg.mxu0
    %7444 = vmatprep.subr.mxu0 0.0
    %7445 = vmatpush1.msra.mxu0 %v919
    %7446 = vmatprep.subr.mxu0 0.0
    %7447 = vmatpush1.msra.mxu0 %v918
    %7448 = vmatprep.subr.mxu0 0.0
    %7449 = vmatpush1.msra.mxu0 %v917
    %7450 = vmatprep.subr.mxu0 0.0
    %7451 = vmatpush1.msra.mxu0 %v916
    %7452 = vmatprep.subr.mxu0 0.0
    %7453 = vmatpush1.msra.mxu0 %v915
    %7454 = vmatprep.subr.mxu0 0.0
    %7455 = vmatpush1.msra.mxu0 %v914
    %7456 = vmatprep.subr.mxu0 0.0
    %7457 = vmatpush1.msra.mxu0 %v913
    %7458 = vmatprep.subr.mxu0 0.0
    %7459 = vmatpush1.msra.mxu0 %v912
    %7460 = vmatprep.subr.mxu0 0.0
    %7461 = vmatpush1.msra.mxu0 %v911
    %7462 = vmatprep.subr.mxu0 0.0
    %7463 = vmatpush1.msra.mxu0 %v910
    %7464 = vmatprep.subr.mxu0 0.0
    %7465 = vmatpush1.msra.mxu0 %v909
    %7466 = vmatprep.subr.mxu0 0.0
    %7467 = vmatpush1.msra.mxu0 %v908
    %7468 = vmatprep.subr.mxu0 0.0
    %7469 = vmatpush1.msra.mxu0 %v907
    %7470 = vmatprep.subr.mxu0 0.0
    %7471 = vmatpush1.msra.mxu0 %v906
    %7472 = vmatprep.subr.mxu0 0.0
    %7473 = vmatpush1.msra.mxu0 %v905
    %7474 = vmatprep.subr.mxu0 0.0
    %7475 = vmatpush1.msra.mxu0 %v904
    %7476 = vmatprep.subr.mxu0 0.0
    %7477 = vmatpush2.msra.mxu0 %v935
    %7478 = vmatprep.subr.mxu0 0.0
    %7479 = vmatpush2.msra.mxu0 %v934
    %7480 = vmatprep.subr.mxu0 0.0
    %7481 = vmatpush2.msra.mxu0 %v933
    %7482 = vmatprep.subr.mxu0 0.0
    %7483 = vmatpush2.msra.mxu0 %v932
    %7484 = vmatprep.subr.mxu0 0.0
    %7485 = vmatpush2.msra.mxu0 %v931
    %7486 = vmatprep.subr.mxu0 0.0
    %7487 = vmatpush2.msra.mxu0 %v930
    %7488 = vmatprep.subr.mxu0 0.0
    %7489 = vmatpush2.msra.mxu0 %v929
    %7490 = vmatprep.subr.mxu0 0.0
    %7491 = vmatpush2.msra.mxu0 %v928
    %7492 = vmatprep.subr.mxu0 0.0
    %7493 = vmatpush2.msra.mxu0 %v927
    %7494 = vmatprep.subr.mxu0 0.0
    %7495 = vmatpush2.msra.mxu0 %v926
    %7496 = vmatprep.subr.mxu0 0.0
    %7497 = vmatpush2.msra.mxu0 %v925
    %7498 = vmatprep.subr.mxu0 0.0
    %7499 = vmatpush2.msra.mxu0 %v924
    %7500 = vmatprep.subr.mxu0 0.0
    %7501 = vmatpush2.msra.mxu0 %v923
    %7502 = vmatprep.subr.mxu0 0.0
    %7503 = vmatpush2.msra.mxu0 %v922
    %7504 = vmatprep.subr.mxu0 0.0
    %7505 = vmatpush2.msra.mxu0 %v921
    %7506 = vmatprep.subr.mxu0 0.0
    %7507 = vmatpush2.msra.mxu0 %v920
    %7508 = vmatprep.mubr.f32.mxu0 %v7436
    %7509 = vmatmul.mubr.f32.gmra.mxu0 %v7434
    %v7510 = vpop.f32.mrf.mxu0
    %v7511 = vadd.f32 0.0, %v7510
    %v7512 = vpop.f32.mrf.mxu0
    %7513 = vmatprep.mubr.f32.mxu0 %v7442
    %7514 = vmatmul.mubr.f32.gmra.mxu0 %v7440
    %v7515 = vpop.f32.mrf.mxu0
    %v7516 = vadd.f32 0.0, %v7515
    %v7517 = vpop.f32.mrf.mxu0
    %7518 = vdwg.mxu0
    %v7519 = vadd.f32 %v7359, %v7511
    %v7520 = vadd.f32 %v7364, %v7516
    %v7522 = vlaneseq
    %v7523 = vshrl.u32 %v7522, 7
    %v7524 = vsub.s32 0, %v7523
    %v7525 = vrot.slane %v839, %v7524
    %v7527 = vadd.f32 %v7519, %v7525
    %v7528 = vadd.f32 %v7520, %v7525
    %7529 = vmatprep.subr.mxu0 0.0
    %7530 = vmatpush1.msra.mxu0 0.0
    %7531 = vmatprep.subr.mxu0 0.0
    %7532 = vmatpush1.msra.mxu0 0.0
    %7533 = vmatprep.subr.mxu0 0.0
    %7534 = vmatpush1.msra.mxu0 0.0
    %7535 = vmatprep.subr.mxu0 0.0
    %7536 = vmatpush1.msra.mxu0 0.0
    %7537 = vmatprep.subr.mxu0 0.0
    %7538 = vmatpush1.msra.mxu0 0.0
    %7539 = vmatprep.subr.mxu0 0.0
    %7540 = vmatpush1.msra.mxu0 0.0
    %7541 = vmatprep.subr.mxu0 0.0
    %7542 = vmatpush1.msra.mxu0 0.0
    %7543 = vmatprep.subr.mxu0 0.0
    %7544 = vmatpush1.msra.mxu0 0.0
    %7545 = vmatprep.subr.mxu0 0.0
    %7546 = vmatpush1.msra.mxu0 0.0
    %7547 = vmatprep.subr.mxu0 0.0
    %7548 = vmatpush1.msra.mxu0 0.0
    %7549 = vmatprep.subr.mxu0 0.0
    %7550 = vmatpush1.msra.mxu0 0.0
    %7551 = vmatprep.subr.mxu0 0.0
    %7552 = vmatpush1.msra.mxu0 0.0
    %7553 = vmatprep.subr.mxu0 0.0
    %7554 = vmatpush1.msra.mxu0 0.0
    %7555 = vmatprep.subr.mxu0 0.0
    %7556 = vmatpush1.msra.mxu0 0.0
    %7557 = vmatprep.subr.mxu0 0.0
    %7558 = vmatpush1.msra.mxu0 %v7528
    %7559 = vmatprep.subr.mxu0 0.0
    %7560 = vmatpush1.msra.mxu0 %v7527
    %7561 = vmatprep.subr.mxu0 0.0
    %7562 = vmatpush2.msra.mxu0 0.0
    %7563 = vmatprep.subr.mxu0 0.0
    %7564 = vmatpush2.msra.mxu0 0.0
    %7565 = vmatprep.subr.mxu0 0.0
    %7566 = vmatpush2.msra.mxu0 0.0
    %7567 = vmatprep.subr.mxu0 0.0
    %7568 = vmatpush2.msra.mxu0 0.0
    %7569 = vmatprep.subr.mxu0 0.0
    %7570 = vmatpush2.msra.mxu0 0.0
    %7571 = vmatprep.subr.mxu0 0.0
    %7572 = vmatpush2.msra.mxu0 0.0
    %7573 = vmatprep.subr.mxu0 0.0
    %7574 = vmatpush2.msra.mxu0 0.0
    %7575 = vmatprep.subr.mxu0 0.0
    %7576 = vmatpush2.msra.mxu0 0.0
    %7577 = vmatprep.subr.mxu0 0.0
    %7578 = vmatpush2.msra.mxu0 0.0
    %7579 = vmatprep.subr.mxu0 0.0
    %7580 = vmatpush2.msra.mxu0 0.0
    %7581 = vmatprep.subr.mxu0 0.0
    %7582 = vmatpush2.msra.mxu0 0.0
    %7583 = vmatprep.subr.mxu0 0.0
    %7584 = vmatpush2.msra.mxu0 0.0
    %7585 = vmatprep.subr.mxu0 0.0
    %7586 = vmatpush2.msra.mxu0 0.0
    %7587 = vmatprep.subr.mxu0 0.0
    %7588 = vmatpush2.msra.mxu0 0.0
    %7589 = vmatprep.subr.mxu0 0.0
    %7590 = vmatpush2.msra.mxu0 0.0
    %7591 = vmatprep.subr.mxu0 0.0
    %7592 = vmatpush2.msra.mxu0 0.0
    %7593 = vmatprep.mubr.f32.mxu0 0.0
    %7594 = vmatmul.mubr.f32.gmra.mxu0 %v5831
    %v7595 = vpop.f32.mrf.mxu0
    %v7596 = vadd.f32 0.0, %v7595
    %v7597 = vpop.f32.mrf.mxu0
    %7598 = vmatprep.mubr.f32.mxu0 0.0
    %7599 = vmatmul.mubr.f32.gmra.mxu0 %v5834
    %v7600 = vpop.f32.mrf.mxu0
    %v7601 = vadd.f32 0.0, %v7600
    %v7602 = vpop.f32.mrf.mxu0
    %7603 = vdwg.mxu0
    %vm7604 = vcmask 15360
    %v7606 = vsel %vm7604, %v7527, 0
    %v7609 = vsel %vm7604, %v7528, 0
    %vm7611 = vcmask 1041408
    %v7613 = vsel %vm7611, %v938, 0
    %7615 = vmatprep.subr.mxu0 0.0
    %7616 = vmatpush1.msra.mxu0 0.0
    %7617 = vmatprep.subr.mxu0 0.0
    %7618 = vmatpush1.msra.mxu0 0.0
    %7619 = vmatprep.subr.mxu0 0.0
    %7620 = vmatpush1.msra.mxu0 0.0
    %7621 = vmatprep.subr.mxu0 0.0
    %7622 = vmatpush1.msra.mxu0 0.0
    %7623 = vmatprep.subr.mxu0 0.0
    %7624 = vmatpush1.msra.mxu0 0.0
    %7625 = vmatprep.subr.mxu0 0.0
    %7626 = vmatpush1.msra.mxu0 0.0
    %7627 = vmatprep.subr.mxu0 0.0
    %7628 = vmatpush1.msra.mxu0 0.0
    %7629 = vmatprep.subr.mxu0 0.0
    %7630 = vmatpush1.msra.mxu0 0.0
    %7631 = vmatprep.subr.mxu0 0.0
    %7632 = vmatpush1.msra.mxu0 0.0
    %7633 = vmatprep.subr.mxu0 0.0
    %7634 = vmatpush1.msra.mxu0 0.0
    %7635 = vmatprep.subr.mxu0 0.0
    %7636 = vmatpush1.msra.mxu0 0.0
    %7637 = vmatprep.subr.mxu0 0.0
    %7638 = vmatpush1.msra.mxu0 0.0
    %7639 = vmatprep.subr.mxu0 0.0
    %7640 = vmatpush1.msra.mxu0 0.0
    %7641 = vmatprep.subr.mxu0 0.0
    %7642 = vmatpush1.msra.mxu0 0.0
    %7643 = vmatprep.subr.mxu0 0.0
    %7644 = vmatpush1.msra.mxu0 0.0
    %7645 = vmatprep.subr.mxu0 0.0
    %7646 = vmatpush1.msra.mxu0 %v7613
    %7647 = vmatprep.subr.mxu0 0.0
    %7648 = vmatpush2.msra.mxu0 0.0
    %7649 = vmatprep.subr.mxu0 0.0
    %7650 = vmatpush2.msra.mxu0 0.0
    %7651 = vmatprep.subr.mxu0 0.0
    %7652 = vmatpush2.msra.mxu0 0.0
    %7653 = vmatprep.subr.mxu0 0.0
    %7654 = vmatpush2.msra.mxu0 0.0
    %7655 = vmatprep.subr.mxu0 0.0
    %7656 = vmatpush2.msra.mxu0 0.0
    %7657 = vmatprep.subr.mxu0 0.0
    %7658 = vmatpush2.msra.mxu0 0.0
    %7659 = vmatprep.subr.mxu0 0.0
    %7660 = vmatpush2.msra.mxu0 0.0
    %7661 = vmatprep.subr.mxu0 0.0
    %7662 = vmatpush2.msra.mxu0 0.0
    %7663 = vmatprep.subr.mxu0 0.0
    %7664 = vmatpush2.msra.mxu0 0.0
    %7665 = vmatprep.subr.mxu0 0.0
    %7666 = vmatpush2.msra.mxu0 0.0
    %7667 = vmatprep.subr.mxu0 0.0
    %7668 = vmatpush2.msra.mxu0 0.0
    %7669 = vmatprep.subr.mxu0 0.0
    %7670 = vmatpush2.msra.mxu0 0.0
    %7671 = vmatprep.subr.mxu0 0.0
    %7672 = vmatpush2.msra.mxu0 0.0
    %7673 = vmatprep.subr.mxu0 0.0
    %7674 = vmatpush2.msra.mxu0 0.0
    %7675 = vmatprep.subr.mxu0 0.0
    %7676 = vmatpush2.msra.mxu0 0.0
    %7677 = vmatprep.subr.mxu0 0.0
    %7678 = vmatpush2.msra.mxu0 0.0
    %7679 = vmatprep.mubr.f32.mxu0 0.0
    %7680 = vmatmul.mubr.f32.gmra.mxu0 %v7606
    %v7681 = vpop.f32.mrf.mxu0
    %v7682 = vadd.f32 0.0, %v7681
    %v7683 = vpop.f32.mrf.mxu0
    %7684 = vmatprep.mubr.f32.mxu0 0.0
    %7685 = vmatmul.mubr.f32.gmra.mxu0 %v7609
    %v7686 = vpop.f32.mrf.mxu0
    %v7687 = vadd.f32 0.0, %v7686
    %v7688 = vpop.f32.mrf.mxu0
    %7689 = vdwg.mxu0
    %v7691 = vsel %vm7604, %v7596, 0
    %v7694 = vsel %vm7604, %v7601, 0
    %v7697 = vsel %vm7611, %v937, 0
    %7699 = vmatprep.subr.mxu0 0.0
    %7700 = vmatpush1.msra.mxu0 0.0
    %7701 = vmatprep.subr.mxu0 0.0
    %7702 = vmatpush1.msra.mxu0 0.0
    %7703 = vmatprep.subr.mxu0 0.0
    %7704 = vmatpush1.msra.mxu0 0.0
    %7705 = vmatprep.subr.mxu0 0.0
    %7706 = vmatpush1.msra.mxu0 0.0
    %7707 = vmatprep.subr.mxu0 0.0
    %7708 = vmatpush1.msra.mxu0 0.0
    %7709 = vmatprep.subr.mxu0 0.0
    %7710 = vmatpush1.msra.mxu0 0.0
    %7711 = vmatprep.subr.mxu0 0.0
    %7712 = vmatpush1.msra.mxu0 0.0
    %7713 = vmatprep.subr.mxu0 0.0
    %7714 = vmatpush1.msra.mxu0 0.0
    %7715 = vmatprep.subr.mxu0 0.0
    %7716 = vmatpush1.msra.mxu0 0.0
    %7717 = vmatprep.subr.mxu0 0.0
    %7718 = vmatpush1.msra.mxu0 0.0
    %7719 = vmatprep.subr.mxu0 0.0
    %7720 = vmatpush1.msra.mxu0 0.0
    %7721 = vmatprep.subr.mxu0 0.0
    %7722 = vmatpush1.msra.mxu0 0.0
    %7723 = vmatprep.subr.mxu0 0.0
    %7724 = vmatpush1.msra.mxu0 0.0
    %7725 = vmatprep.subr.mxu0 0.0
    %7726 = vmatpush1.msra.mxu0 0.0
    %7727 = vmatprep.subr.mxu0 0.0
    %7728 = vmatpush1.msra.mxu0 0.0
    %7729 = vmatprep.subr.mxu0 0.0
    %7730 = vmatpush1.msra.mxu0 %v7697
    %7731 = vmatprep.subr.mxu0 0.0
    %7732 = vmatpush2.msra.mxu0 0.0
    %7733 = vmatprep.subr.mxu0 0.0
    %7734 = vmatpush2.msra.mxu0 0.0
    %7735 = vmatprep.subr.mxu0 0.0
    %7736 = vmatpush2.msra.mxu0 0.0
    %7737 = vmatprep.subr.mxu0 0.0
    %7738 = vmatpush2.msra.mxu0 0.0
    %7739 = vmatprep.subr.mxu0 0.0
    %7740 = vmatpush2.msra.mxu0 0.0
    %7741 = vmatprep.subr.mxu0 0.0
    %7742 = vmatpush2.msra.mxu0 0.0
    %7743 = vmatprep.subr.mxu0 0.0
    %7744 = vmatpush2.msra.mxu0 0.0
    %7745 = vmatprep.subr.mxu0 0.0
    %7746 = vmatpush2.msra.mxu0 0.0
    %7747 = vmatprep.subr.mxu0 0.0
    %7748 = vmatpush2.msra.mxu0 0.0
    %7749 = vmatprep.subr.mxu0 0.0
    %7750 = vmatpush2.msra.mxu0 0.0
    %7751 = vmatprep.subr.mxu0 0.0
    %7752 = vmatpush2.msra.mxu0 0.0
    %7753 = vmatprep.subr.mxu0 0.0
    %7754 = vmatpush2.msra.mxu0 0.0
    %7755 = vmatprep.subr.mxu0 0.0
    %7756 = vmatpush2.msra.mxu0 0.0
    %7757 = vmatprep.subr.mxu0 0.0
    %7758 = vmatpush2.msra.mxu0 0.0
    %7759 = vmatprep.subr.mxu0 0.0
    %7760 = vmatpush2.msra.mxu0 0.0
    %7761 = vmatprep.subr.mxu0 0.0
    %7762 = vmatpush2.msra.mxu0 0.0
    %7763 = vmatprep.mubr.f32.mxu0 0.0
    %7764 = vmatmul.mubr.f32.gmra.mxu0 %v7691
    %v7765 = vpop.f32.mrf.mxu0
    %v7766 = vadd.f32 %v7682, %v7765
    %v7767 = vpop.f32.mrf.mxu0
    %7768 = vmatprep.mubr.f32.mxu0 0.0
    %7769 = vmatmul.mubr.f32.gmra.mxu0 %v7694
    %v7770 = vpop.f32.mrf.mxu0
    %v7771 = vadd.f32 %v7687, %v7770
    %v7772 = vpop.f32.mrf.mxu0
    %7773 = vdwg.mxu0
    %7774 = vmatprep.subr.mxu0 0.0
    %7775 = vmatpush1.msra.mxu0 0.0
    %7776 = vmatprep.subr.mxu0 0.0
    %7777 = vmatpush1.msra.mxu0 0.0
    %7778 = vmatprep.subr.mxu0 0.0
    %7779 = vmatpush1.msra.mxu0 0.0
    %7780 = vmatprep.subr.mxu0 0.0
    %7781 = vmatpush1.msra.mxu0 0.0
    %7782 = vmatprep.subr.mxu0 0.0
    %7783 = vmatpush1.msra.mxu0 0.0
    %7784 = vmatprep.subr.mxu0 0.0
    %7785 = vmatpush1.msra.mxu0 0.0
    %7786 = vmatprep.subr.mxu0 0.0
    %7787 = vmatpush1.msra.mxu0 0.0
    %7788 = vmatprep.subr.mxu0 0.0
    %7789 = vmatpush1.msra.mxu0 0.0
    %7790 = vmatprep.subr.mxu0 0.0
    %7791 = vmatpush1.msra.mxu0 0.0
    %7792 = vmatprep.subr.mxu0 0.0
    %7793 = vmatpush1.msra.mxu0 0.0
    %7794 = vmatprep.subr.mxu0 0.0
    %7795 = vmatpush1.msra.mxu0 0.0
    %7796 = vmatprep.subr.mxu0 0.0
    %7797 = vmatpush1.msra.mxu0 0.0
    %7798 = vmatprep.subr.mxu0 0.0
    %7799 = vmatpush1.msra.mxu0 0.0
    %7800 = vmatprep.subr.mxu0 0.0
    %7801 = vmatpush1.msra.mxu0 0.0
    %7802 = vmatprep.subr.mxu0 0.0
    %7803 = vmatpush1.msra.mxu0 %v7528
    %7804 = vmatprep.subr.mxu0 0.0
    %7805 = vmatpush1.msra.mxu0 %v7527
    %7806 = vmatprep.subr.mxu0 0.0
    %7807 = vmatpush2.msra.mxu0 0.0
    %7808 = vmatprep.subr.mxu0 0.0
    %7809 = vmatpush2.msra.mxu0 0.0
    %7810 = vmatprep.subr.mxu0 0.0
    %7811 = vmatpush2.msra.mxu0 0.0
    %7812 = vmatprep.subr.mxu0 0.0
    %7813 = vmatpush2.msra.mxu0 0.0
    %7814 = vmatprep.subr.mxu0 0.0
    %7815 = vmatpush2.msra.mxu0 0.0
    %7816 = vmatprep.subr.mxu0 0.0
    %7817 = vmatpush2.msra.mxu0 0.0
    %7818 = vmatprep.subr.mxu0 0.0
    %7819 = vmatpush2.msra.mxu0 0.0
    %7820 = vmatprep.subr.mxu0 0.0
    %7821 = vmatpush2.msra.mxu0 0.0
    %7822 = vmatprep.subr.mxu0 0.0
    %7823 = vmatpush2.msra.mxu0 0.0
    %7824 = vmatprep.subr.mxu0 0.0
    %7825 = vmatpush2.msra.mxu0 0.0
    %7826 = vmatprep.subr.mxu0 0.0
    %7827 = vmatpush2.msra.mxu0 0.0
    %7828 = vmatprep.subr.mxu0 0.0
    %7829 = vmatpush2.msra.mxu0 0.0
    %7830 = vmatprep.subr.mxu0 0.0
    %7831 = vmatpush2.msra.mxu0 0.0
    %7832 = vmatprep.subr.mxu0 0.0
    %7833 = vmatpush2.msra.mxu0 0.0
    %7834 = vmatprep.subr.mxu0 0.0
    %7835 = vmatpush2.msra.mxu0 0.0
    %7836 = vmatprep.subr.mxu0 0.0
    %7837 = vmatpush2.msra.mxu0 0.0
    %7838 = vmatprep.mubr.f32.mxu0 0.0
    %7839 = vmatmul.mubr.f32.gmra.mxu0 %v6078
    %v7840 = vpop.f32.mrf.mxu0
    %v7841 = vadd.f32 0.0, %v7840
    %v7842 = vpop.f32.mrf.mxu0
    %7843 = vmatprep.mubr.f32.mxu0 0.0
    %7844 = vmatmul.mubr.f32.gmra.mxu0 %v6081
    %v7845 = vpop.f32.mrf.mxu0
    %v7846 = vadd.f32 0.0, %v7845
    %v7847 = vpop.f32.mrf.mxu0
    %7848 = vdwg.mxu0
    %v7850 = vsel %vm7604, %v7841, 0
    %v7853 = vsel %vm7604, %v7846, 0
    %v7856 = vsel %vm7611, %v939, 0
    %7858 = vmatprep.subr.mxu0 0.0
    %7859 = vmatpush1.msra.mxu0 0.0
    %7860 = vmatprep.subr.mxu0 0.0
    %7861 = vmatpush1.msra.mxu0 0.0
    %7862 = vmatprep.subr.mxu0 0.0
    %7863 = vmatpush1.msra.mxu0 0.0
    %7864 = vmatprep.subr.mxu0 0.0
    %7865 = vmatpush1.msra.mxu0 0.0
    %7866 = vmatprep.subr.mxu0 0.0
    %7867 = vmatpush1.msra.mxu0 0.0
    %7868 = vmatprep.subr.mxu0 0.0
    %7869 = vmatpush1.msra.mxu0 0.0
    %7870 = vmatprep.subr.mxu0 0.0
    %7871 = vmatpush1.msra.mxu0 0.0
    %7872 = vmatprep.subr.mxu0 0.0
    %7873 = vmatpush1.msra.mxu0 0.0
    %7874 = vmatprep.subr.mxu0 0.0
    %7875 = vmatpush1.msra.mxu0 0.0
    %7876 = vmatprep.subr.mxu0 0.0
    %7877 = vmatpush1.msra.mxu0 0.0
    %7878 = vmatprep.subr.mxu0 0.0
    %7879 = vmatpush1.msra.mxu0 0.0
    %7880 = vmatprep.subr.mxu0 0.0
    %7881 = vmatpush1.msra.mxu0 0.0
    %7882 = vmatprep.subr.mxu0 0.0
    %7883 = vmatpush1.msra.mxu0 0.0
    %7884 = vmatprep.subr.mxu0 0.0
    %7885 = vmatpush1.msra.mxu0 0.0
    %7886 = vmatprep.subr.mxu0 0.0
    %7887 = vmatpush1.msra.mxu0 0.0
    %7888 = vmatprep.subr.mxu0 0.0
    %7889 = vmatpush1.msra.mxu0 %v7856
    %7890 = vmatprep.subr.mxu0 0.0
    %7891 = vmatpush2.msra.mxu0 0.0
    %7892 = vmatprep.subr.mxu0 0.0
    %7893 = vmatpush2.msra.mxu0 0.0
    %7894 = vmatprep.subr.mxu0 0.0
    %7895 = vmatpush2.msra.mxu0 0.0
    %7896 = vmatprep.subr.mxu0 0.0
    %7897 = vmatpush2.msra.mxu0 0.0
    %7898 = vmatprep.subr.mxu0 0.0
    %7899 = vmatpush2.msra.mxu0 0.0
    %7900 = vmatprep.subr.mxu0 0.0
    %7901 = vmatpush2.msra.mxu0 0.0
    %7902 = vmatprep.subr.mxu0 0.0
    %7903 = vmatpush2.msra.mxu0 0.0
    %7904 = vmatprep.subr.mxu0 0.0
    %7905 = vmatpush2.msra.mxu0 0.0
    %7906 = vmatprep.subr.mxu0 0.0
    %7907 = vmatpush2.msra.mxu0 0.0
    %7908 = vmatprep.subr.mxu0 0.0
    %7909 = vmatpush2.msra.mxu0 0.0
    %7910 = vmatprep.subr.mxu0 0.0
    %7911 = vmatpush2.msra.mxu0 0.0
    %7912 = vmatprep.subr.mxu0 0.0
    %7913 = vmatpush2.msra.mxu0 0.0
    %7914 = vmatprep.subr.mxu0 0.0
    %7915 = vmatpush2.msra.mxu0 0.0
    %7916 = vmatprep.subr.mxu0 0.0
    %7917 = vmatpush2.msra.mxu0 0.0
    %7918 = vmatprep.subr.mxu0 0.0
    %7919 = vmatpush2.msra.mxu0 0.0
    %7920 = vmatprep.subr.mxu0 0.0
    %7921 = vmatpush2.msra.mxu0 0.0
    %7922 = vmatprep.mubr.f32.mxu0 0.0
    %7923 = vmatmul.mubr.f32.gmra.mxu0 %v7850
    %v7924 = vpop.f32.mrf.mxu0
    %v7925 = vadd.f32 0.0, %v7924
    %v7926 = vpop.f32.mrf.mxu0
    %7927 = vmatprep.mubr.f32.mxu0 0.0
    %7928 = vmatmul.mubr.f32.gmra.mxu0 %v7853
    %v7929 = vpop.f32.mrf.mxu0
    %v7930 = vadd.f32 0.0, %v7929
    %v7931 = vpop.f32.mrf.mxu0
    %7932 = vdwg.mxu0
    %v7933 = vadd.f32 %v7766, %v7925
    %v7934 = vadd.f32 %v7771, %v7930
    %v7936 = vlaneseq
    %v7937 = vshrl.u32 %v7936, 7
    %v7938 = vsub.s32 0, %v7937
    %v7939 = vrot.slane %v936, %v7938
    %v7941 = vadd.f32 %v7933, %v7939
    %v7942 = vadd.f32 %v7934, %v7939
    %vm7943 = vcmask 31744
    %7944 = vst.msk [vmem:[%s163] sm:$0xff] %vm7943, %v7941
    %7945 = vst.msk [vmem:[%s163 + $0x8] sm:$0xff] %vm7943, %v7942
    // Predicated region
    $region338: #{_lambda_.1} parent=1 // pred_check
      _
    $region339: #{_lambda_.1} parent=1 // pred_check_branch
      %7947 = sbr.rel (0) target = $region341
    $region340: #{_lambda_.1} parent=1 // pred_region
      _
    $region341: #{_lambda_.1} parent=1 // pred_fallthru
      _
    // Predicated region
    $region342: #{_lambda_.1} parent=1 // pred_check
      _
    $region343: #{_lambda_.1} parent=1 // pred_check_branch
      %7949 = sbr.rel (0) target = $region345
    $region344: #{_lambda_.1} parent=1 // pred_region
      _
    $region345: #{_lambda_.1} parent=1 // pred_fallthru
      _
    %7950 = vsyncpa [#allocation3], 1
    %7951 = vsyncpa [#allocation5], 1

</llo_original>
